<compile_context>
chip_gen: v7x
topology: tpu7x:2x2x1
jax: 0.10.0
libtpu: 0.0.40
codegen_flags: <defaults>
</compile_context>

<pallas_src>
import collections
import functools

import jax
import jax.numpy as jnp
from jax.experimental import pallas as pl
from jax.experimental.pallas import tpu as pltpu

LEAKY_SLOPE = 0.2
BN_EPS = 1e-5
K_SIZE = 4
PAD = 1

LayerCfg = collections.namedtuple(
    "LayerCfg", ["stride", "norm", "act", "cout", "cin_pad"])


def _round_up(x, m):
    return ((x + m - 1) // m) * m


def _vmem_limit_bytes():
    """Generation-aware scoped-VMEM limit (v5e/v6e -> 96 MiB, v7x -> ~48 MiB)."""
    try:
        cap = int(pltpu.get_tpu_info().vmem_capacity_bytes)
        return max(32 * 1024 * 1024, min((cap * 3) // 4, 96 * 1024 * 1024))
    except Exception:
        return 32 * 1024 * 1024


# ------------------------------------------------------------------ kernels --

def _build_patch_slab(x_ref, *, stride, ho_n, wo_n):
    """On-chip im2col: [Ho*Wo, k*k*Cin_pad] slab, columns ordered (kh, kw, cin).

    stride==2 inputs are pair-packed along W ([.., Wp//2, 2*Cin]), so every
    access below is a plain contiguous slice -- no strided or gather loads.
    """
    rows = []
    for ho in range(ho_n):
        pieces = []
        if stride == 2:
            for di in range(K_SIZE):
                row = x_ref[0, 2 * ho + di]            # (Wp//2, 2*Cin)
                pieces.append(row[0:wo_n])             # kw = 0, 1
                pieces.append(row[1:wo_n + 1])         # kw = 2, 3
        else:
            for di in range(K_SIZE):
                row = x_ref[0, ho + di]                # (Wp, Cin)
                for dj in range(K_SIZE):
                    pieces.append(row[dj:dj + wo_n])
        rows.append(jnp.concatenate(pieces, axis=-1))  # (Wo, k*k*Cin)
    return jnp.concatenate(rows, axis=0)               # (Ho*Wo, k*k*Cin)


def _conv_bias_act_kernel(x_ref, w_ref, b_ref, o_ref, *, stride, ho_n, wo_n, act):
    # y = im2col(x) @ W + b ; optional LeakyReLU(0.2).  bf16 in, f32 epilogue.
    slab = _build_patch_slab(x_ref, stride=stride, ho_n=ho_n, wo_n=wo_n)
    y = jnp.dot(slab, w_ref[...], preferred_element_type=jnp.float32)
    y = y + b_ref[...]
    if act:
        y = jnp.maximum(y, LEAKY_SLOPE * y)            # vmul+vmax, no select
    o_ref[0] = y.astype(o_ref.dtype)


def _conv_stats_kernel(x_ref, w_ref, o_ref, s1_ref, s2_ref, *, stride, ho_n, wo_n):
    # Conv matmul (no bias for BN layers) + per-sample channel sum / sum-of-sq.
    slab = _build_patch_slab(x_ref, stride=stride, ho_n=ho_n, wo_n=wo_n)
    y = jnp.dot(slab, w_ref[...], preferred_element_type=jnp.float32)
    o_ref[0] = y.astype(o_ref.dtype)
    # Whole-sample block => every row is a real output position: no masking.
    s1_ref[0] = jnp.sum(y, axis=0, keepdims=True)
    s2_ref[0] = jnp.sum(y * y, axis=0, keepdims=True)


def _conv_layer_pallas(x_prep, w2, b2=None, *, stride, ho_n, wo_n, act=False,
                       with_stats=False):
    n = x_prep.shape[0]
    cpad = w2.shape[1]
    x_spec = pl.BlockSpec((1,) + tuple(x_prep.shape[1:]), lambda i: (i, 0, 0, 0))
    w_spec = pl.BlockSpec(w2.shape, lambda i: (0, 0))
    out_spec = pl.BlockSpec((1, ho_n * wo_n, cpad), lambda i: (i, 0, 0))
    cparams = pltpu.CompilerParams(dimension_semantics=("parallel",),
                                   vmem_limit_bytes=_vmem_limit_bytes())

    if with_stats:
        stat_spec = pl.BlockSpec((1, 1, cpad), lambda i: (i, 0, 0))
        y, s1, s2 = pl.pallas_call(
            functools.partial(_conv_stats_kernel, stride=stride,
                              ho_n=ho_n, wo_n=wo_n),
            out_shape=(jax.ShapeDtypeStruct((n, ho_n * wo_n, cpad), jnp.bfloat16),
                       jax.ShapeDtypeStruct((n, 1, cpad), jnp.float32),
                       jax.ShapeDtypeStruct((n, 1, cpad), jnp.float32)),
            grid=(n,),
            in_specs=[x_spec, w_spec],
            out_specs=(out_spec, stat_spec, stat_spec),
            compiler_params=cparams,
        )(x_prep, w2)
        return y.reshape(n, ho_n, wo_n, cpad), s1, s2

    y = pl.pallas_call(
        functools.partial(_conv_bias_act_kernel, stride=stride,
                          ho_n=ho_n, wo_n=wo_n, act=act),
        out_shape=jax.ShapeDtypeStruct((n, ho_n * wo_n, cpad), jnp.bfloat16),
        grid=(n,),
        in_specs=[x_spec, w_spec, pl.BlockSpec((1, cpad), lambda i: (0, 0))],
        out_specs=out_spec,
        compiler_params=cparams,
    )(x_prep, w2, b2)
    return y.reshape(n, ho_n, wo_n, cpad)


# --------------------------------------------------------------------- glue --

def _bn_act(y4, s1, s2, gamma_pad, beta_pad, *, count, act):
    """Training-mode BatchNorm (biased batch variance) + optional LeakyReLU.

    Single fused XLA elementwise pass over the bf16 activation; stats in f32.
    """
    cnt = jnp.float32(count)
    mean = jnp.sum(s1, axis=(0, 1)) / cnt
    var = jnp.maximum(jnp.sum(s2, axis=(0, 1)) / cnt - mean * mean, 0.0)
    inv = jax.lax.rsqrt(var + BN_EPS)
    scale = gamma_pad * inv                       # 0 on pad channels (gamma=0)
    shift = beta_pad - mean * scale
    a = y4.astype(jnp.float32) * scale + shift
    if act:
        a = jnp.maximum(a, LEAKY_SLOPE * a)
    return a.astype(jnp.bfloat16)


def _prep_conv_input(a, stride):
    """Zero-pad H/W by 1; for stride-2 convs pair-pack W into lanes (free reshape)."""
    n, h, w, c = a.shape
    ap = jnp.pad(a, ((0, 0), (PAD, PAD), (PAD, PAD), (0, 0)))
    if stride == 2:
        assert (w + 2 * PAD) % 2 == 0, "stride-2 layer needs even padded width"
        ap = ap.reshape(n, h + 2 * PAD, (w + 2 * PAD) // 2, 2 * c)
    return ap


# ---------------------------------------------------------------- model glue --

def init_params(key, input_c, num_filters=64, n_down=3):
    """Mirrors PatchDiscriminator.__init__ layer configs (PyTorch weight layout)."""
    cfgs = [(input_c, num_filters, 2, False, True)]
    for i in range(n_down):
        cfgs.append((num_filters * 2 ** i, num_filters * 2 ** (i + 1),
                     1 if i == n_down - 1 else 2, True, True))
    cfgs.append((num_filters * 2 ** n_down, 1, 1, False, False))

    layers = []
    for ni, nf, s, norm, act in cfgs:
        key, kw, kb = jax.random.split(key, 3)
        w = jax.random.normal(kw, (nf, ni, 4, 4), jnp.float32) * 0.05
        b = None if norm else jax.random.normal(kb, (nf,), jnp.float32) * 0.05
        gamma = jnp.ones((nf,), jnp.float32) if norm else None
        beta = jnp.zeros((nf,), jnp.float32) if norm else None
        layers.append(dict(w=w, b=b, gamma=gamma, beta=beta,
                           stride=s, norm=norm, act=act))
    return layers


def prepare_params(raw_layers):
    """One-time: weights to MXU layout [k*k*Cin_pad, Cout_pad] bf16, bias/BN padded."""
    cfgs, weights = [], []
    for li, lyr in enumerate(raw_layers):
        w = lyr["w"]                                   # [Cout, Cin, k, k]
        cout, cin, k, _ = w.shape
        cpad = _round_up(cout, 128)
        # Layer 0 input channels padded to 64 so the pair-packed lane width is a
        # full 128 lanes; deeper layers inherit the previous layer's 128-padded
        # channel count (carried end-to-end, never sliced between layers).
        cin_pad = _round_up(cin, 64) if li == 0 else _round_up(cin, 128)
        wp = jnp.pad(w, ((0, 0), (0, cin_pad - cin), (0, 0), (0, 0)))
        w2 = jnp.transpose(wp, (2, 3, 1, 0)).reshape(k * k * cin_pad, cout)
        w2 = jnp.pad(w2, ((0, 0), (0, cpad - cout))).astype(jnp.bfloat16)
        d = {"w2": w2}
        if lyr["norm"]:
            d["gamma_pad"] = jnp.pad(lyr["gamma"], (0, cpad - cout)).astype(jnp.float32)
            d["beta_pad"] = jnp.pad(lyr["beta"], (0, cpad - cout)).astype(jnp.float32)
        else:
            b = lyr["b"] if lyr["b"] is not None else jnp.zeros((cout,), jnp.float32)
            d["b2"] = jnp.pad(b, (0, cpad - cout)).reshape(1, cpad).astype(jnp.float32)
        cfgs.append(LayerCfg(stride=int(lyr["stride"]), norm=bool(lyr["norm"]),
                             act=bool(lyr["act"]), cout=int(cout),
                             cin_pad=int(cin_pad)))
        weights.append(d)
    return tuple(cfgs), tuple(weights)


@functools.partial(jax.jit, static_argnums=0)
def patch_discriminator_forward(cfgs, weights, x_nchw):
    n = x_nchw.shape[0]
    # NCHW -> NHWC once at the boundary, bf16, channel-pad for layer 0.
    a = jnp.transpose(x_nchw, (0, 2, 3, 1)).astype(jnp.bfloat16)
    a = jnp.pad(a, ((0, 0), (0, 0), (0, 0), (0, cfgs[0].cin_pad - a.shape[-1])))
    for cfg, wts in zip(cfgs, weights):
        hin, win = a.shape[1], a.shape[2]
        ho = (hin + 2 * PAD - K_SIZE) // cfg.stride + 1
        wo = (win + 2 * PAD - K_SIZE) // cfg.stride + 1
        x_prep = _prep_conv_input(a, cfg.stride)
        if cfg.norm:
            y, s1, s2 = _conv_layer_pallas(x_prep, wts["w2"], stride=cfg.stride,
                                           ho_n=ho, wo_n=wo, with_stats=True)
            a = _bn_act(y, s1, s2, wts["gamma_pad"], wts["beta_pad"],
                        count=n * ho * wo, act=cfg.act)
        else:
            a = _conv_layer_pallas(x_prep, wts["w2"], wts["b2"], stride=cfg.stride,
                                   ho_n=ho, wo_n=wo, act=cfg.act)
    out = a[..., :cfgs[-1].cout].astype(jnp.float32)   # drop channel padding once
    return jnp.transpose(out, (0, 3, 1, 2))            # NHWC -> NCHW at the boundary


if __name__ == "__main__":
    key = jax.random.PRNGKey(0)
    kx, kp = jax.random.split(key)
    # 32x32 spatial keeps all 5 conv layers valid: 32->16->8->4->3->2.
    x = jax.random.normal(kx, (2, 4, 32, 32), jnp.float32)
    raw = init_params(kp, input_c=4, num_filters=16, n_down=3)
    cfgs, weights = prepare_params(raw)

    out = patch_discriminator_forward(cfgs, weights, x)
    out = jax.block_until_ready(out)
    assert out.shape == (2, 1, 2, 2), out.shape
    assert bool(jnp.all(jnp.isfinite(out)))
    print("KERNEL_OK")
</pallas_src>

<mosaic_0001>
module attributes {stable_mosaic.version = 11 : i64} {
  func.func @_conv_bias_act_kernel(%arg0: i32, %arg1: memref<1x34x17x128xbf16, #tpu.memory_space<vmem>>, %arg2: memref<1024x128xbf16, #tpu.memory_space<vmem>>, %arg3: memref<1x128xf32, #tpu.memory_space<vmem>>, %arg4: memref<1x256x128xbf16, #tpu.memory_space<vmem>>) attributes {dimension_semantics = [#tpu.dimension_semantics<parallel>], iteration_bounds = array<i64: 2>, scalar_prefetch = 0 : i64, scratch_operands = 0 : i64, tpu.core_type = #tpu.core_type<tc>, window_params = [{transform_indices = @transform_0, window_bounds = array<i64: 1, 34, 17, 128>}, {pipeline_mode = #tpu.pipeline_mode<synchronous>, transform_indices = @transform_1, window_bounds = array<i64: 1024, 128>}, {pipeline_mode = #tpu.pipeline_mode<synchronous>, transform_indices = @transform_2, window_bounds = array<i64: 1, 128>}, {transform_indices = @transform_3, window_bounds = array<i64: 1, 256, 128>}]} {
    %c0 = arith.constant 0 : index
    %c0_0 = arith.constant 0 : index
    %c0_1 = arith.constant 0 : index
    %c0_2 = arith.constant 0 : index
    %0 = vector.load %arg1[%c0, %c0_0, %c0_1, %c0_2] : memref<1x34x17x128xbf16, #tpu.memory_space<vmem>>, vector<1x1x17x128xbf16>
    %1 = vector.shape_cast %0 : vector<1x1x17x128xbf16> to vector<17x128xbf16>
    %2 = vector.extract_strided_slice %1 {offsets = [0, 0], sizes = [16, 128], strides = [1, 1]} : vector<17x128xbf16> to vector<16x128xbf16>
    %3 = vector.extract_strided_slice %1 {offsets = [1, 0], sizes = [16, 128], strides = [1, 1]} : vector<17x128xbf16> to vector<16x128xbf16>
    %c0_3 = arith.constant 0 : index
    %c1 = arith.constant 1 : index
    %c0_4 = arith.constant 0 : index
    %c0_5 = arith.constant 0 : index
    %4 = vector.load %arg1[%c0_3, %c1, %c0_4, %c0_5] : memref<1x34x17x128xbf16, #tpu.memory_space<vmem>>, vector<1x1x17x128xbf16>
    %5 = vector.shape_cast %4 : vector<1x1x17x128xbf16> to vector<17x128xbf16>
    %6 = vector.extract_strided_slice %5 {offsets = [0, 0], sizes = [16, 128], strides = [1, 1]} : vector<17x128xbf16> to vector<16x128xbf16>
    %7 = vector.extract_strided_slice %5 {offsets = [1, 0], sizes = [16, 128], strides = [1, 1]} : vector<17x128xbf16> to vector<16x128xbf16>
    %c0_6 = arith.constant 0 : index
    %c2 = arith.constant 2 : index
    %c0_7 = arith.constant 0 : index
    %c0_8 = arith.constant 0 : index
    %8 = vector.load %arg1[%c0_6, %c2, %c0_7, %c0_8] : memref<1x34x17x128xbf16, #tpu.memory_space<vmem>>, vector<1x1x17x128xbf16>
    %9 = vector.shape_cast %8 : vector<1x1x17x128xbf16> to vector<17x128xbf16>
    %10 = vector.extract_strided_slice %9 {offsets = [0, 0], sizes = [16, 128], strides = [1, 1]} : vector<17x128xbf16> to vector<16x128xbf16>
    %11 = vector.extract_strided_slice %9 {offsets = [1, 0], sizes = [16, 128], strides = [1, 1]} : vector<17x128xbf16> to vector<16x128xbf16>
    %c0_9 = arith.constant 0 : index
    %c3 = arith.constant 3 : index
    %c0_10 = arith.constant 0 : index
    %c0_11 = arith.constant 0 : index
    %12 = vector.load %arg1[%c0_9, %c3, %c0_10, %c0_11] : memref<1x34x17x128xbf16, #tpu.memory_space<vmem>>, vector<1x1x17x128xbf16>
    %13 = vector.shape_cast %12 : vector<1x1x17x128xbf16> to vector<17x128xbf16>
    %14 = vector.extract_strided_slice %13 {offsets = [0, 0], sizes = [16, 128], strides = [1, 1]} : vector<17x128xbf16> to vector<16x128xbf16>
    %15 = vector.extract_strided_slice %13 {offsets = [1, 0], sizes = [16, 128], strides = [1, 1]} : vector<17x128xbf16> to vector<16x128xbf16>
    %16 = tpu.concatenate %2, %3, %6, %7, %10, %11, %14, %15 in 1 : vector<16x128xbf16>, vector<16x128xbf16>, vector<16x128xbf16>, vector<16x128xbf16>, vector<16x128xbf16>, vector<16x128xbf16>, vector<16x128xbf16>, vector<16x128xbf16> -> vector<16x1024xbf16>
    %c0_12 = arith.constant 0 : index
    %c2_13 = arith.constant 2 : index
    %c0_14 = arith.constant 0 : index
    %c0_15 = arith.constant 0 : index
    %17 = vector.load %arg1[%c0_12, %c2_13, %c0_14, %c0_15] : memref<1x34x17x128xbf16, #tpu.memory_space<vmem>>, vector<1x1x17x128xbf16>
    %18 = vector.shape_cast %17 : vector<1x1x17x128xbf16> to vector<17x128xbf16>
    %19 = vector.extract_strided_slice %18 {offsets = [0, 0], sizes = [16, 128], strides = [1, 1]} : vector<17x128xbf16> to vector<16x128xbf16>
    %20 = vector.extract_strided_slice %18 {offsets = [1, 0], sizes = [16, 128], strides = [1, 1]} : vector<17x128xbf16> to vector<16x128xbf16>
    %c0_16 = arith.constant 0 : index
    %c3_17 = arith.constant 3 : index
    %c0_18 = arith.constant 0 : index
    %c0_19 = arith.constant 0 : index
    %21 = vector.load %arg1[%c0_16, %c3_17, %c0_18, %c0_19] : memref<1x34x17x128xbf16, #tpu.memory_space<vmem>>, vector<1x1x17x128xbf16>
    %22 = vector.shape_cast %21 : vector<1x1x17x128xbf16> to vector<17x128xbf16>
    %23 = vector.extract_strided_slice %22 {offsets = [0, 0], sizes = [16, 128], strides = [1, 1]} : vector<17x128xbf16> to vector<16x128xbf16>
    %24 = vector.extract_strided_slice %22 {offsets = [1, 0], sizes = [16, 128], strides = [1, 1]} : vector<17x128xbf16> to vector<16x128xbf16>
    %c0_20 = arith.constant 0 : index
    %c4 = arith.constant 4 : index
    %c0_21 = arith.constant 0 : index
    %c0_22 = arith.constant 0 : index
    %25 = vector.load %arg1[%c0_20, %c4, %c0_21, %c0_22] : memref<1x34x17x128xbf16, #tpu.memory_space<vmem>>, vector<1x1x17x128xbf16>
    %26 = vector.shape_cast %25 : vector<1x1x17x128xbf16> to vector<17x128xbf16>
    %27 = vector.extract_strided_slice %26 {offsets = [0, 0], sizes = [16, 128], strides = [1, 1]} : vector<17x128xbf16> to vector<16x128xbf16>
    %28 = vector.extract_strided_slice %26 {offsets = [1, 0], sizes = [16, 128], strides = [1, 1]} : vector<17x128xbf16> to vector<16x128xbf16>
    %c0_23 = arith.constant 0 : index
    %c5 = arith.constant 5 : index
    %c0_24 = arith.constant 0 : index
    %c0_25 = arith.constant 0 : index
    %29 = vector.load %arg1[%c0_23, %c5, %c0_24, %c0_25] : memref<1x34x17x128xbf16, #tpu.memory_space<vmem>>, vector<1x1x17x128xbf16>
    %30 = vector.shape_cast %29 : vector<1x1x17x128xbf16> to vector<17x128xbf16>
    %31 = vector.extract_strided_slice %30 {offsets = [0, 0], sizes = [16, 128], strides = [1, 1]} : vector<17x128xbf16> to vector<16x128xbf16>
    %32 = vector.extract_strided_slice %30 {offsets = [1, 0], sizes = [16, 128], strides = [1, 1]} : vector<17x128xbf16> to vector<16x128xbf16>
    %33 = tpu.concatenate %19, %20, %23, %24, %27, %28, %31, %32 in 1 : vector<16x128xbf16>, vector<16x128xbf16>, vector<16x128xbf16>, vector<16x128xbf16>, vector<16x128xbf16>, vector<16x128xbf16>, vector<16x128xbf16>, vector<16x128xbf16> -> vector<16x1024xbf16>
    %c0_26 = arith.constant 0 : index
    %c4_27 = arith.constant 4 : index
    %c0_28 = arith.constant 0 : index
    %c0_29 = arith.constant 0 : index
    %34 = vector.load %arg1[%c0_26, %c4_27, %c0_28, %c0_29] : memref<1x34x17x128xbf16, #tpu.memory_space<vmem>>, vector<1x1x17x128xbf16>
    %35 = vector.shape_cast %34 : vector<1x1x17x128xbf16> to vector<17x128xbf16>
    %36 = vector.extract_strided_slice %35 {offsets = [0, 0], sizes = [16, 128], strides = [1, 1]} : vector<17x128xbf16> to vector<16x128xbf16>
    %37 = vector.extract_strided_slice %35 {offsets = [1, 0], sizes = [16, 128], strides = [1, 1]} : vector<17x128xbf16> to vector<16x128xbf16>
    %c0_30 = arith.constant 0 : index
    %c5_31 = arith.constant 5 : index
    %c0_32 = arith.constant 0 : index
    %c0_33 = arith.constant 0 : index
    %38 = vector.load %arg1[%c0_30, %c5_31, %c0_32, %c0_33] : memref<1x34x17x128xbf16, #tpu.memory_space<vmem>>, vector<1x1x17x128xbf16>
    %39 = vector.shape_cast %38 : vector<1x1x17x128xbf16> to vector<17x128xbf16>
    %40 = vector.extract_strided_slice %39 {offsets = [0, 0], sizes = [16, 128], strides = [1, 1]} : vector<17x128xbf16> to vector<16x128xbf16>
    %41 = vector.extract_strided_slice %39 {offsets = [1, 0], sizes = [16, 128], strides = [1, 1]} : vector<17x128xbf16> to vector<16x128xbf16>
    %c0_34 = arith.constant 0 : index
    %c6 = arith.constant 6 : index
    %c0_35 = arith.constant 0 : index
    %c0_36 = arith.constant 0 : index
    %42 = vector.load %arg1[%c0_34, %c6, %c0_35, %c0_36] : memref<1x34x17x128xbf16, #tpu.memory_space<vmem>>, vector<1x1x17x128xbf16>
    %43 = vector.shape_cast %42 : vector<1x1x17x128xbf16> to vector<17x128xbf16>
    %44 = vector.extract_strided_slice %43 {offsets = [0, 0], sizes = [16, 128], strides = [1, 1]} : vector<17x128xbf16> to vector<16x128xbf16>
    %45 = vector.extract_strided_slice %43 {offsets = [1, 0], sizes = [16, 128], strides = [1, 1]} : vector<17x128xbf16> to vector<16x128xbf16>
    %c0_37 = arith.constant 0 : index
    %c7 = arith.constant 7 : index
    %c0_38 = arith.constant 0 : index
    %c0_39 = arith.constant 0 : index
    %46 = vector.load %arg1[%c0_37, %c7, %c0_38, %c0_39] : memref<1x34x17x128xbf16, #tpu.memory_space<vmem>>, vector<1x1x17x128xbf16>
    %47 = vector.shape_cast %46 : vector<1x1x17x128xbf16> to vector<17x128xbf16>
    %48 = vector.extract_strided_slice %47 {offsets = [0, 0], sizes = [16, 128], strides = [1, 1]} : vector<17x128xbf16> to vector<16x128xbf16>
    %49 = vector.extract_strided_slice %47 {offsets = [1, 0], sizes = [16, 128], strides = [1, 1]} : vector<17x128xbf16> to vector<16x128xbf16>
    %50 = tpu.concatenate %36, %37, %40, %41, %44, %45, %48, %49 in 1 : vector<16x128xbf16>, vector<16x128xbf16>, vector<16x128xbf16>, vector<16x128xbf16>, vector<16x128xbf16>, vector<16x128xbf16>, vector<16x128xbf16>, vector<16x128xbf16> -> vector<16x1024xbf16>
    %c0_40 = arith.constant 0 : index
    %c6_41 = arith.constant 6 : index
    %c0_42 = arith.constant 0 : index
    %c0_43 = arith.constant 0 : index
    %51 = vector.load %arg1[%c0_40, %c6_41, %c0_42, %c0_43] : memref<1x34x17x128xbf16, #tpu.memory_space<vmem>>, vector<1x1x17x128xbf16>
    %52 = vector.shape_cast %51 : vector<1x1x17x128xbf16> to vector<17x128xbf16>
    %53 = vector.extract_strided_slice %52 {offsets = [0, 0], sizes = [16, 128], strides = [1, 1]} : vector<17x128xbf16> to vector<16x128xbf16>
    %54 = vector.extract_strided_slice %52 {offsets = [1, 0], sizes = [16, 128], strides = [1, 1]} : vector<17x128xbf16> to vector<16x128xbf16>
    %c0_44 = arith.constant 0 : index
    %c7_45 = arith.constant 7 : index
    %c0_46 = arith.constant 0 : index
    %c0_47 = arith.constant 0 : index
    %55 = vector.load %arg1[%c0_44, %c7_45, %c0_46, %c0_47] : memref<1x34x17x128xbf16, #tpu.memory_space<vmem>>, vector<1x1x17x128xbf16>
    %56 = vector.shape_cast %55 : vector<1x1x17x128xbf16> to vector<17x128xbf16>
    %57 = vector.extract_strided_slice %56 {offsets = [0, 0], sizes = [16, 128], strides = [1, 1]} : vector<17x128xbf16> to vector<16x128xbf16>
    %58 = vector.extract_strided_slice %56 {offsets = [1, 0], sizes = [16, 128], strides = [1, 1]} : vector<17x128xbf16> to vector<16x128xbf16>
    %c0_48 = arith.constant 0 : index
    %c8 = arith.constant 8 : index
    %c0_49 = arith.constant 0 : index
    %c0_50 = arith.constant 0 : index
    %59 = vector.load %arg1[%c0_48, %c8, %c0_49, %c0_50] : memref<1x34x17x128xbf16, #tpu.memory_space<vmem>>, vector<1x1x17x128xbf16>
    %60 = vector.shape_cast %59 : vector<1x1x17x128xbf16> to vector<17x128xbf16>
    %61 = vector.extract_strided_slice %60 {offsets = [0, 0], sizes = [16, 128], strides = [1, 1]} : vector<17x128xbf16> to vector<16x128xbf16>
    %62 = vector.extract_strided_slice %60 {offsets = [1, 0], sizes = [16, 128], strides = [1, 1]} : vector<17x128xbf16> to vector<16x128xbf16>
    %c0_51 = arith.constant 0 : index
    %c9 = arith.constant 9 : index
    %c0_52 = arith.constant 0 : index
    %c0_53 = arith.constant 0 : index
    %63 = vector.load %arg1[%c0_51, %c9, %c0_52, %c0_53] : memref<1x34x17x128xbf16, #tpu.memory_space<vmem>>, vector<1x1x17x128xbf16>
    %64 = vector.shape_cast %63 : vector<1x1x17x128xbf16> to vector<17x128xbf16>
    %65 = vector.extract_strided_slice %64 {offsets = [0, 0], sizes = [16, 128], strides = [1, 1]} : vector<17x128xbf16> to vector<16x128xbf16>
    %66 = vector.extract_strided_slice %64 {offsets = [1, 0], sizes = [16, 128], strides = [1, 1]} : vector<17x128xbf16> to vector<16x128xbf16>
    %67 = tpu.concatenate %53, %54, %57, %58, %61, %62, %65, %66 in 1 : vector<16x128xbf16>, vector<16x128xbf16>, vector<16x128xbf16>, vector<16x128xbf16>, vector<16x128xbf16>, vector<16x128xbf16>, vector<16x128xbf16>, vector<16x128xbf16> -> vector<16x1024xbf16>
    %c0_54 = arith.constant 0 : index
    %c8_55 = arith.constant 8 : index
    %c0_56 = arith.constant 0 : index
    %c0_57 = arith.constant 0 : index
    %68 = vector.load %arg1[%c0_54, %c8_55, %c0_56, %c0_57] : memref<1x34x17x128xbf16, #tpu.memory_space<vmem>>, vector<1x1x17x128xbf16>
    %69 = vector.shape_cast %68 : vector<1x1x17x128xbf16> to vector<17x128xbf16>
    %70 = vector.extract_strided_slice %69 {offsets = [0, 0], sizes = [16, 128], strides = [1, 1]} : vector<17x128xbf16> to vector<16x128xbf16>
    %71 = vector.extract_strided_slice %69 {offsets = [1, 0], sizes = [16, 128], strides = [1, 1]} : vector<17x128xbf16> to vector<16x128xbf16>
    %c0_58 = arith.constant 0 : index
    %c9_59 = arith.constant 9 : index
    %c0_60 = arith.constant 0 : index
    %c0_61 = arith.constant 0 : index
    %72 = vector.load %arg1[%c0_58, %c9_59, %c0_60, %c0_61] : memref<1x34x17x128xbf16, #tpu.memory_space<vmem>>, vector<1x1x17x128xbf16>
    %73 = vector.shape_cast %72 : vector<1x1x17x128xbf16> to vector<17x128xbf16>
    %74 = vector.extract_strided_slice %73 {offsets = [0, 0], sizes = [16, 128], strides = [1, 1]} : vector<17x128xbf16> to vector<16x128xbf16>
    %75 = vector.extract_strided_slice %73 {offsets = [1, 0], sizes = [16, 128], strides = [1, 1]} : vector<17x128xbf16> to vector<16x128xbf16>
    %c0_62 = arith.constant 0 : index
    %c10 = arith.constant 10 : index
    %c0_63 = arith.constant 0 : index
    %c0_64 = arith.constant 0 : index
    %76 = vector.load %arg1[%c0_62, %c10, %c0_63, %c0_64] : memref<1x34x17x128xbf16, #tpu.memory_space<vmem>>, vector<1x1x17x128xbf16>
    %77 = vector.shape_cast %76 : vector<1x1x17x128xbf16> to vector<17x128xbf16>
    %78 = vector.extract_strided_slice %77 {offsets = [0, 0], sizes = [16, 128], strides = [1, 1]} : vector<17x128xbf16> to vector<16x128xbf16>
    %79 = vector.extract_strided_slice %77 {offsets = [1, 0], sizes = [16, 128], strides = [1, 1]} : vector<17x128xbf16> to vector<16x128xbf16>
    %c0_65 = arith.constant 0 : index
    %c11 = arith.constant 11 : index
    %c0_66 = arith.constant 0 : index
    %c0_67 = arith.constant 0 : index
    %80 = vector.load %arg1[%c0_65, %c11, %c0_66, %c0_67] : memref<1x34x17x128xbf16, #tpu.memory_space<vmem>>, vector<1x1x17x128xbf16>
    %81 = vector.shape_cast %80 : vector<1x1x17x128xbf16> to vector<17x128xbf16>
    %82 = vector.extract_strided_slice %81 {offsets = [0, 0], sizes = [16, 128], strides = [1, 1]} : vector<17x128xbf16> to vector<16x128xbf16>
    %83 = vector.extract_strided_slice %81 {offsets = [1, 0], sizes = [16, 128], strides = [1, 1]} : vector<17x128xbf16> to vector<16x128xbf16>
    %84 = tpu.concatenate %70, %71, %74, %75, %78, %79, %82, %83 in 1 : vector<16x128xbf16>, vector<16x128xbf16>, vector<16x128xbf16>, vector<16x128xbf16>, vector<16x128xbf16>, vector<16x128xbf16>, vector<16x128xbf16>, vector<16x128xbf16> -> vector<16x1024xbf16>
    %c0_68 = arith.constant 0 : index
    %c10_69 = arith.constant 10 : index
    %c0_70 = arith.constant 0 : index
    %c0_71 = arith.constant 0 : index
    %85 = vector.load %arg1[%c0_68, %c10_69, %c0_70, %c0_71] : memref<1x34x17x128xbf16, #tpu.memory_space<vmem>>, vector<1x1x17x128xbf16>
    %86 = vector.shape_cast %85 : vector<1x1x17x128xbf16> to vector<17x128xbf16>
    %87 = vector.extract_strided_slice %86 {offsets = [0, 0], sizes = [16, 128], strides = [1, 1]} : vector<17x128xbf16> to vector<16x128xbf16>
    %88 = vector.extract_strided_slice %86 {offsets = [1, 0], sizes = [16, 128], strides = [1, 1]} : vector<17x128xbf16> to vector<16x128xbf16>
    %c0_72 = arith.constant 0 : index
    %c11_73 = arith.constant 11 : index
    %c0_74 = arith.constant 0 : index
    %c0_75 = arith.constant 0 : index
    %89 = vector.load %arg1[%c0_72, %c11_73, %c0_74, %c0_75] : memref<1x34x17x128xbf16, #tpu.memory_space<vmem>>, vector<1x1x17x128xbf16>
    %90 = vector.shape_cast %89 : vector<1x1x17x128xbf16> to vector<17x128xbf16>
    %91 = vector.extract_strided_slice %90 {offsets = [0, 0], sizes = [16, 128], strides = [1, 1]} : vector<17x128xbf16> to vector<16x128xbf16>
    %92 = vector.extract_strided_slice %90 {offsets = [1, 0], sizes = [16, 128], strides = [1, 1]} : vector<17x128xbf16> to vector<16x128xbf16>
    %c0_76 = arith.constant 0 : index
    %c12 = arith.constant 12 : index
    %c0_77 = arith.constant 0 : index
    %c0_78 = arith.constant 0 : index
    %93 = vector.load %arg1[%c0_76, %c12, %c0_77, %c0_78] : memref<1x34x17x128xbf16, #tpu.memory_space<vmem>>, vector<1x1x17x128xbf16>
    %94 = vector.shape_cast %93 : vector<1x1x17x128xbf16> to vector<17x128xbf16>
    %95 = vector.extract_strided_slice %94 {offsets = [0, 0], sizes = [16, 128], strides = [1, 1]} : vector<17x128xbf16> to vector<16x128xbf16>
    %96 = vector.extract_strided_slice %94 {offsets = [1, 0], sizes = [16, 128], strides = [1, 1]} : vector<17x128xbf16> to vector<16x128xbf16>
    %c0_79 = arith.constant 0 : index
    %c13 = arith.constant 13 : index
    %c0_80 = arith.constant 0 : index
    %c0_81 = arith.constant 0 : index
    %97 = vector.load %arg1[%c0_79, %c13, %c0_80, %c0_81] : memref<1x34x17x128xbf16, #tpu.memory_space<vmem>>, vector<1x1x17x128xbf16>
    %98 = vector.shape_cast %97 : vector<1x1x17x128xbf16> to vector<17x128xbf16>
    %99 = vector.extract_strided_slice %98 {offsets = [0, 0], sizes = [16, 128], strides = [1, 1]} : vector<17x128xbf16> to vector<16x128xbf16>
    %100 = vector.extract_strided_slice %98 {offsets = [1, 0], sizes = [16, 128], strides = [1, 1]} : vector<17x128xbf16> to vector<16x128xbf16>
    %101 = tpu.concatenate %87, %88, %91, %92, %95, %96, %99, %100 in 1 : vector<16x128xbf16>, vector<16x128xbf16>, vector<16x128xbf16>, vector<16x128xbf16>, vector<16x128xbf16>, vector<16x128xbf16>, vector<16x128xbf16>, vector<16x128xbf16> -> vector<16x1024xbf16>
    %c0_82 = arith.constant 0 : index
    %c12_83 = arith.constant 12 : index
    %c0_84 = arith.constant 0 : index
    %c0_85 = arith.constant 0 : index
    %102 = vector.load %arg1[%c0_82, %c12_83, %c0_84, %c0_85] : memref<1x34x17x128xbf16, #tpu.memory_space<vmem>>, vector<1x1x17x128xbf16>
    %103 = vector.shape_cast %102 : vector<1x1x17x128xbf16> to vector<17x128xbf16>
    %104 = vector.extract_strided_slice %103 {offsets = [0, 0], sizes = [16, 128], strides = [1, 1]} : vector<17x128xbf16> to vector<16x128xbf16>
    %105 = vector.extract_strided_slice %103 {offsets = [1, 0], sizes = [16, 128], strides = [1, 1]} : vector<17x128xbf16> to vector<16x128xbf16>
    %c0_86 = arith.constant 0 : index
    %c13_87 = arith.constant 13 : index
    %c0_88 = arith.constant 0 : index
    %c0_89 = arith.constant 0 : index
    %106 = vector.load %arg1[%c0_86, %c13_87, %c0_88, %c0_89] : memref<1x34x17x128xbf16, #tpu.memory_space<vmem>>, vector<1x1x17x128xbf16>
    %107 = vector.shape_cast %106 : vector<1x1x17x128xbf16> to vector<17x128xbf16>
    %108 = vector.extract_strided_slice %107 {offsets = [0, 0], sizes = [16, 128], strides = [1, 1]} : vector<17x128xbf16> to vector<16x128xbf16>
    %109 = vector.extract_strided_slice %107 {offsets = [1, 0], sizes = [16, 128], strides = [1, 1]} : vector<17x128xbf16> to vector<16x128xbf16>
    %c0_90 = arith.constant 0 : index
    %c14 = arith.constant 14 : index
    %c0_91 = arith.constant 0 : index
    %c0_92 = arith.constant 0 : index
    %110 = vector.load %arg1[%c0_90, %c14, %c0_91, %c0_92] : memref<1x34x17x128xbf16, #tpu.memory_space<vmem>>, vector<1x1x17x128xbf16>
    %111 = vector.shape_cast %110 : vector<1x1x17x128xbf16> to vector<17x128xbf16>
    %112 = vector.extract_strided_slice %111 {offsets = [0, 0], sizes = [16, 128], strides = [1, 1]} : vector<17x128xbf16> to vector<16x128xbf16>
    %113 = vector.extract_strided_slice %111 {offsets = [1, 0], sizes = [16, 128], strides = [1, 1]} : vector<17x128xbf16> to vector<16x128xbf16>
    %c0_93 = arith.constant 0 : index
    %c15 = arith.constant 15 : index
    %c0_94 = arith.constant 0 : index
    %c0_95 = arith.constant 0 : index
    %114 = vector.load %arg1[%c0_93, %c15, %c0_94, %c0_95] : memref<1x34x17x128xbf16, #tpu.memory_space<vmem>>, vector<1x1x17x128xbf16>
    %115 = vector.shape_cast %114 : vector<1x1x17x128xbf16> to vector<17x128xbf16>
    %116 = vector.extract_strided_slice %115 {offsets = [0, 0], sizes = [16, 128], strides = [1, 1]} : vector<17x128xbf16> to vector<16x128xbf16>
    %117 = vector.extract_strided_slice %115 {offsets = [1, 0], sizes = [16, 128], strides = [1, 1]} : vector<17x128xbf16> to vector<16x128xbf16>
    %118 = tpu.concatenate %104, %105, %108, %109, %112, %113, %116, %117 in 1 : vector<16x128xbf16>, vector<16x128xbf16>, vector<16x128xbf16>, vector<16x128xbf16>, vector<16x128xbf16>, vector<16x128xbf16>, vector<16x128xbf16>, vector<16x128xbf16> -> vector<16x1024xbf16>
    %c0_96 = arith.constant 0 : index
    %c14_97 = arith.constant 14 : index
    %c0_98 = arith.constant 0 : index
    %c0_99 = arith.constant 0 : index
    %119 = vector.load %arg1[%c0_96, %c14_97, %c0_98, %c0_99] : memref<1x34x17x128xbf16, #tpu.memory_space<vmem>>, vector<1x1x17x128xbf16>
    %120 = vector.shape_cast %119 : vector<1x1x17x128xbf16> to vector<17x128xbf16>
    %121 = vector.extract_strided_slice %120 {offsets = [0, 0], sizes = [16, 128], strides = [1, 1]} : vector<17x128xbf16> to vector<16x128xbf16>
    %122 = vector.extract_strided_slice %120 {offsets = [1, 0], sizes = [16, 128], strides = [1, 1]} : vector<17x128xbf16> to vector<16x128xbf16>
    %c0_100 = arith.constant 0 : index
    %c15_101 = arith.constant 15 : index
    %c0_102 = arith.constant 0 : index
    %c0_103 = arith.constant 0 : index
    %123 = vector.load %arg1[%c0_100, %c15_101, %c0_102, %c0_103] : memref<1x34x17x128xbf16, #tpu.memory_space<vmem>>, vector<1x1x17x128xbf16>
    %124 = vector.shape_cast %123 : vector<1x1x17x128xbf16> to vector<17x128xbf16>
    %125 = vector.extract_strided_slice %124 {offsets = [0, 0], sizes = [16, 128], strides = [1, 1]} : vector<17x128xbf16> to vector<16x128xbf16>
    %126 = vector.extract_strided_slice %124 {offsets = [1, 0], sizes = [16, 128], strides = [1, 1]} : vector<17x128xbf16> to vector<16x128xbf16>
    %c0_104 = arith.constant 0 : index
    %c16 = arith.constant 16 : index
    %c0_105 = arith.constant 0 : index
    %c0_106 = arith.constant 0 : index
    %127 = vector.load %arg1[%c0_104, %c16, %c0_105, %c0_106] : memref<1x34x17x128xbf16, #tpu.memory_space<vmem>>, vector<1x1x17x128xbf16>
    %128 = vector.shape_cast %127 : vector<1x1x17x128xbf16> to vector<17x128xbf16>
    %129 = vector.extract_strided_slice %128 {offsets = [0, 0], sizes = [16, 128], strides = [1, 1]} : vector<17x128xbf16> to vector<16x128xbf16>
    %130 = vector.extract_strided_slice %128 {offsets = [1, 0], sizes = [16, 128], strides = [1, 1]} : vector<17x128xbf16> to vector<16x128xbf16>
    %c0_107 = arith.constant 0 : index
    %c17 = arith.constant 17 : index
    %c0_108 = arith.constant 0 : index
    %c0_109 = arith.constant 0 : index
    %131 = vector.load %arg1[%c0_107, %c17, %c0_108, %c0_109] : memref<1x34x17x128xbf16, #tpu.memory_space<vmem>>, vector<1x1x17x128xbf16>
    %132 = vector.shape_cast %131 : vector<1x1x17x128xbf16> to vector<17x128xbf16>
    %133 = vector.extract_strided_slice %132 {offsets = [0, 0], sizes = [16, 128], strides = [1, 1]} : vector<17x128xbf16> to vector<16x128xbf16>
    %134 = vector.extract_strided_slice %132 {offsets = [1, 0], sizes = [16, 128], strides = [1, 1]} : vector<17x128xbf16> to vector<16x128xbf16>
    %135 = tpu.concatenate %121, %122, %125, %126, %129, %130, %133, %134 in 1 : vector<16x128xbf16>, vector<16x128xbf16>, vector<16x128xbf16>, vector<16x128xbf16>, vector<16x128xbf16>, vector<16x128xbf16>, vector<16x128xbf16>, vector<16x128xbf16> -> vector<16x1024xbf16>
    %c0_110 = arith.constant 0 : index
    %c16_111 = arith.constant 16 : index
    %c0_112 = arith.constant 0 : index
    %c0_113 = arith.constant 0 : index
    %136 = vector.load %arg1[%c0_110, %c16_111, %c0_112, %c0_113] : memref<1x34x17x128xbf16, #tpu.memory_space<vmem>>, vector<1x1x17x128xbf16>
    %137 = vector.shape_cast %136 : vector<1x1x17x128xbf16> to vector<17x128xbf16>
    %138 = vector.extract_strided_slice %137 {offsets = [0, 0], sizes = [16, 128], strides = [1, 1]} : vector<17x128xbf16> to vector<16x128xbf16>
    %139 = vector.extract_strided_slice %137 {offsets = [1, 0], sizes = [16, 128], strides = [1, 1]} : vector<17x128xbf16> to vector<16x128xbf16>
    %c0_114 = arith.constant 0 : index
    %c17_115 = arith.constant 17 : index
    %c0_116 = arith.constant 0 : index
    %c0_117 = arith.constant 0 : index
    %140 = vector.load %arg1[%c0_114, %c17_115, %c0_116, %c0_117] : memref<1x34x17x128xbf16, #tpu.memory_space<vmem>>, vector<1x1x17x128xbf16>
    %141 = vector.shape_cast %140 : vector<1x1x17x128xbf16> to vector<17x128xbf16>
    %142 = vector.extract_strided_slice %141 {offsets = [0, 0], sizes = [16, 128], strides = [1, 1]} : vector<17x128xbf16> to vector<16x128xbf16>
    %143 = vector.extract_strided_slice %141 {offsets = [1, 0], sizes = [16, 128], strides = [1, 1]} : vector<17x128xbf16> to vector<16x128xbf16>
    %c0_118 = arith.constant 0 : index
    %c18 = arith.constant 18 : index
    %c0_119 = arith.constant 0 : index
    %c0_120 = arith.constant 0 : index
    %144 = vector.load %arg1[%c0_118, %c18, %c0_119, %c0_120] : memref<1x34x17x128xbf16, #tpu.memory_space<vmem>>, vector<1x1x17x128xbf16>
    %145 = vector.shape_cast %144 : vector<1x1x17x128xbf16> to vector<17x128xbf16>
    %146 = vector.extract_strided_slice %145 {offsets = [0, 0], sizes = [16, 128], strides = [1, 1]} : vector<17x128xbf16> to vector<16x128xbf16>
    %147 = vector.extract_strided_slice %145 {offsets = [1, 0], sizes = [16, 128], strides = [1, 1]} : vector<17x128xbf16> to vector<16x128xbf16>
    %c0_121 = arith.constant 0 : index
    %c19 = arith.constant 19 : index
    %c0_122 = arith.constant 0 : index
    %c0_123 = arith.constant 0 : index
    %148 = vector.load %arg1[%c0_121, %c19, %c0_122, %c0_123] : memref<1x34x17x128xbf16, #tpu.memory_space<vmem>>, vector<1x1x17x128xbf16>
    %149 = vector.shape_cast %148 : vector<1x1x17x128xbf16> to vector<17x128xbf16>
    %150 = vector.extract_strided_slice %149 {offsets = [0, 0], sizes = [16, 128], strides = [1, 1]} : vector<17x128xbf16> to vector<16x128xbf16>
    %151 = vector.extract_strided_slice %149 {offsets = [1, 0], sizes = [16, 128], strides = [1, 1]} : vector<17x128xbf16> to vector<16x128xbf16>
    %152 = tpu.concatenate %138, %139, %142, %143, %146, %147, %150, %151 in 1 : vector<16x128xbf16>, vector<16x128xbf16>, vector<16x128xbf16>, vector<16x128xbf16>, vector<16x128xbf16>, vector<16x128xbf16>, vector<16x128xbf16>, vector<16x128xbf16> -> vector<16x1024xbf16>
    %c0_124 = arith.constant 0 : index
    %c18_125 = arith.constant 18 : index
    %c0_126 = arith.constant 0 : index
    %c0_127 = arith.constant 0 : index
    %153 = vector.load %arg1[%c0_124, %c18_125, %c0_126, %c0_127] : memref<1x34x17x128xbf16, #tpu.memory_space<vmem>>, vector<1x1x17x128xbf16>
    %154 = vector.shape_cast %153 : vector<1x1x17x128xbf16> to vector<17x128xbf16>
    %155 = vector.extract_strided_slice %154 {offsets = [0, 0], sizes = [16, 128], strides = [1, 1]} : vector<17x128xbf16> to vector<16x128xbf16>
    %156 = vector.extract_strided_slice %154 {offsets = [1, 0], sizes = [16, 128], strides = [1, 1]} : vector<17x128xbf16> to vector<16x128xbf16>
    %c0_128 = arith.constant 0 : index
    %c19_129 = arith.constant 19 : index
    %c0_130 = arith.constant 0 : index
    %c0_131 = arith.constant 0 : index
    %157 = vector.load %arg1[%c0_128, %c19_129, %c0_130, %c0_131] : memref<1x34x17x128xbf16, #tpu.memory_space<vmem>>, vector<1x1x17x128xbf16>
    %158 = vector.shape_cast %157 : vector<1x1x17x128xbf16> to vector<17x128xbf16>
    %159 = vector.extract_strided_slice %158 {offsets = [0, 0], sizes = [16, 128], strides = [1, 1]} : vector<17x128xbf16> to vector<16x128xbf16>
    %160 = vector.extract_strided_slice %158 {offsets = [1, 0], sizes = [16, 128], strides = [1, 1]} : vector<17x128xbf16> to vector<16x128xbf16>
    %c0_132 = arith.constant 0 : index
    %c20 = arith.constant 20 : index
    %c0_133 = arith.constant 0 : index
    %c0_134 = arith.constant 0 : index
    %161 = vector.load %arg1[%c0_132, %c20, %c0_133, %c0_134] : memref<1x34x17x128xbf16, #tpu.memory_space<vmem>>, vector<1x1x17x128xbf16>
    %162 = vector.shape_cast %161 : vector<1x1x17x128xbf16> to vector<17x128xbf16>
    %163 = vector.extract_strided_slice %162 {offsets = [0, 0], sizes = [16, 128], strides = [1, 1]} : vector<17x128xbf16> to vector<16x128xbf16>
    %164 = vector.extract_strided_slice %162 {offsets = [1, 0], sizes = [16, 128], strides = [1, 1]} : vector<17x128xbf16> to vector<16x128xbf16>
    %c0_135 = arith.constant 0 : index
    %c21 = arith.constant 21 : index
    %c0_136 = arith.constant 0 : index
    %c0_137 = arith.constant 0 : index
    %165 = vector.load %arg1[%c0_135, %c21, %c0_136, %c0_137] : memref<1x34x17x128xbf16, #tpu.memory_space<vmem>>, vector<1x1x17x128xbf16>
    %166 = vector.shape_cast %165 : vector<1x1x17x128xbf16> to vector<17x128xbf16>
    %167 = vector.extract_strided_slice %166 {offsets = [0, 0], sizes = [16, 128], strides = [1, 1]} : vector<17x128xbf16> to vector<16x128xbf16>
    %168 = vector.extract_strided_slice %166 {offsets = [1, 0], sizes = [16, 128], strides = [1, 1]} : vector<17x128xbf16> to vector<16x128xbf16>
    %169 = tpu.concatenate %155, %156, %159, %160, %163, %164, %167, %168 in 1 : vector<16x128xbf16>, vector<16x128xbf16>, vector<16x128xbf16>, vector<16x128xbf16>, vector<16x128xbf16>, vector<16x128xbf16>, vector<16x128xbf16>, vector<16x128xbf16> -> vector<16x1024xbf16>
    %c0_138 = arith.constant 0 : index
    %c20_139 = arith.constant 20 : index
    %c0_140 = arith.constant 0 : index
    %c0_141 = arith.constant 0 : index
    %170 = vector.load %arg1[%c0_138, %c20_139, %c0_140, %c0_141] : memref<1x34x17x128xbf16, #tpu.memory_space<vmem>>, vector<1x1x17x128xbf16>
    %171 = vector.shape_cast %170 : vector<1x1x17x128xbf16> to vector<17x128xbf16>
    %172 = vector.extract_strided_slice %171 {offsets = [0, 0], sizes = [16, 128], strides = [1, 1]} : vector<17x128xbf16> to vector<16x128xbf16>
    %173 = vector.extract_strided_slice %171 {offsets = [1, 0], sizes = [16, 128], strides = [1, 1]} : vector<17x128xbf16> to vector<16x128xbf16>
    %c0_142 = arith.constant 0 : index
    %c21_143 = arith.constant 21 : index
    %c0_144 = arith.constant 0 : index
    %c0_145 = arith.constant 0 : index
    %174 = vector.load %arg1[%c0_142, %c21_143, %c0_144, %c0_145] : memref<1x34x17x128xbf16, #tpu.memory_space<vmem>>, vector<1x1x17x128xbf16>
    %175 = vector.shape_cast %174 : vector<1x1x17x128xbf16> to vector<17x128xbf16>
    %176 = vector.extract_strided_slice %175 {offsets = [0, 0], sizes = [16, 128], strides = [1, 1]} : vector<17x128xbf16> to vector<16x128xbf16>
    %177 = vector.extract_strided_slice %175 {offsets = [1, 0], sizes = [16, 128], strides = [1, 1]} : vector<17x128xbf16> to vector<16x128xbf16>
    %c0_146 = arith.constant 0 : index
    %c22 = arith.constant 22 : index
    %c0_147 = arith.constant 0 : index
    %c0_148 = arith.constant 0 : index
    %178 = vector.load %arg1[%c0_146, %c22, %c0_147, %c0_148] : memref<1x34x17x128xbf16, #tpu.memory_space<vmem>>, vector<1x1x17x128xbf16>
    %179 = vector.shape_cast %178 : vector<1x1x17x128xbf16> to vector<17x128xbf16>
    %180 = vector.extract_strided_slice %179 {offsets = [0, 0], sizes = [16, 128], strides = [1, 1]} : vector<17x128xbf16> to vector<16x128xbf16>
    %181 = vector.extract_strided_slice %179 {offsets = [1, 0], sizes = [16, 128], strides = [1, 1]} : vector<17x128xbf16> to vector<16x128xbf16>
    %c0_149 = arith.constant 0 : index
    %c23 = arith.constant 23 : index
    %c0_150 = arith.constant 0 : index
    %c0_151 = arith.constant 0 : index
    %182 = vector.load %arg1[%c0_149, %c23, %c0_150, %c0_151] : memref<1x34x17x128xbf16, #tpu.memory_space<vmem>>, vector<1x1x17x128xbf16>
    %183 = vector.shape_cast %182 : vector<1x1x17x128xbf16> to vector<17x128xbf16>
    %184 = vector.extract_strided_slice %183 {offsets = [0, 0], sizes = [16, 128], strides = [1, 1]} : vector<17x128xbf16> to vector<16x128xbf16>
    %185 = vector.extract_strided_slice %183 {offsets = [1, 0], sizes = [16, 128], strides = [1, 1]} : vector<17x128xbf16> to vector<16x128xbf16>
    %186 = tpu.concatenate %172, %173, %176, %177, %180, %181, %184, %185 in 1 : vector<16x128xbf16>, vector<16x128xbf16>, vector<16x128xbf16>, vector<16x128xbf16>, vector<16x128xbf16>, vector<16x128xbf16>, vector<16x128xbf16>, vector<16x128xbf16> -> vector<16x1024xbf16>
    %c0_152 = arith.constant 0 : index
    %c22_153 = arith.constant 22 : index
    %c0_154 = arith.constant 0 : index
    %c0_155 = arith.constant 0 : index
    %187 = vector.load %arg1[%c0_152, %c22_153, %c0_154, %c0_155] : memref<1x34x17x128xbf16, #tpu.memory_space<vmem>>, vector<1x1x17x128xbf16>
    %188 = vector.shape_cast %187 : vector<1x1x17x128xbf16> to vector<17x128xbf16>
    %189 = vector.extract_strided_slice %188 {offsets = [0, 0], sizes = [16, 128], strides = [1, 1]} : vector<17x128xbf16> to vector<16x128xbf16>
    %190 = vector.extract_strided_slice %188 {offsets = [1, 0], sizes = [16, 128], strides = [1, 1]} : vector<17x128xbf16> to vector<16x128xbf16>
    %c0_156 = arith.constant 0 : index
    %c23_157 = arith.constant 23 : index
    %c0_158 = arith.constant 0 : index
    %c0_159 = arith.constant 0 : index
    %191 = vector.load %arg1[%c0_156, %c23_157, %c0_158, %c0_159] : memref<1x34x17x128xbf16, #tpu.memory_space<vmem>>, vector<1x1x17x128xbf16>
    %192 = vector.shape_cast %191 : vector<1x1x17x128xbf16> to vector<17x128xbf16>
    %193 = vector.extract_strided_slice %192 {offsets = [0, 0], sizes = [16, 128], strides = [1, 1]} : vector<17x128xbf16> to vector<16x128xbf16>
    %194 = vector.extract_strided_slice %192 {offsets = [1, 0], sizes = [16, 128], strides = [1, 1]} : vector<17x128xbf16> to vector<16x128xbf16>
    %c0_160 = arith.constant 0 : index
    %c24 = arith.constant 24 : index
    %c0_161 = arith.constant 0 : index
    %c0_162 = arith.constant 0 : index
    %195 = vector.load %arg1[%c0_160, %c24, %c0_161, %c0_162] : memref<1x34x17x128xbf16, #tpu.memory_space<vmem>>, vector<1x1x17x128xbf16>
    %196 = vector.shape_cast %195 : vector<1x1x17x128xbf16> to vector<17x128xbf16>
    %197 = vector.extract_strided_slice %196 {offsets = [0, 0], sizes = [16, 128], strides = [1, 1]} : vector<17x128xbf16> to vector<16x128xbf16>
    %198 = vector.extract_strided_slice %196 {offsets = [1, 0], sizes = [16, 128], strides = [1, 1]} : vector<17x128xbf16> to vector<16x128xbf16>
    %c0_163 = arith.constant 0 : index
    %c25 = arith.constant 25 : index
    %c0_164 = arith.constant 0 : index
    %c0_165 = arith.constant 0 : index
    %199 = vector.load %arg1[%c0_163, %c25, %c0_164, %c0_165] : memref<1x34x17x128xbf16, #tpu.memory_space<vmem>>, vector<1x1x17x128xbf16>
    %200 = vector.shape_cast %199 : vector<1x1x17x128xbf16> to vector<17x128xbf16>
    %201 = vector.extract_strided_slice %200 {offsets = [0, 0], sizes = [16, 128], strides = [1, 1]} : vector<17x128xbf16> to vector<16x128xbf16>
    %202 = vector.extract_strided_slice %200 {offsets = [1, 0], sizes = [16, 128], strides = [1, 1]} : vector<17x128xbf16> to vector<16x128xbf16>
    %203 = tpu.concatenate %189, %190, %193, %194, %197, %198, %201, %202 in 1 : vector<16x128xbf16>, vector<16x128xbf16>, vector<16x128xbf16>, vector<16x128xbf16>, vector<16x128xbf16>, vector<16x128xbf16>, vector<16x128xbf16>, vector<16x128xbf16> -> vector<16x1024xbf16>
    %c0_166 = arith.constant 0 : index
    %c24_167 = arith.constant 24 : index
    %c0_168 = arith.constant 0 : index
    %c0_169 = arith.constant 0 : index
    %204 = vector.load %arg1[%c0_166, %c24_167, %c0_168, %c0_169] : memref<1x34x17x128xbf16, #tpu.memory_space<vmem>>, vector<1x1x17x128xbf16>
    %205 = vector.shape_cast %204 : vector<1x1x17x128xbf16> to vector<17x128xbf16>
    %206 = vector.extract_strided_slice %205 {offsets = [0, 0], sizes = [16, 128], strides = [1, 1]} : vector<17x128xbf16> to vector<16x128xbf16>
    %207 = vector.extract_strided_slice %205 {offsets = [1, 0], sizes = [16, 128], strides = [1, 1]} : vector<17x128xbf16> to vector<16x128xbf16>
    %c0_170 = arith.constant 0 : index
    %c25_171 = arith.constant 25 : index
    %c0_172 = arith.constant 0 : index
    %c0_173 = arith.constant 0 : index
    %208 = vector.load %arg1[%c0_170, %c25_171, %c0_172, %c0_173] : memref<1x34x17x128xbf16, #tpu.memory_space<vmem>>, vector<1x1x17x128xbf16>
    %209 = vector.shape_cast %208 : vector<1x1x17x128xbf16> to vector<17x128xbf16>
    %210 = vector.extract_strided_slice %209 {offsets = [0, 0], sizes = [16, 128], strides = [1, 1]} : vector<17x128xbf16> to vector<16x128xbf16>
    %211 = vector.extract_strided_slice %209 {offsets = [1, 0], sizes = [16, 128], strides = [1, 1]} : vector<17x128xbf16> to vector<16x128xbf16>
    %c0_174 = arith.constant 0 : index
    %c26 = arith.constant 26 : index
    %c0_175 = arith.constant 0 : index
    %c0_176 = arith.constant 0 : index
    %212 = vector.load %arg1[%c0_174, %c26, %c0_175, %c0_176] : memref<1x34x17x128xbf16, #tpu.memory_space<vmem>>, vector<1x1x17x128xbf16>
    %213 = vector.shape_cast %212 : vector<1x1x17x128xbf16> to vector<17x128xbf16>
    %214 = vector.extract_strided_slice %213 {offsets = [0, 0], sizes = [16, 128], strides = [1, 1]} : vector<17x128xbf16> to vector<16x128xbf16>
    %215 = vector.extract_strided_slice %213 {offsets = [1, 0], sizes = [16, 128], strides = [1, 1]} : vector<17x128xbf16> to vector<16x128xbf16>
    %c0_177 = arith.constant 0 : index
    %c27 = arith.constant 27 : index
    %c0_178 = arith.constant 0 : index
    %c0_179 = arith.constant 0 : index
    %216 = vector.load %arg1[%c0_177, %c27, %c0_178, %c0_179] : memref<1x34x17x128xbf16, #tpu.memory_space<vmem>>, vector<1x1x17x128xbf16>
    %217 = vector.shape_cast %216 : vector<1x1x17x128xbf16> to vector<17x128xbf16>
    %218 = vector.extract_strided_slice %217 {offsets = [0, 0], sizes = [16, 128], strides = [1, 1]} : vector<17x128xbf16> to vector<16x128xbf16>
    %219 = vector.extract_strided_slice %217 {offsets = [1, 0], sizes = [16, 128], strides = [1, 1]} : vector<17x128xbf16> to vector<16x128xbf16>
    %220 = tpu.concatenate %206, %207, %210, %211, %214, %215, %218, %219 in 1 : vector<16x128xbf16>, vector<16x128xbf16>, vector<16x128xbf16>, vector<16x128xbf16>, vector<16x128xbf16>, vector<16x128xbf16>, vector<16x128xbf16>, vector<16x128xbf16> -> vector<16x1024xbf16>
    %c0_180 = arith.constant 0 : index
    %c26_181 = arith.constant 26 : index
    %c0_182 = arith.constant 0 : index
    %c0_183 = arith.constant 0 : index
    %221 = vector.load %arg1[%c0_180, %c26_181, %c0_182, %c0_183] : memref<1x34x17x128xbf16, #tpu.memory_space<vmem>>, vector<1x1x17x128xbf16>
    %222 = vector.shape_cast %221 : vector<1x1x17x128xbf16> to vector<17x128xbf16>
    %223 = vector.extract_strided_slice %222 {offsets = [0, 0], sizes = [16, 128], strides = [1, 1]} : vector<17x128xbf16> to vector<16x128xbf16>
    %224 = vector.extract_strided_slice %222 {offsets = [1, 0], sizes = [16, 128], strides = [1, 1]} : vector<17x128xbf16> to vector<16x128xbf16>
    %c0_184 = arith.constant 0 : index
    %c27_185 = arith.constant 27 : index
    %c0_186 = arith.constant 0 : index
    %c0_187 = arith.constant 0 : index
    %225 = vector.load %arg1[%c0_184, %c27_185, %c0_186, %c0_187] : memref<1x34x17x128xbf16, #tpu.memory_space<vmem>>, vector<1x1x17x128xbf16>
    %226 = vector.shape_cast %225 : vector<1x1x17x128xbf16> to vector<17x128xbf16>
    %227 = vector.extract_strided_slice %226 {offsets = [0, 0], sizes = [16, 128], strides = [1, 1]} : vector<17x128xbf16> to vector<16x128xbf16>
    %228 = vector.extract_strided_slice %226 {offsets = [1, 0], sizes = [16, 128], strides = [1, 1]} : vector<17x128xbf16> to vector<16x128xbf16>
    %c0_188 = arith.constant 0 : index
    %c28 = arith.constant 28 : index
    %c0_189 = arith.constant 0 : index
    %c0_190 = arith.constant 0 : index
    %229 = vector.load %arg1[%c0_188, %c28, %c0_189, %c0_190] : memref<1x34x17x128xbf16, #tpu.memory_space<vmem>>, vector<1x1x17x128xbf16>
    %230 = vector.shape_cast %229 : vector<1x1x17x128xbf16> to vector<17x128xbf16>
    %231 = vector.extract_strided_slice %230 {offsets = [0, 0], sizes = [16, 128], strides = [1, 1]} : vector<17x128xbf16> to vector<16x128xbf16>
    %232 = vector.extract_strided_slice %230 {offsets = [1, 0], sizes = [16, 128], strides = [1, 1]} : vector<17x128xbf16> to vector<16x128xbf16>
    %c0_191 = arith.constant 0 : index
    %c29 = arith.constant 29 : index
    %c0_192 = arith.constant 0 : index
    %c0_193 = arith.constant 0 : index
    %233 = vector.load %arg1[%c0_191, %c29, %c0_192, %c0_193] : memref<1x34x17x128xbf16, #tpu.memory_space<vmem>>, vector<1x1x17x128xbf16>
    %234 = vector.shape_cast %233 : vector<1x1x17x128xbf16> to vector<17x128xbf16>
    %235 = vector.extract_strided_slice %234 {offsets = [0, 0], sizes = [16, 128], strides = [1, 1]} : vector<17x128xbf16> to vector<16x128xbf16>
    %236 = vector.extract_strided_slice %234 {offsets = [1, 0], sizes = [16, 128], strides = [1, 1]} : vector<17x128xbf16> to vector<16x128xbf16>
    %237 = tpu.concatenate %223, %224, %227, %228, %231, %232, %235, %236 in 1 : vector<16x128xbf16>, vector<16x128xbf16>, vector<16x128xbf16>, vector<16x128xbf16>, vector<16x128xbf16>, vector<16x128xbf16>, vector<16x128xbf16>, vector<16x128xbf16> -> vector<16x1024xbf16>
    %c0_194 = arith.constant 0 : index
    %c28_195 = arith.constant 28 : index
    %c0_196 = arith.constant 0 : index
    %c0_197 = arith.constant 0 : index
    %238 = vector.load %arg1[%c0_194, %c28_195, %c0_196, %c0_197] : memref<1x34x17x128xbf16, #tpu.memory_space<vmem>>, vector<1x1x17x128xbf16>
    %239 = vector.shape_cast %238 : vector<1x1x17x128xbf16> to vector<17x128xbf16>
    %240 = vector.extract_strided_slice %239 {offsets = [0, 0], sizes = [16, 128], strides = [1, 1]} : vector<17x128xbf16> to vector<16x128xbf16>
    %241 = vector.extract_strided_slice %239 {offsets = [1, 0], sizes = [16, 128], strides = [1, 1]} : vector<17x128xbf16> to vector<16x128xbf16>
    %c0_198 = arith.constant 0 : index
    %c29_199 = arith.constant 29 : index
    %c0_200 = arith.constant 0 : index
    %c0_201 = arith.constant 0 : index
    %242 = vector.load %arg1[%c0_198, %c29_199, %c0_200, %c0_201] : memref<1x34x17x128xbf16, #tpu.memory_space<vmem>>, vector<1x1x17x128xbf16>
    %243 = vector.shape_cast %242 : vector<1x1x17x128xbf16> to vector<17x128xbf16>
    %244 = vector.extract_strided_slice %243 {offsets = [0, 0], sizes = [16, 128], strides = [1, 1]} : vector<17x128xbf16> to vector<16x128xbf16>
    %245 = vector.extract_strided_slice %243 {offsets = [1, 0], sizes = [16, 128], strides = [1, 1]} : vector<17x128xbf16> to vector<16x128xbf16>
    %c0_202 = arith.constant 0 : index
    %c30 = arith.constant 30 : index
    %c0_203 = arith.constant 0 : index
    %c0_204 = arith.constant 0 : index
    %246 = vector.load %arg1[%c0_202, %c30, %c0_203, %c0_204] : memref<1x34x17x128xbf16, #tpu.memory_space<vmem>>, vector<1x1x17x128xbf16>
    %247 = vector.shape_cast %246 : vector<1x1x17x128xbf16> to vector<17x128xbf16>
    %248 = vector.extract_strided_slice %247 {offsets = [0, 0], sizes = [16, 128], strides = [1, 1]} : vector<17x128xbf16> to vector<16x128xbf16>
    %249 = vector.extract_strided_slice %247 {offsets = [1, 0], sizes = [16, 128], strides = [1, 1]} : vector<17x128xbf16> to vector<16x128xbf16>
    %c0_205 = arith.constant 0 : index
    %c31 = arith.constant 31 : index
    %c0_206 = arith.constant 0 : index
    %c0_207 = arith.constant 0 : index
    %250 = vector.load %arg1[%c0_205, %c31, %c0_206, %c0_207] : memref<1x34x17x128xbf16, #tpu.memory_space<vmem>>, vector<1x1x17x128xbf16>
    %251 = vector.shape_cast %250 : vector<1x1x17x128xbf16> to vector<17x128xbf16>
    %252 = vector.extract_strided_slice %251 {offsets = [0, 0], sizes = [16, 128], strides = [1, 1]} : vector<17x128xbf16> to vector<16x128xbf16>
    %253 = vector.extract_strided_slice %251 {offsets = [1, 0], sizes = [16, 128], strides = [1, 1]} : vector<17x128xbf16> to vector<16x128xbf16>
    %254 = tpu.concatenate %240, %241, %244, %245, %248, %249, %252, %253 in 1 : vector<16x128xbf16>, vector<16x128xbf16>, vector<16x128xbf16>, vector<16x128xbf16>, vector<16x128xbf16>, vector<16x128xbf16>, vector<16x128xbf16>, vector<16x128xbf16> -> vector<16x1024xbf16>
    %c0_208 = arith.constant 0 : index
    %c30_209 = arith.constant 30 : index
    %c0_210 = arith.constant 0 : index
    %c0_211 = arith.constant 0 : index
    %255 = vector.load %arg1[%c0_208, %c30_209, %c0_210, %c0_211] : memref<1x34x17x128xbf16, #tpu.memory_space<vmem>>, vector<1x1x17x128xbf16>
    %256 = vector.shape_cast %255 : vector<1x1x17x128xbf16> to vector<17x128xbf16>
    %257 = vector.extract_strided_slice %256 {offsets = [0, 0], sizes = [16, 128], strides = [1, 1]} : vector<17x128xbf16> to vector<16x128xbf16>
    %258 = vector.extract_strided_slice %256 {offsets = [1, 0], sizes = [16, 128], strides = [1, 1]} : vector<17x128xbf16> to vector<16x128xbf16>
    %c0_212 = arith.constant 0 : index
    %c31_213 = arith.constant 31 : index
    %c0_214 = arith.constant 0 : index
    %c0_215 = arith.constant 0 : index
    %259 = vector.load %arg1[%c0_212, %c31_213, %c0_214, %c0_215] : memref<1x34x17x128xbf16, #tpu.memory_space<vmem>>, vector<1x1x17x128xbf16>
    %260 = vector.shape_cast %259 : vector<1x1x17x128xbf16> to vector<17x128xbf16>
    %261 = vector.extract_strided_slice %260 {offsets = [0, 0], sizes = [16, 128], strides = [1, 1]} : vector<17x128xbf16> to vector<16x128xbf16>
    %262 = vector.extract_strided_slice %260 {offsets = [1, 0], sizes = [16, 128], strides = [1, 1]} : vector<17x128xbf16> to vector<16x128xbf16>
    %c0_216 = arith.constant 0 : index
    %c32 = arith.constant 32 : index
    %c0_217 = arith.constant 0 : index
    %c0_218 = arith.constant 0 : index
    %263 = vector.load %arg1[%c0_216, %c32, %c0_217, %c0_218] : memref<1x34x17x128xbf16, #tpu.memory_space<vmem>>, vector<1x1x17x128xbf16>
    %264 = vector.shape_cast %263 : vector<1x1x17x128xbf16> to vector<17x128xbf16>
    %265 = vector.extract_strided_slice %264 {offsets = [0, 0], sizes = [16, 128], strides = [1, 1]} : vector<17x128xbf16> to vector<16x128xbf16>
    %266 = vector.extract_strided_slice %264 {offsets = [1, 0], sizes = [16, 128], strides = [1, 1]} : vector<17x128xbf16> to vector<16x128xbf16>
    %c0_219 = arith.constant 0 : index
    %c33 = arith.constant 33 : index
    %c0_220 = arith.constant 0 : index
    %c0_221 = arith.constant 0 : index
    %267 = vector.load %arg1[%c0_219, %c33, %c0_220, %c0_221] : memref<1x34x17x128xbf16, #tpu.memory_space<vmem>>, vector<1x1x17x128xbf16>
    %268 = vector.shape_cast %267 : vector<1x1x17x128xbf16> to vector<17x128xbf16>
    %269 = vector.extract_strided_slice %268 {offsets = [0, 0], sizes = [16, 128], strides = [1, 1]} : vector<17x128xbf16> to vector<16x128xbf16>
    %270 = vector.extract_strided_slice %268 {offsets = [1, 0], sizes = [16, 128], strides = [1, 1]} : vector<17x128xbf16> to vector<16x128xbf16>
    %271 = tpu.concatenate %257, %258, %261, %262, %265, %266, %269, %270 in 1 : vector<16x128xbf16>, vector<16x128xbf16>, vector<16x128xbf16>, vector<16x128xbf16>, vector<16x128xbf16>, vector<16x128xbf16>, vector<16x128xbf16>, vector<16x128xbf16> -> vector<16x1024xbf16>
    %272 = tpu.concatenate %16, %33, %50, %67, %84, %101, %118, %135, %152, %169, %186, %203, %220, %237, %254, %271 in 0 : vector<16x1024xbf16>, vector<16x1024xbf16>, vector<16x1024xbf16>, vector<16x1024xbf16>, vector<16x1024xbf16>, vector<16x1024xbf16>, vector<16x1024xbf16>, vector<16x1024xbf16>, vector<16x1024xbf16>, vector<16x1024xbf16>, vector<16x1024xbf16>, vector<16x1024xbf16>, vector<16x1024xbf16>, vector<16x1024xbf16>, vector<16x1024xbf16>, vector<16x1024xbf16> -> vector<256x1024xbf16>
    %c0_222 = arith.constant 0 : index
    %c0_223 = arith.constant 0 : index
    %273 = vector.load %arg2[%c0_222, %c0_223] : memref<1024x128xbf16, #tpu.memory_space<vmem>>, vector<1024x128xbf16>
    %cst = arith.constant dense<0.000000e+00> : vector<256x128xf32>
    %274 = tpu.matmul %272, %273, %cst {dimension_numbers = #tpu.dot_dimension_numbers<[1], [0], [0], [1], [0, 0, 1, 1], [], []>} : vector<256x1024xbf16>, vector<1024x128xbf16>, vector<256x128xf32> -> vector<256x128xf32>
    %c0_224 = arith.constant 0 : index
    %c0_225 = arith.constant 0 : index
    %275 = vector.load %arg3[%c0_224, %c0_225] : memref<1x128xf32, #tpu.memory_space<vmem>>, vector<1x128xf32>
    %276 = vector.broadcast %275 : vector<1x128xf32> to vector<256x128xf32>
    %277 = arith.addf %274, %276 : vector<256x128xf32>
    %cst_226 = arith.constant 2.000000e-01 : f32
    %278 = vector.broadcast %cst_226 : f32 to vector<256x128xf32>
    %279 = arith.mulf %278, %277 : vector<256x128xf32>
    %280 = arith.maximumf %277, %279 : vector<256x128xf32>
    %281 = arith.truncf %280 : vector<256x128xf32> to vector<256x128xbf16>
    %c0_227 = arith.constant 0 : index
    %c0_228 = arith.constant 0 : index
    %c0_229 = arith.constant 0 : index
    %282 = vector.load %arg4[%c0_227, %c0_228, %c0_229] : memref<1x256x128xbf16, #tpu.memory_space<vmem>>, vector<1x256x128xbf16>
    %283 = vector.shape_cast %282 : vector<1x256x128xbf16> to vector<256x128xbf16>
    %284 = vector.shape_cast %281 : vector<256x128xbf16> to vector<1x256x128xbf16>
    tpu.vector_store %arg4[%c0_227, %c0_228, %c0_229], %284 {strides = array<i32>} : memref<1x256x128xbf16, #tpu.memory_space<vmem>>, vector<1x256x128xbf16>,
    return
  }
  func.func @transform_0(%arg0: i32) -> (i32, i32, i32, i32) {
    %c0_i32 = arith.constant 0 : i32
    %c0_i32_0 = arith.constant 0 : i32
    %c0_i32_1 = arith.constant 0 : i32
    %c0_i32_2 = arith.constant 0 : i32
    return %arg0, %c0_i32, %c0_i32_0, %c0_i32_1 : i32, i32, i32, i32
  }
  func.func @transform_1(%arg0: i32) -> (i32, i32) {
    %c0_i32 = arith.constant 0 : i32
    %c0_i32_0 = arith.constant 0 : i32
    %c0_i32_1 = arith.constant 0 : i32
    return %c0_i32, %c0_i32_0 : i32, i32
  }
  func.func @transform_2(%arg0: i32) -> (i32, i32) {
    %c0_i32 = arith.constant 0 : i32
    %c0_i32_0 = arith.constant 0 : i32
    %c0_i32_1 = arith.constant 0 : i32
    return %c0_i32, %c0_i32_0 : i32, i32
  }
  func.func @transform_3(%arg0: i32) -> (i32, i32, i32) {
    %c0_i32 = arith.constant 0 : i32
    %c0_i32_0 = arith.constant 0 : i32
    %c0_i32_1 = arith.constant 0 : i32
    return %arg0, %c0_i32, %c0_i32_0 : i32, i32, i32
  }
}

module attributes {stable_mosaic.version = 11 : i64} {
  func.func @_conv_stats_kernel(%arg0: i32, %arg1: memref<1x18x9x256xbf16, #tpu.memory_space<vmem>>, %arg2: memref<2048x128xbf16, #tpu.memory_space<vmem>>, %arg3: memref<1x64x128xbf16, #tpu.memory_space<vmem>>, %arg4: memref<1x1x128xf32, #tpu.memory_space<vmem>>, %arg5: memref<1x1x128xf32, #tpu.memory_space<vmem>>) attributes {dimension_semantics = [#tpu.dimension_semantics<parallel>], iteration_bounds = array<i64: 2>, scalar_prefetch = 0 : i64, scratch_operands = 0 : i64, tpu.core_type = #tpu.core_type<tc>, window_params = [{transform_indices = @transform_0, window_bounds = array<i64: 1, 18, 9, 256>}, {pipeline_mode = #tpu.pipeline_mode<synchronous>, transform_indices = @transform_1, window_bounds = array<i64: 2048, 128>}, {transform_indices = @transform_2, window_bounds = array<i64: 1, 64, 128>}, {transform_indices = @transform_3, window_bounds = array<i64: 1, 1, 128>}, {transform_indices = @transform_4, window_bounds = array<i64: 1, 1, 128>}]} {
    %c0 = arith.constant 0 : index
    %c0_0 = arith.constant 0 : index
    %c0_1 = arith.constant 0 : index
    %c0_2 = arith.constant 0 : index
    %0 = vector.load %arg1[%c0, %c0_0, %c0_1, %c0_2] : memref<1x18x9x256xbf16, #tpu.memory_space<vmem>>, vector<1x1x9x256xbf16>
    %1 = vector.shape_cast %0 : vector<1x1x9x256xbf16> to vector<9x256xbf16>
    %2 = vector.extract_strided_slice %1 {offsets = [0, 0], sizes = [8, 256], strides = [1, 1]} : vector<9x256xbf16> to vector<8x256xbf16>
    %3 = vector.extract_strided_slice %1 {offsets = [1, 0], sizes = [8, 256], strides = [1, 1]} : vector<9x256xbf16> to vector<8x256xbf16>
    %c0_3 = arith.constant 0 : index
    %c1 = arith.constant 1 : index
    %c0_4 = arith.constant 0 : index
    %c0_5 = arith.constant 0 : index
    %4 = vector.load %arg1[%c0_3, %c1, %c0_4, %c0_5] : memref<1x18x9x256xbf16, #tpu.memory_space<vmem>>, vector<1x1x9x256xbf16>
    %5 = vector.shape_cast %4 : vector<1x1x9x256xbf16> to vector<9x256xbf16>
    %6 = vector.extract_strided_slice %5 {offsets = [0, 0], sizes = [8, 256], strides = [1, 1]} : vector<9x256xbf16> to vector<8x256xbf16>
    %7 = vector.extract_strided_slice %5 {offsets = [1, 0], sizes = [8, 256], strides = [1, 1]} : vector<9x256xbf16> to vector<8x256xbf16>
    %c0_6 = arith.constant 0 : index
    %c2 = arith.constant 2 : index
    %c0_7 = arith.constant 0 : index
    %c0_8 = arith.constant 0 : index
    %8 = vector.load %arg1[%c0_6, %c2, %c0_7, %c0_8] : memref<1x18x9x256xbf16, #tpu.memory_space<vmem>>, vector<1x1x9x256xbf16>
    %9 = vector.shape_cast %8 : vector<1x1x9x256xbf16> to vector<9x256xbf16>
    %10 = vector.extract_strided_slice %9 {offsets = [0, 0], sizes = [8, 256], strides = [1, 1]} : vector<9x256xbf16> to vector<8x256xbf16>
    %11 = vector.extract_strided_slice %9 {offsets = [1, 0], sizes = [8, 256], strides = [1, 1]} : vector<9x256xbf16> to vector<8x256xbf16>
    %c0_9 = arith.constant 0 : index
    %c3 = arith.constant 3 : index
    %c0_10 = arith.constant 0 : index
    %c0_11 = arith.constant 0 : index
    %12 = vector.load %arg1[%c0_9, %c3, %c0_10, %c0_11] : memref<1x18x9x256xbf16, #tpu.memory_space<vmem>>, vector<1x1x9x256xbf16>
    %13 = vector.shape_cast %12 : vector<1x1x9x256xbf16> to vector<9x256xbf16>
    %14 = vector.extract_strided_slice %13 {offsets = [0, 0], sizes = [8, 256], strides = [1, 1]} : vector<9x256xbf16> to vector<8x256xbf16>
    %15 = vector.extract_strided_slice %13 {offsets = [1, 0], sizes = [8, 256], strides = [1, 1]} : vector<9x256xbf16> to vector<8x256xbf16>
    %16 = tpu.concatenate %2, %3, %6, %7, %10, %11, %14, %15 in 1 : vector<8x256xbf16>, vector<8x256xbf16>, vector<8x256xbf16>, vector<8x256xbf16>, vector<8x256xbf16>, vector<8x256xbf16>, vector<8x256xbf16>, vector<8x256xbf16> -> vector<8x2048xbf16>
    %c0_12 = arith.constant 0 : index
    %c2_13 = arith.constant 2 : index
    %c0_14 = arith.constant 0 : index
    %c0_15 = arith.constant 0 : index
    %17 = vector.load %arg1[%c0_12, %c2_13, %c0_14, %c0_15] : memref<1x18x9x256xbf16, #tpu.memory_space<vmem>>, vector<1x1x9x256xbf16>
    %18 = vector.shape_cast %17 : vector<1x1x9x256xbf16> to vector<9x256xbf16>
    %19 = vector.extract_strided_slice %18 {offsets = [0, 0], sizes = [8, 256], strides = [1, 1]} : vector<9x256xbf16> to vector<8x256xbf16>
    %20 = vector.extract_strided_slice %18 {offsets = [1, 0], sizes = [8, 256], strides = [1, 1]} : vector<9x256xbf16> to vector<8x256xbf16>
    %c0_16 = arith.constant 0 : index
    %c3_17 = arith.constant 3 : index
    %c0_18 = arith.constant 0 : index
    %c0_19 = arith.constant 0 : index
    %21 = vector.load %arg1[%c0_16, %c3_17, %c0_18, %c0_19] : memref<1x18x9x256xbf16, #tpu.memory_space<vmem>>, vector<1x1x9x256xbf16>
    %22 = vector.shape_cast %21 : vector<1x1x9x256xbf16> to vector<9x256xbf16>
    %23 = vector.extract_strided_slice %22 {offsets = [0, 0], sizes = [8, 256], strides = [1, 1]} : vector<9x256xbf16> to vector<8x256xbf16>
    %24 = vector.extract_strided_slice %22 {offsets = [1, 0], sizes = [8, 256], strides = [1, 1]} : vector<9x256xbf16> to vector<8x256xbf16>
    %c0_20 = arith.constant 0 : index
    %c4 = arith.constant 4 : index
    %c0_21 = arith.constant 0 : index
    %c0_22 = arith.constant 0 : index
    %25 = vector.load %arg1[%c0_20, %c4, %c0_21, %c0_22] : memref<1x18x9x256xbf16, #tpu.memory_space<vmem>>, vector<1x1x9x256xbf16>
    %26 = vector.shape_cast %25 : vector<1x1x9x256xbf16> to vector<9x256xbf16>
    %27 = vector.extract_strided_slice %26 {offsets = [0, 0], sizes = [8, 256], strides = [1, 1]} : vector<9x256xbf16> to vector<8x256xbf16>
    %28 = vector.extract_strided_slice %26 {offsets = [1, 0], sizes = [8, 256], strides = [1, 1]} : vector<9x256xbf16> to vector<8x256xbf16>
    %c0_23 = arith.constant 0 : index
    %c5 = arith.constant 5 : index
    %c0_24 = arith.constant 0 : index
    %c0_25 = arith.constant 0 : index
    %29 = vector.load %arg1[%c0_23, %c5, %c0_24, %c0_25] : memref<1x18x9x256xbf16, #tpu.memory_space<vmem>>, vector<1x1x9x256xbf16>
    %30 = vector.shape_cast %29 : vector<1x1x9x256xbf16> to vector<9x256xbf16>
    %31 = vector.extract_strided_slice %30 {offsets = [0, 0], sizes = [8, 256], strides = [1, 1]} : vector<9x256xbf16> to vector<8x256xbf16>
    %32 = vector.extract_strided_slice %30 {offsets = [1, 0], sizes = [8, 256], strides = [1, 1]} : vector<9x256xbf16> to vector<8x256xbf16>
    %33 = tpu.concatenate %19, %20, %23, %24, %27, %28, %31, %32 in 1 : vector<8x256xbf16>, vector<8x256xbf16>, vector<8x256xbf16>, vector<8x256xbf16>, vector<8x256xbf16>, vector<8x256xbf16>, vector<8x256xbf16>, vector<8x256xbf16> -> vector<8x2048xbf16>
    %c0_26 = arith.constant 0 : index
    %c4_27 = arith.constant 4 : index
    %c0_28 = arith.constant 0 : index
    %c0_29 = arith.constant 0 : index
    %34 = vector.load %arg1[%c0_26, %c4_27, %c0_28, %c0_29] : memref<1x18x9x256xbf16, #tpu.memory_space<vmem>>, vector<1x1x9x256xbf16>
    %35 = vector.shape_cast %34 : vector<1x1x9x256xbf16> to vector<9x256xbf16>
    %36 = vector.extract_strided_slice %35 {offsets = [0, 0], sizes = [8, 256], strides = [1, 1]} : vector<9x256xbf16> to vector<8x256xbf16>
    %37 = vector.extract_strided_slice %35 {offsets = [1, 0], sizes = [8, 256], strides = [1, 1]} : vector<9x256xbf16> to vector<8x256xbf16>
    %c0_30 = arith.constant 0 : index
    %c5_31 = arith.constant 5 : index
    %c0_32 = arith.constant 0 : index
    %c0_33 = arith.constant 0 : index
    %38 = vector.load %arg1[%c0_30, %c5_31, %c0_32, %c0_33] : memref<1x18x9x256xbf16, #tpu.memory_space<vmem>>, vector<1x1x9x256xbf16>
    %39 = vector.shape_cast %38 : vector<1x1x9x256xbf16> to vector<9x256xbf16>
    %40 = vector.extract_strided_slice %39 {offsets = [0, 0], sizes = [8, 256], strides = [1, 1]} : vector<9x256xbf16> to vector<8x256xbf16>
    %41 = vector.extract_strided_slice %39 {offsets = [1, 0], sizes = [8, 256], strides = [1, 1]} : vector<9x256xbf16> to vector<8x256xbf16>
    %c0_34 = arith.constant 0 : index
    %c6 = arith.constant 6 : index
    %c0_35 = arith.constant 0 : index
    %c0_36 = arith.constant 0 : index
    %42 = vector.load %arg1[%c0_34, %c6, %c0_35, %c0_36] : memref<1x18x9x256xbf16, #tpu.memory_space<vmem>>, vector<1x1x9x256xbf16>
    %43 = vector.shape_cast %42 : vector<1x1x9x256xbf16> to vector<9x256xbf16>
    %44 = vector.extract_strided_slice %43 {offsets = [0, 0], sizes = [8, 256], strides = [1, 1]} : vector<9x256xbf16> to vector<8x256xbf16>
    %45 = vector.extract_strided_slice %43 {offsets = [1, 0], sizes = [8, 256], strides = [1, 1]} : vector<9x256xbf16> to vector<8x256xbf16>
    %c0_37 = arith.constant 0 : index
    %c7 = arith.constant 7 : index
    %c0_38 = arith.constant 0 : index
    %c0_39 = arith.constant 0 : index
    %46 = vector.load %arg1[%c0_37, %c7, %c0_38, %c0_39] : memref<1x18x9x256xbf16, #tpu.memory_space<vmem>>, vector<1x1x9x256xbf16>
    %47 = vector.shape_cast %46 : vector<1x1x9x256xbf16> to vector<9x256xbf16>
    %48 = vector.extract_strided_slice %47 {offsets = [0, 0], sizes = [8, 256], strides = [1, 1]} : vector<9x256xbf16> to vector<8x256xbf16>
    %49 = vector.extract_strided_slice %47 {offsets = [1, 0], sizes = [8, 256], strides = [1, 1]} : vector<9x256xbf16> to vector<8x256xbf16>
    %50 = tpu.concatenate %36, %37, %40, %41, %44, %45, %48, %49 in 1 : vector<8x256xbf16>, vector<8x256xbf16>, vector<8x256xbf16>, vector<8x256xbf16>, vector<8x256xbf16>, vector<8x256xbf16>, vector<8x256xbf16>, vector<8x256xbf16> -> vector<8x2048xbf16>
    %c0_40 = arith.constant 0 : index
    %c6_41 = arith.constant 6 : index
    %c0_42 = arith.constant 0 : index
    %c0_43 = arith.constant 0 : index
    %51 = vector.load %arg1[%c0_40, %c6_41, %c0_42, %c0_43] : memref<1x18x9x256xbf16, #tpu.memory_space<vmem>>, vector<1x1x9x256xbf16>
    %52 = vector.shape_cast %51 : vector<1x1x9x256xbf16> to vector<9x256xbf16>
    %53 = vector.extract_strided_slice %52 {offsets = [0, 0], sizes = [8, 256], strides = [1, 1]} : vector<9x256xbf16> to vector<8x256xbf16>
    %54 = vector.extract_strided_slice %52 {offsets = [1, 0], sizes = [8, 256], strides = [1, 1]} : vector<9x256xbf16> to vector<8x256xbf16>
    %c0_44 = arith.constant 0 : index
    %c7_45 = arith.constant 7 : index
    %c0_46 = arith.constant 0 : index
    %c0_47 = arith.constant 0 : index
    %55 = vector.load %arg1[%c0_44, %c7_45, %c0_46, %c0_47] : memref<1x18x9x256xbf16, #tpu.memory_space<vmem>>, vector<1x1x9x256xbf16>
    %56 = vector.shape_cast %55 : vector<1x1x9x256xbf16> to vector<9x256xbf16>
    %57 = vector.extract_strided_slice %56 {offsets = [0, 0], sizes = [8, 256], strides = [1, 1]} : vector<9x256xbf16> to vector<8x256xbf16>
    %58 = vector.extract_strided_slice %56 {offsets = [1, 0], sizes = [8, 256], strides = [1, 1]} : vector<9x256xbf16> to vector<8x256xbf16>
    %c0_48 = arith.constant 0 : index
    %c8 = arith.constant 8 : index
    %c0_49 = arith.constant 0 : index
    %c0_50 = arith.constant 0 : index
    %59 = vector.load %arg1[%c0_48, %c8, %c0_49, %c0_50] : memref<1x18x9x256xbf16, #tpu.memory_space<vmem>>, vector<1x1x9x256xbf16>
    %60 = vector.shape_cast %59 : vector<1x1x9x256xbf16> to vector<9x256xbf16>
    %61 = vector.extract_strided_slice %60 {offsets = [0, 0], sizes = [8, 256], strides = [1, 1]} : vector<9x256xbf16> to vector<8x256xbf16>
    %62 = vector.extract_strided_slice %60 {offsets = [1, 0], sizes = [8, 256], strides = [1, 1]} : vector<9x256xbf16> to vector<8x256xbf16>
    %c0_51 = arith.constant 0 : index
    %c9 = arith.constant 9 : index
    %c0_52 = arith.constant 0 : index
    %c0_53 = arith.constant 0 : index
    %63 = vector.load %arg1[%c0_51, %c9, %c0_52, %c0_53] : memref<1x18x9x256xbf16, #tpu.memory_space<vmem>>, vector<1x1x9x256xbf16>
    %64 = vector.shape_cast %63 : vector<1x1x9x256xbf16> to vector<9x256xbf16>
    %65 = vector.extract_strided_slice %64 {offsets = [0, 0], sizes = [8, 256], strides = [1, 1]} : vector<9x256xbf16> to vector<8x256xbf16>
    %66 = vector.extract_strided_slice %64 {offsets = [1, 0], sizes = [8, 256], strides = [1, 1]} : vector<9x256xbf16> to vector<8x256xbf16>
    %67 = tpu.concatenate %53, %54, %57, %58, %61, %62, %65, %66 in 1 : vector<8x256xbf16>, vector<8x256xbf16>, vector<8x256xbf16>, vector<8x256xbf16>, vector<8x256xbf16>, vector<8x256xbf16>, vector<8x256xbf16>, vector<8x256xbf16> -> vector<8x2048xbf16>
    %c0_54 = arith.constant 0 : index
    %c8_55 = arith.constant 8 : index
    %c0_56 = arith.constant 0 : index
    %c0_57 = arith.constant 0 : index
    %68 = vector.load %arg1[%c0_54, %c8_55, %c0_56, %c0_57] : memref<1x18x9x256xbf16, #tpu.memory_space<vmem>>, vector<1x1x9x256xbf16>
    %69 = vector.shape_cast %68 : vector<1x1x9x256xbf16> to vector<9x256xbf16>
    %70 = vector.extract_strided_slice %69 {offsets = [0, 0], sizes = [8, 256], strides = [1, 1]} : vector<9x256xbf16> to vector<8x256xbf16>
    %71 = vector.extract_strided_slice %69 {offsets = [1, 0], sizes = [8, 256], strides = [1, 1]} : vector<9x256xbf16> to vector<8x256xbf16>
    %c0_58 = arith.constant 0 : index
    %c9_59 = arith.constant 9 : index
    %c0_60 = arith.constant 0 : index
    %c0_61 = arith.constant 0 : index
    %72 = vector.load %arg1[%c0_58, %c9_59, %c0_60, %c0_61] : memref<1x18x9x256xbf16, #tpu.memory_space<vmem>>, vector<1x1x9x256xbf16>
    %73 = vector.shape_cast %72 : vector<1x1x9x256xbf16> to vector<9x256xbf16>
    %74 = vector.extract_strided_slice %73 {offsets = [0, 0], sizes = [8, 256], strides = [1, 1]} : vector<9x256xbf16> to vector<8x256xbf16>
    %75 = vector.extract_strided_slice %73 {offsets = [1, 0], sizes = [8, 256], strides = [1, 1]} : vector<9x256xbf16> to vector<8x256xbf16>
    %c0_62 = arith.constant 0 : index
    %c10 = arith.constant 10 : index
    %c0_63 = arith.constant 0 : index
    %c0_64 = arith.constant 0 : index
    %76 = vector.load %arg1[%c0_62, %c10, %c0_63, %c0_64] : memref<1x18x9x256xbf16, #tpu.memory_space<vmem>>, vector<1x1x9x256xbf16>
    %77 = vector.shape_cast %76 : vector<1x1x9x256xbf16> to vector<9x256xbf16>
    %78 = vector.extract_strided_slice %77 {offsets = [0, 0], sizes = [8, 256], strides = [1, 1]} : vector<9x256xbf16> to vector<8x256xbf16>
    %79 = vector.extract_strided_slice %77 {offsets = [1, 0], sizes = [8, 256], strides = [1, 1]} : vector<9x256xbf16> to vector<8x256xbf16>
    %c0_65 = arith.constant 0 : index
    %c11 = arith.constant 11 : index
    %c0_66 = arith.constant 0 : index
    %c0_67 = arith.constant 0 : index
    %80 = vector.load %arg1[%c0_65, %c11, %c0_66, %c0_67] : memref<1x18x9x256xbf16, #tpu.memory_space<vmem>>, vector<1x1x9x256xbf16>
    %81 = vector.shape_cast %80 : vector<1x1x9x256xbf16> to vector<9x256xbf16>
    %82 = vector.extract_strided_slice %81 {offsets = [0, 0], sizes = [8, 256], strides = [1, 1]} : vector<9x256xbf16> to vector<8x256xbf16>
    %83 = vector.extract_strided_slice %81 {offsets = [1, 0], sizes = [8, 256], strides = [1, 1]} : vector<9x256xbf16> to vector<8x256xbf16>
    %84 = tpu.concatenate %70, %71, %74, %75, %78, %79, %82, %83 in 1 : vector<8x256xbf16>, vector<8x256xbf16>, vector<8x256xbf16>, vector<8x256xbf16>, vector<8x256xbf16>, vector<8x256xbf16>, vector<8x256xbf16>, vector<8x256xbf16> -> vector<8x2048xbf16>
    %c0_68 = arith.constant 0 : index
    %c10_69 = arith.constant 10 : index
    %c0_70 = arith.constant 0 : index
    %c0_71 = arith.constant 0 : index
    %85 = vector.load %arg1[%c0_68, %c10_69, %c0_70, %c0_71] : memref<1x18x9x256xbf16, #tpu.memory_space<vmem>>, vector<1x1x9x256xbf16>
    %86 = vector.shape_cast %85 : vector<1x1x9x256xbf16> to vector<9x256xbf16>
    %87 = vector.extract_strided_slice %86 {offsets = [0, 0], sizes = [8, 256], strides = [1, 1]} : vector<9x256xbf16> to vector<8x256xbf16>
    %88 = vector.extract_strided_slice %86 {offsets = [1, 0], sizes = [8, 256], strides = [1, 1]} : vector<9x256xbf16> to vector<8x256xbf16>
    %c0_72 = arith.constant 0 : index
    %c11_73 = arith.constant 11 : index
    %c0_74 = arith.constant 0 : index
    %c0_75 = arith.constant 0 : index
    %89 = vector.load %arg1[%c0_72, %c11_73, %c0_74, %c0_75] : memref<1x18x9x256xbf16, #tpu.memory_space<vmem>>, vector<1x1x9x256xbf16>
    %90 = vector.shape_cast %89 : vector<1x1x9x256xbf16> to vector<9x256xbf16>
    %91 = vector.extract_strided_slice %90 {offsets = [0, 0], sizes = [8, 256], strides = [1, 1]} : vector<9x256xbf16> to vector<8x256xbf16>
    %92 = vector.extract_strided_slice %90 {offsets = [1, 0], sizes = [8, 256], strides = [1, 1]} : vector<9x256xbf16> to vector<8x256xbf16>
    %c0_76 = arith.constant 0 : index
    %c12 = arith.constant 12 : index
    %c0_77 = arith.constant 0 : index
    %c0_78 = arith.constant 0 : index
    %93 = vector.load %arg1[%c0_76, %c12, %c0_77, %c0_78] : memref<1x18x9x256xbf16, #tpu.memory_space<vmem>>, vector<1x1x9x256xbf16>
    %94 = vector.shape_cast %93 : vector<1x1x9x256xbf16> to vector<9x256xbf16>
    %95 = vector.extract_strided_slice %94 {offsets = [0, 0], sizes = [8, 256], strides = [1, 1]} : vector<9x256xbf16> to vector<8x256xbf16>
    %96 = vector.extract_strided_slice %94 {offsets = [1, 0], sizes = [8, 256], strides = [1, 1]} : vector<9x256xbf16> to vector<8x256xbf16>
    %c0_79 = arith.constant 0 : index
    %c13 = arith.constant 13 : index
    %c0_80 = arith.constant 0 : index
    %c0_81 = arith.constant 0 : index
    %97 = vector.load %arg1[%c0_79, %c13, %c0_80, %c0_81] : memref<1x18x9x256xbf16, #tpu.memory_space<vmem>>, vector<1x1x9x256xbf16>
    %98 = vector.shape_cast %97 : vector<1x1x9x256xbf16> to vector<9x256xbf16>
    %99 = vector.extract_strided_slice %98 {offsets = [0, 0], sizes = [8, 256], strides = [1, 1]} : vector<9x256xbf16> to vector<8x256xbf16>
    %100 = vector.extract_strided_slice %98 {offsets = [1, 0], sizes = [8, 256], strides = [1, 1]} : vector<9x256xbf16> to vector<8x256xbf16>
    %101 = tpu.concatenate %87, %88, %91, %92, %95, %96, %99, %100 in 1 : vector<8x256xbf16>, vector<8x256xbf16>, vector<8x256xbf16>, vector<8x256xbf16>, vector<8x256xbf16>, vector<8x256xbf16>, vector<8x256xbf16>, vector<8x256xbf16> -> vector<8x2048xbf16>
    %c0_82 = arith.constant 0 : index
    %c12_83 = arith.constant 12 : index
    %c0_84 = arith.constant 0 : index
    %c0_85 = arith.constant 0 : index
    %102 = vector.load %arg1[%c0_82, %c12_83, %c0_84, %c0_85] : memref<1x18x9x256xbf16, #tpu.memory_space<vmem>>, vector<1x1x9x256xbf16>
    %103 = vector.shape_cast %102 : vector<1x1x9x256xbf16> to vector<9x256xbf16>
    %104 = vector.extract_strided_slice %103 {offsets = [0, 0], sizes = [8, 256], strides = [1, 1]} : vector<9x256xbf16> to vector<8x256xbf16>
    %105 = vector.extract_strided_slice %103 {offsets = [1, 0], sizes = [8, 256], strides = [1, 1]} : vector<9x256xbf16> to vector<8x256xbf16>
    %c0_86 = arith.constant 0 : index
    %c13_87 = arith.constant 13 : index
    %c0_88 = arith.constant 0 : index
    %c0_89 = arith.constant 0 : index
    %106 = vector.load %arg1[%c0_86, %c13_87, %c0_88, %c0_89] : memref<1x18x9x256xbf16, #tpu.memory_space<vmem>>, vector<1x1x9x256xbf16>
    %107 = vector.shape_cast %106 : vector<1x1x9x256xbf16> to vector<9x256xbf16>
    %108 = vector.extract_strided_slice %107 {offsets = [0, 0], sizes = [8, 256], strides = [1, 1]} : vector<9x256xbf16> to vector<8x256xbf16>
    %109 = vector.extract_strided_slice %107 {offsets = [1, 0], sizes = [8, 256], strides = [1, 1]} : vector<9x256xbf16> to vector<8x256xbf16>
    %c0_90 = arith.constant 0 : index
    %c14 = arith.constant 14 : index
    %c0_91 = arith.constant 0 : index
    %c0_92 = arith.constant 0 : index
    %110 = vector.load %arg1[%c0_90, %c14, %c0_91, %c0_92] : memref<1x18x9x256xbf16, #tpu.memory_space<vmem>>, vector<1x1x9x256xbf16>
    %111 = vector.shape_cast %110 : vector<1x1x9x256xbf16> to vector<9x256xbf16>
    %112 = vector.extract_strided_slice %111 {offsets = [0, 0], sizes = [8, 256], strides = [1, 1]} : vector<9x256xbf16> to vector<8x256xbf16>
    %113 = vector.extract_strided_slice %111 {offsets = [1, 0], sizes = [8, 256], strides = [1, 1]} : vector<9x256xbf16> to vector<8x256xbf16>
    %c0_93 = arith.constant 0 : index
    %c15 = arith.constant 15 : index
    %c0_94 = arith.constant 0 : index
    %c0_95 = arith.constant 0 : index
    %114 = vector.load %arg1[%c0_93, %c15, %c0_94, %c0_95] : memref<1x18x9x256xbf16, #tpu.memory_space<vmem>>, vector<1x1x9x256xbf16>
    %115 = vector.shape_cast %114 : vector<1x1x9x256xbf16> to vector<9x256xbf16>
    %116 = vector.extract_strided_slice %115 {offsets = [0, 0], sizes = [8, 256], strides = [1, 1]} : vector<9x256xbf16> to vector<8x256xbf16>
    %117 = vector.extract_strided_slice %115 {offsets = [1, 0], sizes = [8, 256], strides = [1, 1]} : vector<9x256xbf16> to vector<8x256xbf16>
    %118 = tpu.concatenate %104, %105, %108, %109, %112, %113, %116, %117 in 1 : vector<8x256xbf16>, vector<8x256xbf16>, vector<8x256xbf16>, vector<8x256xbf16>, vector<8x256xbf16>, vector<8x256xbf16>, vector<8x256xbf16>, vector<8x256xbf16> -> vector<8x2048xbf16>
    %c0_96 = arith.constant 0 : index
    %c14_97 = arith.constant 14 : index
    %c0_98 = arith.constant 0 : index
    %c0_99 = arith.constant 0 : index
    %119 = vector.load %arg1[%c0_96, %c14_97, %c0_98, %c0_99] : memref<1x18x9x256xbf16, #tpu.memory_space<vmem>>, vector<1x1x9x256xbf16>
    %120 = vector.shape_cast %119 : vector<1x1x9x256xbf16> to vector<9x256xbf16>
    %121 = vector.extract_strided_slice %120 {offsets = [0, 0], sizes = [8, 256], strides = [1, 1]} : vector<9x256xbf16> to vector<8x256xbf16>
    %122 = vector.extract_strided_slice %120 {offsets = [1, 0], sizes = [8, 256], strides = [1, 1]} : vector<9x256xbf16> to vector<8x256xbf16>
    %c0_100 = arith.constant 0 : index
    %c15_101 = arith.constant 15 : index
    %c0_102 = arith.constant 0 : index
    %c0_103 = arith.constant 0 : index
    %123 = vector.load %arg1[%c0_100, %c15_101, %c0_102, %c0_103] : memref<1x18x9x256xbf16, #tpu.memory_space<vmem>>, vector<1x1x9x256xbf16>
    %124 = vector.shape_cast %123 : vector<1x1x9x256xbf16> to vector<9x256xbf16>
    %125 = vector.extract_strided_slice %124 {offsets = [0, 0], sizes = [8, 256], strides = [1, 1]} : vector<9x256xbf16> to vector<8x256xbf16>
    %126 = vector.extract_strided_slice %124 {offsets = [1, 0], sizes = [8, 256], strides = [1, 1]} : vector<9x256xbf16> to vector<8x256xbf16>
    %c0_104 = arith.constant 0 : index
    %c16 = arith.constant 16 : index
    %c0_105 = arith.constant 0 : index
    %c0_106 = arith.constant 0 : index
    %127 = vector.load %arg1[%c0_104, %c16, %c0_105, %c0_106] : memref<1x18x9x256xbf16, #tpu.memory_space<vmem>>, vector<1x1x9x256xbf16>
    %128 = vector.shape_cast %127 : vector<1x1x9x256xbf16> to vector<9x256xbf16>
    %129 = vector.extract_strided_slice %128 {offsets = [0, 0], sizes = [8, 256], strides = [1, 1]} : vector<9x256xbf16> to vector<8x256xbf16>
    %130 = vector.extract_strided_slice %128 {offsets = [1, 0], sizes = [8, 256], strides = [1, 1]} : vector<9x256xbf16> to vector<8x256xbf16>
    %c0_107 = arith.constant 0 : index
    %c17 = arith.constant 17 : index
    %c0_108 = arith.constant 0 : index
    %c0_109 = arith.constant 0 : index
    %131 = vector.load %arg1[%c0_107, %c17, %c0_108, %c0_109] : memref<1x18x9x256xbf16, #tpu.memory_space<vmem>>, vector<1x1x9x256xbf16>
    %132 = vector.shape_cast %131 : vector<1x1x9x256xbf16> to vector<9x256xbf16>
    %133 = vector.extract_strided_slice %132 {offsets = [0, 0], sizes = [8, 256], strides = [1, 1]} : vector<9x256xbf16> to vector<8x256xbf16>
    %134 = vector.extract_strided_slice %132 {offsets = [1, 0], sizes = [8, 256], strides = [1, 1]} : vector<9x256xbf16> to vector<8x256xbf16>
    %135 = tpu.concatenate %121, %122, %125, %126, %129, %130, %133, %134 in 1 : vector<8x256xbf16>, vector<8x256xbf16>, vector<8x256xbf16>, vector<8x256xbf16>, vector<8x256xbf16>, vector<8x256xbf16>, vector<8x256xbf16>, vector<8x256xbf16> -> vector<8x2048xbf16>
    %136 = tpu.concatenate %16, %33, %50, %67, %84, %101, %118, %135 in 0 : vector<8x2048xbf16>, vector<8x2048xbf16>, vector<8x2048xbf16>, vector<8x2048xbf16>, vector<8x2048xbf16>, vector<8x2048xbf16>, vector<8x2048xbf16>, vector<8x2048xbf16> -> vector<64x2048xbf16>
    %c0_110 = arith.constant 0 : index
    %c0_111 = arith.constant 0 : index
    %137 = vector.load %arg2[%c0_110, %c0_111] : memref<2048x128xbf16, #tpu.memory_space<vmem>>, vector<2048x128xbf16>
    %cst = arith.constant dense<0.000000e+00> : vector<64x128xf32>
    %138 = tpu.matmul %136, %137, %cst {dimension_numbers = #tpu.dot_dimension_numbers<[1], [0], [0], [1], [0, 0, 1, 1], [], []>} : vector<64x2048xbf16>, vector<2048x128xbf16>, vector<64x128xf32> -> vector<64x128xf32>
    %139 = arith.truncf %138 : vector<64x128xf32> to vector<64x128xbf16>
    %c0_112 = arith.constant 0 : index
    %c0_113 = arith.constant 0 : index
    %c0_114 = arith.constant 0 : index
    %140 = vector.load %arg3[%c0_112, %c0_113, %c0_114] : memref<1x64x128xbf16, #tpu.memory_space<vmem>>, vector<1x64x128xbf16>
    %141 = vector.shape_cast %140 : vector<1x64x128xbf16> to vector<64x128xbf16>
    %142 = vector.shape_cast %139 : vector<64x128xbf16> to vector<1x64x128xbf16>
    tpu.vector_store %arg3[%c0_112, %c0_113, %c0_114], %142 {strides = array<i32>} : memref<1x64x128xbf16, #tpu.memory_space<vmem>>, vector<1x64x128xbf16>,
    %cst_115 = arith.constant dense<0.000000e+00> : vector<128xf32>
    %143 = vector.multi_reduction <add>, %138, %cst_115 [0] : vector<64x128xf32> to vector<128xf32>
    %144 = vector.shape_cast %143 : vector<128xf32> to vector<1x128xf32>
    %c0_116 = arith.constant 0 : index
    %c0_117 = arith.constant 0 : index
    %c0_118 = arith.constant 0 : index
    %145 = vector.load %arg4[%c0_116, %c0_117, %c0_118] : memref<1x1x128xf32, #tpu.memory_space<vmem>>, vector<1x1x128xf32>
    %146 = vector.shape_cast %145 : vector<1x1x128xf32> to vector<1x128xf32>
    %147 = vector.shape_cast %144 : vector<1x128xf32> to vector<1x1x128xf32>
    tpu.vector_store %arg4[%c0_116, %c0_117, %c0_118], %147 {strides = array<i32>} : memref<1x1x128xf32, #tpu.memory_space<vmem>>, vector<1x1x128xf32>,
    %148 = arith.mulf %138, %138 : vector<64x128xf32>
    %cst_119 = arith.constant dense<0.000000e+00> : vector<128xf32>
    %149 = vector.multi_reduction <add>, %148, %cst_119 [0] : vector<64x128xf32> to vector<128xf32>
    %150 = vector.shape_cast %149 : vector<128xf32> to vector<1x128xf32>
    %c0_120 = arith.constant 0 : index
    %c0_121 = arith.constant 0 : index
    %c0_122 = arith.constant 0 : index
    %151 = vector.load %arg5[%c0_120, %c0_121, %c0_122] : memref<1x1x128xf32, #tpu.memory_space<vmem>>, vector<1x1x128xf32>
    %152 = vector.shape_cast %151 : vector<1x1x128xf32> to vector<1x128xf32>
    %153 = vector.shape_cast %150 : vector<1x128xf32> to vector<1x1x128xf32>
    tpu.vector_store %arg5[%c0_120, %c0_121, %c0_122], %153 {strides = array<i32>} : memref<1x1x128xf32, #tpu.memory_space<vmem>>, vector<1x1x128xf32>,
    return
  }
  func.func @transform_0(%arg0: i32) -> (i32, i32, i32, i32) {
    %c0_i32 = arith.constant 0 : i32
    %c0_i32_0 = arith.constant 0 : i32
    %c0_i32_1 = arith.constant 0 : i32
    %c0_i32_2 = arith.constant 0 : i32
    return %arg0, %c0_i32, %c0_i32_0, %c0_i32_1 : i32, i32, i32, i32
  }
  func.func @transform_1(%arg0: i32) -> (i32, i32) {
    %c0_i32 = arith.constant 0 : i32
    %c0_i32_0 = arith.constant 0 : i32
    %c0_i32_1 = arith.constant 0 : i32
    return %c0_i32, %c0_i32_0 : i32, i32
  }
  func.func @transform_2(%arg0: i32) -> (i32, i32, i32) {
    %c0_i32 = arith.constant 0 : i32
    %c0_i32_0 = arith.constant 0 : i32
    %c0_i32_1 = arith.constant 0 : i32
    return %arg0, %c0_i32, %c0_i32_0 : i32, i32, i32
  }
  func.func @transform_3(%arg0: i32) -> (i32, i32, i32) {
    %c0_i32 = arith.constant 0 : i32
    %c0_i32_0 = arith.constant 0 : i32
    %c0_i32_1 = arith.constant 0 : i32
    return %arg0, %c0_i32, %c0_i32_0 : i32, i32, i32
  }
  func.func @transform_4(%arg0: i32) -> (i32, i32, i32) {
    %c0_i32 = arith.constant 0 : i32
    %c0_i32_0 = arith.constant 0 : i32
    %c0_i32_1 = arith.constant 0 : i32
    return %arg0, %c0_i32, %c0_i32_0 : i32, i32, i32
  }
}

module attributes {stable_mosaic.version = 11 : i64} {
  func.func @_conv_stats_kernel(%arg0: i32, %arg1: memref<1x10x5x256xbf16, #tpu.memory_space<vmem>>, %arg2: memref<2048x128xbf16, #tpu.memory_space<vmem>>, %arg3: memref<1x16x128xbf16, #tpu.memory_space<vmem>>, %arg4: memref<1x1x128xf32, #tpu.memory_space<vmem>>, %arg5: memref<1x1x128xf32, #tpu.memory_space<vmem>>) attributes {dimension_semantics = [#tpu.dimension_semantics<parallel>], iteration_bounds = array<i64: 2>, scalar_prefetch = 0 : i64, scratch_operands = 0 : i64, tpu.core_type = #tpu.core_type<tc>, window_params = [{transform_indices = @transform_0, window_bounds = array<i64: 1, 10, 5, 256>}, {pipeline_mode = #tpu.pipeline_mode<synchronous>, transform_indices = @transform_1, window_bounds = array<i64: 2048, 128>}, {transform_indices = @transform_2, window_bounds = array<i64: 1, 16, 128>}, {transform_indices = @transform_3, window_bounds = array<i64: 1, 1, 128>}, {transform_indices = @transform_4, window_bounds = array<i64: 1, 1, 128>}]} {
    %c0 = arith.constant 0 : index
    %c0_0 = arith.constant 0 : index
    %c0_1 = arith.constant 0 : index
    %c0_2 = arith.constant 0 : index
    %0 = vector.load %arg1[%c0, %c0_0, %c0_1, %c0_2] : memref<1x10x5x256xbf16, #tpu.memory_space<vmem>>, vector<1x1x5x256xbf16>
    %1 = vector.shape_cast %0 : vector<1x1x5x256xbf16> to vector<5x256xbf16>
    %2 = vector.extract_strided_slice %1 {offsets = [0, 0], sizes = [4, 256], strides = [1, 1]} : vector<5x256xbf16> to vector<4x256xbf16>
    %3 = vector.extract_strided_slice %1 {offsets = [1, 0], sizes = [4, 256], strides = [1, 1]} : vector<5x256xbf16> to vector<4x256xbf16>
    %c0_3 = arith.constant 0 : index
    %c1 = arith.constant 1 : index
    %c0_4 = arith.constant 0 : index
    %c0_5 = arith.constant 0 : index
    %4 = vector.load %arg1[%c0_3, %c1, %c0_4, %c0_5] : memref<1x10x5x256xbf16, #tpu.memory_space<vmem>>, vector<1x1x5x256xbf16>
    %5 = vector.shape_cast %4 : vector<1x1x5x256xbf16> to vector<5x256xbf16>
    %6 = vector.extract_strided_slice %5 {offsets = [0, 0], sizes = [4, 256], strides = [1, 1]} : vector<5x256xbf16> to vector<4x256xbf16>
    %7 = vector.extract_strided_slice %5 {offsets = [1, 0], sizes = [4, 256], strides = [1, 1]} : vector<5x256xbf16> to vector<4x256xbf16>
    %c0_6 = arith.constant 0 : index
    %c2 = arith.constant 2 : index
    %c0_7 = arith.constant 0 : index
    %c0_8 = arith.constant 0 : index
    %8 = vector.load %arg1[%c0_6, %c2, %c0_7, %c0_8] : memref<1x10x5x256xbf16, #tpu.memory_space<vmem>>, vector<1x1x5x256xbf16>
    %9 = vector.shape_cast %8 : vector<1x1x5x256xbf16> to vector<5x256xbf16>
    %10 = vector.extract_strided_slice %9 {offsets = [0, 0], sizes = [4, 256], strides = [1, 1]} : vector<5x256xbf16> to vector<4x256xbf16>
    %11 = vector.extract_strided_slice %9 {offsets = [1, 0], sizes = [4, 256], strides = [1, 1]} : vector<5x256xbf16> to vector<4x256xbf16>
    %c0_9 = arith.constant 0 : index
    %c3 = arith.constant 3 : index
    %c0_10 = arith.constant 0 : index
    %c0_11 = arith.constant 0 : index
    %12 = vector.load %arg1[%c0_9, %c3, %c0_10, %c0_11] : memref<1x10x5x256xbf16, #tpu.memory_space<vmem>>, vector<1x1x5x256xbf16>
    %13 = vector.shape_cast %12 : vector<1x1x5x256xbf16> to vector<5x256xbf16>
    %14 = vector.extract_strided_slice %13 {offsets = [0, 0], sizes = [4, 256], strides = [1, 1]} : vector<5x256xbf16> to vector<4x256xbf16>
    %15 = vector.extract_strided_slice %13 {offsets = [1, 0], sizes = [4, 256], strides = [1, 1]} : vector<5x256xbf16> to vector<4x256xbf16>
    %16 = tpu.concatenate %2, %3, %6, %7, %10, %11, %14, %15 in 1 : vector<4x256xbf16>, vector<4x256xbf16>, vector<4x256xbf16>, vector<4x256xbf16>, vector<4x256xbf16>, vector<4x256xbf16>, vector<4x256xbf16>, vector<4x256xbf16> -> vector<4x2048xbf16>
    %c0_12 = arith.constant 0 : index
    %c2_13 = arith.constant 2 : index
    %c0_14 = arith.constant 0 : index
    %c0_15 = arith.constant 0 : index
    %17 = vector.load %arg1[%c0_12, %c2_13, %c0_14, %c0_15] : memref<1x10x5x256xbf16, #tpu.memory_space<vmem>>, vector<1x1x5x256xbf16>
    %18 = vector.shape_cast %17 : vector<1x1x5x256xbf16> to vector<5x256xbf16>
    %19 = vector.extract_strided_slice %18 {offsets = [0, 0], sizes = [4, 256], strides = [1, 1]} : vector<5x256xbf16> to vector<4x256xbf16>
    %20 = vector.extract_strided_slice %18 {offsets = [1, 0], sizes = [4, 256], strides = [1, 1]} : vector<5x256xbf16> to vector<4x256xbf16>
    %c0_16 = arith.constant 0 : index
    %c3_17 = arith.constant 3 : index
    %c0_18 = arith.constant 0 : index
    %c0_19 = arith.constant 0 : index
    %21 = vector.load %arg1[%c0_16, %c3_17, %c0_18, %c0_19] : memref<1x10x5x256xbf16, #tpu.memory_space<vmem>>, vector<1x1x5x256xbf16>
    %22 = vector.shape_cast %21 : vector<1x1x5x256xbf16> to vector<5x256xbf16>
    %23 = vector.extract_strided_slice %22 {offsets = [0, 0], sizes = [4, 256], strides = [1, 1]} : vector<5x256xbf16> to vector<4x256xbf16>
    %24 = vector.extract_strided_slice %22 {offsets = [1, 0], sizes = [4, 256], strides = [1, 1]} : vector<5x256xbf16> to vector<4x256xbf16>
    %c0_20 = arith.constant 0 : index
    %c4 = arith.constant 4 : index
    %c0_21 = arith.constant 0 : index
    %c0_22 = arith.constant 0 : index
    %25 = vector.load %arg1[%c0_20, %c4, %c0_21, %c0_22] : memref<1x10x5x256xbf16, #tpu.memory_space<vmem>>, vector<1x1x5x256xbf16>
    %26 = vector.shape_cast %25 : vector<1x1x5x256xbf16> to vector<5x256xbf16>
    %27 = vector.extract_strided_slice %26 {offsets = [0, 0], sizes = [4, 256], strides = [1, 1]} : vector<5x256xbf16> to vector<4x256xbf16>
    %28 = vector.extract_strided_slice %26 {offsets = [1, 0], sizes = [4, 256], strides = [1, 1]} : vector<5x256xbf16> to vector<4x256xbf16>
    %c0_23 = arith.constant 0 : index
    %c5 = arith.constant 5 : index
    %c0_24 = arith.constant 0 : index
    %c0_25 = arith.constant 0 : index
    %29 = vector.load %arg1[%c0_23, %c5, %c0_24, %c0_25] : memref<1x10x5x256xbf16, #tpu.memory_space<vmem>>, vector<1x1x5x256xbf16>
    %30 = vector.shape_cast %29 : vector<1x1x5x256xbf16> to vector<5x256xbf16>
    %31 = vector.extract_strided_slice %30 {offsets = [0, 0], sizes = [4, 256], strides = [1, 1]} : vector<5x256xbf16> to vector<4x256xbf16>
    %32 = vector.extract_strided_slice %30 {offsets = [1, 0], sizes = [4, 256], strides = [1, 1]} : vector<5x256xbf16> to vector<4x256xbf16>
    %33 = tpu.concatenate %19, %20, %23, %24, %27, %28, %31, %32 in 1 : vector<4x256xbf16>, vector<4x256xbf16>, vector<4x256xbf16>, vector<4x256xbf16>, vector<4x256xbf16>, vector<4x256xbf16>, vector<4x256xbf16>, vector<4x256xbf16> -> vector<4x2048xbf16>
    %c0_26 = arith.constant 0 : index
    %c4_27 = arith.constant 4 : index
    %c0_28 = arith.constant 0 : index
    %c0_29 = arith.constant 0 : index
    %34 = vector.load %arg1[%c0_26, %c4_27, %c0_28, %c0_29] : memref<1x10x5x256xbf16, #tpu.memory_space<vmem>>, vector<1x1x5x256xbf16>
    %35 = vector.shape_cast %34 : vector<1x1x5x256xbf16> to vector<5x256xbf16>
    %36 = vector.extract_strided_slice %35 {offsets = [0, 0], sizes = [4, 256], strides = [1, 1]} : vector<5x256xbf16> to vector<4x256xbf16>
    %37 = vector.extract_strided_slice %35 {offsets = [1, 0], sizes = [4, 256], strides = [1, 1]} : vector<5x256xbf16> to vector<4x256xbf16>
    %c0_30 = arith.constant 0 : index
    %c5_31 = arith.constant 5 : index
    %c0_32 = arith.constant 0 : index
    %c0_33 = arith.constant 0 : index
    %38 = vector.load %arg1[%c0_30, %c5_31, %c0_32, %c0_33] : memref<1x10x5x256xbf16, #tpu.memory_space<vmem>>, vector<1x1x5x256xbf16>
    %39 = vector.shape_cast %38 : vector<1x1x5x256xbf16> to vector<5x256xbf16>
    %40 = vector.extract_strided_slice %39 {offsets = [0, 0], sizes = [4, 256], strides = [1, 1]} : vector<5x256xbf16> to vector<4x256xbf16>
    %41 = vector.extract_strided_slice %39 {offsets = [1, 0], sizes = [4, 256], strides = [1, 1]} : vector<5x256xbf16> to vector<4x256xbf16>
    %c0_34 = arith.constant 0 : index
    %c6 = arith.constant 6 : index
    %c0_35 = arith.constant 0 : index
    %c0_36 = arith.constant 0 : index
    %42 = vector.load %arg1[%c0_34, %c6, %c0_35, %c0_36] : memref<1x10x5x256xbf16, #tpu.memory_space<vmem>>, vector<1x1x5x256xbf16>
    %43 = vector.shape_cast %42 : vector<1x1x5x256xbf16> to vector<5x256xbf16>
    %44 = vector.extract_strided_slice %43 {offsets = [0, 0], sizes = [4, 256], strides = [1, 1]} : vector<5x256xbf16> to vector<4x256xbf16>
    %45 = vector.extract_strided_slice %43 {offsets = [1, 0], sizes = [4, 256], strides = [1, 1]} : vector<5x256xbf16> to vector<4x256xbf16>
    %c0_37 = arith.constant 0 : index
    %c7 = arith.constant 7 : index
    %c0_38 = arith.constant 0 : index
    %c0_39 = arith.constant 0 : index
    %46 = vector.load %arg1[%c0_37, %c7, %c0_38, %c0_39] : memref<1x10x5x256xbf16, #tpu.memory_space<vmem>>, vector<1x1x5x256xbf16>
    %47 = vector.shape_cast %46 : vector<1x1x5x256xbf16> to vector<5x256xbf16>
    %48 = vector.extract_strided_slice %47 {offsets = [0, 0], sizes = [4, 256], strides = [1, 1]} : vector<5x256xbf16> to vector<4x256xbf16>
    %49 = vector.extract_strided_slice %47 {offsets = [1, 0], sizes = [4, 256], strides = [1, 1]} : vector<5x256xbf16> to vector<4x256xbf16>
    %50 = tpu.concatenate %36, %37, %40, %41, %44, %45, %48, %49 in 1 : vector<4x256xbf16>, vector<4x256xbf16>, vector<4x256xbf16>, vector<4x256xbf16>, vector<4x256xbf16>, vector<4x256xbf16>, vector<4x256xbf16>, vector<4x256xbf16> -> vector<4x2048xbf16>
    %c0_40 = arith.constant 0 : index
    %c6_41 = arith.constant 6 : index
    %c0_42 = arith.constant 0 : index
    %c0_43 = arith.constant 0 : index
    %51 = vector.load %arg1[%c0_40, %c6_41, %c0_42, %c0_43] : memref<1x10x5x256xbf16, #tpu.memory_space<vmem>>, vector<1x1x5x256xbf16>
    %52 = vector.shape_cast %51 : vector<1x1x5x256xbf16> to vector<5x256xbf16>
    %53 = vector.extract_strided_slice %52 {offsets = [0, 0], sizes = [4, 256], strides = [1, 1]} : vector<5x256xbf16> to vector<4x256xbf16>
    %54 = vector.extract_strided_slice %52 {offsets = [1, 0], sizes = [4, 256], strides = [1, 1]} : vector<5x256xbf16> to vector<4x256xbf16>
    %c0_44 = arith.constant 0 : index
    %c7_45 = arith.constant 7 : index
    %c0_46 = arith.constant 0 : index
    %c0_47 = arith.constant 0 : index
    %55 = vector.load %arg1[%c0_44, %c7_45, %c0_46, %c0_47] : memref<1x10x5x256xbf16, #tpu.memory_space<vmem>>, vector<1x1x5x256xbf16>
    %56 = vector.shape_cast %55 : vector<1x1x5x256xbf16> to vector<5x256xbf16>
    %57 = vector.extract_strided_slice %56 {offsets = [0, 0], sizes = [4, 256], strides = [1, 1]} : vector<5x256xbf16> to vector<4x256xbf16>
    %58 = vector.extract_strided_slice %56 {offsets = [1, 0], sizes = [4, 256], strides = [1, 1]} : vector<5x256xbf16> to vector<4x256xbf16>
    %c0_48 = arith.constant 0 : index
    %c8 = arith.constant 8 : index
    %c0_49 = arith.constant 0 : index
    %c0_50 = arith.constant 0 : index
    %59 = vector.load %arg1[%c0_48, %c8, %c0_49, %c0_50] : memref<1x10x5x256xbf16, #tpu.memory_space<vmem>>, vector<1x1x5x256xbf16>
    %60 = vector.shape_cast %59 : vector<1x1x5x256xbf16> to vector<5x256xbf16>
    %61 = vector.extract_strided_slice %60 {offsets = [0, 0], sizes = [4, 256], strides = [1, 1]} : vector<5x256xbf16> to vector<4x256xbf16>
    %62 = vector.extract_strided_slice %60 {offsets = [1, 0], sizes = [4, 256], strides = [1, 1]} : vector<5x256xbf16> to vector<4x256xbf16>
    %c0_51 = arith.constant 0 : index
    %c9 = arith.constant 9 : index
    %c0_52 = arith.constant 0 : index
    %c0_53 = arith.constant 0 : index
    %63 = vector.load %arg1[%c0_51, %c9, %c0_52, %c0_53] : memref<1x10x5x256xbf16, #tpu.memory_space<vmem>>, vector<1x1x5x256xbf16>
    %64 = vector.shape_cast %63 : vector<1x1x5x256xbf16> to vector<5x256xbf16>
    %65 = vector.extract_strided_slice %64 {offsets = [0, 0], sizes = [4, 256], strides = [1, 1]} : vector<5x256xbf16> to vector<4x256xbf16>
    %66 = vector.extract_strided_slice %64 {offsets = [1, 0], sizes = [4, 256], strides = [1, 1]} : vector<5x256xbf16> to vector<4x256xbf16>
    %67 = tpu.concatenate %53, %54, %57, %58, %61, %62, %65, %66 in 1 : vector<4x256xbf16>, vector<4x256xbf16>, vector<4x256xbf16>, vector<4x256xbf16>, vector<4x256xbf16>, vector<4x256xbf16>, vector<4x256xbf16>, vector<4x256xbf16> -> vector<4x2048xbf16>
    %68 = tpu.concatenate %16, %33, %50, %67 in 0 : vector<4x2048xbf16>, vector<4x2048xbf16>, vector<4x2048xbf16>, vector<4x2048xbf16> -> vector<16x2048xbf16>
    %c0_54 = arith.constant 0 : index
    %c0_55 = arith.constant 0 : index
    %69 = vector.load %arg2[%c0_54, %c0_55] : memref<2048x128xbf16, #tpu.memory_space<vmem>>, vector<2048x128xbf16>
    %cst = arith.constant dense<0.000000e+00> : vector<16x128xf32>
    %70 = tpu.matmul %68, %69, %cst {dimension_numbers = #tpu.dot_dimension_numbers<[1], [0], [0], [1], [0, 0, 1, 1], [], []>} : vector<16x2048xbf16>, vector<2048x128xbf16>, vector<16x128xf32> -> vector<16x128xf32>
    %71 = arith.truncf %70 : vector<16x128xf32> to vector<16x128xbf16>
    %c0_56 = arith.constant 0 : index
    %c0_57 = arith.constant 0 : index
    %c0_58 = arith.constant 0 : index
    %72 = vector.load %arg3[%c0_56, %c0_57, %c0_58] : memref<1x16x128xbf16, #tpu.memory_space<vmem>>, vector<1x16x128xbf16>
    %73 = vector.shape_cast %72 : vector<1x16x128xbf16> to vector<16x128xbf16>
    %74 = vector.shape_cast %71 : vector<16x128xbf16> to vector<1x16x128xbf16>
    tpu.vector_store %arg3[%c0_56, %c0_57, %c0_58], %74 {strides = array<i32>} : memref<1x16x128xbf16, #tpu.memory_space<vmem>>, vector<1x16x128xbf16>,
    %cst_59 = arith.constant dense<0.000000e+00> : vector<128xf32>
    %75 = vector.multi_reduction <add>, %70, %cst_59 [0] : vector<16x128xf32> to vector<128xf32>
    %76 = vector.shape_cast %75 : vector<128xf32> to vector<1x128xf32>
    %c0_60 = arith.constant 0 : index
    %c0_61 = arith.constant 0 : index
    %c0_62 = arith.constant 0 : index
    %77 = vector.load %arg4[%c0_60, %c0_61, %c0_62] : memref<1x1x128xf32, #tpu.memory_space<vmem>>, vector<1x1x128xf32>
    %78 = vector.shape_cast %77 : vector<1x1x128xf32> to vector<1x128xf32>
    %79 = vector.shape_cast %76 : vector<1x128xf32> to vector<1x1x128xf32>
    tpu.vector_store %arg4[%c0_60, %c0_61, %c0_62], %79 {strides = array<i32>} : memref<1x1x128xf32, #tpu.memory_space<vmem>>, vector<1x1x128xf32>,
    %80 = arith.mulf %70, %70 : vector<16x128xf32>
    %cst_63 = arith.constant dense<0.000000e+00> : vector<128xf32>
    %81 = vector.multi_reduction <add>, %80, %cst_63 [0] : vector<16x128xf32> to vector<128xf32>
    %82 = vector.shape_cast %81 : vector<128xf32> to vector<1x128xf32>
    %c0_64 = arith.constant 0 : index
    %c0_65 = arith.constant 0 : index
    %c0_66 = arith.constant 0 : index
    %83 = vector.load %arg5[%c0_64, %c0_65, %c0_66] : memref<1x1x128xf32, #tpu.memory_space<vmem>>, vector<1x1x128xf32>
    %84 = vector.shape_cast %83 : vector<1x1x128xf32> to vector<1x128xf32>
    %85 = vector.shape_cast %82 : vector<1x128xf32> to vector<1x1x128xf32>
    tpu.vector_store %arg5[%c0_64, %c0_65, %c0_66], %85 {strides = array<i32>} : memref<1x1x128xf32, #tpu.memory_space<vmem>>, vector<1x1x128xf32>,
    return
  }
  func.func @transform_0(%arg0: i32) -> (i32, i32, i32, i32) {
    %c0_i32 = arith.constant 0 : i32
    %c0_i32_0 = arith.constant 0 : i32
    %c0_i32_1 = arith.constant 0 : i32
    %c0_i32_2 = arith.constant 0 : i32
    return %arg0, %c0_i32, %c0_i32_0, %c0_i32_1 : i32, i32, i32, i32
  }
  func.func @transform_1(%arg0: i32) -> (i32, i32) {
    %c0_i32 = arith.constant 0 : i32
    %c0_i32_0 = arith.constant 0 : i32
    %c0_i32_1 = arith.constant 0 : i32
    return %c0_i32, %c0_i32_0 : i32, i32
  }
  func.func @transform_2(%arg0: i32) -> (i32, i32, i32) {
    %c0_i32 = arith.constant 0 : i32
    %c0_i32_0 = arith.constant 0 : i32
    %c0_i32_1 = arith.constant 0 : i32
    return %arg0, %c0_i32, %c0_i32_0 : i32, i32, i32
  }
  func.func @transform_3(%arg0: i32) -> (i32, i32, i32) {
    %c0_i32 = arith.constant 0 : i32
    %c0_i32_0 = arith.constant 0 : i32
    %c0_i32_1 = arith.constant 0 : i32
    return %arg0, %c0_i32, %c0_i32_0 : i32, i32, i32
  }
  func.func @transform_4(%arg0: i32) -> (i32, i32, i32) {
    %c0_i32 = arith.constant 0 : i32
    %c0_i32_0 = arith.constant 0 : i32
    %c0_i32_1 = arith.constant 0 : i32
    return %arg0, %c0_i32, %c0_i32_0 : i32, i32, i32
  }
}

module attributes {stable_mosaic.version = 11 : i64} {
  func.func @_conv_stats_kernel(%arg0: i32, %arg1: memref<1x6x6x128xbf16, #tpu.memory_space<vmem>>, %arg2: memref<2048x128xbf16, #tpu.memory_space<vmem>>, %arg3: memref<1x9x128xbf16, #tpu.memory_space<vmem>>, %arg4: memref<1x1x128xf32, #tpu.memory_space<vmem>>, %arg5: memref<1x1x128xf32, #tpu.memory_space<vmem>>) attributes {dimension_semantics = [#tpu.dimension_semantics<parallel>], iteration_bounds = array<i64: 2>, scalar_prefetch = 0 : i64, scratch_operands = 0 : i64, tpu.core_type = #tpu.core_type<tc>, window_params = [{transform_indices = @transform_0, window_bounds = array<i64: 1, 6, 6, 128>}, {pipeline_mode = #tpu.pipeline_mode<synchronous>, transform_indices = @transform_1, window_bounds = array<i64: 2048, 128>}, {transform_indices = @transform_2, window_bounds = array<i64: 1, 9, 128>}, {transform_indices = @transform_3, window_bounds = array<i64: 1, 1, 128>}, {transform_indices = @transform_4, window_bounds = array<i64: 1, 1, 128>}]} {
    %c0 = arith.constant 0 : index
    %c0_0 = arith.constant 0 : index
    %c0_1 = arith.constant 0 : index
    %c0_2 = arith.constant 0 : index
    %0 = vector.load %arg1[%c0, %c0_0, %c0_1, %c0_2] : memref<1x6x6x128xbf16, #tpu.memory_space<vmem>>, vector<1x1x6x128xbf16>
    %1 = vector.shape_cast %0 : vector<1x1x6x128xbf16> to vector<6x128xbf16>
    %2 = vector.extract_strided_slice %1 {offsets = [0, 0], sizes = [3, 128], strides = [1, 1]} : vector<6x128xbf16> to vector<3x128xbf16>
    %3 = vector.extract_strided_slice %1 {offsets = [1, 0], sizes = [3, 128], strides = [1, 1]} : vector<6x128xbf16> to vector<3x128xbf16>
    %4 = vector.extract_strided_slice %1 {offsets = [2, 0], sizes = [3, 128], strides = [1, 1]} : vector<6x128xbf16> to vector<3x128xbf16>
    %5 = vector.extract_strided_slice %1 {offsets = [3, 0], sizes = [3, 128], strides = [1, 1]} : vector<6x128xbf16> to vector<3x128xbf16>
    %c0_3 = arith.constant 0 : index
    %c1 = arith.constant 1 : index
    %c0_4 = arith.constant 0 : index
    %c0_5 = arith.constant 0 : index
    %6 = vector.load %arg1[%c0_3, %c1, %c0_4, %c0_5] : memref<1x6x6x128xbf16, #tpu.memory_space<vmem>>, vector<1x1x6x128xbf16>
    %7 = vector.shape_cast %6 : vector<1x1x6x128xbf16> to vector<6x128xbf16>
    %8 = vector.extract_strided_slice %7 {offsets = [0, 0], sizes = [3, 128], strides = [1, 1]} : vector<6x128xbf16> to vector<3x128xbf16>
    %9 = vector.extract_strided_slice %7 {offsets = [1, 0], sizes = [3, 128], strides = [1, 1]} : vector<6x128xbf16> to vector<3x128xbf16>
    %10 = vector.extract_strided_slice %7 {offsets = [2, 0], sizes = [3, 128], strides = [1, 1]} : vector<6x128xbf16> to vector<3x128xbf16>
    %11 = vector.extract_strided_slice %7 {offsets = [3, 0], sizes = [3, 128], strides = [1, 1]} : vector<6x128xbf16> to vector<3x128xbf16>
    %c0_6 = arith.constant 0 : index
    %c2 = arith.constant 2 : index
    %c0_7 = arith.constant 0 : index
    %c0_8 = arith.constant 0 : index
    %12 = vector.load %arg1[%c0_6, %c2, %c0_7, %c0_8] : memref<1x6x6x128xbf16, #tpu.memory_space<vmem>>, vector<1x1x6x128xbf16>
    %13 = vector.shape_cast %12 : vector<1x1x6x128xbf16> to vector<6x128xbf16>
    %14 = vector.extract_strided_slice %13 {offsets = [0, 0], sizes = [3, 128], strides = [1, 1]} : vector<6x128xbf16> to vector<3x128xbf16>
    %15 = vector.extract_strided_slice %13 {offsets = [1, 0], sizes = [3, 128], strides = [1, 1]} : vector<6x128xbf16> to vector<3x128xbf16>
    %16 = vector.extract_strided_slice %13 {offsets = [2, 0], sizes = [3, 128], strides = [1, 1]} : vector<6x128xbf16> to vector<3x128xbf16>
    %17 = vector.extract_strided_slice %13 {offsets = [3, 0], sizes = [3, 128], strides = [1, 1]} : vector<6x128xbf16> to vector<3x128xbf16>
    %c0_9 = arith.constant 0 : index
    %c3 = arith.constant 3 : index
    %c0_10 = arith.constant 0 : index
    %c0_11 = arith.constant 0 : index
    %18 = vector.load %arg1[%c0_9, %c3, %c0_10, %c0_11] : memref<1x6x6x128xbf16, #tpu.memory_space<vmem>>, vector<1x1x6x128xbf16>
    %19 = vector.shape_cast %18 : vector<1x1x6x128xbf16> to vector<6x128xbf16>
    %20 = vector.extract_strided_slice %19 {offsets = [0, 0], sizes = [3, 128], strides = [1, 1]} : vector<6x128xbf16> to vector<3x128xbf16>
    %21 = vector.extract_strided_slice %19 {offsets = [1, 0], sizes = [3, 128], strides = [1, 1]} : vector<6x128xbf16> to vector<3x128xbf16>
    %22 = vector.extract_strided_slice %19 {offsets = [2, 0], sizes = [3, 128], strides = [1, 1]} : vector<6x128xbf16> to vector<3x128xbf16>
    %23 = vector.extract_strided_slice %19 {offsets = [3, 0], sizes = [3, 128], strides = [1, 1]} : vector<6x128xbf16> to vector<3x128xbf16>
    %24 = tpu.concatenate %2, %3, %4, %5, %8, %9, %10, %11, %14, %15, %16, %17, %20, %21, %22, %23 in 1 : vector<3x128xbf16>, vector<3x128xbf16>, vector<3x128xbf16>, vector<3x128xbf16>, vector<3x128xbf16>, vector<3x128xbf16>, vector<3x128xbf16>, vector<3x128xbf16>, vector<3x128xbf16>, vector<3x128xbf16>, vector<3x128xbf16>, vector<3x128xbf16>, vector<3x128xbf16>, vector<3x128xbf16>, vector<3x128xbf16>, vector<3x128xbf16> -> vector<3x2048xbf16>
    %c0_12 = arith.constant 0 : index
    %c1_13 = arith.constant 1 : index
    %c0_14 = arith.constant 0 : index
    %c0_15 = arith.constant 0 : index
    %25 = vector.load %arg1[%c0_12, %c1_13, %c0_14, %c0_15] : memref<1x6x6x128xbf16, #tpu.memory_space<vmem>>, vector<1x1x6x128xbf16>
    %26 = vector.shape_cast %25 : vector<1x1x6x128xbf16> to vector<6x128xbf16>
    %27 = vector.extract_strided_slice %26 {offsets = [0, 0], sizes = [3, 128], strides = [1, 1]} : vector<6x128xbf16> to vector<3x128xbf16>
    %28 = vector.extract_strided_slice %26 {offsets = [1, 0], sizes = [3, 128], strides = [1, 1]} : vector<6x128xbf16> to vector<3x128xbf16>
    %29 = vector.extract_strided_slice %26 {offsets = [2, 0], sizes = [3, 128], strides = [1, 1]} : vector<6x128xbf16> to vector<3x128xbf16>
    %30 = vector.extract_strided_slice %26 {offsets = [3, 0], sizes = [3, 128], strides = [1, 1]} : vector<6x128xbf16> to vector<3x128xbf16>
    %c0_16 = arith.constant 0 : index
    %c2_17 = arith.constant 2 : index
    %c0_18 = arith.constant 0 : index
    %c0_19 = arith.constant 0 : index
    %31 = vector.load %arg1[%c0_16, %c2_17, %c0_18, %c0_19] : memref<1x6x6x128xbf16, #tpu.memory_space<vmem>>, vector<1x1x6x128xbf16>
    %32 = vector.shape_cast %31 : vector<1x1x6x128xbf16> to vector<6x128xbf16>
    %33 = vector.extract_strided_slice %32 {offsets = [0, 0], sizes = [3, 128], strides = [1, 1]} : vector<6x128xbf16> to vector<3x128xbf16>
    %34 = vector.extract_strided_slice %32 {offsets = [1, 0], sizes = [3, 128], strides = [1, 1]} : vector<6x128xbf16> to vector<3x128xbf16>
    %35 = vector.extract_strided_slice %32 {offsets = [2, 0], sizes = [3, 128], strides = [1, 1]} : vector<6x128xbf16> to vector<3x128xbf16>
    %36 = vector.extract_strided_slice %32 {offsets = [3, 0], sizes = [3, 128], strides = [1, 1]} : vector<6x128xbf16> to vector<3x128xbf16>
    %c0_20 = arith.constant 0 : index
    %c3_21 = arith.constant 3 : index
    %c0_22 = arith.constant 0 : index
    %c0_23 = arith.constant 0 : index
    %37 = vector.load %arg1[%c0_20, %c3_21, %c0_22, %c0_23] : memref<1x6x6x128xbf16, #tpu.memory_space<vmem>>, vector<1x1x6x128xbf16>
    %38 = vector.shape_cast %37 : vector<1x1x6x128xbf16> to vector<6x128xbf16>
    %39 = vector.extract_strided_slice %38 {offsets = [0, 0], sizes = [3, 128], strides = [1, 1]} : vector<6x128xbf16> to vector<3x128xbf16>
    %40 = vector.extract_strided_slice %38 {offsets = [1, 0], sizes = [3, 128], strides = [1, 1]} : vector<6x128xbf16> to vector<3x128xbf16>
    %41 = vector.extract_strided_slice %38 {offsets = [2, 0], sizes = [3, 128], strides = [1, 1]} : vector<6x128xbf16> to vector<3x128xbf16>
    %42 = vector.extract_strided_slice %38 {offsets = [3, 0], sizes = [3, 128], strides = [1, 1]} : vector<6x128xbf16> to vector<3x128xbf16>
    %c0_24 = arith.constant 0 : index
    %c4 = arith.constant 4 : index
    %c0_25 = arith.constant 0 : index
    %c0_26 = arith.constant 0 : index
    %43 = vector.load %arg1[%c0_24, %c4, %c0_25, %c0_26] : memref<1x6x6x128xbf16, #tpu.memory_space<vmem>>, vector<1x1x6x128xbf16>
    %44 = vector.shape_cast %43 : vector<1x1x6x128xbf16> to vector<6x128xbf16>
    %45 = vector.extract_strided_slice %44 {offsets = [0, 0], sizes = [3, 128], strides = [1, 1]} : vector<6x128xbf16> to vector<3x128xbf16>
    %46 = vector.extract_strided_slice %44 {offsets = [1, 0], sizes = [3, 128], strides = [1, 1]} : vector<6x128xbf16> to vector<3x128xbf16>
    %47 = vector.extract_strided_slice %44 {offsets = [2, 0], sizes = [3, 128], strides = [1, 1]} : vector<6x128xbf16> to vector<3x128xbf16>
    %48 = vector.extract_strided_slice %44 {offsets = [3, 0], sizes = [3, 128], strides = [1, 1]} : vector<6x128xbf16> to vector<3x128xbf16>
    %49 = tpu.concatenate %27, %28, %29, %30, %33, %34, %35, %36, %39, %40, %41, %42, %45, %46, %47, %48 in 1 : vector<3x128xbf16>, vector<3x128xbf16>, vector<3x128xbf16>, vector<3x128xbf16>, vector<3x128xbf16>, vector<3x128xbf16>, vector<3x128xbf16>, vector<3x128xbf16>, vector<3x128xbf16>, vector<3x128xbf16>, vector<3x128xbf16>, vector<3x128xbf16>, vector<3x128xbf16>, vector<3x128xbf16>, vector<3x128xbf16>, vector<3x128xbf16> -> vector<3x2048xbf16>
    %c0_27 = arith.constant 0 : index
    %c2_28 = arith.constant 2 : index
    %c0_29 = arith.constant 0 : index
    %c0_30 = arith.constant 0 : index
    %50 = vector.load %arg1[%c0_27, %c2_28, %c0_29, %c0_30] : memref<1x6x6x128xbf16, #tpu.memory_space<vmem>>, vector<1x1x6x128xbf16>
    %51 = vector.shape_cast %50 : vector<1x1x6x128xbf16> to vector<6x128xbf16>
    %52 = vector.extract_strided_slice %51 {offsets = [0, 0], sizes = [3, 128], strides = [1, 1]} : vector<6x128xbf16> to vector<3x128xbf16>
    %53 = vector.extract_strided_slice %51 {offsets = [1, 0], sizes = [3, 128], strides = [1, 1]} : vector<6x128xbf16> to vector<3x128xbf16>
    %54 = vector.extract_strided_slice %51 {offsets = [2, 0], sizes = [3, 128], strides = [1, 1]} : vector<6x128xbf16> to vector<3x128xbf16>
    %55 = vector.extract_strided_slice %51 {offsets = [3, 0], sizes = [3, 128], strides = [1, 1]} : vector<6x128xbf16> to vector<3x128xbf16>
    %c0_31 = arith.constant 0 : index
    %c3_32 = arith.constant 3 : index
    %c0_33 = arith.constant 0 : index
    %c0_34 = arith.constant 0 : index
    %56 = vector.load %arg1[%c0_31, %c3_32, %c0_33, %c0_34] : memref<1x6x6x128xbf16, #tpu.memory_space<vmem>>, vector<1x1x6x128xbf16>
    %57 = vector.shape_cast %56 : vector<1x1x6x128xbf16> to vector<6x128xbf16>
    %58 = vector.extract_strided_slice %57 {offsets = [0, 0], sizes = [3, 128], strides = [1, 1]} : vector<6x128xbf16> to vector<3x128xbf16>
    %59 = vector.extract_strided_slice %57 {offsets = [1, 0], sizes = [3, 128], strides = [1, 1]} : vector<6x128xbf16> to vector<3x128xbf16>
    %60 = vector.extract_strided_slice %57 {offsets = [2, 0], sizes = [3, 128], strides = [1, 1]} : vector<6x128xbf16> to vector<3x128xbf16>
    %61 = vector.extract_strided_slice %57 {offsets = [3, 0], sizes = [3, 128], strides = [1, 1]} : vector<6x128xbf16> to vector<3x128xbf16>
    %c0_35 = arith.constant 0 : index
    %c4_36 = arith.constant 4 : index
    %c0_37 = arith.constant 0 : index
    %c0_38 = arith.constant 0 : index
    %62 = vector.load %arg1[%c0_35, %c4_36, %c0_37, %c0_38] : memref<1x6x6x128xbf16, #tpu.memory_space<vmem>>, vector<1x1x6x128xbf16>
    %63 = vector.shape_cast %62 : vector<1x1x6x128xbf16> to vector<6x128xbf16>
    %64 = vector.extract_strided_slice %63 {offsets = [0, 0], sizes = [3, 128], strides = [1, 1]} : vector<6x128xbf16> to vector<3x128xbf16>
    %65 = vector.extract_strided_slice %63 {offsets = [1, 0], sizes = [3, 128], strides = [1, 1]} : vector<6x128xbf16> to vector<3x128xbf16>
    %66 = vector.extract_strided_slice %63 {offsets = [2, 0], sizes = [3, 128], strides = [1, 1]} : vector<6x128xbf16> to vector<3x128xbf16>
    %67 = vector.extract_strided_slice %63 {offsets = [3, 0], sizes = [3, 128], strides = [1, 1]} : vector<6x128xbf16> to vector<3x128xbf16>
    %c0_39 = arith.constant 0 : index
    %c5 = arith.constant 5 : index
    %c0_40 = arith.constant 0 : index
    %c0_41 = arith.constant 0 : index
    %68 = vector.load %arg1[%c0_39, %c5, %c0_40, %c0_41] : memref<1x6x6x128xbf16, #tpu.memory_space<vmem>>, vector<1x1x6x128xbf16>
    %69 = vector.shape_cast %68 : vector<1x1x6x128xbf16> to vector<6x128xbf16>
    %70 = vector.extract_strided_slice %69 {offsets = [0, 0], sizes = [3, 128], strides = [1, 1]} : vector<6x128xbf16> to vector<3x128xbf16>
    %71 = vector.extract_strided_slice %69 {offsets = [1, 0], sizes = [3, 128], strides = [1, 1]} : vector<6x128xbf16> to vector<3x128xbf16>
    %72 = vector.extract_strided_slice %69 {offsets = [2, 0], sizes = [3, 128], strides = [1, 1]} : vector<6x128xbf16> to vector<3x128xbf16>
    %73 = vector.extract_strided_slice %69 {offsets = [3, 0], sizes = [3, 128], strides = [1, 1]} : vector<6x128xbf16> to vector<3x128xbf16>
    %74 = tpu.concatenate %52, %53, %54, %55, %58, %59, %60, %61, %64, %65, %66, %67, %70, %71, %72, %73 in 1 : vector<3x128xbf16>, vector<3x128xbf16>, vector<3x128xbf16>, vector<3x128xbf16>, vector<3x128xbf16>, vector<3x128xbf16>, vector<3x128xbf16>, vector<3x128xbf16>, vector<3x128xbf16>, vector<3x128xbf16>, vector<3x128xbf16>, vector<3x128xbf16>, vector<3x128xbf16>, vector<3x128xbf16>, vector<3x128xbf16>, vector<3x128xbf16> -> vector<3x2048xbf16>
    %75 = tpu.concatenate %24, %49, %74 in 0 : vector<3x2048xbf16>, vector<3x2048xbf16>, vector<3x2048xbf16> -> vector<9x2048xbf16>
    %c0_42 = arith.constant 0 : index
    %c0_43 = arith.constant 0 : index
    %76 = vector.load %arg2[%c0_42, %c0_43] : memref<2048x128xbf16, #tpu.memory_space<vmem>>, vector<2048x128xbf16>
    %cst = arith.constant dense<0.000000e+00> : vector<9x128xf32>
    %77 = tpu.matmul %75, %76, %cst {dimension_numbers = #tpu.dot_dimension_numbers<[1], [0], [0], [1], [0, 0, 1, 1], [], []>} : vector<9x2048xbf16>, vector<2048x128xbf16>, vector<9x128xf32> -> vector<9x128xf32>
    %78 = arith.truncf %77 : vector<9x128xf32> to vector<9x128xbf16>
    %c0_44 = arith.constant 0 : index
    %c0_45 = arith.constant 0 : index
    %c0_46 = arith.constant 0 : index
    %79 = vector.load %arg3[%c0_44, %c0_45, %c0_46] : memref<1x9x128xbf16, #tpu.memory_space<vmem>>, vector<1x9x128xbf16>
    %80 = vector.shape_cast %79 : vector<1x9x128xbf16> to vector<9x128xbf16>
    %81 = vector.shape_cast %78 : vector<9x128xbf16> to vector<1x9x128xbf16>
    tpu.vector_store %arg3[%c0_44, %c0_45, %c0_46], %81 {strides = array<i32>} : memref<1x9x128xbf16, #tpu.memory_space<vmem>>, vector<1x9x128xbf16>,
    %cst_47 = arith.constant dense<0.000000e+00> : vector<128xf32>
    %82 = vector.multi_reduction <add>, %77, %cst_47 [0] : vector<9x128xf32> to vector<128xf32>
    %83 = vector.shape_cast %82 : vector<128xf32> to vector<1x128xf32>
    %c0_48 = arith.constant 0 : index
    %c0_49 = arith.constant 0 : index
    %c0_50 = arith.constant 0 : index
    %84 = vector.load %arg4[%c0_48, %c0_49, %c0_50] : memref<1x1x128xf32, #tpu.memory_space<vmem>>, vector<1x1x128xf32>
    %85 = vector.shape_cast %84 : vector<1x1x128xf32> to vector<1x128xf32>
    %86 = vector.shape_cast %83 : vector<1x128xf32> to vector<1x1x128xf32>
    tpu.vector_store %arg4[%c0_48, %c0_49, %c0_50], %86 {strides = array<i32>} : memref<1x1x128xf32, #tpu.memory_space<vmem>>, vector<1x1x128xf32>,
    %87 = arith.mulf %77, %77 : vector<9x128xf32>
    %cst_51 = arith.constant dense<0.000000e+00> : vector<128xf32>
    %88 = vector.multi_reduction <add>, %87, %cst_51 [0] : vector<9x128xf32> to vector<128xf32>
    %89 = vector.shape_cast %88 : vector<128xf32> to vector<1x128xf32>
    %c0_52 = arith.constant 0 : index
    %c0_53 = arith.constant 0 : index
    %c0_54 = arith.constant 0 : index
    %90 = vector.load %arg5[%c0_52, %c0_53, %c0_54] : memref<1x1x128xf32, #tpu.memory_space<vmem>>, vector<1x1x128xf32>
    %91 = vector.shape_cast %90 : vector<1x1x128xf32> to vector<1x128xf32>
    %92 = vector.shape_cast %89 : vector<1x128xf32> to vector<1x1x128xf32>
    tpu.vector_store %arg5[%c0_52, %c0_53, %c0_54], %92 {strides = array<i32>} : memref<1x1x128xf32, #tpu.memory_space<vmem>>, vector<1x1x128xf32>,
    return
  }
  func.func @transform_0(%arg0: i32) -> (i32, i32, i32, i32) {
    %c0_i32 = arith.constant 0 : i32
    %c0_i32_0 = arith.constant 0 : i32
    %c0_i32_1 = arith.constant 0 : i32
    %c0_i32_2 = arith.constant 0 : i32
    return %arg0, %c0_i32, %c0_i32_0, %c0_i32_1 : i32, i32, i32, i32
  }
  func.func @transform_1(%arg0: i32) -> (i32, i32) {
    %c0_i32 = arith.constant 0 : i32
    %c0_i32_0 = arith.constant 0 : i32
    %c0_i32_1 = arith.constant 0 : i32
    return %c0_i32, %c0_i32_0 : i32, i32
  }
  func.func @transform_2(%arg0: i32) -> (i32, i32, i32) {
    %c0_i32 = arith.constant 0 : i32
    %c0_i32_0 = arith.constant 0 : i32
    %c0_i32_1 = arith.constant 0 : i32
    return %arg0, %c0_i32, %c0_i32_0 : i32, i32, i32
  }
  func.func @transform_3(%arg0: i32) -> (i32, i32, i32) {
    %c0_i32 = arith.constant 0 : i32
    %c0_i32_0 = arith.constant 0 : i32
    %c0_i32_1 = arith.constant 0 : i32
    return %arg0, %c0_i32, %c0_i32_0 : i32, i32, i32
  }
  func.func @transform_4(%arg0: i32) -> (i32, i32, i32) {
    %c0_i32 = arith.constant 0 : i32
    %c0_i32_0 = arith.constant 0 : i32
    %c0_i32_1 = arith.constant 0 : i32
    return %arg0, %c0_i32, %c0_i32_0 : i32, i32, i32
  }
}

module attributes {stable_mosaic.version = 11 : i64} {
  func.func @_conv_bias_act_kernel(%arg0: i32, %arg1: memref<1x5x5x128xbf16, #tpu.memory_space<vmem>>, %arg2: memref<2048x128xbf16, #tpu.memory_space<vmem>>, %arg3: memref<1x128xf32, #tpu.memory_space<vmem>>, %arg4: memref<1x4x128xbf16, #tpu.memory_space<vmem>>) attributes {dimension_semantics = [#tpu.dimension_semantics<parallel>], iteration_bounds = array<i64: 2>, scalar_prefetch = 0 : i64, scratch_operands = 0 : i64, tpu.core_type = #tpu.core_type<tc>, window_params = [{transform_indices = @transform_0, window_bounds = array<i64: 1, 5, 5, 128>}, {pipeline_mode = #tpu.pipeline_mode<synchronous>, transform_indices = @transform_1, window_bounds = array<i64: 2048, 128>}, {pipeline_mode = #tpu.pipeline_mode<synchronous>, transform_indices = @transform_2, window_bounds = array<i64: 1, 128>}, {transform_indices = @transform_3, window_bounds = array<i64: 1, 4, 128>}]} {
    %c0 = arith.constant 0 : index
    %c0_0 = arith.constant 0 : index
    %c0_1 = arith.constant 0 : index
    %c0_2 = arith.constant 0 : index
    %0 = vector.load %arg1[%c0, %c0_0, %c0_1, %c0_2] : memref<1x5x5x128xbf16, #tpu.memory_space<vmem>>, vector<1x1x5x128xbf16>
    %1 = vector.shape_cast %0 : vector<1x1x5x128xbf16> to vector<5x128xbf16>
    %2 = vector.extract_strided_slice %1 {offsets = [0, 0], sizes = [2, 128], strides = [1, 1]} : vector<5x128xbf16> to vector<2x128xbf16>
    %3 = vector.extract_strided_slice %1 {offsets = [1, 0], sizes = [2, 128], strides = [1, 1]} : vector<5x128xbf16> to vector<2x128xbf16>
    %4 = vector.extract_strided_slice %1 {offsets = [2, 0], sizes = [2, 128], strides = [1, 1]} : vector<5x128xbf16> to vector<2x128xbf16>
    %5 = vector.extract_strided_slice %1 {offsets = [3, 0], sizes = [2, 128], strides = [1, 1]} : vector<5x128xbf16> to vector<2x128xbf16>
    %c0_3 = arith.constant 0 : index
    %c1 = arith.constant 1 : index
    %c0_4 = arith.constant 0 : index
    %c0_5 = arith.constant 0 : index
    %6 = vector.load %arg1[%c0_3, %c1, %c0_4, %c0_5] : memref<1x5x5x128xbf16, #tpu.memory_space<vmem>>, vector<1x1x5x128xbf16>
    %7 = vector.shape_cast %6 : vector<1x1x5x128xbf16> to vector<5x128xbf16>
    %8 = vector.extract_strided_slice %7 {offsets = [0, 0], sizes = [2, 128], strides = [1, 1]} : vector<5x128xbf16> to vector<2x128xbf16>
    %9 = vector.extract_strided_slice %7 {offsets = [1, 0], sizes = [2, 128], strides = [1, 1]} : vector<5x128xbf16> to vector<2x128xbf16>
    %10 = vector.extract_strided_slice %7 {offsets = [2, 0], sizes = [2, 128], strides = [1, 1]} : vector<5x128xbf16> to vector<2x128xbf16>
    %11 = vector.extract_strided_slice %7 {offsets = [3, 0], sizes = [2, 128], strides = [1, 1]} : vector<5x128xbf16> to vector<2x128xbf16>
    %c0_6 = arith.constant 0 : index
    %c2 = arith.constant 2 : index
    %c0_7 = arith.constant 0 : index
    %c0_8 = arith.constant 0 : index
    %12 = vector.load %arg1[%c0_6, %c2, %c0_7, %c0_8] : memref<1x5x5x128xbf16, #tpu.memory_space<vmem>>, vector<1x1x5x128xbf16>
    %13 = vector.shape_cast %12 : vector<1x1x5x128xbf16> to vector<5x128xbf16>
    %14 = vector.extract_strided_slice %13 {offsets = [0, 0], sizes = [2, 128], strides = [1, 1]} : vector<5x128xbf16> to vector<2x128xbf16>
    %15 = vector.extract_strided_slice %13 {offsets = [1, 0], sizes = [2, 128], strides = [1, 1]} : vector<5x128xbf16> to vector<2x128xbf16>
    %16 = vector.extract_strided_slice %13 {offsets = [2, 0], sizes = [2, 128], strides = [1, 1]} : vector<5x128xbf16> to vector<2x128xbf16>
    %17 = vector.extract_strided_slice %13 {offsets = [3, 0], sizes = [2, 128], strides = [1, 1]} : vector<5x128xbf16> to vector<2x128xbf16>
    %c0_9 = arith.constant 0 : index
    %c3 = arith.constant 3 : index
    %c0_10 = arith.constant 0 : index
    %c0_11 = arith.constant 0 : index
    %18 = vector.load %arg1[%c0_9, %c3, %c0_10, %c0_11] : memref<1x5x5x128xbf16, #tpu.memory_space<vmem>>, vector<1x1x5x128xbf16>
    %19 = vector.shape_cast %18 : vector<1x1x5x128xbf16> to vector<5x128xbf16>
    %20 = vector.extract_strided_slice %19 {offsets = [0, 0], sizes = [2, 128], strides = [1, 1]} : vector<5x128xbf16> to vector<2x128xbf16>
    %21 = vector.extract_strided_slice %19 {offsets = [1, 0], sizes = [2, 128], strides = [1, 1]} : vector<5x128xbf16> to vector<2x128xbf16>
    %22 = vector.extract_strided_slice %19 {offsets = [2, 0], sizes = [2, 128], strides = [1, 1]} : vector<5x128xbf16> to vector<2x128xbf16>
    %23 = vector.extract_strided_slice %19 {offsets = [3, 0], sizes = [2, 128], strides = [1, 1]} : vector<5x128xbf16> to vector<2x128xbf16>
    %24 = tpu.concatenate %2, %3, %4, %5, %8, %9, %10, %11, %14, %15, %16, %17, %20, %21, %22, %23 in 1 : vector<2x128xbf16>, vector<2x128xbf16>, vector<2x128xbf16>, vector<2x128xbf16>, vector<2x128xbf16>, vector<2x128xbf16>, vector<2x128xbf16>, vector<2x128xbf16>, vector<2x128xbf16>, vector<2x128xbf16>, vector<2x128xbf16>, vector<2x128xbf16>, vector<2x128xbf16>, vector<2x128xbf16>, vector<2x128xbf16>, vector<2x128xbf16> -> vector<2x2048xbf16>
    %c0_12 = arith.constant 0 : index
    %c1_13 = arith.constant 1 : index
    %c0_14 = arith.constant 0 : index
    %c0_15 = arith.constant 0 : index
    %25 = vector.load %arg1[%c0_12, %c1_13, %c0_14, %c0_15] : memref<1x5x5x128xbf16, #tpu.memory_space<vmem>>, vector<1x1x5x128xbf16>
    %26 = vector.shape_cast %25 : vector<1x1x5x128xbf16> to vector<5x128xbf16>
    %27 = vector.extract_strided_slice %26 {offsets = [0, 0], sizes = [2, 128], strides = [1, 1]} : vector<5x128xbf16> to vector<2x128xbf16>
    %28 = vector.extract_strided_slice %26 {offsets = [1, 0], sizes = [2, 128], strides = [1, 1]} : vector<5x128xbf16> to vector<2x128xbf16>
    %29 = vector.extract_strided_slice %26 {offsets = [2, 0], sizes = [2, 128], strides = [1, 1]} : vector<5x128xbf16> to vector<2x128xbf16>
    %30 = vector.extract_strided_slice %26 {offsets = [3, 0], sizes = [2, 128], strides = [1, 1]} : vector<5x128xbf16> to vector<2x128xbf16>
    %c0_16 = arith.constant 0 : index
    %c2_17 = arith.constant 2 : index
    %c0_18 = arith.constant 0 : index
    %c0_19 = arith.constant 0 : index
    %31 = vector.load %arg1[%c0_16, %c2_17, %c0_18, %c0_19] : memref<1x5x5x128xbf16, #tpu.memory_space<vmem>>, vector<1x1x5x128xbf16>
    %32 = vector.shape_cast %31 : vector<1x1x5x128xbf16> to vector<5x128xbf16>
    %33 = vector.extract_strided_slice %32 {offsets = [0, 0], sizes = [2, 128], strides = [1, 1]} : vector<5x128xbf16> to vector<2x128xbf16>
    %34 = vector.extract_strided_slice %32 {offsets = [1, 0], sizes = [2, 128], strides = [1, 1]} : vector<5x128xbf16> to vector<2x128xbf16>
    %35 = vector.extract_strided_slice %32 {offsets = [2, 0], sizes = [2, 128], strides = [1, 1]} : vector<5x128xbf16> to vector<2x128xbf16>
    %36 = vector.extract_strided_slice %32 {offsets = [3, 0], sizes = [2, 128], strides = [1, 1]} : vector<5x128xbf16> to vector<2x128xbf16>
    %c0_20 = arith.constant 0 : index
    %c3_21 = arith.constant 3 : index
    %c0_22 = arith.constant 0 : index
    %c0_23 = arith.constant 0 : index
    %37 = vector.load %arg1[%c0_20, %c3_21, %c0_22, %c0_23] : memref<1x5x5x128xbf16, #tpu.memory_space<vmem>>, vector<1x1x5x128xbf16>
    %38 = vector.shape_cast %37 : vector<1x1x5x128xbf16> to vector<5x128xbf16>
    %39 = vector.extract_strided_slice %38 {offsets = [0, 0], sizes = [2, 128], strides = [1, 1]} : vector<5x128xbf16> to vector<2x128xbf16>
    %40 = vector.extract_strided_slice %38 {offsets = [1, 0], sizes = [2, 128], strides = [1, 1]} : vector<5x128xbf16> to vector<2x128xbf16>
    %41 = vector.extract_strided_slice %38 {offsets = [2, 0], sizes = [2, 128], strides = [1, 1]} : vector<5x128xbf16> to vector<2x128xbf16>
    %42 = vector.extract_strided_slice %38 {offsets = [3, 0], sizes = [2, 128], strides = [1, 1]} : vector<5x128xbf16> to vector<2x128xbf16>
    %c0_24 = arith.constant 0 : index
    %c4 = arith.constant 4 : index
    %c0_25 = arith.constant 0 : index
    %c0_26 = arith.constant 0 : index
    %43 = vector.load %arg1[%c0_24, %c4, %c0_25, %c0_26] : memref<1x5x5x128xbf16, #tpu.memory_space<vmem>>, vector<1x1x5x128xbf16>
    %44 = vector.shape_cast %43 : vector<1x1x5x128xbf16> to vector<5x128xbf16>
    %45 = vector.extract_strided_slice %44 {offsets = [0, 0], sizes = [2, 128], strides = [1, 1]} : vector<5x128xbf16> to vector<2x128xbf16>
    %46 = vector.extract_strided_slice %44 {offsets = [1, 0], sizes = [2, 128], strides = [1, 1]} : vector<5x128xbf16> to vector<2x128xbf16>
    %47 = vector.extract_strided_slice %44 {offsets = [2, 0], sizes = [2, 128], strides = [1, 1]} : vector<5x128xbf16> to vector<2x128xbf16>
    %48 = vector.extract_strided_slice %44 {offsets = [3, 0], sizes = [2, 128], strides = [1, 1]} : vector<5x128xbf16> to vector<2x128xbf16>
    %49 = tpu.concatenate %27, %28, %29, %30, %33, %34, %35, %36, %39, %40, %41, %42, %45, %46, %47, %48 in 1 : vector<2x128xbf16>, vector<2x128xbf16>, vector<2x128xbf16>, vector<2x128xbf16>, vector<2x128xbf16>, vector<2x128xbf16>, vector<2x128xbf16>, vector<2x128xbf16>, vector<2x128xbf16>, vector<2x128xbf16>, vector<2x128xbf16>, vector<2x128xbf16>, vector<2x128xbf16>, vector<2x128xbf16>, vector<2x128xbf16>, vector<2x128xbf16> -> vector<2x2048xbf16>
    %50 = tpu.concatenate %24, %49 in 0 : vector<2x2048xbf16>, vector<2x2048xbf16> -> vector<4x2048xbf16>
    %c0_27 = arith.constant 0 : index
    %c0_28 = arith.constant 0 : index
    %51 = vector.load %arg2[%c0_27, %c0_28] : memref<2048x128xbf16, #tpu.memory_space<vmem>>, vector<2048x128xbf16>
    %cst = arith.constant dense<0.000000e+00> : vector<4x128xf32>
    %52 = tpu.matmul %50, %51, %cst {dimension_numbers = #tpu.dot_dimension_numbers<[1], [0], [0], [1], [0, 0, 1, 1], [], []>} : vector<4x2048xbf16>, vector<2048x128xbf16>, vector<4x128xf32> -> vector<4x128xf32>
    %c0_29 = arith.constant 0 : index
    %c0_30 = arith.constant 0 : index
    %53 = vector.load %arg3[%c0_29, %c0_30] : memref<1x128xf32, #tpu.memory_space<vmem>>, vector<1x128xf32>
    %54 = vector.broadcast %53 : vector<1x128xf32> to vector<4x128xf32>
    %55 = arith.addf %52, %54 : vector<4x128xf32>
    %56 = arith.truncf %55 : vector<4x128xf32> to vector<4x128xbf16>
    %c0_31 = arith.constant 0 : index
    %c0_32 = arith.constant 0 : index
    %c0_33 = arith.constant 0 : index
    %57 = vector.load %arg4[%c0_31, %c0_32, %c0_33] : memref<1x4x128xbf16, #tpu.memory_space<vmem>>, vector<1x4x128xbf16>
    %58 = vector.shape_cast %57 : vector<1x4x128xbf16> to vector<4x128xbf16>
    %59 = vector.shape_cast %56 : vector<4x128xbf16> to vector<1x4x128xbf16>
    tpu.vector_store %arg4[%c0_31, %c0_32, %c0_33], %59 {strides = array<i32>} : memref<1x4x128xbf16, #tpu.memory_space<vmem>>, vector<1x4x128xbf16>,
    return
  }
  func.func @transform_0(%arg0: i32) -> (i32, i32, i32, i32) {
    %c0_i32 = arith.constant 0 : i32
    %c0_i32_0 = arith.constant 0 : i32
    %c0_i32_1 = arith.constant 0 : i32
    %c0_i32_2 = arith.constant 0 : i32
    return %arg0, %c0_i32, %c0_i32_0, %c0_i32_1 : i32, i32, i32, i32
  }
  func.func @transform_1(%arg0: i32) -> (i32, i32) {
    %c0_i32 = arith.constant 0 : i32
    %c0_i32_0 = arith.constant 0 : i32
    %c0_i32_1 = arith.constant 0 : i32
    return %c0_i32, %c0_i32_0 : i32, i32
  }
  func.func @transform_2(%arg0: i32) -> (i32, i32) {
    %c0_i32 = arith.constant 0 : i32
    %c0_i32_0 = arith.constant 0 : i32
    %c0_i32_1 = arith.constant 0 : i32
    return %c0_i32, %c0_i32_0 : i32, i32
  }
  func.func @transform_3(%arg0: i32) -> (i32, i32, i32) {
    %c0_i32 = arith.constant 0 : i32
    %c0_i32_0 = arith.constant 0 : i32
    %c0_i32_1 = arith.constant 0 : i32
    return %arg0, %c0_i32, %c0_i32_0 : i32, i32, i32
  }
}

</mosaic_0001>

<llo_original>
// kernel: patch_discriminator_forward.5
$region0: #{patch_discriminator_forward.5}
  #allocation0 [shape = 'u32[]', space=smem, size = 0x4, offset = 0x4, fixed_abs, tag = 'smem constant byte address 0x4 - core index']
  #allocation1 [shape = 'u32[144,128]{1,0:T(1,128)}', space=vmem, size = 0x12000, scoped, tag = 'internal scratch']
  %s0 = inlined_call_operand.vmem [shape: bf16[2,34,17,128], index: 0, kind: input, shape index: {}]
  %s1 = inlined_call_operand.vmem [shape: bf16[1024,128], index: 1, kind: input, shape index: {}]
  %s2 = inlined_call_operand.vmem [shape: f32[1,128], index: 2, kind: input, shape index: {}]
  %s3 = inlined_call_operand.vmem [shape: bf16[2,256,128], index: 3, kind: output, shape index: {}]
  %s4 = sld [smem:[#allocation0]]
  $region45: #{patch_discriminator_forward.5} parent=0
    _
  %s6 = ssub.s32 1, %s4
  %s7 = scalar_select 0, %s6, %s4
  loop: start=0, step=1, limit=4
  $region2: #{patch_discriminator_forward.5} parent=0 // loop_pre_header
    _
  $region3: #{patch_discriminator_forward.5} parent=0 // loop_header
    %s9 = sphi 0, %s13
    %p10 = scmp.ge.s32.totalorder %s9, 4
    %s19 = sphi 0, %s21
    %s22 = sphi 0, %s19
    %s23 = sphi 0, %s22
    %s39 = sphi 0, %s23
    %s43 = sphi 0, %s43
    %s45 = sphi 0, %s43
    %s46 = sphi 0, %s45
    %s60 = sphi 0, %s46
    %s64 = sphi 0, %s64
    %s66 = sphi 0, %s64
    %s67 = sphi 0, %s66
    %s81 = sphi 0, %s67
    %s87 = sphi 0, %s89
    %s90 = sphi 0, %s87
    %s91 = sphi 0, %s90
    %s107 = sphi 0, %s91
  $region4: #{patch_discriminator_forward.5} parent=0 // loop_header_branch
    %12 = sbr.rel (%p10) target = $region8
  $region5: #{patch_discriminator_forward.5} parent=0 // loop_body
    %s14 = ssub.s32 %s9, 1
    %s15 = ssub.s32 %s9, 2
    %s16 = sadd.s32 %s9, 1
    %s17 = ssub.s32 %s9, %s16
    %p18 = scmp.eq.s32.totalorder %s17, 0
    %s20 = sadd.s32 %s19, 1
    %s21 = scalar_select %p18, %s19, %s20
    %p24 = pneg %p18
    %p25 = scmp.eq.s32.totalorder %s9, 1
    %p26 = por %p24, %p25
    %p27 = scmp.ne.s32.totalorder %s19, %s22
    %p28 = scmp.eq.s32.totalorder %s9, 0
    %p29 = por %p27, %p28
    %p30 = scmp.ne.s32.totalorder %s19, %s22
    %p31 = scmp.eq.s32.totalorder %s14, 1
    %p32 = por %p30, %p31
    %p33 = scmp.ne.s32.totalorder %s22, %s23
    %p34 = scmp.eq.s32.totalorder %s14, 0
    %p35 = por %p33, %p34
    %p36 = scmp.ne.s32.totalorder %s22, %s23
    %p37 = scmp.eq.s32.totalorder %s15, 1
    %p38 = por %p36, %p37
    %p40 = scmp.ne.s32.totalorder %s23, %s39
    %p41 = scmp.eq.s32.totalorder %s15, 0
    %p42 = por %p40, %p41
    %s44 = sadd.s32 %s43, 1
    %p47 = scmp.eq.s32.totalorder %s9, 1
    %p48 = scmp.ne.s32.totalorder %s43, %s45
    %p49 = scmp.eq.s32.totalorder %s9, 0
    %p50 = por %p48, %p49
    %p51 = scmp.ne.s32.totalorder %s43, %s45
    %p52 = scmp.eq.s32.totalorder %s14, 1
    %p53 = por %p51, %p52
    %p54 = scmp.ne.s32.totalorder %s45, %s46
    %p55 = scmp.eq.s32.totalorder %s14, 0
    %p56 = por %p54, %p55
    %p57 = scmp.ne.s32.totalorder %s45, %s46
    %p58 = scmp.eq.s32.totalorder %s15, 1
    %p59 = por %p57, %p58
    %p61 = scmp.ne.s32.totalorder %s46, %s60
    %p62 = scmp.eq.s32.totalorder %s15, 0
    %p63 = por %p61, %p62
    %s65 = sadd.s32 %s64, 1
    %p68 = scmp.eq.s32.totalorder %s9, 1
    %p69 = scmp.ne.s32.totalorder %s64, %s66
    %p70 = scmp.eq.s32.totalorder %s9, 0
    %p71 = por %p69, %p70
    %p72 = scmp.ne.s32.totalorder %s64, %s66
    %p73 = scmp.eq.s32.totalorder %s14, 1
    %p74 = por %p72, %p73
    %p75 = scmp.ne.s32.totalorder %s66, %s67
    %p76 = scmp.eq.s32.totalorder %s14, 0
    %p77 = por %p75, %p76
    %p78 = scmp.ne.s32.totalorder %s66, %s67
    %p79 = scmp.eq.s32.totalorder %s15, 1
    %p80 = por %p78, %p79
    %p82 = scmp.ne.s32.totalorder %s67, %s81
    %p83 = scmp.eq.s32.totalorder %s15, 0
    %p84 = por %p82, %p83
    %s85 = ssub.s32 %s9, %s16
    %p86 = scmp.eq.s32.totalorder %s85, 0
    %s88 = sadd.s32 %s87, 1
    %s89 = scalar_select %p86, %s87, %s88
    %p92 = pneg %p86
    %p93 = scmp.eq.s32.totalorder %s9, 1
    %p94 = por %p92, %p93
    %p95 = scmp.ne.s32.totalorder %s87, %s90
    %p96 = scmp.eq.s32.totalorder %s9, 0
    %p97 = por %p95, %p96
    %p98 = scmp.ne.s32.totalorder %s87, %s90
    %p99 = scmp.eq.s32.totalorder %s14, 1
    %p100 = por %p98, %p99
    %p101 = scmp.ne.s32.totalorder %s90, %s91
    %p102 = scmp.eq.s32.totalorder %s14, 0
    %p103 = por %p101, %p102
    %p104 = scmp.ne.s32.totalorder %s90, %s91
    %p105 = scmp.eq.s32.totalorder %s15, 1
    %p106 = por %p104, %p105
    %p108 = scmp.ne.s32.totalorder %s91, %s107
    %p109 = scmp.eq.s32.totalorder %s15, 0
    %p110 = por %p108, %p109
    %p111 = scmp.le.s32.totalorder 1, %s9
    %p112 = scmp.lt.s32.totalorder %s9, 3
    %p113 = pnand %p111, %p112
    %p114 = pneg %p113
    // Predicated region
    $region9: #{patch_discriminator_forward.5} parent=5 // pred_check
      _
    $region10: #{patch_discriminator_forward.5} parent=5 // pred_check_branch
      %116 = sbr.rel (%p113) target = $region12
    $region11: #{patch_discriminator_forward.5} parent=5 // pred_region
      %s117 = ssub.s32 %s9, 1
      // Predicated region
      $region13: #{patch_discriminator_forward.5} parent=11 // pred_check
        %p118 = pneg %p56
      $region14: #{patch_discriminator_forward.5} parent=11 // pred_check_branch
        %120 = sbr.rel (%p118) target = $region16
      $region15: #{patch_discriminator_forward.5} parent=11 // pred_region
        _
      $region16: #{patch_discriminator_forward.5} parent=11 // pred_fallthru
        _
      // Predicated region
      $region17: #{patch_discriminator_forward.5} parent=11 // pred_check
        %p121 = pneg %p77
      $region18: #{patch_discriminator_forward.5} parent=11 // pred_check_branch
        %123 = sbr.rel (%p121) target = $region20
      $region19: #{patch_discriminator_forward.5} parent=11 // pred_region
        _
      $region20: #{patch_discriminator_forward.5} parent=11 // pred_fallthru
        _
    $region12: #{patch_discriminator_forward.5} parent=5 // pred_fallthru
      _
    %p124 = scmp.lt.s32.totalorder %s9, 2
    // Predicated region
    $region21: #{patch_discriminator_forward.5} parent=5 // pred_check
      %p125 = pneg %p124
    $region22: #{patch_discriminator_forward.5} parent=5 // pred_check_branch
      %127 = sbr.rel (%p125) target = $region24
    $region23: #{patch_discriminator_forward.5} parent=5 // pred_region
      // Predicated region
      $region25: #{patch_discriminator_forward.5} parent=23 // pred_check
        %p128 = pneg %p29
      $region26: #{patch_discriminator_forward.5} parent=23 // pred_check_branch
        %130 = sbr.rel (%p128) target = $region28
      $region27: #{patch_discriminator_forward.5} parent=23 // pred_region
        %p131 = scmp.lt.s32.totalorder %s9, 1
        %s132 = scalar_select %p131, %s9, 1
        %s133 = smul.addr %s132, 102
        %s134 = smul.addr %s133, 4
        %s135 = scalar_lea.vmem %s0, %s134
      $region28: #{patch_discriminator_forward.5} parent=23 // pred_fallthru
        _
    $region24: #{patch_discriminator_forward.5} parent=5 // pred_fallthru
      _
    %p136 = scmp.le.s32.totalorder 1, %s9
    %p137 = scmp.lt.s32.totalorder %s9, 3
    %p138 = pnand %p136, %p137
    %p139 = pneg %p138
    // Predicated region
    $region29: #{patch_discriminator_forward.5} parent=5 // pred_check
      _
    $region30: #{patch_discriminator_forward.5} parent=5 // pred_check_branch
      %141 = sbr.rel (%p138) target = $region32
    $region31: #{patch_discriminator_forward.5} parent=5 // pred_region
      %s142 = ssub.s32 %s9, 1
      %p143 = scmp.lt.s32.totalorder %s14, 1
      %s144 = scalar_select %p143, %s14, 1
      %s145 = smul.addr %s144, 102
      %s146 = smul.addr %s145, 4
      %s147 = scalar_lea.vmem %s0, %s146
      %p148 = pneg %p35
      %p149 = pneg %p32
      %p150 = pneg %p56
      %p151 = pneg %p53
      %p152 = pneg %p77
      %p153 = pneg %p74
      %p154 = pneg %p103
      %p155 = pneg %p100
      %p156 = scmp.lt.s32.totalorder %s14, 1
      %s157 = scalar_select %p156, %s14, 1
      %s158 = smul.addr %s157, 32
      %s159 = smul.addr %s158, 4
      %s160 = scalar_lea.vmem %s3, %s159
      %p161 = scmp.lt.s32.totalorder %s14, 1
      %s162 = scalar_select %p161, %s14, 1
      %s163 = smul.addr %s162, 102
      %s164 = smul.addr %s163, 4
      %s165 = scalar_lea.vmem %s0, %s164
      %p166 = scmp.lt.s32.totalorder %s14, 1
      %s167 = scalar_select %p166, %s14, 1
      %s168 = smul.addr %s167, 32
      %s169 = smul.addr %s168, 4
      %s170 = scalar_lea.vmem %s3, %s169
      %v172 = vld [vmem:[%s165] sm:$0xf]
      %v173 = vld [vmem:[%s165 + $0x4] sm:$0xf]
      %v174 = vld [vmem:[%s165 + $0x8] sm:$0x1]
      %s175 = scalar_lea.vmem %s165, 12
      %v176 = vld [vmem:[%s175] sm:$0xf]
      %v177 = vld [vmem:[%s175 + $0x4] sm:$0xf]
      %v178 = vld [vmem:[%s175 + $0x8] sm:$0x1]
      %s179 = scalar_lea.vmem %s165, 24
      %v180 = vld [vmem:[%s179] sm:$0xf]
      %v181 = vld [vmem:[%s179 + $0x4] sm:$0xf]
      %v182 = vld [vmem:[%s179 + $0x8] sm:$0x1]
      %s183 = scalar_lea.vmem %s165, 36
      %v184 = vld [vmem:[%s183] sm:$0xf]
      %v185 = vld [vmem:[%s183 + $0x4] sm:$0xf]
      %v186 = vld [vmem:[%s183 + $0x8] sm:$0x1]
      %v189 = vunpack.c.l.b16 %v172
      %v190 = vunpack.c.l.b16 %v173
      %v191 = vpack.c.b16 %v190, %v189
      %v194 = vunpack.c.l.b16 %v174
      %v195 = vpack.c.b16 %v194, %v194
      %vm196 = vsmask.f32 7424
      %v198 = vshrl.u32 %v191, 16
      %v200 = vshll.u32 %v191, 16
      %v202 = vrot.slane %v200, 1
      %v203 = vor.u32 %v198, %v202
      %v205 = vshll.u32 %v195, 16
      %v207 = vrot.slane %v205, 1
      %v208 = vsel %vm196, %v203, %v207
      %v212 = vunpack.c.l.b16 %v176
      %v213 = vunpack.c.l.b16 %v177
      %v214 = vpack.c.b16 %v213, %v212
      %v217 = vunpack.c.l.b16 %v178
      %v218 = vpack.c.b16 %v217, %v217
      %v220 = vshrl.u32 %v214, 16
      %v222 = vshll.u32 %v214, 16
      %v224 = vrot.slane %v222, 1
      %v225 = vor.u32 %v220, %v224
      %v227 = vshll.u32 %v218, 16
      %v229 = vrot.slane %v227, 1
      %v230 = vsel %vm196, %v225, %v229
      %v234 = vunpack.c.l.b16 %v180
      %v235 = vunpack.c.l.b16 %v181
      %v236 = vpack.c.b16 %v235, %v234
      %v239 = vunpack.c.l.b16 %v182
      %v240 = vpack.c.b16 %v239, %v239
      %v242 = vshrl.u32 %v236, 16
      %v244 = vshll.u32 %v236, 16
      %v246 = vrot.slane %v244, 1
      %v247 = vor.u32 %v242, %v246
      %v249 = vshll.u32 %v240, 16
      %v251 = vrot.slane %v249, 1
      %v252 = vsel %vm196, %v247, %v251
      %v256 = vunpack.c.l.b16 %v184
      %v257 = vunpack.c.l.b16 %v185
      %v258 = vpack.c.b16 %v257, %v256
      %v261 = vunpack.c.l.b16 %v186
      %v262 = vpack.c.b16 %v261, %v261
      %v264 = vshrl.u32 %v258, 16
      %v266 = vshll.u32 %v258, 16
      %v268 = vrot.slane %v266, 1
      %v269 = vor.u32 %v264, %v268
      %v271 = vshll.u32 %v262, 16
      %v273 = vrot.slane %v271, 1
      %v274 = vsel %vm196, %v269, %v273
      %s276 = scalar_lea.vmem %s165, 48
      %v277 = vld [vmem:[%s276] sm:$0xf]
      %v278 = vld [vmem:[%s276 + $0x4] sm:$0xf]
      %v279 = vld [vmem:[%s276 + $0x8] sm:$0x1]
      %s280 = scalar_lea.vmem %s165, 60
      %v281 = vld [vmem:[%s280] sm:$0xf]
      %v282 = vld [vmem:[%s280 + $0x4] sm:$0xf]
      %v283 = vld [vmem:[%s280 + $0x8] sm:$0x1]
      %v286 = vunpack.c.l.b16 %v277
      %v287 = vunpack.c.l.b16 %v278
      %v288 = vpack.c.b16 %v287, %v286
      %v291 = vunpack.c.l.b16 %v279
      %v292 = vpack.c.b16 %v291, %v291
      %v294 = vshrl.u32 %v288, 16
      %v296 = vshll.u32 %v288, 16
      %v298 = vrot.slane %v296, 1
      %v299 = vor.u32 %v294, %v298
      %v301 = vshll.u32 %v292, 16
      %v303 = vrot.slane %v301, 1
      %v304 = vsel %vm196, %v299, %v303
      %v308 = vunpack.c.l.b16 %v281
      %v309 = vunpack.c.l.b16 %v282
      %v310 = vpack.c.b16 %v309, %v308
      %v313 = vunpack.c.l.b16 %v283
      %v314 = vpack.c.b16 %v313, %v313
      %v316 = vshrl.u32 %v310, 16
      %v318 = vshll.u32 %v310, 16
      %v320 = vrot.slane %v318, 1
      %v321 = vor.u32 %v316, %v320
      %v323 = vshll.u32 %v314, 16
      %v325 = vrot.slane %v323, 1
      %v326 = vsel %vm196, %v321, %v325
      %s328 = scalar_lea.vmem %s165, 72
      %v329 = vld [vmem:[%s328] sm:$0xf]
      %v330 = vld [vmem:[%s328 + $0x4] sm:$0xf]
      %v331 = vld [vmem:[%s328 + $0x8] sm:$0x1]
      %s332 = scalar_lea.vmem %s165, 84
      %v333 = vld [vmem:[%s332] sm:$0xf]
      %v334 = vld [vmem:[%s332 + $0x4] sm:$0xf]
      %v335 = vld [vmem:[%s332 + $0x8] sm:$0x1]
      %v338 = vunpack.c.l.b16 %v329
      %v339 = vunpack.c.l.b16 %v330
      %v340 = vpack.c.b16 %v339, %v338
      %v343 = vunpack.c.l.b16 %v331
      %v344 = vpack.c.b16 %v343, %v343
      %v346 = vshrl.u32 %v340, 16
      %v348 = vshll.u32 %v340, 16
      %v350 = vrot.slane %v348, 1
      %v351 = vor.u32 %v346, %v350
      %v353 = vshll.u32 %v344, 16
      %v355 = vrot.slane %v353, 1
      %v356 = vsel %vm196, %v351, %v355
      %v360 = vunpack.c.l.b16 %v333
      %v361 = vunpack.c.l.b16 %v334
      %v362 = vpack.c.b16 %v361, %v360
      %v365 = vunpack.c.l.b16 %v335
      %v366 = vpack.c.b16 %v365, %v365
      %v368 = vshrl.u32 %v362, 16
      %v370 = vshll.u32 %v362, 16
      %v372 = vrot.slane %v370, 1
      %v373 = vor.u32 %v368, %v372
      %v375 = vshll.u32 %v366, 16
      %v377 = vrot.slane %v375, 1
      %v378 = vsel %vm196, %v373, %v377
      %s380 = scalar_lea.vmem %s165, 96
      %v381 = vld [vmem:[%s380] sm:$0xf]
      %v382 = vld [vmem:[%s380 + $0x4] sm:$0xf]
      %v383 = vld [vmem:[%s380 + $0x8] sm:$0x1]
      %s384 = scalar_lea.vmem %s165, 108
      %v385 = vld [vmem:[%s384] sm:$0xf]
      %v386 = vld [vmem:[%s384 + $0x4] sm:$0xf]
      %v387 = vld [vmem:[%s384 + $0x8] sm:$0x1]
      %v390 = vunpack.c.l.b16 %v381
      %v391 = vunpack.c.l.b16 %v382
      %v392 = vpack.c.b16 %v391, %v390
      %v395 = vunpack.c.l.b16 %v383
      %v396 = vpack.c.b16 %v395, %v395
      %v398 = vshrl.u32 %v392, 16
      %v400 = vshll.u32 %v392, 16
      %v402 = vrot.slane %v400, 1
      %v403 = vor.u32 %v398, %v402
      %v405 = vshll.u32 %v396, 16
      %v407 = vrot.slane %v405, 1
      %v408 = vsel %vm196, %v403, %v407
      %v412 = vunpack.c.l.b16 %v385
      %v413 = vunpack.c.l.b16 %v386
      %v414 = vpack.c.b16 %v413, %v412
      %v417 = vunpack.c.l.b16 %v387
      %v418 = vpack.c.b16 %v417, %v417
      %v420 = vshrl.u32 %v414, 16
      %v422 = vshll.u32 %v414, 16
      %v424 = vrot.slane %v422, 1
      %v425 = vor.u32 %v420, %v424
      %v427 = vshll.u32 %v418, 16
      %v429 = vrot.slane %v427, 1
      %v430 = vsel %vm196, %v425, %v429
      %s432 = scalar_lea.vmem %s165, 120
      %v433 = vld [vmem:[%s432] sm:$0xf]
      %v434 = vld [vmem:[%s432 + $0x4] sm:$0xf]
      %v435 = vld [vmem:[%s432 + $0x8] sm:$0x1]
      %s436 = scalar_lea.vmem %s165, 132
      %v437 = vld [vmem:[%s436] sm:$0xf]
      %v438 = vld [vmem:[%s436 + $0x4] sm:$0xf]
      %v439 = vld [vmem:[%s436 + $0x8] sm:$0x1]
      %v442 = vunpack.c.l.b16 %v433
      %v443 = vunpack.c.l.b16 %v434
      %v444 = vpack.c.b16 %v443, %v442
      %v447 = vunpack.c.l.b16 %v435
      %v448 = vpack.c.b16 %v447, %v447
      %v450 = vshrl.u32 %v444, 16
      %v452 = vshll.u32 %v444, 16
      %v454 = vrot.slane %v452, 1
      %v455 = vor.u32 %v450, %v454
      %v457 = vshll.u32 %v448, 16
      %v459 = vrot.slane %v457, 1
      %v460 = vsel %vm196, %v455, %v459
      %v464 = vunpack.c.l.b16 %v437
      %v465 = vunpack.c.l.b16 %v438
      %v466 = vpack.c.b16 %v465, %v464
      %v469 = vunpack.c.l.b16 %v439
      %v470 = vpack.c.b16 %v469, %v469
      %v472 = vshrl.u32 %v466, 16
      %v474 = vshll.u32 %v466, 16
      %v476 = vrot.slane %v474, 1
      %v477 = vor.u32 %v472, %v476
      %v479 = vshll.u32 %v470, 16
      %v481 = vrot.slane %v479, 1
      %v482 = vsel %vm196, %v477, %v481
      %s484 = scalar_lea.vmem %s165, 144
      %v485 = vld [vmem:[%s484] sm:$0xf]
      %v486 = vld [vmem:[%s484 + $0x4] sm:$0xf]
      %v487 = vld [vmem:[%s484 + $0x8] sm:$0x1]
      %s488 = scalar_lea.vmem %s165, 156
      %v489 = vld [vmem:[%s488] sm:$0xf]
      %v490 = vld [vmem:[%s488 + $0x4] sm:$0xf]
      %v491 = vld [vmem:[%s488 + $0x8] sm:$0x1]
      %v494 = vunpack.c.l.b16 %v485
      %v495 = vunpack.c.l.b16 %v486
      %v496 = vpack.c.b16 %v495, %v494
      %v499 = vunpack.c.l.b16 %v487
      %v500 = vpack.c.b16 %v499, %v499
      %v502 = vshrl.u32 %v496, 16
      %v504 = vshll.u32 %v496, 16
      %v506 = vrot.slane %v504, 1
      %v507 = vor.u32 %v502, %v506
      %v509 = vshll.u32 %v500, 16
      %v511 = vrot.slane %v509, 1
      %v512 = vsel %vm196, %v507, %v511
      %v516 = vunpack.c.l.b16 %v489
      %v517 = vunpack.c.l.b16 %v490
      %v518 = vpack.c.b16 %v517, %v516
      %v521 = vunpack.c.l.b16 %v491
      %v522 = vpack.c.b16 %v521, %v521
      %v524 = vshrl.u32 %v518, 16
      %v526 = vshll.u32 %v518, 16
      %v528 = vrot.slane %v526, 1
      %v529 = vor.u32 %v524, %v528
      %v531 = vshll.u32 %v522, 16
      %v533 = vrot.slane %v531, 1
      %v534 = vsel %vm196, %v529, %v533
      %s536 = scalar_lea.vmem %s165, 168
      %v537 = vld [vmem:[%s536] sm:$0xf]
      %v538 = vld [vmem:[%s536 + $0x4] sm:$0xf]
      %v539 = vld [vmem:[%s536 + $0x8] sm:$0x1]
      %s540 = scalar_lea.vmem %s165, 180
      %v541 = vld [vmem:[%s540] sm:$0xf]
      %v542 = vld [vmem:[%s540 + $0x4] sm:$0xf]
      %v543 = vld [vmem:[%s540 + $0x8] sm:$0x1]
      %v546 = vunpack.c.l.b16 %v537
      %v547 = vunpack.c.l.b16 %v538
      %v548 = vpack.c.b16 %v547, %v546
      %v551 = vunpack.c.l.b16 %v539
      %v552 = vpack.c.b16 %v551, %v551
      %v554 = vshrl.u32 %v548, 16
      %v556 = vshll.u32 %v548, 16
      %v558 = vrot.slane %v556, 1
      %v559 = vor.u32 %v554, %v558
      %v561 = vshll.u32 %v552, 16
      %v563 = vrot.slane %v561, 1
      %v564 = vsel %vm196, %v559, %v563
      %v568 = vunpack.c.l.b16 %v541
      %v569 = vunpack.c.l.b16 %v542
      %v570 = vpack.c.b16 %v569, %v568
      %v573 = vunpack.c.l.b16 %v543
      %v574 = vpack.c.b16 %v573, %v573
      %v576 = vshrl.u32 %v570, 16
      %v578 = vshll.u32 %v570, 16
      %v580 = vrot.slane %v578, 1
      %v581 = vor.u32 %v576, %v580
      %v583 = vshll.u32 %v574, 16
      %v585 = vrot.slane %v583, 1
      %v586 = vsel %vm196, %v581, %v585
      %s588 = scalar_lea.vmem %s165, 192
      %v589 = vld [vmem:[%s588] sm:$0xf]
      %v590 = vld [vmem:[%s588 + $0x4] sm:$0xf]
      %v591 = vld [vmem:[%s588 + $0x8] sm:$0x1]
      %s592 = scalar_lea.vmem %s165, 204
      %v593 = vld [vmem:[%s592] sm:$0xf]
      %v594 = vld [vmem:[%s592 + $0x4] sm:$0xf]
      %v595 = vld [vmem:[%s592 + $0x8] sm:$0x1]
      %v598 = vunpack.c.l.b16 %v589
      %v599 = vunpack.c.l.b16 %v590
      %v600 = vpack.c.b16 %v599, %v598
      %v603 = vunpack.c.l.b16 %v591
      %v604 = vpack.c.b16 %v603, %v603
      %v606 = vshrl.u32 %v600, 16
      %v608 = vshll.u32 %v600, 16
      %v610 = vrot.slane %v608, 1
      %v611 = vor.u32 %v606, %v610
      %v613 = vshll.u32 %v604, 16
      %v615 = vrot.slane %v613, 1
      %v616 = vsel %vm196, %v611, %v615
      %v620 = vunpack.c.l.b16 %v593
      %v621 = vunpack.c.l.b16 %v594
      %v622 = vpack.c.b16 %v621, %v620
      %v625 = vunpack.c.l.b16 %v595
      %v626 = vpack.c.b16 %v625, %v625
      %v628 = vshrl.u32 %v622, 16
      %v630 = vshll.u32 %v622, 16
      %v632 = vrot.slane %v630, 1
      %v633 = vor.u32 %v628, %v632
      %v635 = vshll.u32 %v626, 16
      %v637 = vrot.slane %v635, 1
      %v638 = vsel %vm196, %v633, %v637
      %s640 = scalar_lea.vmem %s165, 216
      %v641 = vld [vmem:[%s640] sm:$0xf]
      %v642 = vld [vmem:[%s640 + $0x4] sm:$0xf]
      %v643 = vld [vmem:[%s640 + $0x8] sm:$0x1]
      %s644 = scalar_lea.vmem %s165, 228
      %v645 = vld [vmem:[%s644] sm:$0xf]
      %v646 = vld [vmem:[%s644 + $0x4] sm:$0xf]
      %v647 = vld [vmem:[%s644 + $0x8] sm:$0x1]
      %v650 = vunpack.c.l.b16 %v641
      %v651 = vunpack.c.l.b16 %v642
      %v652 = vpack.c.b16 %v651, %v650
      %v655 = vunpack.c.l.b16 %v643
      %v656 = vpack.c.b16 %v655, %v655
      %v658 = vshrl.u32 %v652, 16
      %v660 = vshll.u32 %v652, 16
      %v662 = vrot.slane %v660, 1
      %v663 = vor.u32 %v658, %v662
      %v665 = vshll.u32 %v656, 16
      %v667 = vrot.slane %v665, 1
      %v668 = vsel %vm196, %v663, %v667
      %v672 = vunpack.c.l.b16 %v645
      %v673 = vunpack.c.l.b16 %v646
      %v674 = vpack.c.b16 %v673, %v672
      %v677 = vunpack.c.l.b16 %v647
      %v678 = vpack.c.b16 %v677, %v677
      %v680 = vshrl.u32 %v674, 16
      %v682 = vshll.u32 %v674, 16
      %v684 = vrot.slane %v682, 1
      %v685 = vor.u32 %v680, %v684
      %v687 = vshll.u32 %v678, 16
      %v689 = vrot.slane %v687, 1
      %v690 = vsel %vm196, %v685, %v689
      %s692 = scalar_lea.vmem %s165, 240
      %v693 = vld [vmem:[%s692] sm:$0xf]
      %v694 = vld [vmem:[%s692 + $0x4] sm:$0xf]
      %v695 = vld [vmem:[%s692 + $0x8] sm:$0x1]
      %s696 = scalar_lea.vmem %s165, 252
      %v697 = vld [vmem:[%s696] sm:$0xf]
      %v698 = vld [vmem:[%s696 + $0x4] sm:$0xf]
      %v699 = vld [vmem:[%s696 + $0x8] sm:$0x1]
      %v702 = vunpack.c.l.b16 %v693
      %v703 = vunpack.c.l.b16 %v694
      %v704 = vpack.c.b16 %v703, %v702
      %v707 = vunpack.c.l.b16 %v695
      %v708 = vpack.c.b16 %v707, %v707
      %v710 = vshrl.u32 %v704, 16
      %v712 = vshll.u32 %v704, 16
      %v714 = vrot.slane %v712, 1
      %v715 = vor.u32 %v710, %v714
      %v717 = vshll.u32 %v708, 16
      %v719 = vrot.slane %v717, 1
      %v720 = vsel %vm196, %v715, %v719
      %v724 = vunpack.c.l.b16 %v697
      %v725 = vunpack.c.l.b16 %v698
      %v726 = vpack.c.b16 %v725, %v724
      %v729 = vunpack.c.l.b16 %v699
      %v730 = vpack.c.b16 %v729, %v729
      %v732 = vshrl.u32 %v726, 16
      %v734 = vshll.u32 %v726, 16
      %v736 = vrot.slane %v734, 1
      %v737 = vor.u32 %v732, %v736
      %v739 = vshll.u32 %v730, 16
      %v741 = vrot.slane %v739, 1
      %v742 = vsel %vm196, %v737, %v741
      %s744 = scalar_lea.vmem %s165, 264
      %v745 = vld [vmem:[%s744] sm:$0xf]
      %v746 = vld [vmem:[%s744 + $0x4] sm:$0xf]
      %v747 = vld [vmem:[%s744 + $0x8] sm:$0x1]
      %s748 = scalar_lea.vmem %s165, 276
      %v749 = vld [vmem:[%s748] sm:$0xf]
      %v750 = vld [vmem:[%s748 + $0x4] sm:$0xf]
      %v751 = vld [vmem:[%s748 + $0x8] sm:$0x1]
      %v754 = vunpack.c.l.b16 %v745
      %v755 = vunpack.c.l.b16 %v746
      %v756 = vpack.c.b16 %v755, %v754
      %v759 = vunpack.c.l.b16 %v747
      %v760 = vpack.c.b16 %v759, %v759
      %v762 = vshrl.u32 %v756, 16
      %v764 = vshll.u32 %v756, 16
      %v766 = vrot.slane %v764, 1
      %v767 = vor.u32 %v762, %v766
      %v769 = vshll.u32 %v760, 16
      %v771 = vrot.slane %v769, 1
      %v772 = vsel %vm196, %v767, %v771
      %v776 = vunpack.c.l.b16 %v749
      %v777 = vunpack.c.l.b16 %v750
      %v778 = vpack.c.b16 %v777, %v776
      %v781 = vunpack.c.l.b16 %v751
      %v782 = vpack.c.b16 %v781, %v781
      %v784 = vshrl.u32 %v778, 16
      %v786 = vshll.u32 %v778, 16
      %v788 = vrot.slane %v786, 1
      %v789 = vor.u32 %v784, %v788
      %v791 = vshll.u32 %v782, 16
      %v793 = vrot.slane %v791, 1
      %v794 = vsel %vm196, %v789, %v793
      %s796 = scalar_lea.vmem %s165, 288
      %v797 = vld [vmem:[%s796] sm:$0xf]
      %v798 = vld [vmem:[%s796 + $0x4] sm:$0xf]
      %v799 = vld [vmem:[%s796 + $0x8] sm:$0x1]
      %s800 = scalar_lea.vmem %s165, 300
      %v801 = vld [vmem:[%s800] sm:$0xf]
      %v802 = vld [vmem:[%s800 + $0x4] sm:$0xf]
      %v803 = vld [vmem:[%s800 + $0x8] sm:$0x1]
      %v806 = vunpack.c.l.b16 %v797
      %v807 = vunpack.c.l.b16 %v798
      %v808 = vpack.c.b16 %v807, %v806
      %v811 = vunpack.c.l.b16 %v799
      %v812 = vpack.c.b16 %v811, %v811
      %v814 = vshrl.u32 %v808, 16
      %v816 = vshll.u32 %v808, 16
      %v818 = vrot.slane %v816, 1
      %v819 = vor.u32 %v814, %v818
      %v821 = vshll.u32 %v812, 16
      %v823 = vrot.slane %v821, 1
      %v824 = vsel %vm196, %v819, %v823
      %v828 = vunpack.c.l.b16 %v801
      %v829 = vunpack.c.l.b16 %v802
      %v830 = vpack.c.b16 %v829, %v828
      %v833 = vunpack.c.l.b16 %v803
      %v834 = vpack.c.b16 %v833, %v833
      %v836 = vshrl.u32 %v830, 16
      %v838 = vshll.u32 %v830, 16
      %v840 = vrot.slane %v838, 1
      %v841 = vor.u32 %v836, %v840
      %v843 = vshll.u32 %v834, 16
      %v845 = vrot.slane %v843, 1
      %v846 = vsel %vm196, %v841, %v845
      %s848 = scalar_lea.vmem %s165, 312
      %v849 = vld [vmem:[%s848] sm:$0xf]
      %v850 = vld [vmem:[%s848 + $0x4] sm:$0xf]
      %v851 = vld [vmem:[%s848 + $0x8] sm:$0x1]
      %s852 = scalar_lea.vmem %s165, 324
      %v853 = vld [vmem:[%s852] sm:$0xf]
      %v854 = vld [vmem:[%s852 + $0x4] sm:$0xf]
      %v855 = vld [vmem:[%s852 + $0x8] sm:$0x1]
      %v858 = vunpack.c.l.b16 %v849
      %v859 = vunpack.c.l.b16 %v850
      %v860 = vpack.c.b16 %v859, %v858
      %v863 = vunpack.c.l.b16 %v851
      %v864 = vpack.c.b16 %v863, %v863
      %v866 = vshrl.u32 %v860, 16
      %v868 = vshll.u32 %v860, 16
      %v870 = vrot.slane %v868, 1
      %v871 = vor.u32 %v866, %v870
      %v873 = vshll.u32 %v864, 16
      %v875 = vrot.slane %v873, 1
      %v876 = vsel %vm196, %v871, %v875
      %v880 = vunpack.c.l.b16 %v853
      %v881 = vunpack.c.l.b16 %v854
      %v882 = vpack.c.b16 %v881, %v880
      %v885 = vunpack.c.l.b16 %v855
      %v886 = vpack.c.b16 %v885, %v885
      %v888 = vshrl.u32 %v882, 16
      %v890 = vshll.u32 %v882, 16
      %v892 = vrot.slane %v890, 1
      %v893 = vor.u32 %v888, %v892
      %v895 = vshll.u32 %v886, 16
      %v897 = vrot.slane %v895, 1
      %v898 = vsel %vm196, %v893, %v897
      %s900 = scalar_lea.vmem %s165, 336
      %v901 = vld [vmem:[%s900] sm:$0xf]
      %v902 = vld [vmem:[%s900 + $0x4] sm:$0xf]
      %v903 = vld [vmem:[%s900 + $0x8] sm:$0x1]
      %s904 = scalar_lea.vmem %s165, 348
      %v905 = vld [vmem:[%s904] sm:$0xf]
      %v906 = vld [vmem:[%s904 + $0x4] sm:$0xf]
      %v907 = vld [vmem:[%s904 + $0x8] sm:$0x1]
      %v910 = vunpack.c.l.b16 %v901
      %v911 = vunpack.c.l.b16 %v902
      %v912 = vpack.c.b16 %v911, %v910
      %v915 = vunpack.c.l.b16 %v903
      %v916 = vpack.c.b16 %v915, %v915
      %v918 = vshrl.u32 %v912, 16
      %v920 = vshll.u32 %v912, 16
      %v922 = vrot.slane %v920, 1
      %v923 = vor.u32 %v918, %v922
      %v925 = vshll.u32 %v916, 16
      %v927 = vrot.slane %v925, 1
      %v928 = vsel %vm196, %v923, %v927
      %v932 = vunpack.c.l.b16 %v905
      %v933 = vunpack.c.l.b16 %v906
      %v934 = vpack.c.b16 %v933, %v932
      %v937 = vunpack.c.l.b16 %v907
      %v938 = vpack.c.b16 %v937, %v937
      %v940 = vshrl.u32 %v934, 16
      %v942 = vshll.u32 %v934, 16
      %v944 = vrot.slane %v942, 1
      %v945 = vor.u32 %v940, %v944
      %v947 = vshll.u32 %v938, 16
      %v949 = vrot.slane %v947, 1
      %v950 = vsel %vm196, %v945, %v949
      %s952 = scalar_lea.vmem %s165, 360
      %v953 = vld [vmem:[%s952] sm:$0xf]
      %v954 = vld [vmem:[%s952 + $0x4] sm:$0xf]
      %v955 = vld [vmem:[%s952 + $0x8] sm:$0x1]
      %s956 = scalar_lea.vmem %s165, 372
      %v957 = vld [vmem:[%s956] sm:$0xf]
      %v958 = vld [vmem:[%s956 + $0x4] sm:$0xf]
      %v959 = vld [vmem:[%s956 + $0x8] sm:$0x1]
      %v962 = vunpack.c.l.b16 %v953
      %v963 = vunpack.c.l.b16 %v954
      %v964 = vpack.c.b16 %v963, %v962
      %v967 = vunpack.c.l.b16 %v955
      %v968 = vpack.c.b16 %v967, %v967
      %v970 = vshrl.u32 %v964, 16
      %v972 = vshll.u32 %v964, 16
      %v974 = vrot.slane %v972, 1
      %v975 = vor.u32 %v970, %v974
      %v977 = vshll.u32 %v968, 16
      %v979 = vrot.slane %v977, 1
      %v980 = vsel %vm196, %v975, %v979
      %v984 = vunpack.c.l.b16 %v957
      %v985 = vunpack.c.l.b16 %v958
      %v986 = vpack.c.b16 %v985, %v984
      %v989 = vunpack.c.l.b16 %v959
      %v990 = vpack.c.b16 %v989, %v989
      %v992 = vshrl.u32 %v986, 16
      %v994 = vshll.u32 %v986, 16
      %v996 = vrot.slane %v994, 1
      %v997 = vor.u32 %v992, %v996
      %v999 = vshll.u32 %v990, 16
      %v1001 = vrot.slane %v999, 1
      %v1002 = vsel %vm196, %v997, %v1001
      %s1004 = scalar_lea.vmem %s165, 384
      %v1005 = vld [vmem:[%s1004] sm:$0xf]
      %v1006 = vld [vmem:[%s1004 + $0x4] sm:$0xf]
      %v1007 = vld [vmem:[%s1004 + $0x8] sm:$0x1]
      %s1008 = scalar_lea.vmem %s165, 396
      %v1009 = vld [vmem:[%s1008] sm:$0xf]
      %v1010 = vld [vmem:[%s1008 + $0x4] sm:$0xf]
      %v1011 = vld [vmem:[%s1008 + $0x8] sm:$0x1]
      %v1014 = vunpack.c.l.b16 %v1005
      %v1015 = vunpack.c.l.b16 %v1006
      %v1016 = vpack.c.b16 %v1015, %v1014
      %v1019 = vunpack.c.l.b16 %v1007
      %v1020 = vpack.c.b16 %v1019, %v1019
      %v1022 = vshrl.u32 %v1016, 16
      %v1024 = vshll.u32 %v1016, 16
      %v1026 = vrot.slane %v1024, 1
      %v1027 = vor.u32 %v1022, %v1026
      %v1029 = vshll.u32 %v1020, 16
      %v1031 = vrot.slane %v1029, 1
      %v1032 = vsel %vm196, %v1027, %v1031
      %v1036 = vunpack.c.l.b16 %v1009
      %v1037 = vunpack.c.l.b16 %v1010
      %v1038 = vpack.c.b16 %v1037, %v1036
      %v1041 = vunpack.c.l.b16 %v1011
      %v1042 = vpack.c.b16 %v1041, %v1041
      %v1044 = vshrl.u32 %v1038, 16
      %v1046 = vshll.u32 %v1038, 16
      %v1048 = vrot.slane %v1046, 1
      %v1049 = vor.u32 %v1044, %v1048
      %v1051 = vshll.u32 %v1042, 16
      %v1053 = vrot.slane %v1051, 1
      %v1054 = vsel %vm196, %v1049, %v1053
      %v1056 = vld [vmem:[%s1] sm:$0xf]
      %v1057 = vld [vmem:[%s1 + $0x4] sm:$0xf]
      %v1058 = vld [vmem:[%s1 + $0x8] sm:$0xf]
      %v1059 = vld [vmem:[%s1 + $0xc] sm:$0xf]
      %v1060 = vld [vmem:[%s1 + $0x10] sm:$0xf]
      %v1061 = vld [vmem:[%s1 + $0x14] sm:$0xf]
      %v1062 = vld [vmem:[%s1 + $0x18] sm:$0xf]
      %v1063 = vld [vmem:[%s1 + $0x1c] sm:$0xf]
      %v1064 = vld [vmem:[%s1 + $0x20] sm:$0xf]
      %v1065 = vld [vmem:[%s1 + $0x24] sm:$0xf]
      %v1066 = vld [vmem:[%s1 + $0x28] sm:$0xf]
      %v1067 = vld [vmem:[%s1 + $0x2c] sm:$0xf]
      %v1068 = vld [vmem:[%s1 + $0x30] sm:$0xf]
      %v1069 = vld [vmem:[%s1 + $0x34] sm:$0xf]
      %v1070 = vld [vmem:[%s1 + $0x38] sm:$0xf]
      %v1071 = vld [vmem:[%s1 + $0x3c] sm:$0xf]
      %v1072 = vld [vmem:[%s1 + $0x40] sm:$0xf]
      %v1073 = vld [vmem:[%s1 + $0x44] sm:$0xf]
      %v1074 = vld [vmem:[%s1 + $0x48] sm:$0xf]
      %v1075 = vld [vmem:[%s1 + $0x4c] sm:$0xf]
      %v1076 = vld [vmem:[%s1 + $0x50] sm:$0xf]
      %v1077 = vld [vmem:[%s1 + $0x54] sm:$0xf]
      %v1078 = vld [vmem:[%s1 + $0x58] sm:$0xf]
      %v1079 = vld [vmem:[%s1 + $0x5c] sm:$0xf]
      %v1080 = vld [vmem:[%s1 + $0x60] sm:$0xf]
      %v1081 = vld [vmem:[%s1 + $0x64] sm:$0xf]
      %v1082 = vld [vmem:[%s1 + $0x68] sm:$0xf]
      %v1083 = vld [vmem:[%s1 + $0x6c] sm:$0xf]
      %v1084 = vld [vmem:[%s1 + $0x70] sm:$0xf]
      %v1085 = vld [vmem:[%s1 + $0x74] sm:$0xf]
      %v1086 = vld [vmem:[%s1 + $0x78] sm:$0xf]
      %v1087 = vld [vmem:[%s1 + $0x7c] sm:$0xf]
      %v1088 = vld [vmem:[%s1 + $0x80] sm:$0xf]
      %v1089 = vld [vmem:[%s1 + $0x84] sm:$0xf]
      %v1090 = vld [vmem:[%s1 + $0x88] sm:$0xf]
      %v1091 = vld [vmem:[%s1 + $0x8c] sm:$0xf]
      %v1092 = vld [vmem:[%s1 + $0x90] sm:$0xf]
      %v1093 = vld [vmem:[%s1 + $0x94] sm:$0xf]
      %v1094 = vld [vmem:[%s1 + $0x98] sm:$0xf]
      %v1095 = vld [vmem:[%s1 + $0x9c] sm:$0xf]
      %v1096 = vld [vmem:[%s1 + $0xa0] sm:$0xf]
      %v1097 = vld [vmem:[%s1 + $0xa4] sm:$0xf]
      %v1098 = vld [vmem:[%s1 + $0xa8] sm:$0xf]
      %v1099 = vld [vmem:[%s1 + $0xac] sm:$0xf]
      %v1100 = vld [vmem:[%s1 + $0xb0] sm:$0xf]
      %v1101 = vld [vmem:[%s1 + $0xb4] sm:$0xf]
      %v1102 = vld [vmem:[%s1 + $0xb8] sm:$0xf]
      %v1103 = vld [vmem:[%s1 + $0xbc] sm:$0xf]
      %v1104 = vld [vmem:[%s1 + $0xc0] sm:$0xf]
      %v1105 = vld [vmem:[%s1 + $0xc4] sm:$0xf]
      %v1106 = vld [vmem:[%s1 + $0xc8] sm:$0xf]
      %v1107 = vld [vmem:[%s1 + $0xcc] sm:$0xf]
      %v1108 = vld [vmem:[%s1 + $0xd0] sm:$0xf]
      %v1109 = vld [vmem:[%s1 + $0xd4] sm:$0xf]
      %v1110 = vld [vmem:[%s1 + $0xd8] sm:$0xf]
      %v1111 = vld [vmem:[%s1 + $0xdc] sm:$0xf]
      %v1112 = vld [vmem:[%s1 + $0xe0] sm:$0xf]
      %v1113 = vld [vmem:[%s1 + $0xe4] sm:$0xf]
      %v1114 = vld [vmem:[%s1 + $0xe8] sm:$0xf]
      %v1115 = vld [vmem:[%s1 + $0xec] sm:$0xf]
      %v1116 = vld [vmem:[%s1 + $0xf0] sm:$0xf]
      %v1117 = vld [vmem:[%s1 + $0xf4] sm:$0xf]
      %v1118 = vld [vmem:[%s1 + $0xf8] sm:$0xf]
      %v1119 = vld [vmem:[%s1 + $0xfc] sm:$0xf]
      %v1120 = vld [vmem:[%s1 + $0x100] sm:$0xf]
      %v1121 = vld [vmem:[%s1 + $0x104] sm:$0xf]
      %v1122 = vld [vmem:[%s1 + $0x108] sm:$0xf]
      %v1123 = vld [vmem:[%s1 + $0x10c] sm:$0xf]
      %v1124 = vld [vmem:[%s1 + $0x110] sm:$0xf]
      %v1125 = vld [vmem:[%s1 + $0x114] sm:$0xf]
      %v1126 = vld [vmem:[%s1 + $0x118] sm:$0xf]
      %v1127 = vld [vmem:[%s1 + $0x11c] sm:$0xf]
      %v1128 = vld [vmem:[%s1 + $0x120] sm:$0xf]
      %v1129 = vld [vmem:[%s1 + $0x124] sm:$0xf]
      %v1130 = vld [vmem:[%s1 + $0x128] sm:$0xf]
      %v1131 = vld [vmem:[%s1 + $0x12c] sm:$0xf]
      %v1132 = vld [vmem:[%s1 + $0x130] sm:$0xf]
      %v1133 = vld [vmem:[%s1 + $0x134] sm:$0xf]
      %v1134 = vld [vmem:[%s1 + $0x138] sm:$0xf]
      %v1135 = vld [vmem:[%s1 + $0x13c] sm:$0xf]
      %v1136 = vld [vmem:[%s1 + $0x140] sm:$0xf]
      %v1137 = vld [vmem:[%s1 + $0x144] sm:$0xf]
      %v1138 = vld [vmem:[%s1 + $0x148] sm:$0xf]
      %v1139 = vld [vmem:[%s1 + $0x14c] sm:$0xf]
      %v1140 = vld [vmem:[%s1 + $0x150] sm:$0xf]
      %v1141 = vld [vmem:[%s1 + $0x154] sm:$0xf]
      %v1142 = vld [vmem:[%s1 + $0x158] sm:$0xf]
      %v1143 = vld [vmem:[%s1 + $0x15c] sm:$0xf]
      %v1144 = vld [vmem:[%s1 + $0x160] sm:$0xf]
      %v1145 = vld [vmem:[%s1 + $0x164] sm:$0xf]
      %v1146 = vld [vmem:[%s1 + $0x168] sm:$0xf]
      %v1147 = vld [vmem:[%s1 + $0x16c] sm:$0xf]
      %v1148 = vld [vmem:[%s1 + $0x170] sm:$0xf]
      %v1149 = vld [vmem:[%s1 + $0x174] sm:$0xf]
      %v1150 = vld [vmem:[%s1 + $0x178] sm:$0xf]
      %v1151 = vld [vmem:[%s1 + $0x17c] sm:$0xf]
      %v1152 = vld [vmem:[%s1 + $0x180] sm:$0xf]
      %v1153 = vld [vmem:[%s1 + $0x184] sm:$0xf]
      %v1154 = vld [vmem:[%s1 + $0x188] sm:$0xf]
      %v1155 = vld [vmem:[%s1 + $0x18c] sm:$0xf]
      %v1156 = vld [vmem:[%s1 + $0x190] sm:$0xf]
      %v1157 = vld [vmem:[%s1 + $0x194] sm:$0xf]
      %v1158 = vld [vmem:[%s1 + $0x198] sm:$0xf]
      %v1159 = vld [vmem:[%s1 + $0x19c] sm:$0xf]
      %v1160 = vld [vmem:[%s1 + $0x1a0] sm:$0xf]
      %v1161 = vld [vmem:[%s1 + $0x1a4] sm:$0xf]
      %v1162 = vld [vmem:[%s1 + $0x1a8] sm:$0xf]
      %v1163 = vld [vmem:[%s1 + $0x1ac] sm:$0xf]
      %v1164 = vld [vmem:[%s1 + $0x1b0] sm:$0xf]
      %v1165 = vld [vmem:[%s1 + $0x1b4] sm:$0xf]
      %v1166 = vld [vmem:[%s1 + $0x1b8] sm:$0xf]
      %v1167 = vld [vmem:[%s1 + $0x1bc] sm:$0xf]
      %v1168 = vld [vmem:[%s1 + $0x1c0] sm:$0xf]
      %v1169 = vld [vmem:[%s1 + $0x1c4] sm:$0xf]
      %v1170 = vld [vmem:[%s1 + $0x1c8] sm:$0xf]
      %v1171 = vld [vmem:[%s1 + $0x1cc] sm:$0xf]
      %v1172 = vld [vmem:[%s1 + $0x1d0] sm:$0xf]
      %v1173 = vld [vmem:[%s1 + $0x1d4] sm:$0xf]
      %v1174 = vld [vmem:[%s1 + $0x1d8] sm:$0xf]
      %v1175 = vld [vmem:[%s1 + $0x1dc] sm:$0xf]
      %v1176 = vld [vmem:[%s1 + $0x1e0] sm:$0xf]
      %v1177 = vld [vmem:[%s1 + $0x1e4] sm:$0xf]
      %v1178 = vld [vmem:[%s1 + $0x1e8] sm:$0xf]
      %v1179 = vld [vmem:[%s1 + $0x1ec] sm:$0xf]
      %v1180 = vld [vmem:[%s1 + $0x1f0] sm:$0xf]
      %v1181 = vld [vmem:[%s1 + $0x1f4] sm:$0xf]
      %v1182 = vld [vmem:[%s1 + $0x1f8] sm:$0xf]
      %v1183 = vld [vmem:[%s1 + $0x1fc] sm:$0xf]
      %v1184 = vld [vmem:[%s2] sm:$0x1]
      %v1186 = vlaneseq
      %v1187 = vshrl.u32 %v1186, 7
      %v1188 = vsub.s32 0, %v1187
      %v1189 = vrot.slane %v1184, %v1188
      %v1319 = vunpack.c.l.b16 %v1056
      %v1320 = vunpack.c.l.b16 %v1057
      %v1321 = vunpack.c.l.b16 %v1058
      %v1322 = vunpack.c.l.b16 %v1059
      %v1323 = vunpack.c.l.b16 %v1060
      %v1324 = vunpack.c.l.b16 %v1061
      %v1325 = vunpack.c.l.b16 %v1062
      %v1326 = vunpack.c.l.b16 %v1063
      %v1327 = vunpack.c.l.b16 %v1064
      %v1328 = vunpack.c.l.b16 %v1065
      %v1329 = vunpack.c.l.b16 %v1066
      %v1330 = vunpack.c.l.b16 %v1067
      %v1331 = vunpack.c.l.b16 %v1068
      %v1332 = vunpack.c.l.b16 %v1069
      %v1333 = vunpack.c.l.b16 %v1070
      %v1334 = vunpack.c.l.b16 %v1071
      %v1335 = vunpack.c.l.b16 %v1072
      %v1336 = vunpack.c.l.b16 %v1073
      %v1337 = vunpack.c.l.b16 %v1074
      %v1338 = vunpack.c.l.b16 %v1075
      %v1339 = vunpack.c.l.b16 %v1076
      %v1340 = vunpack.c.l.b16 %v1077
      %v1341 = vunpack.c.l.b16 %v1078
      %v1342 = vunpack.c.l.b16 %v1079
      %v1343 = vunpack.c.l.b16 %v1080
      %v1344 = vunpack.c.l.b16 %v1081
      %v1345 = vunpack.c.l.b16 %v1082
      %v1346 = vunpack.c.l.b16 %v1083
      %v1347 = vunpack.c.l.b16 %v1084
      %v1348 = vunpack.c.l.b16 %v1085
      %v1349 = vunpack.c.l.b16 %v1086
      %v1350 = vunpack.c.l.b16 %v1087
      %v1351 = vunpack.c.l.b16 %v1088
      %v1352 = vunpack.c.l.b16 %v1089
      %v1353 = vunpack.c.l.b16 %v1090
      %v1354 = vunpack.c.l.b16 %v1091
      %v1355 = vunpack.c.l.b16 %v1092
      %v1356 = vunpack.c.l.b16 %v1093
      %v1357 = vunpack.c.l.b16 %v1094
      %v1358 = vunpack.c.l.b16 %v1095
      %v1359 = vunpack.c.l.b16 %v1096
      %v1360 = vunpack.c.l.b16 %v1097
      %v1361 = vunpack.c.l.b16 %v1098
      %v1362 = vunpack.c.l.b16 %v1099
      %v1363 = vunpack.c.l.b16 %v1100
      %v1364 = vunpack.c.l.b16 %v1101
      %v1365 = vunpack.c.l.b16 %v1102
      %v1366 = vunpack.c.l.b16 %v1103
      %v1367 = vunpack.c.l.b16 %v1104
      %v1368 = vunpack.c.l.b16 %v1105
      %v1369 = vunpack.c.l.b16 %v1106
      %v1370 = vunpack.c.l.b16 %v1107
      %v1371 = vunpack.c.l.b16 %v1108
      %v1372 = vunpack.c.l.b16 %v1109
      %v1373 = vunpack.c.l.b16 %v1110
      %v1374 = vunpack.c.l.b16 %v1111
      %v1375 = vunpack.c.l.b16 %v1112
      %v1376 = vunpack.c.l.b16 %v1113
      %v1377 = vunpack.c.l.b16 %v1114
      %v1378 = vunpack.c.l.b16 %v1115
      %v1379 = vunpack.c.l.b16 %v1116
      %v1380 = vunpack.c.l.b16 %v1117
      %v1381 = vunpack.c.l.b16 %v1118
      %v1382 = vunpack.c.l.b16 %v1119
      %v1383 = vunpack.c.l.b16 %v1120
      %v1384 = vunpack.c.l.b16 %v1121
      %v1385 = vunpack.c.l.b16 %v1122
      %v1386 = vunpack.c.l.b16 %v1123
      %v1387 = vunpack.c.l.b16 %v1124
      %v1388 = vunpack.c.l.b16 %v1125
      %v1389 = vunpack.c.l.b16 %v1126
      %v1390 = vunpack.c.l.b16 %v1127
      %v1391 = vunpack.c.l.b16 %v1128
      %v1392 = vunpack.c.l.b16 %v1129
      %v1393 = vunpack.c.l.b16 %v1130
      %v1394 = vunpack.c.l.b16 %v1131
      %v1395 = vunpack.c.l.b16 %v1132
      %v1396 = vunpack.c.l.b16 %v1133
      %v1397 = vunpack.c.l.b16 %v1134
      %v1398 = vunpack.c.l.b16 %v1135
      %v1399 = vunpack.c.l.b16 %v1136
      %v1400 = vunpack.c.l.b16 %v1137
      %v1401 = vunpack.c.l.b16 %v1138
      %v1402 = vunpack.c.l.b16 %v1139
      %v1403 = vunpack.c.l.b16 %v1140
      %v1404 = vunpack.c.l.b16 %v1141
      %v1405 = vunpack.c.l.b16 %v1142
      %v1406 = vunpack.c.l.b16 %v1143
      %v1407 = vunpack.c.l.b16 %v1144
      %v1408 = vunpack.c.l.b16 %v1145
      %v1409 = vunpack.c.l.b16 %v1146
      %v1410 = vunpack.c.l.b16 %v1147
      %v1411 = vunpack.c.l.b16 %v1148
      %v1412 = vunpack.c.l.b16 %v1149
      %v1413 = vunpack.c.l.b16 %v1150
      %v1414 = vunpack.c.l.b16 %v1151
      %v1415 = vunpack.c.l.b16 %v1152
      %v1416 = vunpack.c.l.b16 %v1153
      %v1417 = vunpack.c.l.b16 %v1154
      %v1418 = vunpack.c.l.b16 %v1155
      %v1419 = vunpack.c.l.b16 %v1156
      %v1420 = vunpack.c.l.b16 %v1157
      %v1421 = vunpack.c.l.b16 %v1158
      %v1422 = vunpack.c.l.b16 %v1159
      %v1423 = vunpack.c.l.b16 %v1160
      %v1424 = vunpack.c.l.b16 %v1161
      %v1425 = vunpack.c.l.b16 %v1162
      %v1426 = vunpack.c.l.b16 %v1163
      %v1427 = vunpack.c.l.b16 %v1164
      %v1428 = vunpack.c.l.b16 %v1165
      %v1429 = vunpack.c.l.b16 %v1166
      %v1430 = vunpack.c.l.b16 %v1167
      %v1431 = vunpack.c.l.b16 %v1168
      %v1432 = vunpack.c.l.b16 %v1169
      %v1433 = vunpack.c.l.b16 %v1170
      %v1434 = vunpack.c.l.b16 %v1171
      %v1435 = vunpack.c.l.b16 %v1172
      %v1436 = vunpack.c.l.b16 %v1173
      %v1437 = vunpack.c.l.b16 %v1174
      %v1438 = vunpack.c.l.b16 %v1175
      %v1439 = vunpack.c.l.b16 %v1176
      %v1440 = vunpack.c.l.b16 %v1177
      %v1441 = vunpack.c.l.b16 %v1178
      %v1442 = vunpack.c.l.b16 %v1179
      %v1443 = vunpack.c.l.b16 %v1180
      %v1444 = vunpack.c.l.b16 %v1181
      %v1445 = vunpack.c.l.b16 %v1182
      %v1446 = vunpack.c.l.b16 %v1183
      %v1447 = vpack.c.b16 %v1320, %v1319
      %v1448 = vpack.c.b16 %v1322, %v1321
      %v1449 = vpack.c.b16 %v1324, %v1323
      %v1450 = vpack.c.b16 %v1326, %v1325
      %v1451 = vpack.c.b16 %v1328, %v1327
      %v1452 = vpack.c.b16 %v1330, %v1329
      %v1453 = vpack.c.b16 %v1332, %v1331
      %v1454 = vpack.c.b16 %v1334, %v1333
      %v1455 = vpack.c.b16 %v1336, %v1335
      %v1456 = vpack.c.b16 %v1338, %v1337
      %v1457 = vpack.c.b16 %v1340, %v1339
      %v1458 = vpack.c.b16 %v1342, %v1341
      %v1459 = vpack.c.b16 %v1344, %v1343
      %v1460 = vpack.c.b16 %v1346, %v1345
      %v1461 = vpack.c.b16 %v1348, %v1347
      %v1462 = vpack.c.b16 %v1350, %v1349
      %v1463 = vpack.c.b16 %v1352, %v1351
      %v1464 = vpack.c.b16 %v1354, %v1353
      %v1465 = vpack.c.b16 %v1356, %v1355
      %v1466 = vpack.c.b16 %v1358, %v1357
      %v1467 = vpack.c.b16 %v1360, %v1359
      %v1468 = vpack.c.b16 %v1362, %v1361
      %v1469 = vpack.c.b16 %v1364, %v1363
      %v1470 = vpack.c.b16 %v1366, %v1365
      %v1471 = vpack.c.b16 %v1368, %v1367
      %v1472 = vpack.c.b16 %v1370, %v1369
      %v1473 = vpack.c.b16 %v1372, %v1371
      %v1474 = vpack.c.b16 %v1374, %v1373
      %v1475 = vpack.c.b16 %v1376, %v1375
      %v1476 = vpack.c.b16 %v1378, %v1377
      %v1477 = vpack.c.b16 %v1380, %v1379
      %v1478 = vpack.c.b16 %v1382, %v1381
      %v1479 = vpack.c.b16 %v1384, %v1383
      %v1480 = vpack.c.b16 %v1386, %v1385
      %v1481 = vpack.c.b16 %v1388, %v1387
      %v1482 = vpack.c.b16 %v1390, %v1389
      %v1483 = vpack.c.b16 %v1392, %v1391
      %v1484 = vpack.c.b16 %v1394, %v1393
      %v1485 = vpack.c.b16 %v1396, %v1395
      %v1486 = vpack.c.b16 %v1398, %v1397
      %v1487 = vpack.c.b16 %v1400, %v1399
      %v1488 = vpack.c.b16 %v1402, %v1401
      %v1489 = vpack.c.b16 %v1404, %v1403
      %v1490 = vpack.c.b16 %v1406, %v1405
      %v1491 = vpack.c.b16 %v1408, %v1407
      %v1492 = vpack.c.b16 %v1410, %v1409
      %v1493 = vpack.c.b16 %v1412, %v1411
      %v1494 = vpack.c.b16 %v1414, %v1413
      %v1495 = vpack.c.b16 %v1416, %v1415
      %v1496 = vpack.c.b16 %v1418, %v1417
      %v1497 = vpack.c.b16 %v1420, %v1419
      %v1498 = vpack.c.b16 %v1422, %v1421
      %v1499 = vpack.c.b16 %v1424, %v1423
      %v1500 = vpack.c.b16 %v1426, %v1425
      %v1501 = vpack.c.b16 %v1428, %v1427
      %v1502 = vpack.c.b16 %v1430, %v1429
      %v1503 = vpack.c.b16 %v1432, %v1431
      %v1504 = vpack.c.b16 %v1434, %v1433
      %v1505 = vpack.c.b16 %v1436, %v1435
      %v1506 = vpack.c.b16 %v1438, %v1437
      %v1507 = vpack.c.b16 %v1440, %v1439
      %v1508 = vpack.c.b16 %v1442, %v1441
      %v1509 = vpack.c.b16 %v1444, %v1443
      %v1510 = vpack.c.b16 %v1446, %v1445
      %1575 = vmatprep.subr.bf16.mxu0 0
      %1576 = vmatpush1.bf16.msra.mxu0 %v1447
      %1577 = vmatprep.subr.bf16.mxu0 0
      %1578 = vmatpush1.bf16.msra.mxu0 %v1448
      %1579 = vmatprep.subr.bf16.mxu0 0
      %1580 = vmatpush1.bf16.msra.mxu0 %v1449
      %1581 = vmatprep.subr.bf16.mxu0 0
      %1582 = vmatpush1.bf16.msra.mxu0 %v1450
      %1583 = vmatprep.subr.bf16.mxu0 0
      %1584 = vmatpush1.bf16.msra.mxu0 %v1451
      %1585 = vmatprep.subr.bf16.mxu0 0
      %1586 = vmatpush1.bf16.msra.mxu0 %v1452
      %1587 = vmatprep.subr.bf16.mxu0 0
      %1588 = vmatpush1.bf16.msra.mxu0 %v1453
      %1589 = vmatprep.subr.bf16.mxu0 0
      %1590 = vmatpush1.bf16.msra.mxu0 %v1454
      %1591 = vmatprep.subr.bf16.mxu0 0
      %1592 = vmatpush1.bf16.msra.mxu0 %v1455
      %1593 = vmatprep.subr.bf16.mxu0 0
      %1594 = vmatpush1.bf16.msra.mxu0 %v1456
      %1595 = vmatprep.subr.bf16.mxu0 0
      %1596 = vmatpush1.bf16.msra.mxu0 %v1457
      %1597 = vmatprep.subr.bf16.mxu0 0
      %1598 = vmatpush1.bf16.msra.mxu0 %v1458
      %1599 = vmatprep.subr.bf16.mxu0 0
      %1600 = vmatpush1.bf16.msra.mxu0 %v1459
      %1601 = vmatprep.subr.bf16.mxu0 0
      %1602 = vmatpush1.bf16.msra.mxu0 %v1460
      %1603 = vmatprep.subr.bf16.mxu0 0
      %1604 = vmatpush1.bf16.msra.mxu0 %v1461
      %1605 = vmatprep.subr.bf16.mxu0 0
      %1606 = vmatpush1.bf16.msra.mxu0 %v1462
      %1607 = vmatprep.mubr.bf16.mxu0 %v208
      %1608 = vmatmul.mubr.bf16.gmra.mrb[0].mxu0 %v191
      %v1609 = vpop.f32.mrb[0].mxu0
      %v1610 = vadd.f32 %v1189, %v1609
      %v1611 = vpop.f32.mrb[0].mxu0
      %v1612 = vpop.f32.mrb[0].mxu0
      %v1613 = vadd.f32 %v1189, %v1612
      %v1614 = vpop.f32.mrb[0].mxu0
      %1615 = vmatprep.mubr.bf16.mxu0 %v252
      %1616 = vmatmul.mubr.bf16.gmra.mrb[0].mxu0 %v236
      %v1617 = vpop.f32.mrb[0].mxu0
      %v1618 = vadd.f32 %v1189, %v1617
      %v1619 = vpop.f32.mrb[0].mxu0
      %v1620 = vpop.f32.mrb[0].mxu0
      %v1621 = vadd.f32 %v1189, %v1620
      %v1622 = vpop.f32.mrb[0].mxu0
      %1623 = vmatprep.mubr.bf16.mxu0 %v304
      %1624 = vmatmul.mubr.bf16.gmra.mrb[0].mxu0 %v288
      %v1625 = vpop.f32.mrb[0].mxu0
      %v1626 = vadd.f32 %v1189, %v1625
      %v1627 = vpop.f32.mrb[0].mxu0
      %v1628 = vpop.f32.mrb[0].mxu0
      %v1629 = vadd.f32 %v1189, %v1628
      %v1630 = vpop.f32.mrb[0].mxu0
      %1631 = vmatprep.mubr.bf16.mxu0 %v356
      %1632 = vmatmul.mubr.bf16.gmra.mrb[0].mxu0 %v340
      %v1633 = vpop.f32.mrb[0].mxu0
      %v1634 = vadd.f32 %v1189, %v1633
      %v1635 = vpop.f32.mrb[0].mxu0
      %v1636 = vpop.f32.mrb[0].mxu0
      %v1637 = vadd.f32 %v1189, %v1636
      %v1638 = vpop.f32.mrb[0].mxu0
      %1639 = vmatprep.mubr.bf16.mxu0 %v408
      %1640 = vmatmul.mubr.bf16.gmra.mrb[0].mxu0 %v392
      %v1641 = vpop.f32.mrb[0].mxu0
      %v1642 = vadd.f32 %v1189, %v1641
      %v1643 = vpop.f32.mrb[0].mxu0
      %v1644 = vpop.f32.mrb[0].mxu0
      %v1645 = vadd.f32 %v1189, %v1644
      %v1646 = vpop.f32.mrb[0].mxu0
      %1647 = vmatprep.mubr.bf16.mxu0 %v460
      %1648 = vmatmul.mubr.bf16.gmra.mrb[0].mxu0 %v444
      %v1649 = vpop.f32.mrb[0].mxu0
      %v1650 = vadd.f32 %v1189, %v1649
      %v1651 = vpop.f32.mrb[0].mxu0
      %v1652 = vpop.f32.mrb[0].mxu0
      %v1653 = vadd.f32 %v1189, %v1652
      %v1654 = vpop.f32.mrb[0].mxu0
      %1655 = vmatprep.mubr.bf16.mxu0 %v512
      %1656 = vmatmul.mubr.bf16.gmra.mrb[0].mxu0 %v496
      %v1657 = vpop.f32.mrb[0].mxu0
      %v1658 = vadd.f32 %v1189, %v1657
      %v1659 = vpop.f32.mrb[0].mxu0
      %v1660 = vpop.f32.mrb[0].mxu0
      %v1661 = vadd.f32 %v1189, %v1660
      %v1662 = vpop.f32.mrb[0].mxu0
      %1663 = vmatprep.mubr.bf16.mxu0 %v564
      %1664 = vmatmul.mubr.bf16.gmra.mrb[0].mxu0 %v548
      %v1665 = vpop.f32.mrb[0].mxu0
      %v1666 = vadd.f32 %v1189, %v1665
      %v1667 = vpop.f32.mrb[0].mxu0
      %v1668 = vpop.f32.mrb[0].mxu0
      %v1669 = vadd.f32 %v1189, %v1668
      %v1670 = vpop.f32.mrb[0].mxu0
      %1671 = vmatprep.mubr.bf16.mxu0 %v616
      %1672 = vmatmul.mubr.bf16.gmra.mrb[0].mxu0 %v600
      %v1673 = vpop.f32.mrb[0].mxu0
      %v1674 = vadd.f32 %v1189, %v1673
      %v1675 = vpop.f32.mrb[0].mxu0
      %v1676 = vpop.f32.mrb[0].mxu0
      %v1677 = vadd.f32 %v1189, %v1676
      %v1678 = vpop.f32.mrb[0].mxu0
      %1679 = vmatprep.mubr.bf16.mxu0 %v668
      %1680 = vmatmul.mubr.bf16.gmra.mrb[0].mxu0 %v652
      %v1681 = vpop.f32.mrb[0].mxu0
      %v1682 = vadd.f32 %v1189, %v1681
      %v1683 = vpop.f32.mrb[0].mxu0
      %v1684 = vpop.f32.mrb[0].mxu0
      %v1685 = vadd.f32 %v1189, %v1684
      %v1686 = vpop.f32.mrb[0].mxu0
      %1687 = vmatprep.mubr.bf16.mxu0 %v720
      %1688 = vmatmul.mubr.bf16.gmra.mrb[0].mxu0 %v704
      %v1689 = vpop.f32.mrb[0].mxu0
      %v1690 = vadd.f32 %v1189, %v1689
      %v1691 = vpop.f32.mrb[0].mxu0
      %v1692 = vpop.f32.mrb[0].mxu0
      %v1693 = vadd.f32 %v1189, %v1692
      %v1694 = vpop.f32.mrb[0].mxu0
      %1695 = vmatprep.mubr.bf16.mxu0 %v772
      %1696 = vmatmul.mubr.bf16.gmra.mrb[0].mxu0 %v756
      %v1697 = vpop.f32.mrb[0].mxu0
      %v1698 = vadd.f32 %v1189, %v1697
      %v1699 = vpop.f32.mrb[0].mxu0
      %v1700 = vpop.f32.mrb[0].mxu0
      %v1701 = vadd.f32 %v1189, %v1700
      %v1702 = vpop.f32.mrb[0].mxu0
      %1703 = vmatprep.mubr.bf16.mxu0 %v824
      %1704 = vmatmul.mubr.bf16.gmra.mrb[0].mxu0 %v808
      %v1705 = vpop.f32.mrb[0].mxu0
      %v1706 = vadd.f32 %v1189, %v1705
      %v1707 = vpop.f32.mrb[0].mxu0
      %v1708 = vpop.f32.mrb[0].mxu0
      %v1709 = vadd.f32 %v1189, %v1708
      %v1710 = vpop.f32.mrb[0].mxu0
      %1711 = vmatprep.mubr.bf16.mxu0 %v876
      %1712 = vmatmul.mubr.bf16.gmra.mrb[0].mxu0 %v860
      %v1713 = vpop.f32.mrb[0].mxu0
      %v1714 = vadd.f32 %v1189, %v1713
      %v1715 = vpop.f32.mrb[0].mxu0
      %v1716 = vpop.f32.mrb[0].mxu0
      %v1717 = vadd.f32 %v1189, %v1716
      %v1718 = vpop.f32.mrb[0].mxu0
      %1719 = vmatprep.mubr.bf16.mxu0 %v928
      %1720 = vmatmul.mubr.bf16.gmra.mrb[0].mxu0 %v912
      %v1721 = vpop.f32.mrb[0].mxu0
      %v1722 = vadd.f32 %v1189, %v1721
      %v1723 = vpop.f32.mrb[0].mxu0
      %v1724 = vpop.f32.mrb[0].mxu0
      %v1725 = vadd.f32 %v1189, %v1724
      %v1726 = vpop.f32.mrb[0].mxu0
      %1727 = vmatprep.mubr.bf16.mxu0 %v980
      %1728 = vmatmul.mubr.bf16.gmra.mrb[0].mxu0 %v964
      %v1729 = vpop.f32.mrb[0].mxu0
      %v1730 = vadd.f32 %v1189, %v1729
      %v1731 = vpop.f32.mrb[0].mxu0
      %v1732 = vpop.f32.mrb[0].mxu0
      %v1733 = vadd.f32 %v1189, %v1732
      %v1734 = vpop.f32.mrb[0].mxu0
      %1735 = vdwg.mxu0
      %1736 = vmatprep.subr.bf16.mxu0 0
      %1737 = vmatpush1.bf16.msra.mxu0 %v1463
      %1738 = vmatprep.subr.bf16.mxu0 0
      %1739 = vmatpush1.bf16.msra.mxu0 %v1464
      %1740 = vmatprep.subr.bf16.mxu0 0
      %1741 = vmatpush1.bf16.msra.mxu0 %v1465
      %1742 = vmatprep.subr.bf16.mxu0 0
      %1743 = vmatpush1.bf16.msra.mxu0 %v1466
      %1744 = vmatprep.subr.bf16.mxu0 0
      %1745 = vmatpush1.bf16.msra.mxu0 %v1467
      %1746 = vmatprep.subr.bf16.mxu0 0
      %1747 = vmatpush1.bf16.msra.mxu0 %v1468
      %1748 = vmatprep.subr.bf16.mxu0 0
      %1749 = vmatpush1.bf16.msra.mxu0 %v1469
      %1750 = vmatprep.subr.bf16.mxu0 0
      %1751 = vmatpush1.bf16.msra.mxu0 %v1470
      %1752 = vmatprep.subr.bf16.mxu0 0
      %1753 = vmatpush1.bf16.msra.mxu0 %v1471
      %1754 = vmatprep.subr.bf16.mxu0 0
      %1755 = vmatpush1.bf16.msra.mxu0 %v1472
      %1756 = vmatprep.subr.bf16.mxu0 0
      %1757 = vmatpush1.bf16.msra.mxu0 %v1473
      %1758 = vmatprep.subr.bf16.mxu0 0
      %1759 = vmatpush1.bf16.msra.mxu0 %v1474
      %1760 = vmatprep.subr.bf16.mxu0 0
      %1761 = vmatpush1.bf16.msra.mxu0 %v1475
      %1762 = vmatprep.subr.bf16.mxu0 0
      %1763 = vmatpush1.bf16.msra.mxu0 %v1476
      %1764 = vmatprep.subr.bf16.mxu0 0
      %1765 = vmatpush1.bf16.msra.mxu0 %v1477
      %1766 = vmatprep.subr.bf16.mxu0 0
      %1767 = vmatpush1.bf16.msra.mxu0 %v1478
      %1768 = vmatprep.mubr.bf16.mxu0 %v230
      %1769 = vmatmul.mubr.bf16.gmra.mrb[0].mxu0 %v214
      %v1770 = vpop.f32.mrb[0].mxu0
      %v1771 = vadd.f32 %v1610, %v1770
      %v1772 = vpop.f32.mrb[0].mxu0
      %v1773 = vpop.f32.mrb[0].mxu0
      %v1774 = vadd.f32 %v1613, %v1773
      %v1775 = vpop.f32.mrb[0].mxu0
      %1776 = vmatprep.mubr.bf16.mxu0 %v274
      %1777 = vmatmul.mubr.bf16.gmra.mrb[0].mxu0 %v258
      %v1778 = vpop.f32.mrb[0].mxu0
      %v1779 = vadd.f32 %v1618, %v1778
      %v1780 = vpop.f32.mrb[0].mxu0
      %v1781 = vpop.f32.mrb[0].mxu0
      %v1782 = vadd.f32 %v1621, %v1781
      %v1783 = vpop.f32.mrb[0].mxu0
      %1784 = vmatprep.mubr.bf16.mxu0 %v326
      %1785 = vmatmul.mubr.bf16.gmra.mrb[0].mxu0 %v310
      %v1786 = vpop.f32.mrb[0].mxu0
      %v1787 = vadd.f32 %v1626, %v1786
      %v1788 = vpop.f32.mrb[0].mxu0
      %v1789 = vpop.f32.mrb[0].mxu0
      %v1790 = vadd.f32 %v1629, %v1789
      %v1791 = vpop.f32.mrb[0].mxu0
      %1792 = vmatprep.mubr.bf16.mxu0 %v378
      %1793 = vmatmul.mubr.bf16.gmra.mrb[0].mxu0 %v362
      %v1794 = vpop.f32.mrb[0].mxu0
      %v1795 = vadd.f32 %v1634, %v1794
      %v1796 = vpop.f32.mrb[0].mxu0
      %v1797 = vpop.f32.mrb[0].mxu0
      %v1798 = vadd.f32 %v1637, %v1797
      %v1799 = vpop.f32.mrb[0].mxu0
      %1800 = vmatprep.mubr.bf16.mxu0 %v430
      %1801 = vmatmul.mubr.bf16.gmra.mrb[0].mxu0 %v414
      %v1802 = vpop.f32.mrb[0].mxu0
      %v1803 = vadd.f32 %v1642, %v1802
      %v1804 = vpop.f32.mrb[0].mxu0
      %v1805 = vpop.f32.mrb[0].mxu0
      %v1806 = vadd.f32 %v1645, %v1805
      %v1807 = vpop.f32.mrb[0].mxu0
      %1808 = vmatprep.mubr.bf16.mxu0 %v482
      %1809 = vmatmul.mubr.bf16.gmra.mrb[0].mxu0 %v466
      %v1810 = vpop.f32.mrb[0].mxu0
      %v1811 = vadd.f32 %v1650, %v1810
      %v1812 = vpop.f32.mrb[0].mxu0
      %v1813 = vpop.f32.mrb[0].mxu0
      %v1814 = vadd.f32 %v1653, %v1813
      %v1815 = vpop.f32.mrb[0].mxu0
      %1816 = vmatprep.mubr.bf16.mxu0 %v534
      %1817 = vmatmul.mubr.bf16.gmra.mrb[0].mxu0 %v518
      %v1818 = vpop.f32.mrb[0].mxu0
      %v1819 = vadd.f32 %v1658, %v1818
      %v1820 = vpop.f32.mrb[0].mxu0
      %v1821 = vpop.f32.mrb[0].mxu0
      %v1822 = vadd.f32 %v1661, %v1821
      %v1823 = vpop.f32.mrb[0].mxu0
      %1824 = vmatprep.mubr.bf16.mxu0 %v586
      %1825 = vmatmul.mubr.bf16.gmra.mrb[0].mxu0 %v570
      %v1826 = vpop.f32.mrb[0].mxu0
      %v1827 = vadd.f32 %v1666, %v1826
      %v1828 = vpop.f32.mrb[0].mxu0
      %v1829 = vpop.f32.mrb[0].mxu0
      %v1830 = vadd.f32 %v1669, %v1829
      %v1831 = vpop.f32.mrb[0].mxu0
      %1832 = vmatprep.mubr.bf16.mxu0 %v638
      %1833 = vmatmul.mubr.bf16.gmra.mrb[0].mxu0 %v622
      %v1834 = vpop.f32.mrb[0].mxu0
      %v1835 = vadd.f32 %v1674, %v1834
      %v1836 = vpop.f32.mrb[0].mxu0
      %v1837 = vpop.f32.mrb[0].mxu0
      %v1838 = vadd.f32 %v1677, %v1837
      %v1839 = vpop.f32.mrb[0].mxu0
      %1840 = vmatprep.mubr.bf16.mxu0 %v690
      %1841 = vmatmul.mubr.bf16.gmra.mrb[0].mxu0 %v674
      %v1842 = vpop.f32.mrb[0].mxu0
      %v1843 = vadd.f32 %v1682, %v1842
      %v1844 = vpop.f32.mrb[0].mxu0
      %v1845 = vpop.f32.mrb[0].mxu0
      %v1846 = vadd.f32 %v1685, %v1845
      %v1847 = vpop.f32.mrb[0].mxu0
      %1848 = vmatprep.mubr.bf16.mxu0 %v742
      %1849 = vmatmul.mubr.bf16.gmra.mrb[0].mxu0 %v726
      %v1850 = vpop.f32.mrb[0].mxu0
      %v1851 = vadd.f32 %v1690, %v1850
      %v1852 = vpop.f32.mrb[0].mxu0
      %v1853 = vpop.f32.mrb[0].mxu0
      %v1854 = vadd.f32 %v1693, %v1853
      %v1855 = vpop.f32.mrb[0].mxu0
      %1856 = vmatprep.mubr.bf16.mxu0 %v794
      %1857 = vmatmul.mubr.bf16.gmra.mrb[0].mxu0 %v778
      %v1858 = vpop.f32.mrb[0].mxu0
      %v1859 = vadd.f32 %v1698, %v1858
      %v1860 = vpop.f32.mrb[0].mxu0
      %v1861 = vpop.f32.mrb[0].mxu0
      %v1862 = vadd.f32 %v1701, %v1861
      %v1863 = vpop.f32.mrb[0].mxu0
      %1864 = vmatprep.mubr.bf16.mxu0 %v846
      %1865 = vmatmul.mubr.bf16.gmra.mrb[0].mxu0 %v830
      %v1866 = vpop.f32.mrb[0].mxu0
      %v1867 = vadd.f32 %v1706, %v1866
      %v1868 = vpop.f32.mrb[0].mxu0
      %v1869 = vpop.f32.mrb[0].mxu0
      %v1870 = vadd.f32 %v1709, %v1869
      %v1871 = vpop.f32.mrb[0].mxu0
      %1872 = vmatprep.mubr.bf16.mxu0 %v898
      %1873 = vmatmul.mubr.bf16.gmra.mrb[0].mxu0 %v882
      %v1874 = vpop.f32.mrb[0].mxu0
      %v1875 = vadd.f32 %v1714, %v1874
      %v1876 = vpop.f32.mrb[0].mxu0
      %v1877 = vpop.f32.mrb[0].mxu0
      %v1878 = vadd.f32 %v1717, %v1877
      %v1879 = vpop.f32.mrb[0].mxu0
      %1880 = vmatprep.mubr.bf16.mxu0 %v950
      %1881 = vmatmul.mubr.bf16.gmra.mrb[0].mxu0 %v934
      %v1882 = vpop.f32.mrb[0].mxu0
      %v1883 = vadd.f32 %v1722, %v1882
      %v1884 = vpop.f32.mrb[0].mxu0
      %v1885 = vpop.f32.mrb[0].mxu0
      %v1886 = vadd.f32 %v1725, %v1885
      %v1887 = vpop.f32.mrb[0].mxu0
      %1888 = vmatprep.mubr.bf16.mxu0 %v1002
      %1889 = vmatmul.mubr.bf16.gmra.mrb[0].mxu0 %v986
      %v1890 = vpop.f32.mrb[0].mxu0
      %v1891 = vadd.f32 %v1730, %v1890
      %v1892 = vpop.f32.mrb[0].mxu0
      %v1893 = vpop.f32.mrb[0].mxu0
      %v1894 = vadd.f32 %v1733, %v1893
      %v1895 = vpop.f32.mrb[0].mxu0
      %1896 = vdwg.mxu0
      %1897 = vmatprep.subr.bf16.mxu0 0
      %1898 = vmatpush1.bf16.msra.mxu0 %v1479
      %1899 = vmatprep.subr.bf16.mxu0 0
      %1900 = vmatpush1.bf16.msra.mxu0 %v1480
      %1901 = vmatprep.subr.bf16.mxu0 0
      %1902 = vmatpush1.bf16.msra.mxu0 %v1481
      %1903 = vmatprep.subr.bf16.mxu0 0
      %1904 = vmatpush1.bf16.msra.mxu0 %v1482
      %1905 = vmatprep.subr.bf16.mxu0 0
      %1906 = vmatpush1.bf16.msra.mxu0 %v1483
      %1907 = vmatprep.subr.bf16.mxu0 0
      %1908 = vmatpush1.bf16.msra.mxu0 %v1484
      %1909 = vmatprep.subr.bf16.mxu0 0
      %1910 = vmatpush1.bf16.msra.mxu0 %v1485
      %1911 = vmatprep.subr.bf16.mxu0 0
      %1912 = vmatpush1.bf16.msra.mxu0 %v1486
      %1913 = vmatprep.subr.bf16.mxu0 0
      %1914 = vmatpush1.bf16.msra.mxu0 %v1487
      %1915 = vmatprep.subr.bf16.mxu0 0
      %1916 = vmatpush1.bf16.msra.mxu0 %v1488
      %1917 = vmatprep.subr.bf16.mxu0 0
      %1918 = vmatpush1.bf16.msra.mxu0 %v1489
      %1919 = vmatprep.subr.bf16.mxu0 0
      %1920 = vmatpush1.bf16.msra.mxu0 %v1490
      %1921 = vmatprep.subr.bf16.mxu0 0
      %1922 = vmatpush1.bf16.msra.mxu0 %v1491
      %1923 = vmatprep.subr.bf16.mxu0 0
      %1924 = vmatpush1.bf16.msra.mxu0 %v1492
      %1925 = vmatprep.subr.bf16.mxu0 0
      %1926 = vmatpush1.bf16.msra.mxu0 %v1493
      %1927 = vmatprep.subr.bf16.mxu0 0
      %1928 = vmatpush1.bf16.msra.mxu0 %v1494
      %1929 = vmatprep.mubr.bf16.mxu0 %v252
      %1930 = vmatmul.mubr.bf16.gmra.mrb[0].mxu0 %v236
      %v1931 = vpop.f32.mrb[0].mxu0
      %v1932 = vadd.f32 %v1771, %v1931
      %v1933 = vpop.f32.mrb[0].mxu0
      %v1934 = vpop.f32.mrb[0].mxu0
      %v1935 = vadd.f32 %v1774, %v1934
      %v1936 = vpop.f32.mrb[0].mxu0
      %1937 = vmatprep.mubr.bf16.mxu0 %v304
      %1938 = vmatmul.mubr.bf16.gmra.mrb[0].mxu0 %v288
      %v1939 = vpop.f32.mrb[0].mxu0
      %v1940 = vadd.f32 %v1779, %v1939
      %v1941 = vpop.f32.mrb[0].mxu0
      %v1942 = vpop.f32.mrb[0].mxu0
      %v1943 = vadd.f32 %v1782, %v1942
      %v1944 = vpop.f32.mrb[0].mxu0
      %1945 = vmatprep.mubr.bf16.mxu0 %v356
      %1946 = vmatmul.mubr.bf16.gmra.mrb[0].mxu0 %v340
      %v1947 = vpop.f32.mrb[0].mxu0
      %v1948 = vadd.f32 %v1787, %v1947
      %v1949 = vpop.f32.mrb[0].mxu0
      %v1950 = vpop.f32.mrb[0].mxu0
      %v1951 = vadd.f32 %v1790, %v1950
      %v1952 = vpop.f32.mrb[0].mxu0
      %1953 = vmatprep.mubr.bf16.mxu0 %v408
      %1954 = vmatmul.mubr.bf16.gmra.mrb[0].mxu0 %v392
      %v1955 = vpop.f32.mrb[0].mxu0
      %v1956 = vadd.f32 %v1795, %v1955
      %v1957 = vpop.f32.mrb[0].mxu0
      %v1958 = vpop.f32.mrb[0].mxu0
      %v1959 = vadd.f32 %v1798, %v1958
      %v1960 = vpop.f32.mrb[0].mxu0
      %1961 = vmatprep.mubr.bf16.mxu0 %v460
      %1962 = vmatmul.mubr.bf16.gmra.mrb[0].mxu0 %v444
      %v1963 = vpop.f32.mrb[0].mxu0
      %v1964 = vadd.f32 %v1803, %v1963
      %v1965 = vpop.f32.mrb[0].mxu0
      %v1966 = vpop.f32.mrb[0].mxu0
      %v1967 = vadd.f32 %v1806, %v1966
      %v1968 = vpop.f32.mrb[0].mxu0
      %1969 = vmatprep.mubr.bf16.mxu0 %v512
      %1970 = vmatmul.mubr.bf16.gmra.mrb[0].mxu0 %v496
      %v1971 = vpop.f32.mrb[0].mxu0
      %v1972 = vadd.f32 %v1811, %v1971
      %v1973 = vpop.f32.mrb[0].mxu0
      %v1974 = vpop.f32.mrb[0].mxu0
      %v1975 = vadd.f32 %v1814, %v1974
      %v1976 = vpop.f32.mrb[0].mxu0
      %1977 = vmatprep.mubr.bf16.mxu0 %v564
      %1978 = vmatmul.mubr.bf16.gmra.mrb[0].mxu0 %v548
      %v1979 = vpop.f32.mrb[0].mxu0
      %v1980 = vadd.f32 %v1819, %v1979
      %v1981 = vpop.f32.mrb[0].mxu0
      %v1982 = vpop.f32.mrb[0].mxu0
      %v1983 = vadd.f32 %v1822, %v1982
      %v1984 = vpop.f32.mrb[0].mxu0
      %1985 = vmatprep.mubr.bf16.mxu0 %v616
      %1986 = vmatmul.mubr.bf16.gmra.mrb[0].mxu0 %v600
      %v1987 = vpop.f32.mrb[0].mxu0
      %v1988 = vadd.f32 %v1827, %v1987
      %v1989 = vpop.f32.mrb[0].mxu0
      %v1990 = vpop.f32.mrb[0].mxu0
      %v1991 = vadd.f32 %v1830, %v1990
      %v1992 = vpop.f32.mrb[0].mxu0
      %1993 = vmatprep.mubr.bf16.mxu0 %v668
      %1994 = vmatmul.mubr.bf16.gmra.mrb[0].mxu0 %v652
      %v1995 = vpop.f32.mrb[0].mxu0
      %v1996 = vadd.f32 %v1835, %v1995
      %v1997 = vpop.f32.mrb[0].mxu0
      %v1998 = vpop.f32.mrb[0].mxu0
      %v1999 = vadd.f32 %v1838, %v1998
      %v2000 = vpop.f32.mrb[0].mxu0
      %2001 = vmatprep.mubr.bf16.mxu0 %v720
      %2002 = vmatmul.mubr.bf16.gmra.mrb[0].mxu0 %v704
      %v2003 = vpop.f32.mrb[0].mxu0
      %v2004 = vadd.f32 %v1843, %v2003
      %v2005 = vpop.f32.mrb[0].mxu0
      %v2006 = vpop.f32.mrb[0].mxu0
      %v2007 = vadd.f32 %v1846, %v2006
      %v2008 = vpop.f32.mrb[0].mxu0
      %2009 = vmatprep.mubr.bf16.mxu0 %v772
      %2010 = vmatmul.mubr.bf16.gmra.mrb[0].mxu0 %v756
      %v2011 = vpop.f32.mrb[0].mxu0
      %v2012 = vadd.f32 %v1851, %v2011
      %v2013 = vpop.f32.mrb[0].mxu0
      %v2014 = vpop.f32.mrb[0].mxu0
      %v2015 = vadd.f32 %v1854, %v2014
      %v2016 = vpop.f32.mrb[0].mxu0
      %2017 = vmatprep.mubr.bf16.mxu0 %v824
      %2018 = vmatmul.mubr.bf16.gmra.mrb[0].mxu0 %v808
      %v2019 = vpop.f32.mrb[0].mxu0
      %v2020 = vadd.f32 %v1859, %v2019
      %v2021 = vpop.f32.mrb[0].mxu0
      %v2022 = vpop.f32.mrb[0].mxu0
      %v2023 = vadd.f32 %v1862, %v2022
      %v2024 = vpop.f32.mrb[0].mxu0
      %2025 = vmatprep.mubr.bf16.mxu0 %v876
      %2026 = vmatmul.mubr.bf16.gmra.mrb[0].mxu0 %v860
      %v2027 = vpop.f32.mrb[0].mxu0
      %v2028 = vadd.f32 %v1867, %v2027
      %v2029 = vpop.f32.mrb[0].mxu0
      %v2030 = vpop.f32.mrb[0].mxu0
      %v2031 = vadd.f32 %v1870, %v2030
      %v2032 = vpop.f32.mrb[0].mxu0
      %2033 = vmatprep.mubr.bf16.mxu0 %v928
      %2034 = vmatmul.mubr.bf16.gmra.mrb[0].mxu0 %v912
      %v2035 = vpop.f32.mrb[0].mxu0
      %v2036 = vadd.f32 %v1875, %v2035
      %v2037 = vpop.f32.mrb[0].mxu0
      %v2038 = vpop.f32.mrb[0].mxu0
      %v2039 = vadd.f32 %v1878, %v2038
      %v2040 = vpop.f32.mrb[0].mxu0
      %2041 = vmatprep.mubr.bf16.mxu0 %v980
      %2042 = vmatmul.mubr.bf16.gmra.mrb[0].mxu0 %v964
      %v2043 = vpop.f32.mrb[0].mxu0
      %v2044 = vadd.f32 %v1883, %v2043
      %v2045 = vpop.f32.mrb[0].mxu0
      %v2046 = vpop.f32.mrb[0].mxu0
      %v2047 = vadd.f32 %v1886, %v2046
      %v2048 = vpop.f32.mrb[0].mxu0
      %2049 = vmatprep.mubr.bf16.mxu0 %v1032
      %2050 = vmatmul.mubr.bf16.gmra.mrb[0].mxu0 %v1016
      %v2051 = vpop.f32.mrb[0].mxu0
      %v2052 = vadd.f32 %v1891, %v2051
      %v2053 = vpop.f32.mrb[0].mxu0
      %v2054 = vpop.f32.mrb[0].mxu0
      %v2055 = vadd.f32 %v1894, %v2054
      %v2056 = vpop.f32.mrb[0].mxu0
      %2057 = vdwg.mxu0
      %2058 = vmatprep.subr.bf16.mxu0 0
      %2059 = vmatpush1.bf16.msra.mxu0 %v1495
      %2060 = vmatprep.subr.bf16.mxu0 0
      %2061 = vmatpush1.bf16.msra.mxu0 %v1496
      %2062 = vmatprep.subr.bf16.mxu0 0
      %2063 = vmatpush1.bf16.msra.mxu0 %v1497
      %2064 = vmatprep.subr.bf16.mxu0 0
      %2065 = vmatpush1.bf16.msra.mxu0 %v1498
      %2066 = vmatprep.subr.bf16.mxu0 0
      %2067 = vmatpush1.bf16.msra.mxu0 %v1499
      %2068 = vmatprep.subr.bf16.mxu0 0
      %2069 = vmatpush1.bf16.msra.mxu0 %v1500
      %2070 = vmatprep.subr.bf16.mxu0 0
      %2071 = vmatpush1.bf16.msra.mxu0 %v1501
      %2072 = vmatprep.subr.bf16.mxu0 0
      %2073 = vmatpush1.bf16.msra.mxu0 %v1502
      %2074 = vmatprep.subr.bf16.mxu0 0
      %2075 = vmatpush1.bf16.msra.mxu0 %v1503
      %2076 = vmatprep.subr.bf16.mxu0 0
      %2077 = vmatpush1.bf16.msra.mxu0 %v1504
      %2078 = vmatprep.subr.bf16.mxu0 0
      %2079 = vmatpush1.bf16.msra.mxu0 %v1505
      %2080 = vmatprep.subr.bf16.mxu0 0
      %2081 = vmatpush1.bf16.msra.mxu0 %v1506
      %2082 = vmatprep.subr.bf16.mxu0 0
      %2083 = vmatpush1.bf16.msra.mxu0 %v1507
      %2084 = vmatprep.subr.bf16.mxu0 0
      %2085 = vmatpush1.bf16.msra.mxu0 %v1508
      %2086 = vmatprep.subr.bf16.mxu0 0
      %2087 = vmatpush1.bf16.msra.mxu0 %v1509
      %2088 = vmatprep.subr.bf16.mxu0 0
      %2089 = vmatpush1.bf16.msra.mxu0 %v1510
      %2090 = vmatprep.mubr.bf16.mxu0 %v274
      %2091 = vmatmul.mubr.bf16.gmra.mrb[0].mxu0 %v258
      %v2092 = vpop.f32.mrb[0].mxu0
      %v2093 = vadd.f32 %v1932, %v2092
      %v2094 = vpop.f32.mrb[0].mxu0
      %v2095 = vpop.f32.mrb[0].mxu0
      %v2096 = vadd.f32 %v1935, %v2095
      %v2097 = vpop.f32.mrb[0].mxu0
      %2098 = vmatprep.mubr.bf16.mxu0 %v326
      %2099 = vmatmul.mubr.bf16.gmra.mrb[0].mxu0 %v310
      %v2100 = vpop.f32.mrb[0].mxu0
      %v2101 = vadd.f32 %v1940, %v2100
      %v2102 = vpop.f32.mrb[0].mxu0
      %v2103 = vpop.f32.mrb[0].mxu0
      %v2104 = vadd.f32 %v1943, %v2103
      %v2105 = vpop.f32.mrb[0].mxu0
      %2106 = vmatprep.mubr.bf16.mxu0 %v378
      %2107 = vmatmul.mubr.bf16.gmra.mrb[0].mxu0 %v362
      %v2108 = vpop.f32.mrb[0].mxu0
      %v2109 = vadd.f32 %v1948, %v2108
      %v2110 = vpop.f32.mrb[0].mxu0
      %v2111 = vpop.f32.mrb[0].mxu0
      %v2112 = vadd.f32 %v1951, %v2111
      %v2113 = vpop.f32.mrb[0].mxu0
      %2114 = vmatprep.mubr.bf16.mxu0 %v430
      %2115 = vmatmul.mubr.bf16.gmra.mrb[0].mxu0 %v414
      %v2116 = vpop.f32.mrb[0].mxu0
      %v2117 = vadd.f32 %v1956, %v2116
      %v2118 = vpop.f32.mrb[0].mxu0
      %v2119 = vpop.f32.mrb[0].mxu0
      %v2120 = vadd.f32 %v1959, %v2119
      %v2121 = vpop.f32.mrb[0].mxu0
      %2122 = vmatprep.mubr.bf16.mxu0 %v482
      %2123 = vmatmul.mubr.bf16.gmra.mrb[0].mxu0 %v466
      %v2124 = vpop.f32.mrb[0].mxu0
      %v2125 = vadd.f32 %v1964, %v2124
      %v2126 = vpop.f32.mrb[0].mxu0
      %v2127 = vpop.f32.mrb[0].mxu0
      %v2128 = vadd.f32 %v1967, %v2127
      %v2129 = vpop.f32.mrb[0].mxu0
      %2130 = vmatprep.mubr.bf16.mxu0 %v534
      %2131 = vmatmul.mubr.bf16.gmra.mrb[0].mxu0 %v518
      %v2132 = vpop.f32.mrb[0].mxu0
      %v2133 = vadd.f32 %v1972, %v2132
      %v2134 = vpop.f32.mrb[0].mxu0
      %v2135 = vpop.f32.mrb[0].mxu0
      %v2136 = vadd.f32 %v1975, %v2135
      %v2137 = vpop.f32.mrb[0].mxu0
      %2138 = vmatprep.mubr.bf16.mxu0 %v586
      %2139 = vmatmul.mubr.bf16.gmra.mrb[0].mxu0 %v570
      %v2140 = vpop.f32.mrb[0].mxu0
      %v2141 = vadd.f32 %v1980, %v2140
      %v2142 = vpop.f32.mrb[0].mxu0
      %v2143 = vpop.f32.mrb[0].mxu0
      %v2144 = vadd.f32 %v1983, %v2143
      %v2145 = vpop.f32.mrb[0].mxu0
      %2146 = vmatprep.mubr.bf16.mxu0 %v638
      %2147 = vmatmul.mubr.bf16.gmra.mrb[0].mxu0 %v622
      %v2148 = vpop.f32.mrb[0].mxu0
      %v2149 = vadd.f32 %v1988, %v2148
      %v2150 = vpop.f32.mrb[0].mxu0
      %v2151 = vpop.f32.mrb[0].mxu0
      %v2152 = vadd.f32 %v1991, %v2151
      %v2153 = vpop.f32.mrb[0].mxu0
      %2154 = vmatprep.mubr.bf16.mxu0 %v690
      %2155 = vmatmul.mubr.bf16.gmra.mrb[0].mxu0 %v674
      %v2156 = vpop.f32.mrb[0].mxu0
      %v2157 = vadd.f32 %v1996, %v2156
      %v2158 = vpop.f32.mrb[0].mxu0
      %v2159 = vpop.f32.mrb[0].mxu0
      %v2160 = vadd.f32 %v1999, %v2159
      %v2161 = vpop.f32.mrb[0].mxu0
      %2162 = vmatprep.mubr.bf16.mxu0 %v742
      %2163 = vmatmul.mubr.bf16.gmra.mrb[0].mxu0 %v726
      %v2164 = vpop.f32.mrb[0].mxu0
      %v2165 = vadd.f32 %v2004, %v2164
      %v2166 = vpop.f32.mrb[0].mxu0
      %v2167 = vpop.f32.mrb[0].mxu0
      %v2168 = vadd.f32 %v2007, %v2167
      %v2169 = vpop.f32.mrb[0].mxu0
      %2170 = vmatprep.mubr.bf16.mxu0 %v794
      %2171 = vmatmul.mubr.bf16.gmra.mrb[0].mxu0 %v778
      %v2172 = vpop.f32.mrb[0].mxu0
      %v2173 = vadd.f32 %v2012, %v2172
      %v2174 = vpop.f32.mrb[0].mxu0
      %v2175 = vpop.f32.mrb[0].mxu0
      %v2176 = vadd.f32 %v2015, %v2175
      %v2177 = vpop.f32.mrb[0].mxu0
      %2178 = vmatprep.mubr.bf16.mxu0 %v846
      %2179 = vmatmul.mubr.bf16.gmra.mrb[0].mxu0 %v830
      %v2180 = vpop.f32.mrb[0].mxu0
      %v2181 = vadd.f32 %v2020, %v2180
      %v2182 = vpop.f32.mrb[0].mxu0
      %v2183 = vpop.f32.mrb[0].mxu0
      %v2184 = vadd.f32 %v2023, %v2183
      %v2185 = vpop.f32.mrb[0].mxu0
      %2186 = vmatprep.mubr.bf16.mxu0 %v898
      %2187 = vmatmul.mubr.bf16.gmra.mrb[0].mxu0 %v882
      %v2188 = vpop.f32.mrb[0].mxu0
      %v2189 = vadd.f32 %v2028, %v2188
      %v2190 = vpop.f32.mrb[0].mxu0
      %v2191 = vpop.f32.mrb[0].mxu0
      %v2192 = vadd.f32 %v2031, %v2191
      %v2193 = vpop.f32.mrb[0].mxu0
      %2194 = vmatprep.mubr.bf16.mxu0 %v950
      %2195 = vmatmul.mubr.bf16.gmra.mrb[0].mxu0 %v934
      %v2196 = vpop.f32.mrb[0].mxu0
      %v2197 = vadd.f32 %v2036, %v2196
      %v2198 = vpop.f32.mrb[0].mxu0
      %v2199 = vpop.f32.mrb[0].mxu0
      %v2200 = vadd.f32 %v2039, %v2199
      %v2201 = vpop.f32.mrb[0].mxu0
      %2202 = vmatprep.mubr.bf16.mxu0 %v1002
      %2203 = vmatmul.mubr.bf16.gmra.mrb[0].mxu0 %v986
      %v2204 = vpop.f32.mrb[0].mxu0
      %v2205 = vadd.f32 %v2044, %v2204
      %v2206 = vpop.f32.mrb[0].mxu0
      %v2207 = vpop.f32.mrb[0].mxu0
      %v2208 = vadd.f32 %v2047, %v2207
      %v2209 = vpop.f32.mrb[0].mxu0
      %2210 = vmatprep.mubr.bf16.mxu0 %v1054
      %2211 = vmatmul.mubr.bf16.gmra.mrb[0].mxu0 %v1038
      %v2212 = vpop.f32.mrb[0].mxu0
      %v2213 = vadd.f32 %v2052, %v2212
      %v2214 = vpop.f32.mrb[0].mxu0
      %v2215 = vpop.f32.mrb[0].mxu0
      %v2216 = vadd.f32 %v2055, %v2215
      %v2217 = vpop.f32.mrb[0].mxu0
      %2218 = vdwg.mxu0
      %v2219 = vmul.f32 %v2093, 0.2
      %v2220 = vmul.f32 %v2096, 0.2
      %v2221 = vmul.f32 %v2101, 0.2
      %v2222 = vmul.f32 %v2104, 0.2
      %v2223 = vmul.f32 %v2109, 0.2
      %v2224 = vmul.f32 %v2112, 0.2
      %v2225 = vmul.f32 %v2117, 0.2
      %v2226 = vmul.f32 %v2120, 0.2
      %v2227 = vmul.f32 %v2125, 0.2
      %v2228 = vmul.f32 %v2128, 0.2
      %v2229 = vmul.f32 %v2133, 0.2
      %v2230 = vmul.f32 %v2136, 0.2
      %v2231 = vmul.f32 %v2141, 0.2
      %v2232 = vmul.f32 %v2144, 0.2
      %v2233 = vmul.f32 %v2149, 0.2
      %v2234 = vmul.f32 %v2152, 0.2
      %v2235 = vmul.f32 %v2157, 0.2
      %v2236 = vmul.f32 %v2160, 0.2
      %v2237 = vmul.f32 %v2165, 0.2
      %v2238 = vmul.f32 %v2168, 0.2
      %v2239 = vmul.f32 %v2173, 0.2
      %v2240 = vmul.f32 %v2176, 0.2
      %v2241 = vmul.f32 %v2181, 0.2
      %v2242 = vmul.f32 %v2184, 0.2
      %v2243 = vmul.f32 %v2189, 0.2
      %v2244 = vmul.f32 %v2192, 0.2
      %v2245 = vmul.f32 %v2197, 0.2
      %v2246 = vmul.f32 %v2200, 0.2
      %v2247 = vmul.f32 %v2205, 0.2
      %v2248 = vmul.f32 %v2208, 0.2
      %v2249 = vmul.f32 %v2213, 0.2
      %v2250 = vmul.f32 %v2216, 0.2
      %v2251 = vmax.f32 %v2093, %v2219
      %v2252 = vmax.f32 %v2096, %v2220
      %v2253 = vmax.f32 %v2101, %v2221
      %v2254 = vmax.f32 %v2104, %v2222
      %v2255 = vmax.f32 %v2109, %v2223
      %v2256 = vmax.f32 %v2112, %v2224
      %v2257 = vmax.f32 %v2117, %v2225
      %v2258 = vmax.f32 %v2120, %v2226
      %v2259 = vmax.f32 %v2125, %v2227
      %v2260 = vmax.f32 %v2128, %v2228
      %v2261 = vmax.f32 %v2133, %v2229
      %v2262 = vmax.f32 %v2136, %v2230
      %v2263 = vmax.f32 %v2141, %v2231
      %v2264 = vmax.f32 %v2144, %v2232
      %v2265 = vmax.f32 %v2149, %v2233
      %v2266 = vmax.f32 %v2152, %v2234
      %v2267 = vmax.f32 %v2157, %v2235
      %v2268 = vmax.f32 %v2160, %v2236
      %v2269 = vmax.f32 %v2165, %v2237
      %v2270 = vmax.f32 %v2168, %v2238
      %v2271 = vmax.f32 %v2173, %v2239
      %v2272 = vmax.f32 %v2176, %v2240
      %v2273 = vmax.f32 %v2181, %v2241
      %v2274 = vmax.f32 %v2184, %v2242
      %v2275 = vmax.f32 %v2189, %v2243
      %v2276 = vmax.f32 %v2192, %v2244
      %v2277 = vmax.f32 %v2197, %v2245
      %v2278 = vmax.f32 %v2200, %v2246
      %v2279 = vmax.f32 %v2205, %v2247
      %v2280 = vmax.f32 %v2208, %v2248
      %v2281 = vmax.f32 %v2213, %v2249
      %v2282 = vmax.f32 %v2216, %v2250
      %v2283 = vpack.c.bf16 %v2252, %v2251
      %v2284 = vpack.c.bf16 %v2254, %v2253
      %v2285 = vpack.c.bf16 %v2256, %v2255
      %v2286 = vpack.c.bf16 %v2258, %v2257
      %v2287 = vpack.c.bf16 %v2260, %v2259
      %v2288 = vpack.c.bf16 %v2262, %v2261
      %v2289 = vpack.c.bf16 %v2264, %v2263
      %v2290 = vpack.c.bf16 %v2266, %v2265
      %v2291 = vpack.c.bf16 %v2268, %v2267
      %v2292 = vpack.c.bf16 %v2270, %v2269
      %v2293 = vpack.c.bf16 %v2272, %v2271
      %v2294 = vpack.c.bf16 %v2274, %v2273
      %v2295 = vpack.c.bf16 %v2276, %v2275
      %v2296 = vpack.c.bf16 %v2278, %v2277
      %v2297 = vpack.c.bf16 %v2280, %v2279
      %v2298 = vpack.c.bf16 %v2282, %v2281
      %v2315 = vunpack.c.l.b16 %v2283
      %v2316 = vunpack.c.h.b16 %v2283
      %v2317 = vunpack.c.l.b16 %v2284
      %v2318 = vunpack.c.h.b16 %v2284
      %v2319 = vunpack.c.l.b16 %v2285
      %v2320 = vunpack.c.h.b16 %v2285
      %v2321 = vunpack.c.l.b16 %v2286
      %v2322 = vunpack.c.h.b16 %v2286
      %v2323 = vunpack.c.l.b16 %v2287
      %v2324 = vunpack.c.h.b16 %v2287
      %v2325 = vunpack.c.l.b16 %v2288
      %v2326 = vunpack.c.h.b16 %v2288
      %v2327 = vunpack.c.l.b16 %v2289
      %v2328 = vunpack.c.h.b16 %v2289
      %v2329 = vunpack.c.l.b16 %v2290
      %v2330 = vunpack.c.h.b16 %v2290
      %v2331 = vunpack.c.l.b16 %v2291
      %v2332 = vunpack.c.h.b16 %v2291
      %v2333 = vunpack.c.l.b16 %v2292
      %v2334 = vunpack.c.h.b16 %v2292
      %v2335 = vunpack.c.l.b16 %v2293
      %v2336 = vunpack.c.h.b16 %v2293
      %v2337 = vunpack.c.l.b16 %v2294
      %v2338 = vunpack.c.h.b16 %v2294
      %v2339 = vunpack.c.l.b16 %v2295
      %v2340 = vunpack.c.h.b16 %v2295
      %v2341 = vunpack.c.l.b16 %v2296
      %v2342 = vunpack.c.h.b16 %v2296
      %v2343 = vunpack.c.l.b16 %v2297
      %v2344 = vunpack.c.h.b16 %v2297
      %v2345 = vunpack.c.l.b16 %v2298
      %v2346 = vunpack.c.h.b16 %v2298
      %v2347 = vpack.c.b16 %v2315, %v2315
      %v2348 = vpack.c.b16 %v2316, %v2316
      %v2349 = vpack.c.b16 %v2317, %v2317
      %v2350 = vpack.c.b16 %v2318, %v2318
      %v2351 = vpack.c.b16 %v2319, %v2319
      %v2352 = vpack.c.b16 %v2320, %v2320
      %v2353 = vpack.c.b16 %v2321, %v2321
      %v2354 = vpack.c.b16 %v2322, %v2322
      %v2355 = vpack.c.b16 %v2323, %v2323
      %v2356 = vpack.c.b16 %v2324, %v2324
      %v2357 = vpack.c.b16 %v2325, %v2325
      %v2358 = vpack.c.b16 %v2326, %v2326
      %v2359 = vpack.c.b16 %v2327, %v2327
      %v2360 = vpack.c.b16 %v2328, %v2328
      %v2361 = vpack.c.b16 %v2329, %v2329
      %v2362 = vpack.c.b16 %v2330, %v2330
      %v2363 = vpack.c.b16 %v2331, %v2331
      %v2364 = vpack.c.b16 %v2332, %v2332
      %v2365 = vpack.c.b16 %v2333, %v2333
      %v2366 = vpack.c.b16 %v2334, %v2334
      %v2367 = vpack.c.b16 %v2335, %v2335
      %v2368 = vpack.c.b16 %v2336, %v2336
      %v2369 = vpack.c.b16 %v2337, %v2337
      %v2370 = vpack.c.b16 %v2338, %v2338
      %v2371 = vpack.c.b16 %v2339, %v2339
      %v2372 = vpack.c.b16 %v2340, %v2340
      %v2373 = vpack.c.b16 %v2341, %v2341
      %v2374 = vpack.c.b16 %v2342, %v2342
      %v2375 = vpack.c.b16 %v2343, %v2343
      %v2376 = vpack.c.b16 %v2344, %v2344
      %v2377 = vpack.c.b16 %v2345, %v2345
      %v2378 = vpack.c.b16 %v2346, %v2346
      %2411 = vst [vmem:[%s170] sm:$0xf] %v2347
      %2412 = vst [vmem:[%s170 + $0x4] sm:$0xf] %v2348
      %2413 = vst [vmem:[%s170 + $0x8] sm:$0xf] %v2349
      %2414 = vst [vmem:[%s170 + $0xc] sm:$0xf] %v2350
      %2415 = vst [vmem:[%s170 + $0x10] sm:$0xf] %v2351
      %2416 = vst [vmem:[%s170 + $0x14] sm:$0xf] %v2352
      %2417 = vst [vmem:[%s170 + $0x18] sm:$0xf] %v2353
      %2418 = vst [vmem:[%s170 + $0x1c] sm:$0xf] %v2354
      %2419 = vst [vmem:[%s170 + $0x20] sm:$0xf] %v2355
      %2420 = vst [vmem:[%s170 + $0x24] sm:$0xf] %v2356
      %2421 = vst [vmem:[%s170 + $0x28] sm:$0xf] %v2357
      %2422 = vst [vmem:[%s170 + $0x2c] sm:$0xf] %v2358
      %2423 = vst [vmem:[%s170 + $0x30] sm:$0xf] %v2359
      %2424 = vst [vmem:[%s170 + $0x34] sm:$0xf] %v2360
      %2425 = vst [vmem:[%s170 + $0x38] sm:$0xf] %v2361
      %2426 = vst [vmem:[%s170 + $0x3c] sm:$0xf] %v2362
      %2427 = vst [vmem:[%s170 + $0x40] sm:$0xf] %v2363
      %2428 = vst [vmem:[%s170 + $0x44] sm:$0xf] %v2364
      %2429 = vst [vmem:[%s170 + $0x48] sm:$0xf] %v2365
      %2430 = vst [vmem:[%s170 + $0x4c] sm:$0xf] %v2366
      %2431 = vst [vmem:[%s170 + $0x50] sm:$0xf] %v2367
      %2432 = vst [vmem:[%s170 + $0x54] sm:$0xf] %v2368
      %2433 = vst [vmem:[%s170 + $0x58] sm:$0xf] %v2369
      %2434 = vst [vmem:[%s170 + $0x5c] sm:$0xf] %v2370
      %2435 = vst [vmem:[%s170 + $0x60] sm:$0xf] %v2371
      %2436 = vst [vmem:[%s170 + $0x64] sm:$0xf] %v2372
      %2437 = vst [vmem:[%s170 + $0x68] sm:$0xf] %v2373
      %2438 = vst [vmem:[%s170 + $0x6c] sm:$0xf] %v2374
      %2439 = vst [vmem:[%s170 + $0x70] sm:$0xf] %v2375
      %2440 = vst [vmem:[%s170 + $0x74] sm:$0xf] %v2376
      %2441 = vst [vmem:[%s170 + $0x78] sm:$0xf] %v2377
      %2442 = vst [vmem:[%s170 + $0x7c] sm:$0xf] %v2378
      %p2443 = scmp.lt.s32.totalorder %s14, 1
      %s2444 = scalar_select %p2443, %s14, 1
      %s2445 = smul.addr %s2444, 32
      %s2446 = smul.addr %s2445, 4
      %s2447 = scalar_lea.vmem %s3, %s2446
      // Predicated region
      $region33: #{patch_discriminator_forward.5} parent=31 // pred_check
        %p2448 = pneg %p100
      $region34: #{patch_discriminator_forward.5} parent=31 // pred_check_branch
        %2450 = sbr.rel (%p2448) target = $region36
      $region35: #{patch_discriminator_forward.5} parent=31 // pred_region
        _
      $region36: #{patch_discriminator_forward.5} parent=31 // pred_fallthru
        _
    $region32: #{patch_discriminator_forward.5} parent=5 // pred_fallthru
      _
    %p2451 = scmp.le.s32.totalorder 2, %s9
    // Predicated region
    $region37: #{patch_discriminator_forward.5} parent=5 // pred_check
      %p2452 = pneg %p2451
    $region38: #{patch_discriminator_forward.5} parent=5 // pred_check_branch
      %2454 = sbr.rel (%p2452) target = $region40
    $region39: #{patch_discriminator_forward.5} parent=5 // pred_region
      %s2455 = ssub.s32 %s9, 2
      // Predicated region
      $region41: #{patch_discriminator_forward.5} parent=39 // pred_check
        %p2456 = pneg %p106
      $region42: #{patch_discriminator_forward.5} parent=39 // pred_check_branch
        %2458 = sbr.rel (%p2456) target = $region44
      $region43: #{patch_discriminator_forward.5} parent=39 // pred_region
        %p2459 = scmp.lt.s32.totalorder %s15, 1
        %s2460 = scalar_select %p2459, %s15, 1
        %s2461 = smul.addr %s2460, 32
        %s2462 = smul.addr %s2461, 4
        %s2463 = scalar_lea.vmem %s3, %s2462
      $region44: #{patch_discriminator_forward.5} parent=39 // pred_fallthru
        _
    $region40: #{patch_discriminator_forward.5} parent=5 // pred_fallthru
      _
  $region6: #{patch_discriminator_forward.5} parent=0 // loop_footer
    %s13 = sadd.s32 1, %s9
  $region7: #{patch_discriminator_forward.5} parent=0 // loop_footer_branch
    %8 = sbr.rel target = $region3
  $region8: #{patch_discriminator_forward.5} parent=0 // loop_exit
    _

// kernel: patch_discriminator_forward.6
$region0: #{patch_discriminator_forward.6}
  #allocation0 [shape = 'u32[]', space=smem, size = 0x4, offset = 0x4, fixed_abs, tag = 'smem constant byte address 0x4 - core index']
  #allocation1 [shape = 'u32[144,128]{1,0:T(1,128)}', space=vmem, size = 0x12000, scoped, tag = 'internal scratch']
  %s0 = inlined_call_operand.vmem [shape: bf16[2,18,9,256], index: 0, kind: input, shape index: {}]
  %s1 = inlined_call_operand.vmem [shape: bf16[2048,128], index: 1, kind: input, shape index: {}]
  %s2 = inlined_call_operand.vmem [shape: bf16[2,64,128], index: 2, kind: output, shape index: {0}]
  %s3 = inlined_call_operand.vmem [shape: f32[2,1,128], index: 3, kind: output, shape index: {1}]
  %s4 = inlined_call_operand.vmem [shape: f32[2,1,128], index: 4, kind: output, shape index: {2}]
  %5 = xla_tuple %s2, %s3, %s4
  %s6 = sld [smem:[#allocation0]]
  $region57: #{patch_discriminator_forward.6} parent=0
    _
  %s8 = ssub.s32 1, %s6
  %s9 = scalar_select 0, %s8, %s6
  loop: start=0, step=1, limit=4
  $region2: #{patch_discriminator_forward.6} parent=0 // loop_pre_header
    _
  $region3: #{patch_discriminator_forward.6} parent=0 // loop_header
    %s11 = sphi 0, %s15
    %p12 = scmp.ge.s32.totalorder %s11, 4
    %s21 = sphi 0, %s23
    %s24 = sphi 0, %s21
    %s25 = sphi 0, %s24
    %s41 = sphi 0, %s25
    %s45 = sphi 0, %s45
    %s47 = sphi 0, %s45
    %s48 = sphi 0, %s47
    %s62 = sphi 0, %s48
    %s68 = sphi 0, %s70
    %s71 = sphi 0, %s68
    %s72 = sphi 0, %s71
    %s88 = sphi 0, %s72
    %s94 = sphi 0, %s96
    %s97 = sphi 0, %s94
    %s98 = sphi 0, %s97
    %s114 = sphi 0, %s98
    %s120 = sphi 0, %s122
    %s123 = sphi 0, %s120
    %s124 = sphi 0, %s123
    %s140 = sphi 0, %s124
  $region4: #{patch_discriminator_forward.6} parent=0 // loop_header_branch
    %14 = sbr.rel (%p12) target = $region8
  $region5: #{patch_discriminator_forward.6} parent=0 // loop_body
    %s16 = ssub.s32 %s11, 1
    %s17 = ssub.s32 %s11, 2
    %s18 = sadd.s32 %s11, 1
    %s19 = ssub.s32 %s11, %s18
    %p20 = scmp.eq.s32.totalorder %s19, 0
    %s22 = sadd.s32 %s21, 1
    %s23 = scalar_select %p20, %s21, %s22
    %p26 = pneg %p20
    %p27 = scmp.eq.s32.totalorder %s11, 1
    %p28 = por %p26, %p27
    %p29 = scmp.ne.s32.totalorder %s21, %s24
    %p30 = scmp.eq.s32.totalorder %s11, 0
    %p31 = por %p29, %p30
    %p32 = scmp.ne.s32.totalorder %s21, %s24
    %p33 = scmp.eq.s32.totalorder %s16, 1
    %p34 = por %p32, %p33
    %p35 = scmp.ne.s32.totalorder %s24, %s25
    %p36 = scmp.eq.s32.totalorder %s16, 0
    %p37 = por %p35, %p36
    %p38 = scmp.ne.s32.totalorder %s24, %s25
    %p39 = scmp.eq.s32.totalorder %s17, 1
    %p40 = por %p38, %p39
    %p42 = scmp.ne.s32.totalorder %s25, %s41
    %p43 = scmp.eq.s32.totalorder %s17, 0
    %p44 = por %p42, %p43
    %s46 = sadd.s32 %s45, 1
    %p49 = scmp.eq.s32.totalorder %s11, 1
    %p50 = scmp.ne.s32.totalorder %s45, %s47
    %p51 = scmp.eq.s32.totalorder %s11, 0
    %p52 = por %p50, %p51
    %p53 = scmp.ne.s32.totalorder %s45, %s47
    %p54 = scmp.eq.s32.totalorder %s16, 1
    %p55 = por %p53, %p54
    %p56 = scmp.ne.s32.totalorder %s47, %s48
    %p57 = scmp.eq.s32.totalorder %s16, 0
    %p58 = por %p56, %p57
    %p59 = scmp.ne.s32.totalorder %s47, %s48
    %p60 = scmp.eq.s32.totalorder %s17, 1
    %p61 = por %p59, %p60
    %p63 = scmp.ne.s32.totalorder %s48, %s62
    %p64 = scmp.eq.s32.totalorder %s17, 0
    %p65 = por %p63, %p64
    %s66 = ssub.s32 %s11, %s18
    %p67 = scmp.eq.s32.totalorder %s66, 0
    %s69 = sadd.s32 %s68, 1
    %s70 = scalar_select %p67, %s68, %s69
    %p73 = pneg %p67
    %p74 = scmp.eq.s32.totalorder %s11, 1
    %p75 = por %p73, %p74
    %p76 = scmp.ne.s32.totalorder %s68, %s71
    %p77 = scmp.eq.s32.totalorder %s11, 0
    %p78 = por %p76, %p77
    %p79 = scmp.ne.s32.totalorder %s68, %s71
    %p80 = scmp.eq.s32.totalorder %s16, 1
    %p81 = por %p79, %p80
    %p82 = scmp.ne.s32.totalorder %s71, %s72
    %p83 = scmp.eq.s32.totalorder %s16, 0
    %p84 = por %p82, %p83
    %p85 = scmp.ne.s32.totalorder %s71, %s72
    %p86 = scmp.eq.s32.totalorder %s17, 1
    %p87 = por %p85, %p86
    %p89 = scmp.ne.s32.totalorder %s72, %s88
    %p90 = scmp.eq.s32.totalorder %s17, 0
    %p91 = por %p89, %p90
    %s92 = ssub.s32 %s11, %s18
    %p93 = scmp.eq.s32.totalorder %s92, 0
    %s95 = sadd.s32 %s94, 1
    %s96 = scalar_select %p93, %s94, %s95
    %p99 = pneg %p93
    %p100 = scmp.eq.s32.totalorder %s11, 1
    %p101 = por %p99, %p100
    %p102 = scmp.ne.s32.totalorder %s94, %s97
    %p103 = scmp.eq.s32.totalorder %s11, 0
    %p104 = por %p102, %p103
    %p105 = scmp.ne.s32.totalorder %s94, %s97
    %p106 = scmp.eq.s32.totalorder %s16, 1
    %p107 = por %p105, %p106
    %p108 = scmp.ne.s32.totalorder %s97, %s98
    %p109 = scmp.eq.s32.totalorder %s16, 0
    %p110 = por %p108, %p109
    %p111 = scmp.ne.s32.totalorder %s97, %s98
    %p112 = scmp.eq.s32.totalorder %s17, 1
    %p113 = por %p111, %p112
    %p115 = scmp.ne.s32.totalorder %s98, %s114
    %p116 = scmp.eq.s32.totalorder %s17, 0
    %p117 = por %p115, %p116
    %s118 = ssub.s32 %s11, %s18
    %p119 = scmp.eq.s32.totalorder %s118, 0
    %s121 = sadd.s32 %s120, 1
    %s122 = scalar_select %p119, %s120, %s121
    %p125 = pneg %p119
    %p126 = scmp.eq.s32.totalorder %s11, 1
    %p127 = por %p125, %p126
    %p128 = scmp.ne.s32.totalorder %s120, %s123
    %p129 = scmp.eq.s32.totalorder %s11, 0
    %p130 = por %p128, %p129
    %p131 = scmp.ne.s32.totalorder %s120, %s123
    %p132 = scmp.eq.s32.totalorder %s16, 1
    %p133 = por %p131, %p132
    %p134 = scmp.ne.s32.totalorder %s123, %s124
    %p135 = scmp.eq.s32.totalorder %s16, 0
    %p136 = por %p134, %p135
    %p137 = scmp.ne.s32.totalorder %s123, %s124
    %p138 = scmp.eq.s32.totalorder %s17, 1
    %p139 = por %p137, %p138
    %p141 = scmp.ne.s32.totalorder %s124, %s140
    %p142 = scmp.eq.s32.totalorder %s17, 0
    %p143 = por %p141, %p142
    %p144 = scmp.le.s32.totalorder 1, %s11
    %p145 = scmp.lt.s32.totalorder %s11, 3
    %p146 = pnand %p144, %p145
    %p147 = pneg %p146
    // Predicated region
    $region9: #{patch_discriminator_forward.6} parent=5 // pred_check
      _
    $region10: #{patch_discriminator_forward.6} parent=5 // pred_check_branch
      %149 = sbr.rel (%p146) target = $region12
    $region11: #{patch_discriminator_forward.6} parent=5 // pred_region
      %s150 = ssub.s32 %s11, 1
      // Predicated region
      $region13: #{patch_discriminator_forward.6} parent=11 // pred_check
        %p151 = pneg %p58
      $region14: #{patch_discriminator_forward.6} parent=11 // pred_check_branch
        %153 = sbr.rel (%p151) target = $region16
      $region15: #{patch_discriminator_forward.6} parent=11 // pred_region
        _
      $region16: #{patch_discriminator_forward.6} parent=11 // pred_fallthru
        _
    $region12: #{patch_discriminator_forward.6} parent=5 // pred_fallthru
      _
    %p154 = scmp.lt.s32.totalorder %s11, 2
    // Predicated region
    $region17: #{patch_discriminator_forward.6} parent=5 // pred_check
      %p155 = pneg %p154
    $region18: #{patch_discriminator_forward.6} parent=5 // pred_check_branch
      %157 = sbr.rel (%p155) target = $region20
    $region19: #{patch_discriminator_forward.6} parent=5 // pred_region
      // Predicated region
      $region21: #{patch_discriminator_forward.6} parent=19 // pred_check
        %p158 = pneg %p31
      $region22: #{patch_discriminator_forward.6} parent=19 // pred_check_branch
        %160 = sbr.rel (%p158) target = $region24
      $region23: #{patch_discriminator_forward.6} parent=19 // pred_region
        %p161 = scmp.lt.s32.totalorder %s11, 1
        %s162 = scalar_select %p161, %s11, 1
        %s163 = smul.addr %s162, 72
        %s164 = smul.addr %s163, 4
        %s165 = scalar_lea.vmem %s0, %s164
      $region24: #{patch_discriminator_forward.6} parent=19 // pred_fallthru
        _
    $region20: #{patch_discriminator_forward.6} parent=5 // pred_fallthru
      _
    %p166 = scmp.le.s32.totalorder 1, %s11
    %p167 = scmp.lt.s32.totalorder %s11, 3
    %p168 = pnand %p166, %p167
    %p169 = pneg %p168
    // Predicated region
    $region25: #{patch_discriminator_forward.6} parent=5 // pred_check
      _
    $region26: #{patch_discriminator_forward.6} parent=5 // pred_check_branch
      %171 = sbr.rel (%p168) target = $region28
    $region27: #{patch_discriminator_forward.6} parent=5 // pred_region
      %s172 = ssub.s32 %s11, 1
      %p173 = scmp.lt.s32.totalorder %s16, 1
      %s174 = scalar_select %p173, %s16, 1
      %s175 = smul.addr %s174, 72
      %s176 = smul.addr %s175, 4
      %s177 = scalar_lea.vmem %s0, %s176
      %p178 = pneg %p37
      %p179 = pneg %p34
      %p180 = pneg %p58
      %p181 = pneg %p55
      %p182 = pneg %p84
      %p183 = pneg %p81
      %p184 = scmp.lt.s32.totalorder %s16, 1
      %s185 = scalar_select %p184, %s16, 1
      %s186 = smul.addr %s185, 8
      %s187 = smul.addr %s186, 4
      %s188 = scalar_lea.vmem %s2, %s187
      %p189 = pneg %p110
      %p190 = pneg %p107
      %p191 = scmp.lt.s32.totalorder %s16, 1
      %s192 = scalar_select %p191, %s16, 1
      %s193 = scalar_lea.vmem %s3, %s192
      %p194 = pneg %p136
      %p195 = pneg %p133
      %p196 = scmp.lt.s32.totalorder %s16, 1
      %s197 = scalar_select %p196, %s16, 1
      %s198 = scalar_lea.vmem %s4, %s197
      %p199 = scmp.lt.s32.totalorder %s16, 1
      %s200 = scalar_select %p199, %s16, 1
      %s201 = smul.addr %s200, 72
      %s202 = smul.addr %s201, 4
      %s203 = scalar_lea.vmem %s0, %s202
      %p204 = scmp.lt.s32.totalorder %s16, 1
      %s205 = scalar_select %p204, %s16, 1
      %s206 = smul.addr %s205, 8
      %s207 = smul.addr %s206, 4
      %s208 = scalar_lea.vmem %s2, %s207
      %p209 = scmp.lt.s32.totalorder %s16, 1
      %s210 = scalar_select %p209, %s16, 1
      %s211 = scalar_lea.vmem %s3, %s210
      %p212 = scmp.lt.s32.totalorder %s16, 1
      %s213 = scalar_select %p212, %s16, 1
      %s214 = scalar_lea.vmem %s4, %s213
      %v216 = vld [vmem:[%s203] sm:$0xff]
      %v217 = vld [vmem:[%s203 + $0x8] sm:$0x11]
      %s218 = scalar_lea.vmem %s203, 16
      %v219 = vld [vmem:[%s218] sm:$0xff]
      %v220 = vld [vmem:[%s218 + $0x8] sm:$0x11]
      %s221 = scalar_lea.vmem %s203, 32
      %v222 = vld [vmem:[%s221] sm:$0xff]
      %v223 = vld [vmem:[%s221 + $0x8] sm:$0x11]
      %s224 = scalar_lea.vmem %s203, 48
      %v225 = vld [vmem:[%s224] sm:$0xff]
      %v226 = vld [vmem:[%s224 + $0x8] sm:$0x11]
      %v228 = vunpack.c.l.b16 %v216
      %v229 = vunpack.c.h.b16 %v216
      %v230 = vpack.c.b16 %v228, %v228
      %v231 = vpack.c.b16 %v229, %v229
      %v233 = vunpack.c.l.b16 %v217
      %v234 = vunpack.c.h.b16 %v217
      %v235 = vpack.c.b16 %v233, %v228
      %v236 = vpack.c.b16 %v234, %v229
      %v238 = vshrl.u32 %v235, 16
      %v240 = vshll.u32 %v235, 16
      %v242 = vrot.slane %v240, 1
      %v243 = vor.u32 %v238, %v242
      %v245 = vshrl.u32 %v236, 16
      %v247 = vshll.u32 %v236, 16
      %v249 = vrot.slane %v247, 1
      %v250 = vor.u32 %v245, %v249
      %v252 = vunpack.c.l.b16 %v219
      %v253 = vunpack.c.h.b16 %v219
      %v254 = vpack.c.b16 %v252, %v252
      %v255 = vpack.c.b16 %v253, %v253
      %v257 = vunpack.c.l.b16 %v220
      %v258 = vunpack.c.h.b16 %v220
      %v259 = vpack.c.b16 %v257, %v252
      %v260 = vpack.c.b16 %v258, %v253
      %v262 = vshrl.u32 %v259, 16
      %v264 = vshll.u32 %v259, 16
      %v266 = vrot.slane %v264, 1
      %v267 = vor.u32 %v262, %v266
      %v269 = vshrl.u32 %v260, 16
      %v271 = vshll.u32 %v260, 16
      %v273 = vrot.slane %v271, 1
      %v274 = vor.u32 %v269, %v273
      %v276 = vunpack.c.l.b16 %v222
      %v277 = vunpack.c.h.b16 %v222
      %v278 = vpack.c.b16 %v276, %v276
      %v279 = vpack.c.b16 %v277, %v277
      %v281 = vunpack.c.l.b16 %v223
      %v282 = vunpack.c.h.b16 %v223
      %v283 = vpack.c.b16 %v281, %v276
      %v284 = vpack.c.b16 %v282, %v277
      %v286 = vshrl.u32 %v283, 16
      %v288 = vshll.u32 %v283, 16
      %v290 = vrot.slane %v288, 1
      %v291 = vor.u32 %v286, %v290
      %v293 = vshrl.u32 %v284, 16
      %v295 = vshll.u32 %v284, 16
      %v297 = vrot.slane %v295, 1
      %v298 = vor.u32 %v293, %v297
      %v300 = vunpack.c.l.b16 %v225
      %v301 = vunpack.c.h.b16 %v225
      %v302 = vpack.c.b16 %v300, %v300
      %v303 = vpack.c.b16 %v301, %v301
      %v305 = vunpack.c.l.b16 %v226
      %v306 = vunpack.c.h.b16 %v226
      %v307 = vpack.c.b16 %v305, %v300
      %v308 = vpack.c.b16 %v306, %v301
      %v310 = vshrl.u32 %v307, 16
      %v312 = vshll.u32 %v307, 16
      %v314 = vrot.slane %v312, 1
      %v315 = vor.u32 %v310, %v314
      %v317 = vshrl.u32 %v308, 16
      %v319 = vshll.u32 %v308, 16
      %v321 = vrot.slane %v319, 1
      %v322 = vor.u32 %v317, %v321
      %s323 = scalar_lea.vmem %s203, 64
      %v324 = vld [vmem:[%s323] sm:$0xff]
      %v325 = vld [vmem:[%s323 + $0x8] sm:$0x11]
      %s326 = scalar_lea.vmem %s203, 80
      %v327 = vld [vmem:[%s326] sm:$0xff]
      %v328 = vld [vmem:[%s326 + $0x8] sm:$0x11]
      %v330 = vunpack.c.l.b16 %v324
      %v331 = vunpack.c.h.b16 %v324
      %v332 = vpack.c.b16 %v330, %v330
      %v333 = vpack.c.b16 %v331, %v331
      %v335 = vunpack.c.l.b16 %v325
      %v336 = vunpack.c.h.b16 %v325
      %v337 = vpack.c.b16 %v335, %v330
      %v338 = vpack.c.b16 %v336, %v331
      %v340 = vshrl.u32 %v337, 16
      %v342 = vshll.u32 %v337, 16
      %v344 = vrot.slane %v342, 1
      %v345 = vor.u32 %v340, %v344
      %v347 = vshrl.u32 %v338, 16
      %v349 = vshll.u32 %v338, 16
      %v351 = vrot.slane %v349, 1
      %v352 = vor.u32 %v347, %v351
      %v354 = vunpack.c.l.b16 %v327
      %v355 = vunpack.c.h.b16 %v327
      %v356 = vpack.c.b16 %v354, %v354
      %v357 = vpack.c.b16 %v355, %v355
      %v359 = vunpack.c.l.b16 %v328
      %v360 = vunpack.c.h.b16 %v328
      %v361 = vpack.c.b16 %v359, %v354
      %v362 = vpack.c.b16 %v360, %v355
      %v364 = vshrl.u32 %v361, 16
      %v366 = vshll.u32 %v361, 16
      %v368 = vrot.slane %v366, 1
      %v369 = vor.u32 %v364, %v368
      %v371 = vshrl.u32 %v362, 16
      %v373 = vshll.u32 %v362, 16
      %v375 = vrot.slane %v373, 1
      %v376 = vor.u32 %v371, %v375
      %s377 = scalar_lea.vmem %s203, 96
      %v378 = vld [vmem:[%s377] sm:$0xff]
      %v379 = vld [vmem:[%s377 + $0x8] sm:$0x11]
      %s380 = scalar_lea.vmem %s203, 112
      %v381 = vld [vmem:[%s380] sm:$0xff]
      %v382 = vld [vmem:[%s380 + $0x8] sm:$0x11]
      %v384 = vunpack.c.l.b16 %v378
      %v385 = vunpack.c.h.b16 %v378
      %v386 = vpack.c.b16 %v384, %v384
      %v387 = vpack.c.b16 %v385, %v385
      %v389 = vunpack.c.l.b16 %v379
      %v390 = vunpack.c.h.b16 %v379
      %v391 = vpack.c.b16 %v389, %v384
      %v392 = vpack.c.b16 %v390, %v385
      %v394 = vshrl.u32 %v391, 16
      %v396 = vshll.u32 %v391, 16
      %v398 = vrot.slane %v396, 1
      %v399 = vor.u32 %v394, %v398
      %v401 = vshrl.u32 %v392, 16
      %v403 = vshll.u32 %v392, 16
      %v405 = vrot.slane %v403, 1
      %v406 = vor.u32 %v401, %v405
      %v408 = vunpack.c.l.b16 %v381
      %v409 = vunpack.c.h.b16 %v381
      %v410 = vpack.c.b16 %v408, %v408
      %v411 = vpack.c.b16 %v409, %v409
      %v413 = vunpack.c.l.b16 %v382
      %v414 = vunpack.c.h.b16 %v382
      %v415 = vpack.c.b16 %v413, %v408
      %v416 = vpack.c.b16 %v414, %v409
      %v418 = vshrl.u32 %v415, 16
      %v420 = vshll.u32 %v415, 16
      %v422 = vrot.slane %v420, 1
      %v423 = vor.u32 %v418, %v422
      %v425 = vshrl.u32 %v416, 16
      %v427 = vshll.u32 %v416, 16
      %v429 = vrot.slane %v427, 1
      %v430 = vor.u32 %v425, %v429
      %s431 = scalar_lea.vmem %s203, 128
      %v432 = vld [vmem:[%s431] sm:$0xff]
      %v433 = vld [vmem:[%s431 + $0x8] sm:$0x11]
      %s434 = scalar_lea.vmem %s203, 144
      %v435 = vld [vmem:[%s434] sm:$0xff]
      %v436 = vld [vmem:[%s434 + $0x8] sm:$0x11]
      %v438 = vunpack.c.l.b16 %v432
      %v439 = vunpack.c.h.b16 %v432
      %v440 = vpack.c.b16 %v438, %v438
      %v441 = vpack.c.b16 %v439, %v439
      %v443 = vunpack.c.l.b16 %v433
      %v444 = vunpack.c.h.b16 %v433
      %v445 = vpack.c.b16 %v443, %v438
      %v446 = vpack.c.b16 %v444, %v439
      %v448 = vshrl.u32 %v445, 16
      %v450 = vshll.u32 %v445, 16
      %v452 = vrot.slane %v450, 1
      %v453 = vor.u32 %v448, %v452
      %v455 = vshrl.u32 %v446, 16
      %v457 = vshll.u32 %v446, 16
      %v459 = vrot.slane %v457, 1
      %v460 = vor.u32 %v455, %v459
      %v462 = vunpack.c.l.b16 %v435
      %v463 = vunpack.c.h.b16 %v435
      %v464 = vpack.c.b16 %v462, %v462
      %v465 = vpack.c.b16 %v463, %v463
      %v467 = vunpack.c.l.b16 %v436
      %v468 = vunpack.c.h.b16 %v436
      %v469 = vpack.c.b16 %v467, %v462
      %v470 = vpack.c.b16 %v468, %v463
      %v472 = vshrl.u32 %v469, 16
      %v474 = vshll.u32 %v469, 16
      %v476 = vrot.slane %v474, 1
      %v477 = vor.u32 %v472, %v476
      %v479 = vshrl.u32 %v470, 16
      %v481 = vshll.u32 %v470, 16
      %v483 = vrot.slane %v481, 1
      %v484 = vor.u32 %v479, %v483
      %s485 = scalar_lea.vmem %s203, 160
      %v486 = vld [vmem:[%s485] sm:$0xff]
      %v487 = vld [vmem:[%s485 + $0x8] sm:$0x11]
      %s488 = scalar_lea.vmem %s203, 176
      %v489 = vld [vmem:[%s488] sm:$0xff]
      %v490 = vld [vmem:[%s488 + $0x8] sm:$0x11]
      %v492 = vunpack.c.l.b16 %v486
      %v493 = vunpack.c.h.b16 %v486
      %v494 = vpack.c.b16 %v492, %v492
      %v495 = vpack.c.b16 %v493, %v493
      %v497 = vunpack.c.l.b16 %v487
      %v498 = vunpack.c.h.b16 %v487
      %v499 = vpack.c.b16 %v497, %v492
      %v500 = vpack.c.b16 %v498, %v493
      %v502 = vshrl.u32 %v499, 16
      %v504 = vshll.u32 %v499, 16
      %v506 = vrot.slane %v504, 1
      %v507 = vor.u32 %v502, %v506
      %v509 = vshrl.u32 %v500, 16
      %v511 = vshll.u32 %v500, 16
      %v513 = vrot.slane %v511, 1
      %v514 = vor.u32 %v509, %v513
      %v516 = vunpack.c.l.b16 %v489
      %v517 = vunpack.c.h.b16 %v489
      %v518 = vpack.c.b16 %v516, %v516
      %v519 = vpack.c.b16 %v517, %v517
      %v521 = vunpack.c.l.b16 %v490
      %v522 = vunpack.c.h.b16 %v490
      %v523 = vpack.c.b16 %v521, %v516
      %v524 = vpack.c.b16 %v522, %v517
      %v526 = vshrl.u32 %v523, 16
      %v528 = vshll.u32 %v523, 16
      %v530 = vrot.slane %v528, 1
      %v531 = vor.u32 %v526, %v530
      %v533 = vshrl.u32 %v524, 16
      %v535 = vshll.u32 %v524, 16
      %v537 = vrot.slane %v535, 1
      %v538 = vor.u32 %v533, %v537
      %s539 = scalar_lea.vmem %s203, 192
      %v540 = vld [vmem:[%s539] sm:$0xff]
      %v541 = vld [vmem:[%s539 + $0x8] sm:$0x11]
      %s542 = scalar_lea.vmem %s203, 208
      %v543 = vld [vmem:[%s542] sm:$0xff]
      %v544 = vld [vmem:[%s542 + $0x8] sm:$0x11]
      %v546 = vunpack.c.l.b16 %v540
      %v547 = vunpack.c.h.b16 %v540
      %v548 = vpack.c.b16 %v546, %v546
      %v549 = vpack.c.b16 %v547, %v547
      %v551 = vunpack.c.l.b16 %v541
      %v552 = vunpack.c.h.b16 %v541
      %v553 = vpack.c.b16 %v551, %v546
      %v554 = vpack.c.b16 %v552, %v547
      %v556 = vshrl.u32 %v553, 16
      %v558 = vshll.u32 %v553, 16
      %v560 = vrot.slane %v558, 1
      %v561 = vor.u32 %v556, %v560
      %v563 = vshrl.u32 %v554, 16
      %v565 = vshll.u32 %v554, 16
      %v567 = vrot.slane %v565, 1
      %v568 = vor.u32 %v563, %v567
      %v570 = vunpack.c.l.b16 %v543
      %v571 = vunpack.c.h.b16 %v543
      %v572 = vpack.c.b16 %v570, %v570
      %v573 = vpack.c.b16 %v571, %v571
      %v575 = vunpack.c.l.b16 %v544
      %v576 = vunpack.c.h.b16 %v544
      %v577 = vpack.c.b16 %v575, %v570
      %v578 = vpack.c.b16 %v576, %v571
      %v580 = vshrl.u32 %v577, 16
      %v582 = vshll.u32 %v577, 16
      %v584 = vrot.slane %v582, 1
      %v585 = vor.u32 %v580, %v584
      %v587 = vshrl.u32 %v578, 16
      %v589 = vshll.u32 %v578, 16
      %v591 = vrot.slane %v589, 1
      %v592 = vor.u32 %v587, %v591
      %s593 = scalar_lea.vmem %s203, 224
      %v594 = vld [vmem:[%s593] sm:$0xff]
      %v595 = vld [vmem:[%s593 + $0x8] sm:$0x11]
      %s596 = scalar_lea.vmem %s203, 240
      %v597 = vld [vmem:[%s596] sm:$0xff]
      %v598 = vld [vmem:[%s596 + $0x8] sm:$0x11]
      %v600 = vunpack.c.l.b16 %v594
      %v601 = vunpack.c.h.b16 %v594
      %v602 = vpack.c.b16 %v600, %v600
      %v603 = vpack.c.b16 %v601, %v601
      %v605 = vunpack.c.l.b16 %v595
      %v606 = vunpack.c.h.b16 %v595
      %v607 = vpack.c.b16 %v605, %v600
      %v608 = vpack.c.b16 %v606, %v601
      %v610 = vshrl.u32 %v607, 16
      %v612 = vshll.u32 %v607, 16
      %v614 = vrot.slane %v612, 1
      %v615 = vor.u32 %v610, %v614
      %v617 = vshrl.u32 %v608, 16
      %v619 = vshll.u32 %v608, 16
      %v621 = vrot.slane %v619, 1
      %v622 = vor.u32 %v617, %v621
      %v624 = vunpack.c.l.b16 %v597
      %v625 = vunpack.c.h.b16 %v597
      %v626 = vpack.c.b16 %v624, %v624
      %v627 = vpack.c.b16 %v625, %v625
      %v629 = vunpack.c.l.b16 %v598
      %v630 = vunpack.c.h.b16 %v598
      %v631 = vpack.c.b16 %v629, %v624
      %v632 = vpack.c.b16 %v630, %v625
      %v634 = vshrl.u32 %v631, 16
      %v636 = vshll.u32 %v631, 16
      %v638 = vrot.slane %v636, 1
      %v639 = vor.u32 %v634, %v638
      %v641 = vshrl.u32 %v632, 16
      %v643 = vshll.u32 %v632, 16
      %v645 = vrot.slane %v643, 1
      %v646 = vor.u32 %v641, %v645
      %s647 = scalar_lea.vmem %s203, 256
      %v648 = vld [vmem:[%s647] sm:$0xff]
      %v649 = vld [vmem:[%s647 + $0x8] sm:$0x11]
      %s650 = scalar_lea.vmem %s203, 272
      %v651 = vld [vmem:[%s650] sm:$0xff]
      %v652 = vld [vmem:[%s650 + $0x8] sm:$0x11]
      %v654 = vunpack.c.l.b16 %v648
      %v655 = vunpack.c.h.b16 %v648
      %v656 = vpack.c.b16 %v654, %v654
      %v657 = vpack.c.b16 %v655, %v655
      %v659 = vunpack.c.l.b16 %v649
      %v660 = vunpack.c.h.b16 %v649
      %v661 = vpack.c.b16 %v659, %v654
      %v662 = vpack.c.b16 %v660, %v655
      %v664 = vshrl.u32 %v661, 16
      %v666 = vshll.u32 %v661, 16
      %v668 = vrot.slane %v666, 1
      %v669 = vor.u32 %v664, %v668
      %v671 = vshrl.u32 %v662, 16
      %v673 = vshll.u32 %v662, 16
      %v675 = vrot.slane %v673, 1
      %v676 = vor.u32 %v671, %v675
      %v678 = vunpack.c.l.b16 %v651
      %v679 = vunpack.c.h.b16 %v651
      %v680 = vpack.c.b16 %v678, %v678
      %v681 = vpack.c.b16 %v679, %v679
      %v683 = vunpack.c.l.b16 %v652
      %v684 = vunpack.c.h.b16 %v652
      %v685 = vpack.c.b16 %v683, %v678
      %v686 = vpack.c.b16 %v684, %v679
      %v688 = vshrl.u32 %v685, 16
      %v690 = vshll.u32 %v685, 16
      %v692 = vrot.slane %v690, 1
      %v693 = vor.u32 %v688, %v692
      %v695 = vshrl.u32 %v686, 16
      %v697 = vshll.u32 %v686, 16
      %v699 = vrot.slane %v697, 1
      %v700 = vor.u32 %v695, %v699
      %v701 = vrot.slane %v278, 4
      %v702 = vrot.slane %v279, 4
      %v703 = vrot.slane %v291, 4
      %v704 = vrot.slane %v298, 4
      %v705 = vrot.slane %v302, 4
      %v706 = vrot.slane %v303, 4
      %v707 = vrot.slane %v315, 4
      %v708 = vrot.slane %v322, 4
      %v709 = vrot.slane %v332, 4
      %v710 = vrot.slane %v333, 4
      %v711 = vrot.slane %v345, 4
      %v712 = vrot.slane %v352, 4
      %v713 = vrot.slane %v356, 4
      %v714 = vrot.slane %v357, 4
      %v715 = vrot.slane %v369, 4
      %v716 = vrot.slane %v376, 4
      %v717 = vrot.slane %v386, 4
      %v718 = vrot.slane %v387, 4
      %v719 = vrot.slane %v399, 4
      %v720 = vrot.slane %v406, 4
      %v721 = vrot.slane %v410, 4
      %v722 = vrot.slane %v411, 4
      %v723 = vrot.slane %v423, 4
      %v724 = vrot.slane %v430, 4
      %v725 = vrot.slane %v440, 4
      %v726 = vrot.slane %v441, 4
      %v727 = vrot.slane %v453, 4
      %v728 = vrot.slane %v460, 4
      %v729 = vrot.slane %v464, 4
      %v730 = vrot.slane %v465, 4
      %v731 = vrot.slane %v477, 4
      %v732 = vrot.slane %v484, 4
      %v733 = vrot.slane %v494, 4
      %v734 = vrot.slane %v495, 4
      %v735 = vrot.slane %v507, 4
      %v736 = vrot.slane %v514, 4
      %v737 = vrot.slane %v518, 4
      %v738 = vrot.slane %v519, 4
      %v739 = vrot.slane %v531, 4
      %v740 = vrot.slane %v538, 4
      %v741 = vrot.slane %v548, 4
      %v742 = vrot.slane %v549, 4
      %v743 = vrot.slane %v561, 4
      %v744 = vrot.slane %v568, 4
      %v745 = vrot.slane %v572, 4
      %v746 = vrot.slane %v573, 4
      %v747 = vrot.slane %v585, 4
      %v748 = vrot.slane %v592, 4
      %v749 = vrot.slane %v602, 4
      %v750 = vrot.slane %v603, 4
      %v751 = vrot.slane %v615, 4
      %v752 = vrot.slane %v622, 4
      %v753 = vrot.slane %v626, 4
      %v754 = vrot.slane %v627, 4
      %v755 = vrot.slane %v639, 4
      %v756 = vrot.slane %v646, 4
      %v757 = vrot.slane %v656, 4
      %v758 = vrot.slane %v657, 4
      %v759 = vrot.slane %v669, 4
      %v760 = vrot.slane %v676, 4
      %v761 = vrot.slane %v680, 4
      %v762 = vrot.slane %v681, 4
      %v763 = vrot.slane %v693, 4
      %v764 = vrot.slane %v700, 4
      %vm765 = vcmask 1043456
      %v768 = vsel %vm765, %v230, %v701
      %v772 = vsel %vm765, %v231, %v702
      %v776 = vsel %vm765, %v243, %v703
      %v780 = vsel %vm765, %v250, %v704
      %v784 = vsel %vm765, %v254, %v705
      %v788 = vsel %vm765, %v255, %v706
      %v792 = vsel %vm765, %v267, %v707
      %v796 = vsel %vm765, %v274, %v708
      %v800 = vsel %vm765, %v278, %v709
      %v804 = vsel %vm765, %v279, %v710
      %v808 = vsel %vm765, %v291, %v711
      %v812 = vsel %vm765, %v298, %v712
      %v816 = vsel %vm765, %v302, %v713
      %v820 = vsel %vm765, %v303, %v714
      %v824 = vsel %vm765, %v315, %v715
      %v828 = vsel %vm765, %v322, %v716
      %v832 = vsel %vm765, %v332, %v717
      %v836 = vsel %vm765, %v333, %v718
      %v840 = vsel %vm765, %v345, %v719
      %v844 = vsel %vm765, %v352, %v720
      %v848 = vsel %vm765, %v356, %v721
      %v852 = vsel %vm765, %v357, %v722
      %v856 = vsel %vm765, %v369, %v723
      %v860 = vsel %vm765, %v376, %v724
      %v864 = vsel %vm765, %v386, %v725
      %v868 = vsel %vm765, %v387, %v726
      %v872 = vsel %vm765, %v399, %v727
      %v876 = vsel %vm765, %v406, %v728
      %v880 = vsel %vm765, %v410, %v729
      %v884 = vsel %vm765, %v411, %v730
      %v888 = vsel %vm765, %v423, %v731
      %v892 = vsel %vm765, %v430, %v732
      %v896 = vsel %vm765, %v440, %v733
      %v900 = vsel %vm765, %v441, %v734
      %v904 = vsel %vm765, %v453, %v735
      %v908 = vsel %vm765, %v460, %v736
      %v912 = vsel %vm765, %v464, %v737
      %v916 = vsel %vm765, %v465, %v738
      %v920 = vsel %vm765, %v477, %v739
      %v924 = vsel %vm765, %v484, %v740
      %v928 = vsel %vm765, %v494, %v741
      %v932 = vsel %vm765, %v495, %v742
      %v936 = vsel %vm765, %v507, %v743
      %v940 = vsel %vm765, %v514, %v744
      %v944 = vsel %vm765, %v518, %v745
      %v948 = vsel %vm765, %v519, %v746
      %v952 = vsel %vm765, %v531, %v747
      %v956 = vsel %vm765, %v538, %v748
      %v960 = vsel %vm765, %v548, %v749
      %v964 = vsel %vm765, %v549, %v750
      %v968 = vsel %vm765, %v561, %v751
      %v972 = vsel %vm765, %v568, %v752
      %v976 = vsel %vm765, %v572, %v753
      %v980 = vsel %vm765, %v573, %v754
      %v984 = vsel %vm765, %v585, %v755
      %v988 = vsel %vm765, %v592, %v756
      %v992 = vsel %vm765, %v602, %v757
      %v996 = vsel %vm765, %v603, %v758
      %v1000 = vsel %vm765, %v615, %v759
      %v1004 = vsel %vm765, %v622, %v760
      %v1008 = vsel %vm765, %v626, %v761
      %v1012 = vsel %vm765, %v627, %v762
      %v1016 = vsel %vm765, %v639, %v763
      %v1020 = vsel %vm765, %v646, %v764
      %v1022 = vld [vmem:[%s1] sm:$0xf]
      %v1023 = vld [vmem:[%s1 + $0x4] sm:$0xf]
      %v1024 = vld [vmem:[%s1 + $0x8] sm:$0xf]
      %v1025 = vld [vmem:[%s1 + $0xc] sm:$0xf]
      %v1026 = vld [vmem:[%s1 + $0x10] sm:$0xf]
      %v1027 = vld [vmem:[%s1 + $0x14] sm:$0xf]
      %v1028 = vld [vmem:[%s1 + $0x18] sm:$0xf]
      %v1029 = vld [vmem:[%s1 + $0x1c] sm:$0xf]
      %v1030 = vld [vmem:[%s1 + $0x20] sm:$0xf]
      %v1031 = vld [vmem:[%s1 + $0x24] sm:$0xf]
      %v1032 = vld [vmem:[%s1 + $0x28] sm:$0xf]
      %v1033 = vld [vmem:[%s1 + $0x2c] sm:$0xf]
      %v1034 = vld [vmem:[%s1 + $0x30] sm:$0xf]
      %v1035 = vld [vmem:[%s1 + $0x34] sm:$0xf]
      %v1036 = vld [vmem:[%s1 + $0x38] sm:$0xf]
      %v1037 = vld [vmem:[%s1 + $0x3c] sm:$0xf]
      %v1038 = vld [vmem:[%s1 + $0x40] sm:$0xf]
      %v1039 = vld [vmem:[%s1 + $0x44] sm:$0xf]
      %v1040 = vld [vmem:[%s1 + $0x48] sm:$0xf]
      %v1041 = vld [vmem:[%s1 + $0x4c] sm:$0xf]
      %v1042 = vld [vmem:[%s1 + $0x50] sm:$0xf]
      %v1043 = vld [vmem:[%s1 + $0x54] sm:$0xf]
      %v1044 = vld [vmem:[%s1 + $0x58] sm:$0xf]
      %v1045 = vld [vmem:[%s1 + $0x5c] sm:$0xf]
      %v1046 = vld [vmem:[%s1 + $0x60] sm:$0xf]
      %v1047 = vld [vmem:[%s1 + $0x64] sm:$0xf]
      %v1048 = vld [vmem:[%s1 + $0x68] sm:$0xf]
      %v1049 = vld [vmem:[%s1 + $0x6c] sm:$0xf]
      %v1050 = vld [vmem:[%s1 + $0x70] sm:$0xf]
      %v1051 = vld [vmem:[%s1 + $0x74] sm:$0xf]
      %v1052 = vld [vmem:[%s1 + $0x78] sm:$0xf]
      %v1053 = vld [vmem:[%s1 + $0x7c] sm:$0xf]
      %v1054 = vld [vmem:[%s1 + $0x80] sm:$0xf]
      %v1055 = vld [vmem:[%s1 + $0x84] sm:$0xf]
      %v1056 = vld [vmem:[%s1 + $0x88] sm:$0xf]
      %v1057 = vld [vmem:[%s1 + $0x8c] sm:$0xf]
      %v1058 = vld [vmem:[%s1 + $0x90] sm:$0xf]
      %v1059 = vld [vmem:[%s1 + $0x94] sm:$0xf]
      %v1060 = vld [vmem:[%s1 + $0x98] sm:$0xf]
      %v1061 = vld [vmem:[%s1 + $0x9c] sm:$0xf]
      %v1062 = vld [vmem:[%s1 + $0xa0] sm:$0xf]
      %v1063 = vld [vmem:[%s1 + $0xa4] sm:$0xf]
      %v1064 = vld [vmem:[%s1 + $0xa8] sm:$0xf]
      %v1065 = vld [vmem:[%s1 + $0xac] sm:$0xf]
      %v1066 = vld [vmem:[%s1 + $0xb0] sm:$0xf]
      %v1067 = vld [vmem:[%s1 + $0xb4] sm:$0xf]
      %v1068 = vld [vmem:[%s1 + $0xb8] sm:$0xf]
      %v1069 = vld [vmem:[%s1 + $0xbc] sm:$0xf]
      %v1070 = vld [vmem:[%s1 + $0xc0] sm:$0xf]
      %v1071 = vld [vmem:[%s1 + $0xc4] sm:$0xf]
      %v1072 = vld [vmem:[%s1 + $0xc8] sm:$0xf]
      %v1073 = vld [vmem:[%s1 + $0xcc] sm:$0xf]
      %v1074 = vld [vmem:[%s1 + $0xd0] sm:$0xf]
      %v1075 = vld [vmem:[%s1 + $0xd4] sm:$0xf]
      %v1076 = vld [vmem:[%s1 + $0xd8] sm:$0xf]
      %v1077 = vld [vmem:[%s1 + $0xdc] sm:$0xf]
      %v1078 = vld [vmem:[%s1 + $0xe0] sm:$0xf]
      %v1079 = vld [vmem:[%s1 + $0xe4] sm:$0xf]
      %v1080 = vld [vmem:[%s1 + $0xe8] sm:$0xf]
      %v1081 = vld [vmem:[%s1 + $0xec] sm:$0xf]
      %v1082 = vld [vmem:[%s1 + $0xf0] sm:$0xf]
      %v1083 = vld [vmem:[%s1 + $0xf4] sm:$0xf]
      %v1084 = vld [vmem:[%s1 + $0xf8] sm:$0xf]
      %v1085 = vld [vmem:[%s1 + $0xfc] sm:$0xf]
      %v1086 = vld [vmem:[%s1 + $0x100] sm:$0xf]
      %v1087 = vld [vmem:[%s1 + $0x104] sm:$0xf]
      %v1088 = vld [vmem:[%s1 + $0x108] sm:$0xf]
      %v1089 = vld [vmem:[%s1 + $0x10c] sm:$0xf]
      %v1090 = vld [vmem:[%s1 + $0x110] sm:$0xf]
      %v1091 = vld [vmem:[%s1 + $0x114] sm:$0xf]
      %v1092 = vld [vmem:[%s1 + $0x118] sm:$0xf]
      %v1093 = vld [vmem:[%s1 + $0x11c] sm:$0xf]
      %v1094 = vld [vmem:[%s1 + $0x120] sm:$0xf]
      %v1095 = vld [vmem:[%s1 + $0x124] sm:$0xf]
      %v1096 = vld [vmem:[%s1 + $0x128] sm:$0xf]
      %v1097 = vld [vmem:[%s1 + $0x12c] sm:$0xf]
      %v1098 = vld [vmem:[%s1 + $0x130] sm:$0xf]
      %v1099 = vld [vmem:[%s1 + $0x134] sm:$0xf]
      %v1100 = vld [vmem:[%s1 + $0x138] sm:$0xf]
      %v1101 = vld [vmem:[%s1 + $0x13c] sm:$0xf]
      %v1102 = vld [vmem:[%s1 + $0x140] sm:$0xf]
      %v1103 = vld [vmem:[%s1 + $0x144] sm:$0xf]
      %v1104 = vld [vmem:[%s1 + $0x148] sm:$0xf]
      %v1105 = vld [vmem:[%s1 + $0x14c] sm:$0xf]
      %v1106 = vld [vmem:[%s1 + $0x150] sm:$0xf]
      %v1107 = vld [vmem:[%s1 + $0x154] sm:$0xf]
      %v1108 = vld [vmem:[%s1 + $0x158] sm:$0xf]
      %v1109 = vld [vmem:[%s1 + $0x15c] sm:$0xf]
      %v1110 = vld [vmem:[%s1 + $0x160] sm:$0xf]
      %v1111 = vld [vmem:[%s1 + $0x164] sm:$0xf]
      %v1112 = vld [vmem:[%s1 + $0x168] sm:$0xf]
      %v1113 = vld [vmem:[%s1 + $0x16c] sm:$0xf]
      %v1114 = vld [vmem:[%s1 + $0x170] sm:$0xf]
      %v1115 = vld [vmem:[%s1 + $0x174] sm:$0xf]
      %v1116 = vld [vmem:[%s1 + $0x178] sm:$0xf]
      %v1117 = vld [vmem:[%s1 + $0x17c] sm:$0xf]
      %v1118 = vld [vmem:[%s1 + $0x180] sm:$0xf]
      %v1119 = vld [vmem:[%s1 + $0x184] sm:$0xf]
      %v1120 = vld [vmem:[%s1 + $0x188] sm:$0xf]
      %v1121 = vld [vmem:[%s1 + $0x18c] sm:$0xf]
      %v1122 = vld [vmem:[%s1 + $0x190] sm:$0xf]
      %v1123 = vld [vmem:[%s1 + $0x194] sm:$0xf]
      %v1124 = vld [vmem:[%s1 + $0x198] sm:$0xf]
      %v1125 = vld [vmem:[%s1 + $0x19c] sm:$0xf]
      %v1126 = vld [vmem:[%s1 + $0x1a0] sm:$0xf]
      %v1127 = vld [vmem:[%s1 + $0x1a4] sm:$0xf]
      %v1128 = vld [vmem:[%s1 + $0x1a8] sm:$0xf]
      %v1129 = vld [vmem:[%s1 + $0x1ac] sm:$0xf]
      %v1130 = vld [vmem:[%s1 + $0x1b0] sm:$0xf]
      %v1131 = vld [vmem:[%s1 + $0x1b4] sm:$0xf]
      %v1132 = vld [vmem:[%s1 + $0x1b8] sm:$0xf]
      %v1133 = vld [vmem:[%s1 + $0x1bc] sm:$0xf]
      %v1134 = vld [vmem:[%s1 + $0x1c0] sm:$0xf]
      %v1135 = vld [vmem:[%s1 + $0x1c4] sm:$0xf]
      %v1136 = vld [vmem:[%s1 + $0x1c8] sm:$0xf]
      %v1137 = vld [vmem:[%s1 + $0x1cc] sm:$0xf]
      %v1138 = vld [vmem:[%s1 + $0x1d0] sm:$0xf]
      %v1139 = vld [vmem:[%s1 + $0x1d4] sm:$0xf]
      %v1140 = vld [vmem:[%s1 + $0x1d8] sm:$0xf]
      %v1141 = vld [vmem:[%s1 + $0x1dc] sm:$0xf]
      %v1142 = vld [vmem:[%s1 + $0x1e0] sm:$0xf]
      %v1143 = vld [vmem:[%s1 + $0x1e4] sm:$0xf]
      %v1144 = vld [vmem:[%s1 + $0x1e8] sm:$0xf]
      %v1145 = vld [vmem:[%s1 + $0x1ec] sm:$0xf]
      %v1146 = vld [vmem:[%s1 + $0x1f0] sm:$0xf]
      %v1147 = vld [vmem:[%s1 + $0x1f4] sm:$0xf]
      %v1148 = vld [vmem:[%s1 + $0x1f8] sm:$0xf]
      %v1149 = vld [vmem:[%s1 + $0x1fc] sm:$0xf]
      %v1150 = vld [vmem:[%s1 + $0x200] sm:$0xf]
      %v1151 = vld [vmem:[%s1 + $0x204] sm:$0xf]
      %v1152 = vld [vmem:[%s1 + $0x208] sm:$0xf]
      %v1153 = vld [vmem:[%s1 + $0x20c] sm:$0xf]
      %v1154 = vld [vmem:[%s1 + $0x210] sm:$0xf]
      %v1155 = vld [vmem:[%s1 + $0x214] sm:$0xf]
      %v1156 = vld [vmem:[%s1 + $0x218] sm:$0xf]
      %v1157 = vld [vmem:[%s1 + $0x21c] sm:$0xf]
      %v1158 = vld [vmem:[%s1 + $0x220] sm:$0xf]
      %v1159 = vld [vmem:[%s1 + $0x224] sm:$0xf]
      %v1160 = vld [vmem:[%s1 + $0x228] sm:$0xf]
      %v1161 = vld [vmem:[%s1 + $0x22c] sm:$0xf]
      %v1162 = vld [vmem:[%s1 + $0x230] sm:$0xf]
      %v1163 = vld [vmem:[%s1 + $0x234] sm:$0xf]
      %v1164 = vld [vmem:[%s1 + $0x238] sm:$0xf]
      %v1165 = vld [vmem:[%s1 + $0x23c] sm:$0xf]
      %v1166 = vld [vmem:[%s1 + $0x240] sm:$0xf]
      %v1167 = vld [vmem:[%s1 + $0x244] sm:$0xf]
      %v1168 = vld [vmem:[%s1 + $0x248] sm:$0xf]
      %v1169 = vld [vmem:[%s1 + $0x24c] sm:$0xf]
      %v1170 = vld [vmem:[%s1 + $0x250] sm:$0xf]
      %v1171 = vld [vmem:[%s1 + $0x254] sm:$0xf]
      %v1172 = vld [vmem:[%s1 + $0x258] sm:$0xf]
      %v1173 = vld [vmem:[%s1 + $0x25c] sm:$0xf]
      %v1174 = vld [vmem:[%s1 + $0x260] sm:$0xf]
      %v1175 = vld [vmem:[%s1 + $0x264] sm:$0xf]
      %v1176 = vld [vmem:[%s1 + $0x268] sm:$0xf]
      %v1177 = vld [vmem:[%s1 + $0x26c] sm:$0xf]
      %v1178 = vld [vmem:[%s1 + $0x270] sm:$0xf]
      %v1179 = vld [vmem:[%s1 + $0x274] sm:$0xf]
      %v1180 = vld [vmem:[%s1 + $0x278] sm:$0xf]
      %v1181 = vld [vmem:[%s1 + $0x27c] sm:$0xf]
      %v1182 = vld [vmem:[%s1 + $0x280] sm:$0xf]
      %v1183 = vld [vmem:[%s1 + $0x284] sm:$0xf]
      %v1184 = vld [vmem:[%s1 + $0x288] sm:$0xf]
      %v1185 = vld [vmem:[%s1 + $0x28c] sm:$0xf]
      %v1186 = vld [vmem:[%s1 + $0x290] sm:$0xf]
      %v1187 = vld [vmem:[%s1 + $0x294] sm:$0xf]
      %v1188 = vld [vmem:[%s1 + $0x298] sm:$0xf]
      %v1189 = vld [vmem:[%s1 + $0x29c] sm:$0xf]
      %v1190 = vld [vmem:[%s1 + $0x2a0] sm:$0xf]
      %v1191 = vld [vmem:[%s1 + $0x2a4] sm:$0xf]
      %v1192 = vld [vmem:[%s1 + $0x2a8] sm:$0xf]
      %v1193 = vld [vmem:[%s1 + $0x2ac] sm:$0xf]
      %v1194 = vld [vmem:[%s1 + $0x2b0] sm:$0xf]
      %v1195 = vld [vmem:[%s1 + $0x2b4] sm:$0xf]
      %v1196 = vld [vmem:[%s1 + $0x2b8] sm:$0xf]
      %v1197 = vld [vmem:[%s1 + $0x2bc] sm:$0xf]
      %v1198 = vld [vmem:[%s1 + $0x2c0] sm:$0xf]
      %v1199 = vld [vmem:[%s1 + $0x2c4] sm:$0xf]
      %v1200 = vld [vmem:[%s1 + $0x2c8] sm:$0xf]
      %v1201 = vld [vmem:[%s1 + $0x2cc] sm:$0xf]
      %v1202 = vld [vmem:[%s1 + $0x2d0] sm:$0xf]
      %v1203 = vld [vmem:[%s1 + $0x2d4] sm:$0xf]
      %v1204 = vld [vmem:[%s1 + $0x2d8] sm:$0xf]
      %v1205 = vld [vmem:[%s1 + $0x2dc] sm:$0xf]
      %v1206 = vld [vmem:[%s1 + $0x2e0] sm:$0xf]
      %v1207 = vld [vmem:[%s1 + $0x2e4] sm:$0xf]
      %v1208 = vld [vmem:[%s1 + $0x2e8] sm:$0xf]
      %v1209 = vld [vmem:[%s1 + $0x2ec] sm:$0xf]
      %v1210 = vld [vmem:[%s1 + $0x2f0] sm:$0xf]
      %v1211 = vld [vmem:[%s1 + $0x2f4] sm:$0xf]
      %v1212 = vld [vmem:[%s1 + $0x2f8] sm:$0xf]
      %v1213 = vld [vmem:[%s1 + $0x2fc] sm:$0xf]
      %v1214 = vld [vmem:[%s1 + $0x300] sm:$0xf]
      %v1215 = vld [vmem:[%s1 + $0x304] sm:$0xf]
      %v1216 = vld [vmem:[%s1 + $0x308] sm:$0xf]
      %v1217 = vld [vmem:[%s1 + $0x30c] sm:$0xf]
      %v1218 = vld [vmem:[%s1 + $0x310] sm:$0xf]
      %v1219 = vld [vmem:[%s1 + $0x314] sm:$0xf]
      %v1220 = vld [vmem:[%s1 + $0x318] sm:$0xf]
      %v1221 = vld [vmem:[%s1 + $0x31c] sm:$0xf]
      %v1222 = vld [vmem:[%s1 + $0x320] sm:$0xf]
      %v1223 = vld [vmem:[%s1 + $0x324] sm:$0xf]
      %v1224 = vld [vmem:[%s1 + $0x328] sm:$0xf]
      %v1225 = vld [vmem:[%s1 + $0x32c] sm:$0xf]
      %v1226 = vld [vmem:[%s1 + $0x330] sm:$0xf]
      %v1227 = vld [vmem:[%s1 + $0x334] sm:$0xf]
      %v1228 = vld [vmem:[%s1 + $0x338] sm:$0xf]
      %v1229 = vld [vmem:[%s1 + $0x33c] sm:$0xf]
      %v1230 = vld [vmem:[%s1 + $0x340] sm:$0xf]
      %v1231 = vld [vmem:[%s1 + $0x344] sm:$0xf]
      %v1232 = vld [vmem:[%s1 + $0x348] sm:$0xf]
      %v1233 = vld [vmem:[%s1 + $0x34c] sm:$0xf]
      %v1234 = vld [vmem:[%s1 + $0x350] sm:$0xf]
      %v1235 = vld [vmem:[%s1 + $0x354] sm:$0xf]
      %v1236 = vld [vmem:[%s1 + $0x358] sm:$0xf]
      %v1237 = vld [vmem:[%s1 + $0x35c] sm:$0xf]
      %v1238 = vld [vmem:[%s1 + $0x360] sm:$0xf]
      %v1239 = vld [vmem:[%s1 + $0x364] sm:$0xf]
      %v1240 = vld [vmem:[%s1 + $0x368] sm:$0xf]
      %v1241 = vld [vmem:[%s1 + $0x36c] sm:$0xf]
      %v1242 = vld [vmem:[%s1 + $0x370] sm:$0xf]
      %v1243 = vld [vmem:[%s1 + $0x374] sm:$0xf]
      %v1244 = vld [vmem:[%s1 + $0x378] sm:$0xf]
      %v1245 = vld [vmem:[%s1 + $0x37c] sm:$0xf]
      %v1246 = vld [vmem:[%s1 + $0x380] sm:$0xf]
      %v1247 = vld [vmem:[%s1 + $0x384] sm:$0xf]
      %v1248 = vld [vmem:[%s1 + $0x388] sm:$0xf]
      %v1249 = vld [vmem:[%s1 + $0x38c] sm:$0xf]
      %v1250 = vld [vmem:[%s1 + $0x390] sm:$0xf]
      %v1251 = vld [vmem:[%s1 + $0x394] sm:$0xf]
      %v1252 = vld [vmem:[%s1 + $0x398] sm:$0xf]
      %v1253 = vld [vmem:[%s1 + $0x39c] sm:$0xf]
      %v1254 = vld [vmem:[%s1 + $0x3a0] sm:$0xf]
      %v1255 = vld [vmem:[%s1 + $0x3a4] sm:$0xf]
      %v1256 = vld [vmem:[%s1 + $0x3a8] sm:$0xf]
      %v1257 = vld [vmem:[%s1 + $0x3ac] sm:$0xf]
      %v1258 = vld [vmem:[%s1 + $0x3b0] sm:$0xf]
      %v1259 = vld [vmem:[%s1 + $0x3b4] sm:$0xf]
      %v1260 = vld [vmem:[%s1 + $0x3b8] sm:$0xf]
      %v1261 = vld [vmem:[%s1 + $0x3bc] sm:$0xf]
      %v1262 = vld [vmem:[%s1 + $0x3c0] sm:$0xf]
      %v1263 = vld [vmem:[%s1 + $0x3c4] sm:$0xf]
      %v1264 = vld [vmem:[%s1 + $0x3c8] sm:$0xf]
      %v1265 = vld [vmem:[%s1 + $0x3cc] sm:$0xf]
      %v1266 = vld [vmem:[%s1 + $0x3d0] sm:$0xf]
      %v1267 = vld [vmem:[%s1 + $0x3d4] sm:$0xf]
      %v1268 = vld [vmem:[%s1 + $0x3d8] sm:$0xf]
      %v1269 = vld [vmem:[%s1 + $0x3dc] sm:$0xf]
      %v1270 = vld [vmem:[%s1 + $0x3e0] sm:$0xf]
      %v1271 = vld [vmem:[%s1 + $0x3e4] sm:$0xf]
      %v1272 = vld [vmem:[%s1 + $0x3e8] sm:$0xf]
      %v1273 = vld [vmem:[%s1 + $0x3ec] sm:$0xf]
      %v1274 = vld [vmem:[%s1 + $0x3f0] sm:$0xf]
      %v1275 = vld [vmem:[%s1 + $0x3f4] sm:$0xf]
      %v1276 = vld [vmem:[%s1 + $0x3f8] sm:$0xf]
      %v1277 = vld [vmem:[%s1 + $0x3fc] sm:$0xf]
      %v1534 = vunpack.c.l.b16 %v1022
      %v1535 = vunpack.c.l.b16 %v1023
      %v1536 = vunpack.c.l.b16 %v1024
      %v1537 = vunpack.c.l.b16 %v1025
      %v1538 = vunpack.c.l.b16 %v1026
      %v1539 = vunpack.c.l.b16 %v1027
      %v1540 = vunpack.c.l.b16 %v1028
      %v1541 = vunpack.c.l.b16 %v1029
      %v1542 = vunpack.c.l.b16 %v1030
      %v1543 = vunpack.c.l.b16 %v1031
      %v1544 = vunpack.c.l.b16 %v1032
      %v1545 = vunpack.c.l.b16 %v1033
      %v1546 = vunpack.c.l.b16 %v1034
      %v1547 = vunpack.c.l.b16 %v1035
      %v1548 = vunpack.c.l.b16 %v1036
      %v1549 = vunpack.c.l.b16 %v1037
      %v1550 = vunpack.c.l.b16 %v1038
      %v1551 = vunpack.c.l.b16 %v1039
      %v1552 = vunpack.c.l.b16 %v1040
      %v1553 = vunpack.c.l.b16 %v1041
      %v1554 = vunpack.c.l.b16 %v1042
      %v1555 = vunpack.c.l.b16 %v1043
      %v1556 = vunpack.c.l.b16 %v1044
      %v1557 = vunpack.c.l.b16 %v1045
      %v1558 = vunpack.c.l.b16 %v1046
      %v1559 = vunpack.c.l.b16 %v1047
      %v1560 = vunpack.c.l.b16 %v1048
      %v1561 = vunpack.c.l.b16 %v1049
      %v1562 = vunpack.c.l.b16 %v1050
      %v1563 = vunpack.c.l.b16 %v1051
      %v1564 = vunpack.c.l.b16 %v1052
      %v1565 = vunpack.c.l.b16 %v1053
      %v1566 = vunpack.c.l.b16 %v1054
      %v1567 = vunpack.c.l.b16 %v1055
      %v1568 = vunpack.c.l.b16 %v1056
      %v1569 = vunpack.c.l.b16 %v1057
      %v1570 = vunpack.c.l.b16 %v1058
      %v1571 = vunpack.c.l.b16 %v1059
      %v1572 = vunpack.c.l.b16 %v1060
      %v1573 = vunpack.c.l.b16 %v1061
      %v1574 = vunpack.c.l.b16 %v1062
      %v1575 = vunpack.c.l.b16 %v1063
      %v1576 = vunpack.c.l.b16 %v1064
      %v1577 = vunpack.c.l.b16 %v1065
      %v1578 = vunpack.c.l.b16 %v1066
      %v1579 = vunpack.c.l.b16 %v1067
      %v1580 = vunpack.c.l.b16 %v1068
      %v1581 = vunpack.c.l.b16 %v1069
      %v1582 = vunpack.c.l.b16 %v1070
      %v1583 = vunpack.c.l.b16 %v1071
      %v1584 = vunpack.c.l.b16 %v1072
      %v1585 = vunpack.c.l.b16 %v1073
      %v1586 = vunpack.c.l.b16 %v1074
      %v1587 = vunpack.c.l.b16 %v1075
      %v1588 = vunpack.c.l.b16 %v1076
      %v1589 = vunpack.c.l.b16 %v1077
      %v1590 = vunpack.c.l.b16 %v1078
      %v1591 = vunpack.c.l.b16 %v1079
      %v1592 = vunpack.c.l.b16 %v1080
      %v1593 = vunpack.c.l.b16 %v1081
      %v1594 = vunpack.c.l.b16 %v1082
      %v1595 = vunpack.c.l.b16 %v1083
      %v1596 = vunpack.c.l.b16 %v1084
      %v1597 = vunpack.c.l.b16 %v1085
      %v1598 = vunpack.c.l.b16 %v1086
      %v1599 = vunpack.c.l.b16 %v1087
      %v1600 = vunpack.c.l.b16 %v1088
      %v1601 = vunpack.c.l.b16 %v1089
      %v1602 = vunpack.c.l.b16 %v1090
      %v1603 = vunpack.c.l.b16 %v1091
      %v1604 = vunpack.c.l.b16 %v1092
      %v1605 = vunpack.c.l.b16 %v1093
      %v1606 = vunpack.c.l.b16 %v1094
      %v1607 = vunpack.c.l.b16 %v1095
      %v1608 = vunpack.c.l.b16 %v1096
      %v1609 = vunpack.c.l.b16 %v1097
      %v1610 = vunpack.c.l.b16 %v1098
      %v1611 = vunpack.c.l.b16 %v1099
      %v1612 = vunpack.c.l.b16 %v1100
      %v1613 = vunpack.c.l.b16 %v1101
      %v1614 = vunpack.c.l.b16 %v1102
      %v1615 = vunpack.c.l.b16 %v1103
      %v1616 = vunpack.c.l.b16 %v1104
      %v1617 = vunpack.c.l.b16 %v1105
      %v1618 = vunpack.c.l.b16 %v1106
      %v1619 = vunpack.c.l.b16 %v1107
      %v1620 = vunpack.c.l.b16 %v1108
      %v1621 = vunpack.c.l.b16 %v1109
      %v1622 = vunpack.c.l.b16 %v1110
      %v1623 = vunpack.c.l.b16 %v1111
      %v1624 = vunpack.c.l.b16 %v1112
      %v1625 = vunpack.c.l.b16 %v1113
      %v1626 = vunpack.c.l.b16 %v1114
      %v1627 = vunpack.c.l.b16 %v1115
      %v1628 = vunpack.c.l.b16 %v1116
      %v1629 = vunpack.c.l.b16 %v1117
      %v1630 = vunpack.c.l.b16 %v1118
      %v1631 = vunpack.c.l.b16 %v1119
      %v1632 = vunpack.c.l.b16 %v1120
      %v1633 = vunpack.c.l.b16 %v1121
      %v1634 = vunpack.c.l.b16 %v1122
      %v1635 = vunpack.c.l.b16 %v1123
      %v1636 = vunpack.c.l.b16 %v1124
      %v1637 = vunpack.c.l.b16 %v1125
      %v1638 = vunpack.c.l.b16 %v1126
      %v1639 = vunpack.c.l.b16 %v1127
      %v1640 = vunpack.c.l.b16 %v1128
      %v1641 = vunpack.c.l.b16 %v1129
      %v1642 = vunpack.c.l.b16 %v1130
      %v1643 = vunpack.c.l.b16 %v1131
      %v1644 = vunpack.c.l.b16 %v1132
      %v1645 = vunpack.c.l.b16 %v1133
      %v1646 = vunpack.c.l.b16 %v1134
      %v1647 = vunpack.c.l.b16 %v1135
      %v1648 = vunpack.c.l.b16 %v1136
      %v1649 = vunpack.c.l.b16 %v1137
      %v1650 = vunpack.c.l.b16 %v1138
      %v1651 = vunpack.c.l.b16 %v1139
      %v1652 = vunpack.c.l.b16 %v1140
      %v1653 = vunpack.c.l.b16 %v1141
      %v1654 = vunpack.c.l.b16 %v1142
      %v1655 = vunpack.c.l.b16 %v1143
      %v1656 = vunpack.c.l.b16 %v1144
      %v1657 = vunpack.c.l.b16 %v1145
      %v1658 = vunpack.c.l.b16 %v1146
      %v1659 = vunpack.c.l.b16 %v1147
      %v1660 = vunpack.c.l.b16 %v1148
      %v1661 = vunpack.c.l.b16 %v1149
      %v1662 = vunpack.c.l.b16 %v1150
      %v1663 = vunpack.c.l.b16 %v1151
      %v1664 = vunpack.c.l.b16 %v1152
      %v1665 = vunpack.c.l.b16 %v1153
      %v1666 = vunpack.c.l.b16 %v1154
      %v1667 = vunpack.c.l.b16 %v1155
      %v1668 = vunpack.c.l.b16 %v1156
      %v1669 = vunpack.c.l.b16 %v1157
      %v1670 = vunpack.c.l.b16 %v1158
      %v1671 = vunpack.c.l.b16 %v1159
      %v1672 = vunpack.c.l.b16 %v1160
      %v1673 = vunpack.c.l.b16 %v1161
      %v1674 = vunpack.c.l.b16 %v1162
      %v1675 = vunpack.c.l.b16 %v1163
      %v1676 = vunpack.c.l.b16 %v1164
      %v1677 = vunpack.c.l.b16 %v1165
      %v1678 = vunpack.c.l.b16 %v1166
      %v1679 = vunpack.c.l.b16 %v1167
      %v1680 = vunpack.c.l.b16 %v1168
      %v1681 = vunpack.c.l.b16 %v1169
      %v1682 = vunpack.c.l.b16 %v1170
      %v1683 = vunpack.c.l.b16 %v1171
      %v1684 = vunpack.c.l.b16 %v1172
      %v1685 = vunpack.c.l.b16 %v1173
      %v1686 = vunpack.c.l.b16 %v1174
      %v1687 = vunpack.c.l.b16 %v1175
      %v1688 = vunpack.c.l.b16 %v1176
      %v1689 = vunpack.c.l.b16 %v1177
      %v1690 = vunpack.c.l.b16 %v1178
      %v1691 = vunpack.c.l.b16 %v1179
      %v1692 = vunpack.c.l.b16 %v1180
      %v1693 = vunpack.c.l.b16 %v1181
      %v1694 = vunpack.c.l.b16 %v1182
      %v1695 = vunpack.c.l.b16 %v1183
      %v1696 = vunpack.c.l.b16 %v1184
      %v1697 = vunpack.c.l.b16 %v1185
      %v1698 = vunpack.c.l.b16 %v1186
      %v1699 = vunpack.c.l.b16 %v1187
      %v1700 = vunpack.c.l.b16 %v1188
      %v1701 = vunpack.c.l.b16 %v1189
      %v1702 = vunpack.c.l.b16 %v1190
      %v1703 = vunpack.c.l.b16 %v1191
      %v1704 = vunpack.c.l.b16 %v1192
      %v1705 = vunpack.c.l.b16 %v1193
      %v1706 = vunpack.c.l.b16 %v1194
      %v1707 = vunpack.c.l.b16 %v1195
      %v1708 = vunpack.c.l.b16 %v1196
      %v1709 = vunpack.c.l.b16 %v1197
      %v1710 = vunpack.c.l.b16 %v1198
      %v1711 = vunpack.c.l.b16 %v1199
      %v1712 = vunpack.c.l.b16 %v1200
      %v1713 = vunpack.c.l.b16 %v1201
      %v1714 = vunpack.c.l.b16 %v1202
      %v1715 = vunpack.c.l.b16 %v1203
      %v1716 = vunpack.c.l.b16 %v1204
      %v1717 = vunpack.c.l.b16 %v1205
      %v1718 = vunpack.c.l.b16 %v1206
      %v1719 = vunpack.c.l.b16 %v1207
      %v1720 = vunpack.c.l.b16 %v1208
      %v1721 = vunpack.c.l.b16 %v1209
      %v1722 = vunpack.c.l.b16 %v1210
      %v1723 = vunpack.c.l.b16 %v1211
      %v1724 = vunpack.c.l.b16 %v1212
      %v1725 = vunpack.c.l.b16 %v1213
      %v1726 = vunpack.c.l.b16 %v1214
      %v1727 = vunpack.c.l.b16 %v1215
      %v1728 = vunpack.c.l.b16 %v1216
      %v1729 = vunpack.c.l.b16 %v1217
      %v1730 = vunpack.c.l.b16 %v1218
      %v1731 = vunpack.c.l.b16 %v1219
      %v1732 = vunpack.c.l.b16 %v1220
      %v1733 = vunpack.c.l.b16 %v1221
      %v1734 = vunpack.c.l.b16 %v1222
      %v1735 = vunpack.c.l.b16 %v1223
      %v1736 = vunpack.c.l.b16 %v1224
      %v1737 = vunpack.c.l.b16 %v1225
      %v1738 = vunpack.c.l.b16 %v1226
      %v1739 = vunpack.c.l.b16 %v1227
      %v1740 = vunpack.c.l.b16 %v1228
      %v1741 = vunpack.c.l.b16 %v1229
      %v1742 = vunpack.c.l.b16 %v1230
      %v1743 = vunpack.c.l.b16 %v1231
      %v1744 = vunpack.c.l.b16 %v1232
      %v1745 = vunpack.c.l.b16 %v1233
      %v1746 = vunpack.c.l.b16 %v1234
      %v1747 = vunpack.c.l.b16 %v1235
      %v1748 = vunpack.c.l.b16 %v1236
      %v1749 = vunpack.c.l.b16 %v1237
      %v1750 = vunpack.c.l.b16 %v1238
      %v1751 = vunpack.c.l.b16 %v1239
      %v1752 = vunpack.c.l.b16 %v1240
      %v1753 = vunpack.c.l.b16 %v1241
      %v1754 = vunpack.c.l.b16 %v1242
      %v1755 = vunpack.c.l.b16 %v1243
      %v1756 = vunpack.c.l.b16 %v1244
      %v1757 = vunpack.c.l.b16 %v1245
      %v1758 = vunpack.c.l.b16 %v1246
      %v1759 = vunpack.c.l.b16 %v1247
      %v1760 = vunpack.c.l.b16 %v1248
      %v1761 = vunpack.c.l.b16 %v1249
      %v1762 = vunpack.c.l.b16 %v1250
      %v1763 = vunpack.c.l.b16 %v1251
      %v1764 = vunpack.c.l.b16 %v1252
      %v1765 = vunpack.c.l.b16 %v1253
      %v1766 = vunpack.c.l.b16 %v1254
      %v1767 = vunpack.c.l.b16 %v1255
      %v1768 = vunpack.c.l.b16 %v1256
      %v1769 = vunpack.c.l.b16 %v1257
      %v1770 = vunpack.c.l.b16 %v1258
      %v1771 = vunpack.c.l.b16 %v1259
      %v1772 = vunpack.c.l.b16 %v1260
      %v1773 = vunpack.c.l.b16 %v1261
      %v1774 = vunpack.c.l.b16 %v1262
      %v1775 = vunpack.c.l.b16 %v1263
      %v1776 = vunpack.c.l.b16 %v1264
      %v1777 = vunpack.c.l.b16 %v1265
      %v1778 = vunpack.c.l.b16 %v1266
      %v1779 = vunpack.c.l.b16 %v1267
      %v1780 = vunpack.c.l.b16 %v1268
      %v1781 = vunpack.c.l.b16 %v1269
      %v1782 = vunpack.c.l.b16 %v1270
      %v1783 = vunpack.c.l.b16 %v1271
      %v1784 = vunpack.c.l.b16 %v1272
      %v1785 = vunpack.c.l.b16 %v1273
      %v1786 = vunpack.c.l.b16 %v1274
      %v1787 = vunpack.c.l.b16 %v1275
      %v1788 = vunpack.c.l.b16 %v1276
      %v1789 = vunpack.c.l.b16 %v1277
      %v1790 = vpack.c.b16 %v1535, %v1534
      %v1791 = vpack.c.b16 %v1537, %v1536
      %v1792 = vpack.c.b16 %v1539, %v1538
      %v1793 = vpack.c.b16 %v1541, %v1540
      %v1794 = vpack.c.b16 %v1543, %v1542
      %v1795 = vpack.c.b16 %v1545, %v1544
      %v1796 = vpack.c.b16 %v1547, %v1546
      %v1797 = vpack.c.b16 %v1549, %v1548
      %v1798 = vpack.c.b16 %v1551, %v1550
      %v1799 = vpack.c.b16 %v1553, %v1552
      %v1800 = vpack.c.b16 %v1555, %v1554
      %v1801 = vpack.c.b16 %v1557, %v1556
      %v1802 = vpack.c.b16 %v1559, %v1558
      %v1803 = vpack.c.b16 %v1561, %v1560
      %v1804 = vpack.c.b16 %v1563, %v1562
      %v1805 = vpack.c.b16 %v1565, %v1564
      %v1806 = vpack.c.b16 %v1567, %v1566
      %v1807 = vpack.c.b16 %v1569, %v1568
      %v1808 = vpack.c.b16 %v1571, %v1570
      %v1809 = vpack.c.b16 %v1573, %v1572
      %v1810 = vpack.c.b16 %v1575, %v1574
      %v1811 = vpack.c.b16 %v1577, %v1576
      %v1812 = vpack.c.b16 %v1579, %v1578
      %v1813 = vpack.c.b16 %v1581, %v1580
      %v1814 = vpack.c.b16 %v1583, %v1582
      %v1815 = vpack.c.b16 %v1585, %v1584
      %v1816 = vpack.c.b16 %v1587, %v1586
      %v1817 = vpack.c.b16 %v1589, %v1588
      %v1818 = vpack.c.b16 %v1591, %v1590
      %v1819 = vpack.c.b16 %v1593, %v1592
      %v1820 = vpack.c.b16 %v1595, %v1594
      %v1821 = vpack.c.b16 %v1597, %v1596
      %v1822 = vpack.c.b16 %v1599, %v1598
      %v1823 = vpack.c.b16 %v1601, %v1600
      %v1824 = vpack.c.b16 %v1603, %v1602
      %v1825 = vpack.c.b16 %v1605, %v1604
      %v1826 = vpack.c.b16 %v1607, %v1606
      %v1827 = vpack.c.b16 %v1609, %v1608
      %v1828 = vpack.c.b16 %v1611, %v1610
      %v1829 = vpack.c.b16 %v1613, %v1612
      %v1830 = vpack.c.b16 %v1615, %v1614
      %v1831 = vpack.c.b16 %v1617, %v1616
      %v1832 = vpack.c.b16 %v1619, %v1618
      %v1833 = vpack.c.b16 %v1621, %v1620
      %v1834 = vpack.c.b16 %v1623, %v1622
      %v1835 = vpack.c.b16 %v1625, %v1624
      %v1836 = vpack.c.b16 %v1627, %v1626
      %v1837 = vpack.c.b16 %v1629, %v1628
      %v1838 = vpack.c.b16 %v1631, %v1630
      %v1839 = vpack.c.b16 %v1633, %v1632
      %v1840 = vpack.c.b16 %v1635, %v1634
      %v1841 = vpack.c.b16 %v1637, %v1636
      %v1842 = vpack.c.b16 %v1639, %v1638
      %v1843 = vpack.c.b16 %v1641, %v1640
      %v1844 = vpack.c.b16 %v1643, %v1642
      %v1845 = vpack.c.b16 %v1645, %v1644
      %v1846 = vpack.c.b16 %v1647, %v1646
      %v1847 = vpack.c.b16 %v1649, %v1648
      %v1848 = vpack.c.b16 %v1651, %v1650
      %v1849 = vpack.c.b16 %v1653, %v1652
      %v1850 = vpack.c.b16 %v1655, %v1654
      %v1851 = vpack.c.b16 %v1657, %v1656
      %v1852 = vpack.c.b16 %v1659, %v1658
      %v1853 = vpack.c.b16 %v1661, %v1660
      %v1854 = vpack.c.b16 %v1663, %v1662
      %v1855 = vpack.c.b16 %v1665, %v1664
      %v1856 = vpack.c.b16 %v1667, %v1666
      %v1857 = vpack.c.b16 %v1669, %v1668
      %v1858 = vpack.c.b16 %v1671, %v1670
      %v1859 = vpack.c.b16 %v1673, %v1672
      %v1860 = vpack.c.b16 %v1675, %v1674
      %v1861 = vpack.c.b16 %v1677, %v1676
      %v1862 = vpack.c.b16 %v1679, %v1678
      %v1863 = vpack.c.b16 %v1681, %v1680
      %v1864 = vpack.c.b16 %v1683, %v1682
      %v1865 = vpack.c.b16 %v1685, %v1684
      %v1866 = vpack.c.b16 %v1687, %v1686
      %v1867 = vpack.c.b16 %v1689, %v1688
      %v1868 = vpack.c.b16 %v1691, %v1690
      %v1869 = vpack.c.b16 %v1693, %v1692
      %v1870 = vpack.c.b16 %v1695, %v1694
      %v1871 = vpack.c.b16 %v1697, %v1696
      %v1872 = vpack.c.b16 %v1699, %v1698
      %v1873 = vpack.c.b16 %v1701, %v1700
      %v1874 = vpack.c.b16 %v1703, %v1702
      %v1875 = vpack.c.b16 %v1705, %v1704
      %v1876 = vpack.c.b16 %v1707, %v1706
      %v1877 = vpack.c.b16 %v1709, %v1708
      %v1878 = vpack.c.b16 %v1711, %v1710
      %v1879 = vpack.c.b16 %v1713, %v1712
      %v1880 = vpack.c.b16 %v1715, %v1714
      %v1881 = vpack.c.b16 %v1717, %v1716
      %v1882 = vpack.c.b16 %v1719, %v1718
      %v1883 = vpack.c.b16 %v1721, %v1720
      %v1884 = vpack.c.b16 %v1723, %v1722
      %v1885 = vpack.c.b16 %v1725, %v1724
      %v1886 = vpack.c.b16 %v1727, %v1726
      %v1887 = vpack.c.b16 %v1729, %v1728
      %v1888 = vpack.c.b16 %v1731, %v1730
      %v1889 = vpack.c.b16 %v1733, %v1732
      %v1890 = vpack.c.b16 %v1735, %v1734
      %v1891 = vpack.c.b16 %v1737, %v1736
      %v1892 = vpack.c.b16 %v1739, %v1738
      %v1893 = vpack.c.b16 %v1741, %v1740
      %v1894 = vpack.c.b16 %v1743, %v1742
      %v1895 = vpack.c.b16 %v1745, %v1744
      %v1896 = vpack.c.b16 %v1747, %v1746
      %v1897 = vpack.c.b16 %v1749, %v1748
      %v1898 = vpack.c.b16 %v1751, %v1750
      %v1899 = vpack.c.b16 %v1753, %v1752
      %v1900 = vpack.c.b16 %v1755, %v1754
      %v1901 = vpack.c.b16 %v1757, %v1756
      %v1902 = vpack.c.b16 %v1759, %v1758
      %v1903 = vpack.c.b16 %v1761, %v1760
      %v1904 = vpack.c.b16 %v1763, %v1762
      %v1905 = vpack.c.b16 %v1765, %v1764
      %v1906 = vpack.c.b16 %v1767, %v1766
      %v1907 = vpack.c.b16 %v1769, %v1768
      %v1908 = vpack.c.b16 %v1771, %v1770
      %v1909 = vpack.c.b16 %v1773, %v1772
      %v1910 = vpack.c.b16 %v1775, %v1774
      %v1911 = vpack.c.b16 %v1777, %v1776
      %v1912 = vpack.c.b16 %v1779, %v1778
      %v1913 = vpack.c.b16 %v1781, %v1780
      %v1914 = vpack.c.b16 %v1783, %v1782
      %v1915 = vpack.c.b16 %v1785, %v1784
      %v1916 = vpack.c.b16 %v1787, %v1786
      %v1917 = vpack.c.b16 %v1789, %v1788
      %2046 = vmatprep.subr.bf16.mxu0 0
      %2047 = vmatpush1.bf16.msra.mxu0 %v1790
      %2048 = vmatprep.subr.bf16.mxu0 0
      %2049 = vmatpush1.bf16.msra.mxu0 %v1791
      %2050 = vmatprep.subr.bf16.mxu0 0
      %2051 = vmatpush1.bf16.msra.mxu0 %v1792
      %2052 = vmatprep.subr.bf16.mxu0 0
      %2053 = vmatpush1.bf16.msra.mxu0 %v1793
      %2054 = vmatprep.subr.bf16.mxu0 0
      %2055 = vmatpush1.bf16.msra.mxu0 %v1794
      %2056 = vmatprep.subr.bf16.mxu0 0
      %2057 = vmatpush1.bf16.msra.mxu0 %v1795
      %2058 = vmatprep.subr.bf16.mxu0 0
      %2059 = vmatpush1.bf16.msra.mxu0 %v1796
      %2060 = vmatprep.subr.bf16.mxu0 0
      %2061 = vmatpush1.bf16.msra.mxu0 %v1797
      %2062 = vmatprep.subr.bf16.mxu0 0
      %2063 = vmatpush1.bf16.msra.mxu0 %v1798
      %2064 = vmatprep.subr.bf16.mxu0 0
      %2065 = vmatpush1.bf16.msra.mxu0 %v1799
      %2066 = vmatprep.subr.bf16.mxu0 0
      %2067 = vmatpush1.bf16.msra.mxu0 %v1800
      %2068 = vmatprep.subr.bf16.mxu0 0
      %2069 = vmatpush1.bf16.msra.mxu0 %v1801
      %2070 = vmatprep.subr.bf16.mxu0 0
      %2071 = vmatpush1.bf16.msra.mxu0 %v1802
      %2072 = vmatprep.subr.bf16.mxu0 0
      %2073 = vmatpush1.bf16.msra.mxu0 %v1803
      %2074 = vmatprep.subr.bf16.mxu0 0
      %2075 = vmatpush1.bf16.msra.mxu0 %v1804
      %2076 = vmatprep.subr.bf16.mxu0 0
      %2077 = vmatpush1.bf16.msra.mxu0 %v1805
      %2078 = vmatprep.mubr.bf16.mxu0 %v772
      %2079 = vmatmul.mubr.bf16.gmra.mrb[0].mxu0 %v768
      %v2080 = vpop.f32.mrb[0].mxu0
      %v2081 = vadd.f32 0.0, %v2080
      %v2082 = vpop.f32.mrb[0].mxu0
      %v2083 = vpop.f32.mrb[0].mxu0
      %v2084 = vadd.f32 0.0, %v2083
      %v2085 = vpop.f32.mrb[0].mxu0
      %2086 = vmatprep.mubr.bf16.mxu0 %v836
      %2087 = vmatmul.mubr.bf16.gmra.mrb[0].mxu0 %v832
      %v2088 = vpop.f32.mrb[0].mxu0
      %v2089 = vadd.f32 0.0, %v2088
      %v2090 = vpop.f32.mrb[0].mxu0
      %v2091 = vpop.f32.mrb[0].mxu0
      %v2092 = vadd.f32 0.0, %v2091
      %v2093 = vpop.f32.mrb[0].mxu0
      %2094 = vmatprep.mubr.bf16.mxu0 %v900
      %2095 = vmatmul.mubr.bf16.gmra.mrb[0].mxu0 %v896
      %v2096 = vpop.f32.mrb[0].mxu0
      %v2097 = vadd.f32 0.0, %v2096
      %v2098 = vpop.f32.mrb[0].mxu0
      %v2099 = vpop.f32.mrb[0].mxu0
      %v2100 = vadd.f32 0.0, %v2099
      %v2101 = vpop.f32.mrb[0].mxu0
      %2102 = vmatprep.mubr.bf16.mxu0 %v964
      %2103 = vmatmul.mubr.bf16.gmra.mrb[0].mxu0 %v960
      %v2104 = vpop.f32.mrb[0].mxu0
      %v2105 = vadd.f32 0.0, %v2104
      %v2106 = vpop.f32.mrb[0].mxu0
      %v2107 = vpop.f32.mrb[0].mxu0
      %v2108 = vadd.f32 0.0, %v2107
      %v2109 = vpop.f32.mrb[0].mxu0
      %2110 = vdwg.mxu0
      %2111 = vmatprep.subr.bf16.mxu0 0
      %2112 = vmatpush1.bf16.msra.mxu0 %v1806
      %2113 = vmatprep.subr.bf16.mxu0 0
      %2114 = vmatpush1.bf16.msra.mxu0 %v1807
      %2115 = vmatprep.subr.bf16.mxu0 0
      %2116 = vmatpush1.bf16.msra.mxu0 %v1808
      %2117 = vmatprep.subr.bf16.mxu0 0
      %2118 = vmatpush1.bf16.msra.mxu0 %v1809
      %2119 = vmatprep.subr.bf16.mxu0 0
      %2120 = vmatpush1.bf16.msra.mxu0 %v1810
      %2121 = vmatprep.subr.bf16.mxu0 0
      %2122 = vmatpush1.bf16.msra.mxu0 %v1811
      %2123 = vmatprep.subr.bf16.mxu0 0
      %2124 = vmatpush1.bf16.msra.mxu0 %v1812
      %2125 = vmatprep.subr.bf16.mxu0 0
      %2126 = vmatpush1.bf16.msra.mxu0 %v1813
      %2127 = vmatprep.subr.bf16.mxu0 0
      %2128 = vmatpush1.bf16.msra.mxu0 %v1814
      %2129 = vmatprep.subr.bf16.mxu0 0
      %2130 = vmatpush1.bf16.msra.mxu0 %v1815
      %2131 = vmatprep.subr.bf16.mxu0 0
      %2132 = vmatpush1.bf16.msra.mxu0 %v1816
      %2133 = vmatprep.subr.bf16.mxu0 0
      %2134 = vmatpush1.bf16.msra.mxu0 %v1817
      %2135 = vmatprep.subr.bf16.mxu0 0
      %2136 = vmatpush1.bf16.msra.mxu0 %v1818
      %2137 = vmatprep.subr.bf16.mxu0 0
      %2138 = vmatpush1.bf16.msra.mxu0 %v1819
      %2139 = vmatprep.subr.bf16.mxu0 0
      %2140 = vmatpush1.bf16.msra.mxu0 %v1820
      %2141 = vmatprep.subr.bf16.mxu0 0
      %2142 = vmatpush1.bf16.msra.mxu0 %v1821
      %2143 = vmatprep.mubr.bf16.mxu0 %v780
      %2144 = vmatmul.mubr.bf16.gmra.mrb[0].mxu0 %v776
      %v2145 = vpop.f32.mrb[0].mxu0
      %v2146 = vadd.f32 %v2081, %v2145
      %v2147 = vpop.f32.mrb[0].mxu0
      %v2148 = vpop.f32.mrb[0].mxu0
      %v2149 = vadd.f32 %v2084, %v2148
      %v2150 = vpop.f32.mrb[0].mxu0
      %2151 = vmatprep.mubr.bf16.mxu0 %v844
      %2152 = vmatmul.mubr.bf16.gmra.mrb[0].mxu0 %v840
      %v2153 = vpop.f32.mrb[0].mxu0
      %v2154 = vadd.f32 %v2089, %v2153
      %v2155 = vpop.f32.mrb[0].mxu0
      %v2156 = vpop.f32.mrb[0].mxu0
      %v2157 = vadd.f32 %v2092, %v2156
      %v2158 = vpop.f32.mrb[0].mxu0
      %2159 = vmatprep.mubr.bf16.mxu0 %v908
      %2160 = vmatmul.mubr.bf16.gmra.mrb[0].mxu0 %v904
      %v2161 = vpop.f32.mrb[0].mxu0
      %v2162 = vadd.f32 %v2097, %v2161
      %v2163 = vpop.f32.mrb[0].mxu0
      %v2164 = vpop.f32.mrb[0].mxu0
      %v2165 = vadd.f32 %v2100, %v2164
      %v2166 = vpop.f32.mrb[0].mxu0
      %2167 = vmatprep.mubr.bf16.mxu0 %v972
      %2168 = vmatmul.mubr.bf16.gmra.mrb[0].mxu0 %v968
      %v2169 = vpop.f32.mrb[0].mxu0
      %v2170 = vadd.f32 %v2105, %v2169
      %v2171 = vpop.f32.mrb[0].mxu0
      %v2172 = vpop.f32.mrb[0].mxu0
      %v2173 = vadd.f32 %v2108, %v2172
      %v2174 = vpop.f32.mrb[0].mxu0
      %2175 = vdwg.mxu0
      %2176 = vmatprep.subr.bf16.mxu0 0
      %2177 = vmatpush1.bf16.msra.mxu0 %v1822
      %2178 = vmatprep.subr.bf16.mxu0 0
      %2179 = vmatpush1.bf16.msra.mxu0 %v1823
      %2180 = vmatprep.subr.bf16.mxu0 0
      %2181 = vmatpush1.bf16.msra.mxu0 %v1824
      %2182 = vmatprep.subr.bf16.mxu0 0
      %2183 = vmatpush1.bf16.msra.mxu0 %v1825
      %2184 = vmatprep.subr.bf16.mxu0 0
      %2185 = vmatpush1.bf16.msra.mxu0 %v1826
      %2186 = vmatprep.subr.bf16.mxu0 0
      %2187 = vmatpush1.bf16.msra.mxu0 %v1827
      %2188 = vmatprep.subr.bf16.mxu0 0
      %2189 = vmatpush1.bf16.msra.mxu0 %v1828
      %2190 = vmatprep.subr.bf16.mxu0 0
      %2191 = vmatpush1.bf16.msra.mxu0 %v1829
      %2192 = vmatprep.subr.bf16.mxu0 0
      %2193 = vmatpush1.bf16.msra.mxu0 %v1830
      %2194 = vmatprep.subr.bf16.mxu0 0
      %2195 = vmatpush1.bf16.msra.mxu0 %v1831
      %2196 = vmatprep.subr.bf16.mxu0 0
      %2197 = vmatpush1.bf16.msra.mxu0 %v1832
      %2198 = vmatprep.subr.bf16.mxu0 0
      %2199 = vmatpush1.bf16.msra.mxu0 %v1833
      %2200 = vmatprep.subr.bf16.mxu0 0
      %2201 = vmatpush1.bf16.msra.mxu0 %v1834
      %2202 = vmatprep.subr.bf16.mxu0 0
      %2203 = vmatpush1.bf16.msra.mxu0 %v1835
      %2204 = vmatprep.subr.bf16.mxu0 0
      %2205 = vmatpush1.bf16.msra.mxu0 %v1836
      %2206 = vmatprep.subr.bf16.mxu0 0
      %2207 = vmatpush1.bf16.msra.mxu0 %v1837
      %2208 = vmatprep.mubr.bf16.mxu0 %v788
      %2209 = vmatmul.mubr.bf16.gmra.mrb[0].mxu0 %v784
      %v2210 = vpop.f32.mrb[0].mxu0
      %v2211 = vadd.f32 %v2146, %v2210
      %v2212 = vpop.f32.mrb[0].mxu0
      %v2213 = vpop.f32.mrb[0].mxu0
      %v2214 = vadd.f32 %v2149, %v2213
      %v2215 = vpop.f32.mrb[0].mxu0
      %2216 = vmatprep.mubr.bf16.mxu0 %v852
      %2217 = vmatmul.mubr.bf16.gmra.mrb[0].mxu0 %v848
      %v2218 = vpop.f32.mrb[0].mxu0
      %v2219 = vadd.f32 %v2154, %v2218
      %v2220 = vpop.f32.mrb[0].mxu0
      %v2221 = vpop.f32.mrb[0].mxu0
      %v2222 = vadd.f32 %v2157, %v2221
      %v2223 = vpop.f32.mrb[0].mxu0
      %2224 = vmatprep.mubr.bf16.mxu0 %v916
      %2225 = vmatmul.mubr.bf16.gmra.mrb[0].mxu0 %v912
      %v2226 = vpop.f32.mrb[0].mxu0
      %v2227 = vadd.f32 %v2162, %v2226
      %v2228 = vpop.f32.mrb[0].mxu0
      %v2229 = vpop.f32.mrb[0].mxu0
      %v2230 = vadd.f32 %v2165, %v2229
      %v2231 = vpop.f32.mrb[0].mxu0
      %2232 = vmatprep.mubr.bf16.mxu0 %v980
      %2233 = vmatmul.mubr.bf16.gmra.mrb[0].mxu0 %v976
      %v2234 = vpop.f32.mrb[0].mxu0
      %v2235 = vadd.f32 %v2170, %v2234
      %v2236 = vpop.f32.mrb[0].mxu0
      %v2237 = vpop.f32.mrb[0].mxu0
      %v2238 = vadd.f32 %v2173, %v2237
      %v2239 = vpop.f32.mrb[0].mxu0
      %2240 = vdwg.mxu0
      %2241 = vmatprep.subr.bf16.mxu0 0
      %2242 = vmatpush1.bf16.msra.mxu0 %v1838
      %2243 = vmatprep.subr.bf16.mxu0 0
      %2244 = vmatpush1.bf16.msra.mxu0 %v1839
      %2245 = vmatprep.subr.bf16.mxu0 0
      %2246 = vmatpush1.bf16.msra.mxu0 %v1840
      %2247 = vmatprep.subr.bf16.mxu0 0
      %2248 = vmatpush1.bf16.msra.mxu0 %v1841
      %2249 = vmatprep.subr.bf16.mxu0 0
      %2250 = vmatpush1.bf16.msra.mxu0 %v1842
      %2251 = vmatprep.subr.bf16.mxu0 0
      %2252 = vmatpush1.bf16.msra.mxu0 %v1843
      %2253 = vmatprep.subr.bf16.mxu0 0
      %2254 = vmatpush1.bf16.msra.mxu0 %v1844
      %2255 = vmatprep.subr.bf16.mxu0 0
      %2256 = vmatpush1.bf16.msra.mxu0 %v1845
      %2257 = vmatprep.subr.bf16.mxu0 0
      %2258 = vmatpush1.bf16.msra.mxu0 %v1846
      %2259 = vmatprep.subr.bf16.mxu0 0
      %2260 = vmatpush1.bf16.msra.mxu0 %v1847
      %2261 = vmatprep.subr.bf16.mxu0 0
      %2262 = vmatpush1.bf16.msra.mxu0 %v1848
      %2263 = vmatprep.subr.bf16.mxu0 0
      %2264 = vmatpush1.bf16.msra.mxu0 %v1849
      %2265 = vmatprep.subr.bf16.mxu0 0
      %2266 = vmatpush1.bf16.msra.mxu0 %v1850
      %2267 = vmatprep.subr.bf16.mxu0 0
      %2268 = vmatpush1.bf16.msra.mxu0 %v1851
      %2269 = vmatprep.subr.bf16.mxu0 0
      %2270 = vmatpush1.bf16.msra.mxu0 %v1852
      %2271 = vmatprep.subr.bf16.mxu0 0
      %2272 = vmatpush1.bf16.msra.mxu0 %v1853
      %2273 = vmatprep.mubr.bf16.mxu0 %v796
      %2274 = vmatmul.mubr.bf16.gmra.mrb[0].mxu0 %v792
      %v2275 = vpop.f32.mrb[0].mxu0
      %v2276 = vadd.f32 %v2211, %v2275
      %v2277 = vpop.f32.mrb[0].mxu0
      %v2278 = vpop.f32.mrb[0].mxu0
      %v2279 = vadd.f32 %v2214, %v2278
      %v2280 = vpop.f32.mrb[0].mxu0
      %2281 = vmatprep.mubr.bf16.mxu0 %v860
      %2282 = vmatmul.mubr.bf16.gmra.mrb[0].mxu0 %v856
      %v2283 = vpop.f32.mrb[0].mxu0
      %v2284 = vadd.f32 %v2219, %v2283
      %v2285 = vpop.f32.mrb[0].mxu0
      %v2286 = vpop.f32.mrb[0].mxu0
      %v2287 = vadd.f32 %v2222, %v2286
      %v2288 = vpop.f32.mrb[0].mxu0
      %2289 = vmatprep.mubr.bf16.mxu0 %v924
      %2290 = vmatmul.mubr.bf16.gmra.mrb[0].mxu0 %v920
      %v2291 = vpop.f32.mrb[0].mxu0
      %v2292 = vadd.f32 %v2227, %v2291
      %v2293 = vpop.f32.mrb[0].mxu0
      %v2294 = vpop.f32.mrb[0].mxu0
      %v2295 = vadd.f32 %v2230, %v2294
      %v2296 = vpop.f32.mrb[0].mxu0
      %2297 = vmatprep.mubr.bf16.mxu0 %v988
      %2298 = vmatmul.mubr.bf16.gmra.mrb[0].mxu0 %v984
      %v2299 = vpop.f32.mrb[0].mxu0
      %v2300 = vadd.f32 %v2235, %v2299
      %v2301 = vpop.f32.mrb[0].mxu0
      %v2302 = vpop.f32.mrb[0].mxu0
      %v2303 = vadd.f32 %v2238, %v2302
      %v2304 = vpop.f32.mrb[0].mxu0
      %2305 = vdwg.mxu0
      %2306 = vmatprep.subr.bf16.mxu0 0
      %2307 = vmatpush1.bf16.msra.mxu0 %v1854
      %2308 = vmatprep.subr.bf16.mxu0 0
      %2309 = vmatpush1.bf16.msra.mxu0 %v1855
      %2310 = vmatprep.subr.bf16.mxu0 0
      %2311 = vmatpush1.bf16.msra.mxu0 %v1856
      %2312 = vmatprep.subr.bf16.mxu0 0
      %2313 = vmatpush1.bf16.msra.mxu0 %v1857
      %2314 = vmatprep.subr.bf16.mxu0 0
      %2315 = vmatpush1.bf16.msra.mxu0 %v1858
      %2316 = vmatprep.subr.bf16.mxu0 0
      %2317 = vmatpush1.bf16.msra.mxu0 %v1859
      %2318 = vmatprep.subr.bf16.mxu0 0
      %2319 = vmatpush1.bf16.msra.mxu0 %v1860
      %2320 = vmatprep.subr.bf16.mxu0 0
      %2321 = vmatpush1.bf16.msra.mxu0 %v1861
      %2322 = vmatprep.subr.bf16.mxu0 0
      %2323 = vmatpush1.bf16.msra.mxu0 %v1862
      %2324 = vmatprep.subr.bf16.mxu0 0
      %2325 = vmatpush1.bf16.msra.mxu0 %v1863
      %2326 = vmatprep.subr.bf16.mxu0 0
      %2327 = vmatpush1.bf16.msra.mxu0 %v1864
      %2328 = vmatprep.subr.bf16.mxu0 0
      %2329 = vmatpush1.bf16.msra.mxu0 %v1865
      %2330 = vmatprep.subr.bf16.mxu0 0
      %2331 = vmatpush1.bf16.msra.mxu0 %v1866
      %2332 = vmatprep.subr.bf16.mxu0 0
      %2333 = vmatpush1.bf16.msra.mxu0 %v1867
      %2334 = vmatprep.subr.bf16.mxu0 0
      %2335 = vmatpush1.bf16.msra.mxu0 %v1868
      %2336 = vmatprep.subr.bf16.mxu0 0
      %2337 = vmatpush1.bf16.msra.mxu0 %v1869
      %2338 = vmatprep.mubr.bf16.mxu0 %v804
      %2339 = vmatmul.mubr.bf16.gmra.mrb[0].mxu0 %v800
      %v2340 = vpop.f32.mrb[0].mxu0
      %v2341 = vadd.f32 %v2276, %v2340
      %v2342 = vpop.f32.mrb[0].mxu0
      %v2343 = vpop.f32.mrb[0].mxu0
      %v2344 = vadd.f32 %v2279, %v2343
      %v2345 = vpop.f32.mrb[0].mxu0
      %2346 = vmatprep.mubr.bf16.mxu0 %v868
      %2347 = vmatmul.mubr.bf16.gmra.mrb[0].mxu0 %v864
      %v2348 = vpop.f32.mrb[0].mxu0
      %v2349 = vadd.f32 %v2284, %v2348
      %v2350 = vpop.f32.mrb[0].mxu0
      %v2351 = vpop.f32.mrb[0].mxu0
      %v2352 = vadd.f32 %v2287, %v2351
      %v2353 = vpop.f32.mrb[0].mxu0
      %2354 = vmatprep.mubr.bf16.mxu0 %v932
      %2355 = vmatmul.mubr.bf16.gmra.mrb[0].mxu0 %v928
      %v2356 = vpop.f32.mrb[0].mxu0
      %v2357 = vadd.f32 %v2292, %v2356
      %v2358 = vpop.f32.mrb[0].mxu0
      %v2359 = vpop.f32.mrb[0].mxu0
      %v2360 = vadd.f32 %v2295, %v2359
      %v2361 = vpop.f32.mrb[0].mxu0
      %2362 = vmatprep.mubr.bf16.mxu0 %v996
      %2363 = vmatmul.mubr.bf16.gmra.mrb[0].mxu0 %v992
      %v2364 = vpop.f32.mrb[0].mxu0
      %v2365 = vadd.f32 %v2300, %v2364
      %v2366 = vpop.f32.mrb[0].mxu0
      %v2367 = vpop.f32.mrb[0].mxu0
      %v2368 = vadd.f32 %v2303, %v2367
      %v2369 = vpop.f32.mrb[0].mxu0
      %2370 = vdwg.mxu0
      %2371 = vmatprep.subr.bf16.mxu0 0
      %2372 = vmatpush1.bf16.msra.mxu0 %v1870
      %2373 = vmatprep.subr.bf16.mxu0 0
      %2374 = vmatpush1.bf16.msra.mxu0 %v1871
      %2375 = vmatprep.subr.bf16.mxu0 0
      %2376 = vmatpush1.bf16.msra.mxu0 %v1872
      %2377 = vmatprep.subr.bf16.mxu0 0
      %2378 = vmatpush1.bf16.msra.mxu0 %v1873
      %2379 = vmatprep.subr.bf16.mxu0 0
      %2380 = vmatpush1.bf16.msra.mxu0 %v1874
      %2381 = vmatprep.subr.bf16.mxu0 0
      %2382 = vmatpush1.bf16.msra.mxu0 %v1875
      %2383 = vmatprep.subr.bf16.mxu0 0
      %2384 = vmatpush1.bf16.msra.mxu0 %v1876
      %2385 = vmatprep.subr.bf16.mxu0 0
      %2386 = vmatpush1.bf16.msra.mxu0 %v1877
      %2387 = vmatprep.subr.bf16.mxu0 0
      %2388 = vmatpush1.bf16.msra.mxu0 %v1878
      %2389 = vmatprep.subr.bf16.mxu0 0
      %2390 = vmatpush1.bf16.msra.mxu0 %v1879
      %2391 = vmatprep.subr.bf16.mxu0 0
      %2392 = vmatpush1.bf16.msra.mxu0 %v1880
      %2393 = vmatprep.subr.bf16.mxu0 0
      %2394 = vmatpush1.bf16.msra.mxu0 %v1881
      %2395 = vmatprep.subr.bf16.mxu0 0
      %2396 = vmatpush1.bf16.msra.mxu0 %v1882
      %2397 = vmatprep.subr.bf16.mxu0 0
      %2398 = vmatpush1.bf16.msra.mxu0 %v1883
      %2399 = vmatprep.subr.bf16.mxu0 0
      %2400 = vmatpush1.bf16.msra.mxu0 %v1884
      %2401 = vmatprep.subr.bf16.mxu0 0
      %2402 = vmatpush1.bf16.msra.mxu0 %v1885
      %2403 = vmatprep.mubr.bf16.mxu0 %v812
      %2404 = vmatmul.mubr.bf16.gmra.mrb[0].mxu0 %v808
      %v2405 = vpop.f32.mrb[0].mxu0
      %v2406 = vadd.f32 %v2341, %v2405
      %v2407 = vpop.f32.mrb[0].mxu0
      %v2408 = vpop.f32.mrb[0].mxu0
      %v2409 = vadd.f32 %v2344, %v2408
      %v2410 = vpop.f32.mrb[0].mxu0
      %2411 = vmatprep.mubr.bf16.mxu0 %v876
      %2412 = vmatmul.mubr.bf16.gmra.mrb[0].mxu0 %v872
      %v2413 = vpop.f32.mrb[0].mxu0
      %v2414 = vadd.f32 %v2349, %v2413
      %v2415 = vpop.f32.mrb[0].mxu0
      %v2416 = vpop.f32.mrb[0].mxu0
      %v2417 = vadd.f32 %v2352, %v2416
      %v2418 = vpop.f32.mrb[0].mxu0
      %2419 = vmatprep.mubr.bf16.mxu0 %v940
      %2420 = vmatmul.mubr.bf16.gmra.mrb[0].mxu0 %v936
      %v2421 = vpop.f32.mrb[0].mxu0
      %v2422 = vadd.f32 %v2357, %v2421
      %v2423 = vpop.f32.mrb[0].mxu0
      %v2424 = vpop.f32.mrb[0].mxu0
      %v2425 = vadd.f32 %v2360, %v2424
      %v2426 = vpop.f32.mrb[0].mxu0
      %2427 = vmatprep.mubr.bf16.mxu0 %v1004
      %2428 = vmatmul.mubr.bf16.gmra.mrb[0].mxu0 %v1000
      %v2429 = vpop.f32.mrb[0].mxu0
      %v2430 = vadd.f32 %v2365, %v2429
      %v2431 = vpop.f32.mrb[0].mxu0
      %v2432 = vpop.f32.mrb[0].mxu0
      %v2433 = vadd.f32 %v2368, %v2432
      %v2434 = vpop.f32.mrb[0].mxu0
      %2435 = vdwg.mxu0
      %2436 = vmatprep.subr.bf16.mxu0 0
      %2437 = vmatpush1.bf16.msra.mxu0 %v1886
      %2438 = vmatprep.subr.bf16.mxu0 0
      %2439 = vmatpush1.bf16.msra.mxu0 %v1887
      %2440 = vmatprep.subr.bf16.mxu0 0
      %2441 = vmatpush1.bf16.msra.mxu0 %v1888
      %2442 = vmatprep.subr.bf16.mxu0 0
      %2443 = vmatpush1.bf16.msra.mxu0 %v1889
      %2444 = vmatprep.subr.bf16.mxu0 0
      %2445 = vmatpush1.bf16.msra.mxu0 %v1890
      %2446 = vmatprep.subr.bf16.mxu0 0
      %2447 = vmatpush1.bf16.msra.mxu0 %v1891
      %2448 = vmatprep.subr.bf16.mxu0 0
      %2449 = vmatpush1.bf16.msra.mxu0 %v1892
      %2450 = vmatprep.subr.bf16.mxu0 0
      %2451 = vmatpush1.bf16.msra.mxu0 %v1893
      %2452 = vmatprep.subr.bf16.mxu0 0
      %2453 = vmatpush1.bf16.msra.mxu0 %v1894
      %2454 = vmatprep.subr.bf16.mxu0 0
      %2455 = vmatpush1.bf16.msra.mxu0 %v1895
      %2456 = vmatprep.subr.bf16.mxu0 0
      %2457 = vmatpush1.bf16.msra.mxu0 %v1896
      %2458 = vmatprep.subr.bf16.mxu0 0
      %2459 = vmatpush1.bf16.msra.mxu0 %v1897
      %2460 = vmatprep.subr.bf16.mxu0 0
      %2461 = vmatpush1.bf16.msra.mxu0 %v1898
      %2462 = vmatprep.subr.bf16.mxu0 0
      %2463 = vmatpush1.bf16.msra.mxu0 %v1899
      %2464 = vmatprep.subr.bf16.mxu0 0
      %2465 = vmatpush1.bf16.msra.mxu0 %v1900
      %2466 = vmatprep.subr.bf16.mxu0 0
      %2467 = vmatpush1.bf16.msra.mxu0 %v1901
      %2468 = vmatprep.mubr.bf16.mxu0 %v820
      %2469 = vmatmul.mubr.bf16.gmra.mrb[0].mxu0 %v816
      %v2470 = vpop.f32.mrb[0].mxu0
      %v2471 = vadd.f32 %v2406, %v2470
      %v2472 = vpop.f32.mrb[0].mxu0
      %v2473 = vpop.f32.mrb[0].mxu0
      %v2474 = vadd.f32 %v2409, %v2473
      %v2475 = vpop.f32.mrb[0].mxu0
      %2476 = vmatprep.mubr.bf16.mxu0 %v884
      %2477 = vmatmul.mubr.bf16.gmra.mrb[0].mxu0 %v880
      %v2478 = vpop.f32.mrb[0].mxu0
      %v2479 = vadd.f32 %v2414, %v2478
      %v2480 = vpop.f32.mrb[0].mxu0
      %v2481 = vpop.f32.mrb[0].mxu0
      %v2482 = vadd.f32 %v2417, %v2481
      %v2483 = vpop.f32.mrb[0].mxu0
      %2484 = vmatprep.mubr.bf16.mxu0 %v948
      %2485 = vmatmul.mubr.bf16.gmra.mrb[0].mxu0 %v944
      %v2486 = vpop.f32.mrb[0].mxu0
      %v2487 = vadd.f32 %v2422, %v2486
      %v2488 = vpop.f32.mrb[0].mxu0
      %v2489 = vpop.f32.mrb[0].mxu0
      %v2490 = vadd.f32 %v2425, %v2489
      %v2491 = vpop.f32.mrb[0].mxu0
      %2492 = vmatprep.mubr.bf16.mxu0 %v1012
      %2493 = vmatmul.mubr.bf16.gmra.mrb[0].mxu0 %v1008
      %v2494 = vpop.f32.mrb[0].mxu0
      %v2495 = vadd.f32 %v2430, %v2494
      %v2496 = vpop.f32.mrb[0].mxu0
      %v2497 = vpop.f32.mrb[0].mxu0
      %v2498 = vadd.f32 %v2433, %v2497
      %v2499 = vpop.f32.mrb[0].mxu0
      %2500 = vdwg.mxu0
      %2501 = vmatprep.subr.bf16.mxu0 0
      %2502 = vmatpush1.bf16.msra.mxu0 %v1902
      %2503 = vmatprep.subr.bf16.mxu0 0
      %2504 = vmatpush1.bf16.msra.mxu0 %v1903
      %2505 = vmatprep.subr.bf16.mxu0 0
      %2506 = vmatpush1.bf16.msra.mxu0 %v1904
      %2507 = vmatprep.subr.bf16.mxu0 0
      %2508 = vmatpush1.bf16.msra.mxu0 %v1905
      %2509 = vmatprep.subr.bf16.mxu0 0
      %2510 = vmatpush1.bf16.msra.mxu0 %v1906
      %2511 = vmatprep.subr.bf16.mxu0 0
      %2512 = vmatpush1.bf16.msra.mxu0 %v1907
      %2513 = vmatprep.subr.bf16.mxu0 0
      %2514 = vmatpush1.bf16.msra.mxu0 %v1908
      %2515 = vmatprep.subr.bf16.mxu0 0
      %2516 = vmatpush1.bf16.msra.mxu0 %v1909
      %2517 = vmatprep.subr.bf16.mxu0 0
      %2518 = vmatpush1.bf16.msra.mxu0 %v1910
      %2519 = vmatprep.subr.bf16.mxu0 0
      %2520 = vmatpush1.bf16.msra.mxu0 %v1911
      %2521 = vmatprep.subr.bf16.mxu0 0
      %2522 = vmatpush1.bf16.msra.mxu0 %v1912
      %2523 = vmatprep.subr.bf16.mxu0 0
      %2524 = vmatpush1.bf16.msra.mxu0 %v1913
      %2525 = vmatprep.subr.bf16.mxu0 0
      %2526 = vmatpush1.bf16.msra.mxu0 %v1914
      %2527 = vmatprep.subr.bf16.mxu0 0
      %2528 = vmatpush1.bf16.msra.mxu0 %v1915
      %2529 = vmatprep.subr.bf16.mxu0 0
      %2530 = vmatpush1.bf16.msra.mxu0 %v1916
      %2531 = vmatprep.subr.bf16.mxu0 0
      %2532 = vmatpush1.bf16.msra.mxu0 %v1917
      %2533 = vmatprep.mubr.bf16.mxu0 %v828
      %2534 = vmatmul.mubr.bf16.gmra.mrb[0].mxu0 %v824
      %v2535 = vpop.f32.mrb[0].mxu0
      %v2536 = vadd.f32 %v2471, %v2535
      %v2537 = vpop.f32.mrb[0].mxu0
      %v2538 = vpop.f32.mrb[0].mxu0
      %v2539 = vadd.f32 %v2474, %v2538
      %v2540 = vpop.f32.mrb[0].mxu0
      %2541 = vmatprep.mubr.bf16.mxu0 %v892
      %2542 = vmatmul.mubr.bf16.gmra.mrb[0].mxu0 %v888
      %v2543 = vpop.f32.mrb[0].mxu0
      %v2544 = vadd.f32 %v2479, %v2543
      %v2545 = vpop.f32.mrb[0].mxu0
      %v2546 = vpop.f32.mrb[0].mxu0
      %v2547 = vadd.f32 %v2482, %v2546
      %v2548 = vpop.f32.mrb[0].mxu0
      %2549 = vmatprep.mubr.bf16.mxu0 %v956
      %2550 = vmatmul.mubr.bf16.gmra.mrb[0].mxu0 %v952
      %v2551 = vpop.f32.mrb[0].mxu0
      %v2552 = vadd.f32 %v2487, %v2551
      %v2553 = vpop.f32.mrb[0].mxu0
      %v2554 = vpop.f32.mrb[0].mxu0
      %v2555 = vadd.f32 %v2490, %v2554
      %v2556 = vpop.f32.mrb[0].mxu0
      %2557 = vmatprep.mubr.bf16.mxu0 %v1020
      %2558 = vmatmul.mubr.bf16.gmra.mrb[0].mxu0 %v1016
      %v2559 = vpop.f32.mrb[0].mxu0
      %v2560 = vadd.f32 %v2495, %v2559
      %v2561 = vpop.f32.mrb[0].mxu0
      %v2562 = vpop.f32.mrb[0].mxu0
      %v2563 = vadd.f32 %v2498, %v2562
      %v2564 = vpop.f32.mrb[0].mxu0
      %2565 = vdwg.mxu0
      %v2566 = vpack.c.bf16 %v2539, %v2536
      %v2567 = vpack.c.bf16 %v2547, %v2544
      %v2568 = vpack.c.bf16 %v2555, %v2552
      %v2569 = vpack.c.bf16 %v2563, %v2560
      %v2574 = vunpack.c.l.b16 %v2566
      %v2575 = vunpack.c.h.b16 %v2566
      %v2576 = vunpack.c.l.b16 %v2567
      %v2577 = vunpack.c.h.b16 %v2567
      %v2578 = vunpack.c.l.b16 %v2568
      %v2579 = vunpack.c.h.b16 %v2568
      %v2580 = vunpack.c.l.b16 %v2569
      %v2581 = vunpack.c.h.b16 %v2569
      %v2582 = vpack.c.b16 %v2574, %v2574
      %v2583 = vpack.c.b16 %v2575, %v2575
      %v2584 = vpack.c.b16 %v2576, %v2576
      %v2585 = vpack.c.b16 %v2577, %v2577
      %v2586 = vpack.c.b16 %v2578, %v2578
      %v2587 = vpack.c.b16 %v2579, %v2579
      %v2588 = vpack.c.b16 %v2580, %v2580
      %v2589 = vpack.c.b16 %v2581, %v2581
      %2598 = vst [vmem:[%s208] sm:$0xf] %v2582
      %2599 = vst [vmem:[%s208 + $0x4] sm:$0xf] %v2583
      %2600 = vst [vmem:[%s208 + $0x8] sm:$0xf] %v2584
      %2601 = vst [vmem:[%s208 + $0xc] sm:$0xf] %v2585
      %2602 = vst [vmem:[%s208 + $0x10] sm:$0xf] %v2586
      %2603 = vst [vmem:[%s208 + $0x14] sm:$0xf] %v2587
      %2604 = vst [vmem:[%s208 + $0x18] sm:$0xf] %v2588
      %2605 = vst [vmem:[%s208 + $0x1c] sm:$0xf] %v2589
      %v2606 = vadd.f32 %v2536, %v2539
      %v2607 = vadd.f32 %v2606, %v2544
      %v2608 = vadd.f32 %v2607, %v2547
      %v2609 = vadd.f32 %v2608, %v2552
      %v2610 = vadd.f32 %v2609, %v2555
      %v2611 = vadd.f32 %v2610, %v2560
      %v2612 = vadd.f32 %v2611, %v2563
      %v2613 = vrot.slane %v2612, 4
      %v2614 = vadd.f32 %v2612, %v2613
      %v2615 = vrot.slane %v2614, 2
      %v2616 = vadd.f32 %v2614, %v2615
      %v2617 = vrot.slane %v2616, 1
      %v2618 = vadd.f32 %v2616, %v2617
      %2619 = vst [vmem:[%s211] sm:$0x1] %v2618
      %v2620 = vmul.f32 %v2536, %v2536
      %v2621 = vmul.f32 %v2539, %v2539
      %v2622 = vmul.f32 %v2544, %v2544
      %v2623 = vmul.f32 %v2547, %v2547
      %v2624 = vmul.f32 %v2552, %v2552
      %v2625 = vmul.f32 %v2555, %v2555
      %v2626 = vmul.f32 %v2560, %v2560
      %v2627 = vmul.f32 %v2563, %v2563
      %v2628 = vadd.f32 %v2620, %v2621
      %v2629 = vadd.f32 %v2628, %v2622
      %v2630 = vadd.f32 %v2629, %v2623
      %v2631 = vadd.f32 %v2630, %v2624
      %v2632 = vadd.f32 %v2631, %v2625
      %v2633 = vadd.f32 %v2632, %v2626
      %v2634 = vadd.f32 %v2633, %v2627
      %v2635 = vrot.slane %v2634, 4
      %v2636 = vadd.f32 %v2634, %v2635
      %v2637 = vrot.slane %v2636, 2
      %v2638 = vadd.f32 %v2636, %v2637
      %v2639 = vrot.slane %v2638, 1
      %v2640 = vadd.f32 %v2638, %v2639
      %2641 = vst [vmem:[%s214] sm:$0x1] %v2640
      %p2642 = scmp.lt.s32.totalorder %s16, 1
      %s2643 = scalar_select %p2642, %s16, 1
      %s2644 = smul.addr %s2643, 8
      %s2645 = smul.addr %s2644, 4
      %s2646 = scalar_lea.vmem %s2, %s2645
      %p2647 = scmp.lt.s32.totalorder %s16, 1
      %s2648 = scalar_select %p2647, %s16, 1
      %s2649 = scalar_lea.vmem %s3, %s2648
      %p2650 = scmp.lt.s32.totalorder %s16, 1
      %s2651 = scalar_select %p2650, %s16, 1
      %s2652 = scalar_lea.vmem %s4, %s2651
      // Predicated region
      $region29: #{patch_discriminator_forward.6} parent=27 // pred_check
        %p2653 = pneg %p81
      $region30: #{patch_discriminator_forward.6} parent=27 // pred_check_branch
        %2655 = sbr.rel (%p2653) target = $region32
      $region31: #{patch_discriminator_forward.6} parent=27 // pred_region
        _
      $region32: #{patch_discriminator_forward.6} parent=27 // pred_fallthru
        _
      // Predicated region
      $region33: #{patch_discriminator_forward.6} parent=27 // pred_check
        %p2656 = pneg %p107
      $region34: #{patch_discriminator_forward.6} parent=27 // pred_check_branch
        %2658 = sbr.rel (%p2656) target = $region36
      $region35: #{patch_discriminator_forward.6} parent=27 // pred_region
        _
      $region36: #{patch_discriminator_forward.6} parent=27 // pred_fallthru
        _
      // Predicated region
      $region37: #{patch_discriminator_forward.6} parent=27 // pred_check
        %p2659 = pneg %p133
      $region38: #{patch_discriminator_forward.6} parent=27 // pred_check_branch
        %2661 = sbr.rel (%p2659) target = $region40
      $region39: #{patch_discriminator_forward.6} parent=27 // pred_region
        _
      $region40: #{patch_discriminator_forward.6} parent=27 // pred_fallthru
        _
    $region28: #{patch_discriminator_forward.6} parent=5 // pred_fallthru
      _
    %p2662 = scmp.le.s32.totalorder 2, %s11
    // Predicated region
    $region41: #{patch_discriminator_forward.6} parent=5 // pred_check
      %p2663 = pneg %p2662
    $region42: #{patch_discriminator_forward.6} parent=5 // pred_check_branch
      %2665 = sbr.rel (%p2663) target = $region44
    $region43: #{patch_discriminator_forward.6} parent=5 // pred_region
      %s2666 = ssub.s32 %s11, 2
      // Predicated region
      $region45: #{patch_discriminator_forward.6} parent=43 // pred_check
        %p2667 = pneg %p87
      $region46: #{patch_discriminator_forward.6} parent=43 // pred_check_branch
        %2669 = sbr.rel (%p2667) target = $region48
      $region47: #{patch_discriminator_forward.6} parent=43 // pred_region
        %p2670 = scmp.lt.s32.totalorder %s17, 1
        %s2671 = scalar_select %p2670, %s17, 1
        %s2672 = smul.addr %s2671, 8
        %s2673 = smul.addr %s2672, 4
        %s2674 = scalar_lea.vmem %s2, %s2673
      $region48: #{patch_discriminator_forward.6} parent=43 // pred_fallthru
        _
      // Predicated region
      $region49: #{patch_discriminator_forward.6} parent=43 // pred_check
        %p2675 = pneg %p113
      $region50: #{patch_discriminator_forward.6} parent=43 // pred_check_branch
        %2677 = sbr.rel (%p2675) target = $region52
      $region51: #{patch_discriminator_forward.6} parent=43 // pred_region
        %p2678 = scmp.lt.s32.totalorder %s17, 1
        %s2679 = scalar_select %p2678, %s17, 1
        %s2680 = scalar_lea.vmem %s3, %s2679
      $region52: #{patch_discriminator_forward.6} parent=43 // pred_fallthru
        _
      // Predicated region
      $region53: #{patch_discriminator_forward.6} parent=43 // pred_check
        %p2681 = pneg %p139
      $region54: #{patch_discriminator_forward.6} parent=43 // pred_check_branch
        %2683 = sbr.rel (%p2681) target = $region56
      $region55: #{patch_discriminator_forward.6} parent=43 // pred_region
        %p2684 = scmp.lt.s32.totalorder %s17, 1
        %s2685 = scalar_select %p2684, %s17, 1
        %s2686 = scalar_lea.vmem %s4, %s2685
      $region56: #{patch_discriminator_forward.6} parent=43 // pred_fallthru
        _
    $region44: #{patch_discriminator_forward.6} parent=5 // pred_fallthru
      _
  $region6: #{patch_discriminator_forward.6} parent=0 // loop_footer
    %s15 = sadd.s32 1, %s11
  $region7: #{patch_discriminator_forward.6} parent=0 // loop_footer_branch
    %10 = sbr.rel target = $region3
  $region8: #{patch_discriminator_forward.6} parent=0 // loop_exit
    _

// kernel: patch_discriminator_forward.7
$region0: #{patch_discriminator_forward.7}
  #allocation0 [shape = 'u32[]', space=smem, size = 0x4, offset = 0x4, fixed_abs, tag = 'smem constant byte address 0x4 - core index']
  #allocation1 [shape = 'u32[144,128]{1,0:T(1,128)}', space=vmem, size = 0x12000, scoped, tag = 'internal scratch']
  %s0 = inlined_call_operand.vmem [shape: bf16[2,10,5,256], index: 0, kind: input, shape index: {}]
  %s1 = inlined_call_operand.vmem [shape: bf16[2048,128], index: 1, kind: input, shape index: {}]
  %s2 = inlined_call_operand.vmem [shape: bf16[2,16,128], index: 2, kind: output, shape index: {0}]
  %s3 = inlined_call_operand.vmem [shape: f32[2,1,128], index: 3, kind: output, shape index: {1}]
  %s4 = inlined_call_operand.vmem [shape: f32[2,1,128], index: 4, kind: output, shape index: {2}]
  %5 = xla_tuple %s2, %s3, %s4
  %s6 = sld [smem:[#allocation0]]
  $region57: #{patch_discriminator_forward.7} parent=0
    _
  %s8 = ssub.s32 1, %s6
  %s9 = scalar_select 0, %s8, %s6
  loop: start=0, step=1, limit=4
  $region2: #{patch_discriminator_forward.7} parent=0 // loop_pre_header
    _
  $region3: #{patch_discriminator_forward.7} parent=0 // loop_header
    %s11 = sphi 0, %s15
    %p12 = scmp.ge.s32.totalorder %s11, 4
    %s21 = sphi 0, %s23
    %s24 = sphi 0, %s21
    %s25 = sphi 0, %s24
    %s41 = sphi 0, %s25
    %s45 = sphi 0, %s45
    %s47 = sphi 0, %s45
    %s48 = sphi 0, %s47
    %s62 = sphi 0, %s48
    %s68 = sphi 0, %s70
    %s71 = sphi 0, %s68
    %s72 = sphi 0, %s71
    %s88 = sphi 0, %s72
    %s94 = sphi 0, %s96
    %s97 = sphi 0, %s94
    %s98 = sphi 0, %s97
    %s114 = sphi 0, %s98
    %s120 = sphi 0, %s122
    %s123 = sphi 0, %s120
    %s124 = sphi 0, %s123
    %s140 = sphi 0, %s124
  $region4: #{patch_discriminator_forward.7} parent=0 // loop_header_branch
    %14 = sbr.rel (%p12) target = $region8
  $region5: #{patch_discriminator_forward.7} parent=0 // loop_body
    %s16 = ssub.s32 %s11, 1
    %s17 = ssub.s32 %s11, 2
    %s18 = sadd.s32 %s11, 1
    %s19 = ssub.s32 %s11, %s18
    %p20 = scmp.eq.s32.totalorder %s19, 0
    %s22 = sadd.s32 %s21, 1
    %s23 = scalar_select %p20, %s21, %s22
    %p26 = pneg %p20
    %p27 = scmp.eq.s32.totalorder %s11, 1
    %p28 = por %p26, %p27
    %p29 = scmp.ne.s32.totalorder %s21, %s24
    %p30 = scmp.eq.s32.totalorder %s11, 0
    %p31 = por %p29, %p30
    %p32 = scmp.ne.s32.totalorder %s21, %s24
    %p33 = scmp.eq.s32.totalorder %s16, 1
    %p34 = por %p32, %p33
    %p35 = scmp.ne.s32.totalorder %s24, %s25
    %p36 = scmp.eq.s32.totalorder %s16, 0
    %p37 = por %p35, %p36
    %p38 = scmp.ne.s32.totalorder %s24, %s25
    %p39 = scmp.eq.s32.totalorder %s17, 1
    %p40 = por %p38, %p39
    %p42 = scmp.ne.s32.totalorder %s25, %s41
    %p43 = scmp.eq.s32.totalorder %s17, 0
    %p44 = por %p42, %p43
    %s46 = sadd.s32 %s45, 1
    %p49 = scmp.eq.s32.totalorder %s11, 1
    %p50 = scmp.ne.s32.totalorder %s45, %s47
    %p51 = scmp.eq.s32.totalorder %s11, 0
    %p52 = por %p50, %p51
    %p53 = scmp.ne.s32.totalorder %s45, %s47
    %p54 = scmp.eq.s32.totalorder %s16, 1
    %p55 = por %p53, %p54
    %p56 = scmp.ne.s32.totalorder %s47, %s48
    %p57 = scmp.eq.s32.totalorder %s16, 0
    %p58 = por %p56, %p57
    %p59 = scmp.ne.s32.totalorder %s47, %s48
    %p60 = scmp.eq.s32.totalorder %s17, 1
    %p61 = por %p59, %p60
    %p63 = scmp.ne.s32.totalorder %s48, %s62
    %p64 = scmp.eq.s32.totalorder %s17, 0
    %p65 = por %p63, %p64
    %s66 = ssub.s32 %s11, %s18
    %p67 = scmp.eq.s32.totalorder %s66, 0
    %s69 = sadd.s32 %s68, 1
    %s70 = scalar_select %p67, %s68, %s69
    %p73 = pneg %p67
    %p74 = scmp.eq.s32.totalorder %s11, 1
    %p75 = por %p73, %p74
    %p76 = scmp.ne.s32.totalorder %s68, %s71
    %p77 = scmp.eq.s32.totalorder %s11, 0
    %p78 = por %p76, %p77
    %p79 = scmp.ne.s32.totalorder %s68, %s71
    %p80 = scmp.eq.s32.totalorder %s16, 1
    %p81 = por %p79, %p80
    %p82 = scmp.ne.s32.totalorder %s71, %s72
    %p83 = scmp.eq.s32.totalorder %s16, 0
    %p84 = por %p82, %p83
    %p85 = scmp.ne.s32.totalorder %s71, %s72
    %p86 = scmp.eq.s32.totalorder %s17, 1
    %p87 = por %p85, %p86
    %p89 = scmp.ne.s32.totalorder %s72, %s88
    %p90 = scmp.eq.s32.totalorder %s17, 0
    %p91 = por %p89, %p90
    %s92 = ssub.s32 %s11, %s18
    %p93 = scmp.eq.s32.totalorder %s92, 0
    %s95 = sadd.s32 %s94, 1
    %s96 = scalar_select %p93, %s94, %s95
    %p99 = pneg %p93
    %p100 = scmp.eq.s32.totalorder %s11, 1
    %p101 = por %p99, %p100
    %p102 = scmp.ne.s32.totalorder %s94, %s97
    %p103 = scmp.eq.s32.totalorder %s11, 0
    %p104 = por %p102, %p103
    %p105 = scmp.ne.s32.totalorder %s94, %s97
    %p106 = scmp.eq.s32.totalorder %s16, 1
    %p107 = por %p105, %p106
    %p108 = scmp.ne.s32.totalorder %s97, %s98
    %p109 = scmp.eq.s32.totalorder %s16, 0
    %p110 = por %p108, %p109
    %p111 = scmp.ne.s32.totalorder %s97, %s98
    %p112 = scmp.eq.s32.totalorder %s17, 1
    %p113 = por %p111, %p112
    %p115 = scmp.ne.s32.totalorder %s98, %s114
    %p116 = scmp.eq.s32.totalorder %s17, 0
    %p117 = por %p115, %p116
    %s118 = ssub.s32 %s11, %s18
    %p119 = scmp.eq.s32.totalorder %s118, 0
    %s121 = sadd.s32 %s120, 1
    %s122 = scalar_select %p119, %s120, %s121
    %p125 = pneg %p119
    %p126 = scmp.eq.s32.totalorder %s11, 1
    %p127 = por %p125, %p126
    %p128 = scmp.ne.s32.totalorder %s120, %s123
    %p129 = scmp.eq.s32.totalorder %s11, 0
    %p130 = por %p128, %p129
    %p131 = scmp.ne.s32.totalorder %s120, %s123
    %p132 = scmp.eq.s32.totalorder %s16, 1
    %p133 = por %p131, %p132
    %p134 = scmp.ne.s32.totalorder %s123, %s124
    %p135 = scmp.eq.s32.totalorder %s16, 0
    %p136 = por %p134, %p135
    %p137 = scmp.ne.s32.totalorder %s123, %s124
    %p138 = scmp.eq.s32.totalorder %s17, 1
    %p139 = por %p137, %p138
    %p141 = scmp.ne.s32.totalorder %s124, %s140
    %p142 = scmp.eq.s32.totalorder %s17, 0
    %p143 = por %p141, %p142
    %p144 = scmp.le.s32.totalorder 1, %s11
    %p145 = scmp.lt.s32.totalorder %s11, 3
    %p146 = pnand %p144, %p145
    %p147 = pneg %p146
    // Predicated region
    $region9: #{patch_discriminator_forward.7} parent=5 // pred_check
      _
    $region10: #{patch_discriminator_forward.7} parent=5 // pred_check_branch
      %149 = sbr.rel (%p146) target = $region12
    $region11: #{patch_discriminator_forward.7} parent=5 // pred_region
      %s150 = ssub.s32 %s11, 1
      // Predicated region
      $region13: #{patch_discriminator_forward.7} parent=11 // pred_check
        %p151 = pneg %p58
      $region14: #{patch_discriminator_forward.7} parent=11 // pred_check_branch
        %153 = sbr.rel (%p151) target = $region16
      $region15: #{patch_discriminator_forward.7} parent=11 // pred_region
        _
      $region16: #{patch_discriminator_forward.7} parent=11 // pred_fallthru
        _
    $region12: #{patch_discriminator_forward.7} parent=5 // pred_fallthru
      _
    %p154 = scmp.lt.s32.totalorder %s11, 2
    // Predicated region
    $region17: #{patch_discriminator_forward.7} parent=5 // pred_check
      %p155 = pneg %p154
    $region18: #{patch_discriminator_forward.7} parent=5 // pred_check_branch
      %157 = sbr.rel (%p155) target = $region20
    $region19: #{patch_discriminator_forward.7} parent=5 // pred_region
      // Predicated region
      $region21: #{patch_discriminator_forward.7} parent=19 // pred_check
        %p158 = pneg %p31
      $region22: #{patch_discriminator_forward.7} parent=19 // pred_check_branch
        %160 = sbr.rel (%p158) target = $region24
      $region23: #{patch_discriminator_forward.7} parent=19 // pred_region
        %p161 = scmp.lt.s32.totalorder %s11, 1
        %s162 = scalar_select %p161, %s11, 1
        %s163 = smul.addr %s162, 20
        %s164 = smul.addr %s163, 4
        %s165 = scalar_lea.vmem %s0, %s164
      $region24: #{patch_discriminator_forward.7} parent=19 // pred_fallthru
        _
    $region20: #{patch_discriminator_forward.7} parent=5 // pred_fallthru
      _
    %p166 = scmp.le.s32.totalorder 1, %s11
    %p167 = scmp.lt.s32.totalorder %s11, 3
    %p168 = pnand %p166, %p167
    %p169 = pneg %p168
    // Predicated region
    $region25: #{patch_discriminator_forward.7} parent=5 // pred_check
      _
    $region26: #{patch_discriminator_forward.7} parent=5 // pred_check_branch
      %171 = sbr.rel (%p168) target = $region28
    $region27: #{patch_discriminator_forward.7} parent=5 // pred_region
      %s172 = ssub.s32 %s11, 1
      %p173 = scmp.lt.s32.totalorder %s16, 1
      %s174 = scalar_select %p173, %s16, 1
      %s175 = smul.addr %s174, 20
      %s176 = smul.addr %s175, 4
      %s177 = scalar_lea.vmem %s0, %s176
      %p178 = pneg %p37
      %p179 = pneg %p34
      %p180 = pneg %p58
      %p181 = pneg %p55
      %p182 = pneg %p84
      %p183 = pneg %p81
      %p184 = scmp.lt.s32.totalorder %s16, 1
      %s185 = scalar_select %p184, %s16, 1
      %s186 = smul.addr %s185, 2
      %s187 = smul.addr %s186, 4
      %s188 = scalar_lea.vmem %s2, %s187
      %p189 = pneg %p110
      %p190 = pneg %p107
      %p191 = scmp.lt.s32.totalorder %s16, 1
      %s192 = scalar_select %p191, %s16, 1
      %s193 = scalar_lea.vmem %s3, %s192
      %p194 = pneg %p136
      %p195 = pneg %p133
      %p196 = scmp.lt.s32.totalorder %s16, 1
      %s197 = scalar_select %p196, %s16, 1
      %s198 = scalar_lea.vmem %s4, %s197
      %p199 = scmp.lt.s32.totalorder %s16, 1
      %s200 = scalar_select %p199, %s16, 1
      %s201 = smul.addr %s200, 20
      %s202 = smul.addr %s201, 4
      %s203 = scalar_lea.vmem %s0, %s202
      %p204 = scmp.lt.s32.totalorder %s16, 1
      %s205 = scalar_select %p204, %s16, 1
      %s206 = smul.addr %s205, 2
      %s207 = smul.addr %s206, 4
      %s208 = scalar_lea.vmem %s2, %s207
      %p209 = scmp.lt.s32.totalorder %s16, 1
      %s210 = scalar_select %p209, %s16, 1
      %s211 = scalar_lea.vmem %s3, %s210
      %p212 = scmp.lt.s32.totalorder %s16, 1
      %s213 = scalar_select %p212, %s16, 1
      %s214 = scalar_lea.vmem %s4, %s213
      %v216 = vld [vmem:[%s203] sm:$0x77]
      %s217 = scalar_lea.vmem %s203, 8
      %v218 = vld [vmem:[%s217] sm:$0x77]
      %s219 = scalar_lea.vmem %s203, 16
      %v220 = vld [vmem:[%s219] sm:$0x77]
      %s221 = scalar_lea.vmem %s203, 24
      %v222 = vld [vmem:[%s221] sm:$0x77]
      %v224 = vunpack.c.l.b16 %v216
      %v225 = vunpack.c.h.b16 %v216
      %v226 = vpack.c.b16 %v224, %v224
      %v227 = vpack.c.b16 %v225, %v225
      %v229 = vshrl.u32 %v226, 16
      %v231 = vshll.u32 %v226, 16
      %v233 = vrot.slane %v231, 1
      %v234 = vor.u32 %v229, %v233
      %v236 = vshrl.u32 %v227, 16
      %v238 = vshll.u32 %v227, 16
      %v240 = vrot.slane %v238, 1
      %v241 = vor.u32 %v236, %v240
      %v243 = vunpack.c.l.b16 %v218
      %v244 = vunpack.c.h.b16 %v218
      %v245 = vpack.c.b16 %v243, %v243
      %v246 = vpack.c.b16 %v244, %v244
      %v248 = vshrl.u32 %v245, 16
      %v250 = vshll.u32 %v245, 16
      %v252 = vrot.slane %v250, 1
      %v253 = vor.u32 %v248, %v252
      %v255 = vshrl.u32 %v246, 16
      %v257 = vshll.u32 %v246, 16
      %v259 = vrot.slane %v257, 1
      %v260 = vor.u32 %v255, %v259
      %v262 = vunpack.c.l.b16 %v220
      %v263 = vunpack.c.h.b16 %v220
      %v264 = vpack.c.b16 %v262, %v262
      %v265 = vpack.c.b16 %v263, %v263
      %v267 = vshrl.u32 %v264, 16
      %v269 = vshll.u32 %v264, 16
      %v271 = vrot.slane %v269, 1
      %v272 = vor.u32 %v267, %v271
      %v274 = vshrl.u32 %v265, 16
      %v276 = vshll.u32 %v265, 16
      %v278 = vrot.slane %v276, 1
      %v279 = vor.u32 %v274, %v278
      %v281 = vunpack.c.l.b16 %v222
      %v282 = vunpack.c.h.b16 %v222
      %v283 = vpack.c.b16 %v281, %v281
      %v284 = vpack.c.b16 %v282, %v282
      %v286 = vshrl.u32 %v283, 16
      %v288 = vshll.u32 %v283, 16
      %v290 = vrot.slane %v288, 1
      %v291 = vor.u32 %v286, %v290
      %v293 = vshrl.u32 %v284, 16
      %v295 = vshll.u32 %v284, 16
      %v297 = vrot.slane %v295, 1
      %v298 = vor.u32 %v293, %v297
      %s299 = scalar_lea.vmem %s203, 32
      %v300 = vld [vmem:[%s299] sm:$0x77]
      %s301 = scalar_lea.vmem %s203, 40
      %v302 = vld [vmem:[%s301] sm:$0x77]
      %v304 = vunpack.c.l.b16 %v300
      %v305 = vunpack.c.h.b16 %v300
      %v306 = vpack.c.b16 %v304, %v304
      %v307 = vpack.c.b16 %v305, %v305
      %v309 = vshrl.u32 %v306, 16
      %v311 = vshll.u32 %v306, 16
      %v313 = vrot.slane %v311, 1
      %v314 = vor.u32 %v309, %v313
      %v316 = vshrl.u32 %v307, 16
      %v318 = vshll.u32 %v307, 16
      %v320 = vrot.slane %v318, 1
      %v321 = vor.u32 %v316, %v320
      %v323 = vunpack.c.l.b16 %v302
      %v324 = vunpack.c.h.b16 %v302
      %v325 = vpack.c.b16 %v323, %v323
      %v326 = vpack.c.b16 %v324, %v324
      %v328 = vshrl.u32 %v325, 16
      %v330 = vshll.u32 %v325, 16
      %v332 = vrot.slane %v330, 1
      %v333 = vor.u32 %v328, %v332
      %v335 = vshrl.u32 %v326, 16
      %v337 = vshll.u32 %v326, 16
      %v339 = vrot.slane %v337, 1
      %v340 = vor.u32 %v335, %v339
      %s341 = scalar_lea.vmem %s203, 48
      %v342 = vld [vmem:[%s341] sm:$0x77]
      %s343 = scalar_lea.vmem %s203, 56
      %v344 = vld [vmem:[%s343] sm:$0x77]
      %v346 = vunpack.c.l.b16 %v342
      %v347 = vunpack.c.h.b16 %v342
      %v348 = vpack.c.b16 %v346, %v346
      %v349 = vpack.c.b16 %v347, %v347
      %v351 = vshrl.u32 %v348, 16
      %v353 = vshll.u32 %v348, 16
      %v355 = vrot.slane %v353, 1
      %v356 = vor.u32 %v351, %v355
      %v358 = vshrl.u32 %v349, 16
      %v360 = vshll.u32 %v349, 16
      %v362 = vrot.slane %v360, 1
      %v363 = vor.u32 %v358, %v362
      %v365 = vunpack.c.l.b16 %v344
      %v366 = vunpack.c.h.b16 %v344
      %v367 = vpack.c.b16 %v365, %v365
      %v368 = vpack.c.b16 %v366, %v366
      %v370 = vshrl.u32 %v367, 16
      %v372 = vshll.u32 %v367, 16
      %v374 = vrot.slane %v372, 1
      %v375 = vor.u32 %v370, %v374
      %v377 = vshrl.u32 %v368, 16
      %v379 = vshll.u32 %v368, 16
      %v381 = vrot.slane %v379, 1
      %v382 = vor.u32 %v377, %v381
      %s383 = scalar_lea.vmem %s203, 64
      %v384 = vld [vmem:[%s383] sm:$0x77]
      %s385 = scalar_lea.vmem %s203, 72
      %v386 = vld [vmem:[%s385] sm:$0x77]
      %v388 = vunpack.c.l.b16 %v384
      %v389 = vunpack.c.h.b16 %v384
      %v390 = vpack.c.b16 %v388, %v388
      %v391 = vpack.c.b16 %v389, %v389
      %v393 = vshrl.u32 %v390, 16
      %v395 = vshll.u32 %v390, 16
      %v397 = vrot.slane %v395, 1
      %v398 = vor.u32 %v393, %v397
      %v400 = vshrl.u32 %v391, 16
      %v402 = vshll.u32 %v391, 16
      %v404 = vrot.slane %v402, 1
      %v405 = vor.u32 %v400, %v404
      %v407 = vunpack.c.l.b16 %v386
      %v408 = vunpack.c.h.b16 %v386
      %v409 = vpack.c.b16 %v407, %v407
      %v410 = vpack.c.b16 %v408, %v408
      %v412 = vshrl.u32 %v409, 16
      %v414 = vshll.u32 %v409, 16
      %v416 = vrot.slane %v414, 1
      %v417 = vor.u32 %v412, %v416
      %v419 = vshrl.u32 %v410, 16
      %v421 = vshll.u32 %v410, 16
      %v423 = vrot.slane %v421, 1
      %v424 = vor.u32 %v419, %v423
      %v425 = vrot.slane %v264, 6
      %v426 = vrot.slane %v265, 6
      %v427 = vrot.slane %v272, 6
      %v428 = vrot.slane %v279, 6
      %v429 = vrot.slane %v283, 6
      %v430 = vrot.slane %v284, 6
      %v431 = vrot.slane %v291, 6
      %v432 = vrot.slane %v298, 6
      %v433 = vrot.slane %v306, 6
      %v434 = vrot.slane %v307, 6
      %v435 = vrot.slane %v314, 6
      %v436 = vrot.slane %v321, 6
      %v437 = vrot.slane %v325, 6
      %v438 = vrot.slane %v326, 6
      %v439 = vrot.slane %v333, 6
      %v440 = vrot.slane %v340, 6
      %v441 = vrot.slane %v306, 4
      %v442 = vrot.slane %v307, 4
      %v443 = vrot.slane %v314, 4
      %v444 = vrot.slane %v321, 4
      %v445 = vrot.slane %v325, 4
      %v446 = vrot.slane %v326, 4
      %v447 = vrot.slane %v333, 4
      %v448 = vrot.slane %v340, 4
      %v449 = vrot.slane %v348, 4
      %v450 = vrot.slane %v349, 4
      %v451 = vrot.slane %v356, 4
      %v452 = vrot.slane %v363, 4
      %v453 = vrot.slane %v367, 4
      %v454 = vrot.slane %v368, 4
      %v455 = vrot.slane %v375, 4
      %v456 = vrot.slane %v382, 4
      %v457 = vrot.slane %v348, 2
      %v458 = vrot.slane %v349, 2
      %v459 = vrot.slane %v356, 2
      %v460 = vrot.slane %v363, 2
      %v461 = vrot.slane %v367, 2
      %v462 = vrot.slane %v368, 2
      %v463 = vrot.slane %v375, 2
      %v464 = vrot.slane %v382, 2
      %v465 = vrot.slane %v390, 2
      %v466 = vrot.slane %v391, 2
      %v467 = vrot.slane %v398, 2
      %v468 = vrot.slane %v405, 2
      %v469 = vrot.slane %v409, 2
      %v470 = vrot.slane %v410, 2
      %v471 = vrot.slane %v417, 2
      %v472 = vrot.slane %v424, 2
      %vm473 = vcmask 1041408
      %v475 = vsel %vm473, %v226, %v425
      %v477 = vsel %vm473, %v227, %v426
      %v480 = vsel %vm473, %v234, %v427
      %v483 = vsel %vm473, %v241, %v428
      %v485 = vsel %vm473, %v245, %v429
      %v487 = vsel %vm473, %v246, %v430
      %v490 = vsel %vm473, %v253, %v431
      %v493 = vsel %vm473, %v260, %v432
      %v495 = vsel %vm473, %v264, %v433
      %v497 = vsel %vm473, %v265, %v434
      %v500 = vsel %vm473, %v272, %v435
      %v503 = vsel %vm473, %v279, %v436
      %v505 = vsel %vm473, %v283, %v437
      %v507 = vsel %vm473, %v284, %v438
      %v510 = vsel %vm473, %v291, %v439
      %v513 = vsel %vm473, %v298, %v440
      %vm514 = vcmask 1043456
      %v516 = vsel %vm514, %v475, %v441
      %v518 = vsel %vm514, %v477, %v442
      %v520 = vsel %vm514, %v480, %v443
      %v522 = vsel %vm514, %v483, %v444
      %v524 = vsel %vm514, %v485, %v445
      %v526 = vsel %vm514, %v487, %v446
      %v528 = vsel %vm514, %v490, %v447
      %v530 = vsel %vm514, %v493, %v448
      %v532 = vsel %vm514, %v495, %v449
      %v534 = vsel %vm514, %v497, %v450
      %v536 = vsel %vm514, %v500, %v451
      %v538 = vsel %vm514, %v503, %v452
      %v540 = vsel %vm514, %v505, %v453
      %v542 = vsel %vm514, %v507, %v454
      %v544 = vsel %vm514, %v510, %v455
      %v546 = vsel %vm514, %v513, %v456
      %vm547 = vcmask 1045504
      %v549 = vsel %vm547, %v516, %v457
      %v552 = vsel %vm547, %v518, %v458
      %v555 = vsel %vm547, %v520, %v459
      %v558 = vsel %vm547, %v522, %v460
      %v561 = vsel %vm547, %v524, %v461
      %v564 = vsel %vm547, %v526, %v462
      %v567 = vsel %vm547, %v528, %v463
      %v570 = vsel %vm547, %v530, %v464
      %v573 = vsel %vm547, %v532, %v465
      %v576 = vsel %vm547, %v534, %v466
      %v579 = vsel %vm547, %v536, %v467
      %v582 = vsel %vm547, %v538, %v468
      %v585 = vsel %vm547, %v540, %v469
      %v588 = vsel %vm547, %v542, %v470
      %v591 = vsel %vm547, %v544, %v471
      %v594 = vsel %vm547, %v546, %v472
      %v596 = vld [vmem:[%s1] sm:$0xf]
      %v597 = vld [vmem:[%s1 + $0x4] sm:$0xf]
      %v598 = vld [vmem:[%s1 + $0x8] sm:$0xf]
      %v599 = vld [vmem:[%s1 + $0xc] sm:$0xf]
      %v600 = vld [vmem:[%s1 + $0x10] sm:$0xf]
      %v601 = vld [vmem:[%s1 + $0x14] sm:$0xf]
      %v602 = vld [vmem:[%s1 + $0x18] sm:$0xf]
      %v603 = vld [vmem:[%s1 + $0x1c] sm:$0xf]
      %v604 = vld [vmem:[%s1 + $0x20] sm:$0xf]
      %v605 = vld [vmem:[%s1 + $0x24] sm:$0xf]
      %v606 = vld [vmem:[%s1 + $0x28] sm:$0xf]
      %v607 = vld [vmem:[%s1 + $0x2c] sm:$0xf]
      %v608 = vld [vmem:[%s1 + $0x30] sm:$0xf]
      %v609 = vld [vmem:[%s1 + $0x34] sm:$0xf]
      %v610 = vld [vmem:[%s1 + $0x38] sm:$0xf]
      %v611 = vld [vmem:[%s1 + $0x3c] sm:$0xf]
      %v612 = vld [vmem:[%s1 + $0x40] sm:$0xf]
      %v613 = vld [vmem:[%s1 + $0x44] sm:$0xf]
      %v614 = vld [vmem:[%s1 + $0x48] sm:$0xf]
      %v615 = vld [vmem:[%s1 + $0x4c] sm:$0xf]
      %v616 = vld [vmem:[%s1 + $0x50] sm:$0xf]
      %v617 = vld [vmem:[%s1 + $0x54] sm:$0xf]
      %v618 = vld [vmem:[%s1 + $0x58] sm:$0xf]
      %v619 = vld [vmem:[%s1 + $0x5c] sm:$0xf]
      %v620 = vld [vmem:[%s1 + $0x60] sm:$0xf]
      %v621 = vld [vmem:[%s1 + $0x64] sm:$0xf]
      %v622 = vld [vmem:[%s1 + $0x68] sm:$0xf]
      %v623 = vld [vmem:[%s1 + $0x6c] sm:$0xf]
      %v624 = vld [vmem:[%s1 + $0x70] sm:$0xf]
      %v625 = vld [vmem:[%s1 + $0x74] sm:$0xf]
      %v626 = vld [vmem:[%s1 + $0x78] sm:$0xf]
      %v627 = vld [vmem:[%s1 + $0x7c] sm:$0xf]
      %v628 = vld [vmem:[%s1 + $0x80] sm:$0xf]
      %v629 = vld [vmem:[%s1 + $0x84] sm:$0xf]
      %v630 = vld [vmem:[%s1 + $0x88] sm:$0xf]
      %v631 = vld [vmem:[%s1 + $0x8c] sm:$0xf]
      %v632 = vld [vmem:[%s1 + $0x90] sm:$0xf]
      %v633 = vld [vmem:[%s1 + $0x94] sm:$0xf]
      %v634 = vld [vmem:[%s1 + $0x98] sm:$0xf]
      %v635 = vld [vmem:[%s1 + $0x9c] sm:$0xf]
      %v636 = vld [vmem:[%s1 + $0xa0] sm:$0xf]
      %v637 = vld [vmem:[%s1 + $0xa4] sm:$0xf]
      %v638 = vld [vmem:[%s1 + $0xa8] sm:$0xf]
      %v639 = vld [vmem:[%s1 + $0xac] sm:$0xf]
      %v640 = vld [vmem:[%s1 + $0xb0] sm:$0xf]
      %v641 = vld [vmem:[%s1 + $0xb4] sm:$0xf]
      %v642 = vld [vmem:[%s1 + $0xb8] sm:$0xf]
      %v643 = vld [vmem:[%s1 + $0xbc] sm:$0xf]
      %v644 = vld [vmem:[%s1 + $0xc0] sm:$0xf]
      %v645 = vld [vmem:[%s1 + $0xc4] sm:$0xf]
      %v646 = vld [vmem:[%s1 + $0xc8] sm:$0xf]
      %v647 = vld [vmem:[%s1 + $0xcc] sm:$0xf]
      %v648 = vld [vmem:[%s1 + $0xd0] sm:$0xf]
      %v649 = vld [vmem:[%s1 + $0xd4] sm:$0xf]
      %v650 = vld [vmem:[%s1 + $0xd8] sm:$0xf]
      %v651 = vld [vmem:[%s1 + $0xdc] sm:$0xf]
      %v652 = vld [vmem:[%s1 + $0xe0] sm:$0xf]
      %v653 = vld [vmem:[%s1 + $0xe4] sm:$0xf]
      %v654 = vld [vmem:[%s1 + $0xe8] sm:$0xf]
      %v655 = vld [vmem:[%s1 + $0xec] sm:$0xf]
      %v656 = vld [vmem:[%s1 + $0xf0] sm:$0xf]
      %v657 = vld [vmem:[%s1 + $0xf4] sm:$0xf]
      %v658 = vld [vmem:[%s1 + $0xf8] sm:$0xf]
      %v659 = vld [vmem:[%s1 + $0xfc] sm:$0xf]
      %v660 = vld [vmem:[%s1 + $0x100] sm:$0xf]
      %v661 = vld [vmem:[%s1 + $0x104] sm:$0xf]
      %v662 = vld [vmem:[%s1 + $0x108] sm:$0xf]
      %v663 = vld [vmem:[%s1 + $0x10c] sm:$0xf]
      %v664 = vld [vmem:[%s1 + $0x110] sm:$0xf]
      %v665 = vld [vmem:[%s1 + $0x114] sm:$0xf]
      %v666 = vld [vmem:[%s1 + $0x118] sm:$0xf]
      %v667 = vld [vmem:[%s1 + $0x11c] sm:$0xf]
      %v668 = vld [vmem:[%s1 + $0x120] sm:$0xf]
      %v669 = vld [vmem:[%s1 + $0x124] sm:$0xf]
      %v670 = vld [vmem:[%s1 + $0x128] sm:$0xf]
      %v671 = vld [vmem:[%s1 + $0x12c] sm:$0xf]
      %v672 = vld [vmem:[%s1 + $0x130] sm:$0xf]
      %v673 = vld [vmem:[%s1 + $0x134] sm:$0xf]
      %v674 = vld [vmem:[%s1 + $0x138] sm:$0xf]
      %v675 = vld [vmem:[%s1 + $0x13c] sm:$0xf]
      %v676 = vld [vmem:[%s1 + $0x140] sm:$0xf]
      %v677 = vld [vmem:[%s1 + $0x144] sm:$0xf]
      %v678 = vld [vmem:[%s1 + $0x148] sm:$0xf]
      %v679 = vld [vmem:[%s1 + $0x14c] sm:$0xf]
      %v680 = vld [vmem:[%s1 + $0x150] sm:$0xf]
      %v681 = vld [vmem:[%s1 + $0x154] sm:$0xf]
      %v682 = vld [vmem:[%s1 + $0x158] sm:$0xf]
      %v683 = vld [vmem:[%s1 + $0x15c] sm:$0xf]
      %v684 = vld [vmem:[%s1 + $0x160] sm:$0xf]
      %v685 = vld [vmem:[%s1 + $0x164] sm:$0xf]
      %v686 = vld [vmem:[%s1 + $0x168] sm:$0xf]
      %v687 = vld [vmem:[%s1 + $0x16c] sm:$0xf]
      %v688 = vld [vmem:[%s1 + $0x170] sm:$0xf]
      %v689 = vld [vmem:[%s1 + $0x174] sm:$0xf]
      %v690 = vld [vmem:[%s1 + $0x178] sm:$0xf]
      %v691 = vld [vmem:[%s1 + $0x17c] sm:$0xf]
      %v692 = vld [vmem:[%s1 + $0x180] sm:$0xf]
      %v693 = vld [vmem:[%s1 + $0x184] sm:$0xf]
      %v694 = vld [vmem:[%s1 + $0x188] sm:$0xf]
      %v695 = vld [vmem:[%s1 + $0x18c] sm:$0xf]
      %v696 = vld [vmem:[%s1 + $0x190] sm:$0xf]
      %v697 = vld [vmem:[%s1 + $0x194] sm:$0xf]
      %v698 = vld [vmem:[%s1 + $0x198] sm:$0xf]
      %v699 = vld [vmem:[%s1 + $0x19c] sm:$0xf]
      %v700 = vld [vmem:[%s1 + $0x1a0] sm:$0xf]
      %v701 = vld [vmem:[%s1 + $0x1a4] sm:$0xf]
      %v702 = vld [vmem:[%s1 + $0x1a8] sm:$0xf]
      %v703 = vld [vmem:[%s1 + $0x1ac] sm:$0xf]
      %v704 = vld [vmem:[%s1 + $0x1b0] sm:$0xf]
      %v705 = vld [vmem:[%s1 + $0x1b4] sm:$0xf]
      %v706 = vld [vmem:[%s1 + $0x1b8] sm:$0xf]
      %v707 = vld [vmem:[%s1 + $0x1bc] sm:$0xf]
      %v708 = vld [vmem:[%s1 + $0x1c0] sm:$0xf]
      %v709 = vld [vmem:[%s1 + $0x1c4] sm:$0xf]
      %v710 = vld [vmem:[%s1 + $0x1c8] sm:$0xf]
      %v711 = vld [vmem:[%s1 + $0x1cc] sm:$0xf]
      %v712 = vld [vmem:[%s1 + $0x1d0] sm:$0xf]
      %v713 = vld [vmem:[%s1 + $0x1d4] sm:$0xf]
      %v714 = vld [vmem:[%s1 + $0x1d8] sm:$0xf]
      %v715 = vld [vmem:[%s1 + $0x1dc] sm:$0xf]
      %v716 = vld [vmem:[%s1 + $0x1e0] sm:$0xf]
      %v717 = vld [vmem:[%s1 + $0x1e4] sm:$0xf]
      %v718 = vld [vmem:[%s1 + $0x1e8] sm:$0xf]
      %v719 = vld [vmem:[%s1 + $0x1ec] sm:$0xf]
      %v720 = vld [vmem:[%s1 + $0x1f0] sm:$0xf]
      %v721 = vld [vmem:[%s1 + $0x1f4] sm:$0xf]
      %v722 = vld [vmem:[%s1 + $0x1f8] sm:$0xf]
      %v723 = vld [vmem:[%s1 + $0x1fc] sm:$0xf]
      %v724 = vld [vmem:[%s1 + $0x200] sm:$0xf]
      %v725 = vld [vmem:[%s1 + $0x204] sm:$0xf]
      %v726 = vld [vmem:[%s1 + $0x208] sm:$0xf]
      %v727 = vld [vmem:[%s1 + $0x20c] sm:$0xf]
      %v728 = vld [vmem:[%s1 + $0x210] sm:$0xf]
      %v729 = vld [vmem:[%s1 + $0x214] sm:$0xf]
      %v730 = vld [vmem:[%s1 + $0x218] sm:$0xf]
      %v731 = vld [vmem:[%s1 + $0x21c] sm:$0xf]
      %v732 = vld [vmem:[%s1 + $0x220] sm:$0xf]
      %v733 = vld [vmem:[%s1 + $0x224] sm:$0xf]
      %v734 = vld [vmem:[%s1 + $0x228] sm:$0xf]
      %v735 = vld [vmem:[%s1 + $0x22c] sm:$0xf]
      %v736 = vld [vmem:[%s1 + $0x230] sm:$0xf]
      %v737 = vld [vmem:[%s1 + $0x234] sm:$0xf]
      %v738 = vld [vmem:[%s1 + $0x238] sm:$0xf]
      %v739 = vld [vmem:[%s1 + $0x23c] sm:$0xf]
      %v740 = vld [vmem:[%s1 + $0x240] sm:$0xf]
      %v741 = vld [vmem:[%s1 + $0x244] sm:$0xf]
      %v742 = vld [vmem:[%s1 + $0x248] sm:$0xf]
      %v743 = vld [vmem:[%s1 + $0x24c] sm:$0xf]
      %v744 = vld [vmem:[%s1 + $0x250] sm:$0xf]
      %v745 = vld [vmem:[%s1 + $0x254] sm:$0xf]
      %v746 = vld [vmem:[%s1 + $0x258] sm:$0xf]
      %v747 = vld [vmem:[%s1 + $0x25c] sm:$0xf]
      %v748 = vld [vmem:[%s1 + $0x260] sm:$0xf]
      %v749 = vld [vmem:[%s1 + $0x264] sm:$0xf]
      %v750 = vld [vmem:[%s1 + $0x268] sm:$0xf]
      %v751 = vld [vmem:[%s1 + $0x26c] sm:$0xf]
      %v752 = vld [vmem:[%s1 + $0x270] sm:$0xf]
      %v753 = vld [vmem:[%s1 + $0x274] sm:$0xf]
      %v754 = vld [vmem:[%s1 + $0x278] sm:$0xf]
      %v755 = vld [vmem:[%s1 + $0x27c] sm:$0xf]
      %v756 = vld [vmem:[%s1 + $0x280] sm:$0xf]
      %v757 = vld [vmem:[%s1 + $0x284] sm:$0xf]
      %v758 = vld [vmem:[%s1 + $0x288] sm:$0xf]
      %v759 = vld [vmem:[%s1 + $0x28c] sm:$0xf]
      %v760 = vld [vmem:[%s1 + $0x290] sm:$0xf]
      %v761 = vld [vmem:[%s1 + $0x294] sm:$0xf]
      %v762 = vld [vmem:[%s1 + $0x298] sm:$0xf]
      %v763 = vld [vmem:[%s1 + $0x29c] sm:$0xf]
      %v764 = vld [vmem:[%s1 + $0x2a0] sm:$0xf]
      %v765 = vld [vmem:[%s1 + $0x2a4] sm:$0xf]
      %v766 = vld [vmem:[%s1 + $0x2a8] sm:$0xf]
      %v767 = vld [vmem:[%s1 + $0x2ac] sm:$0xf]
      %v768 = vld [vmem:[%s1 + $0x2b0] sm:$0xf]
      %v769 = vld [vmem:[%s1 + $0x2b4] sm:$0xf]
      %v770 = vld [vmem:[%s1 + $0x2b8] sm:$0xf]
      %v771 = vld [vmem:[%s1 + $0x2bc] sm:$0xf]
      %v772 = vld [vmem:[%s1 + $0x2c0] sm:$0xf]
      %v773 = vld [vmem:[%s1 + $0x2c4] sm:$0xf]
      %v774 = vld [vmem:[%s1 + $0x2c8] sm:$0xf]
      %v775 = vld [vmem:[%s1 + $0x2cc] sm:$0xf]
      %v776 = vld [vmem:[%s1 + $0x2d0] sm:$0xf]
      %v777 = vld [vmem:[%s1 + $0x2d4] sm:$0xf]
      %v778 = vld [vmem:[%s1 + $0x2d8] sm:$0xf]
      %v779 = vld [vmem:[%s1 + $0x2dc] sm:$0xf]
      %v780 = vld [vmem:[%s1 + $0x2e0] sm:$0xf]
      %v781 = vld [vmem:[%s1 + $0x2e4] sm:$0xf]
      %v782 = vld [vmem:[%s1 + $0x2e8] sm:$0xf]
      %v783 = vld [vmem:[%s1 + $0x2ec] sm:$0xf]
      %v784 = vld [vmem:[%s1 + $0x2f0] sm:$0xf]
      %v785 = vld [vmem:[%s1 + $0x2f4] sm:$0xf]
      %v786 = vld [vmem:[%s1 + $0x2f8] sm:$0xf]
      %v787 = vld [vmem:[%s1 + $0x2fc] sm:$0xf]
      %v788 = vld [vmem:[%s1 + $0x300] sm:$0xf]
      %v789 = vld [vmem:[%s1 + $0x304] sm:$0xf]
      %v790 = vld [vmem:[%s1 + $0x308] sm:$0xf]
      %v791 = vld [vmem:[%s1 + $0x30c] sm:$0xf]
      %v792 = vld [vmem:[%s1 + $0x310] sm:$0xf]
      %v793 = vld [vmem:[%s1 + $0x314] sm:$0xf]
      %v794 = vld [vmem:[%s1 + $0x318] sm:$0xf]
      %v795 = vld [vmem:[%s1 + $0x31c] sm:$0xf]
      %v796 = vld [vmem:[%s1 + $0x320] sm:$0xf]
      %v797 = vld [vmem:[%s1 + $0x324] sm:$0xf]
      %v798 = vld [vmem:[%s1 + $0x328] sm:$0xf]
      %v799 = vld [vmem:[%s1 + $0x32c] sm:$0xf]
      %v800 = vld [vmem:[%s1 + $0x330] sm:$0xf]
      %v801 = vld [vmem:[%s1 + $0x334] sm:$0xf]
      %v802 = vld [vmem:[%s1 + $0x338] sm:$0xf]
      %v803 = vld [vmem:[%s1 + $0x33c] sm:$0xf]
      %v804 = vld [vmem:[%s1 + $0x340] sm:$0xf]
      %v805 = vld [vmem:[%s1 + $0x344] sm:$0xf]
      %v806 = vld [vmem:[%s1 + $0x348] sm:$0xf]
      %v807 = vld [vmem:[%s1 + $0x34c] sm:$0xf]
      %v808 = vld [vmem:[%s1 + $0x350] sm:$0xf]
      %v809 = vld [vmem:[%s1 + $0x354] sm:$0xf]
      %v810 = vld [vmem:[%s1 + $0x358] sm:$0xf]
      %v811 = vld [vmem:[%s1 + $0x35c] sm:$0xf]
      %v812 = vld [vmem:[%s1 + $0x360] sm:$0xf]
      %v813 = vld [vmem:[%s1 + $0x364] sm:$0xf]
      %v814 = vld [vmem:[%s1 + $0x368] sm:$0xf]
      %v815 = vld [vmem:[%s1 + $0x36c] sm:$0xf]
      %v816 = vld [vmem:[%s1 + $0x370] sm:$0xf]
      %v817 = vld [vmem:[%s1 + $0x374] sm:$0xf]
      %v818 = vld [vmem:[%s1 + $0x378] sm:$0xf]
      %v819 = vld [vmem:[%s1 + $0x37c] sm:$0xf]
      %v820 = vld [vmem:[%s1 + $0x380] sm:$0xf]
      %v821 = vld [vmem:[%s1 + $0x384] sm:$0xf]
      %v822 = vld [vmem:[%s1 + $0x388] sm:$0xf]
      %v823 = vld [vmem:[%s1 + $0x38c] sm:$0xf]
      %v824 = vld [vmem:[%s1 + $0x390] sm:$0xf]
      %v825 = vld [vmem:[%s1 + $0x394] sm:$0xf]
      %v826 = vld [vmem:[%s1 + $0x398] sm:$0xf]
      %v827 = vld [vmem:[%s1 + $0x39c] sm:$0xf]
      %v828 = vld [vmem:[%s1 + $0x3a0] sm:$0xf]
      %v829 = vld [vmem:[%s1 + $0x3a4] sm:$0xf]
      %v830 = vld [vmem:[%s1 + $0x3a8] sm:$0xf]
      %v831 = vld [vmem:[%s1 + $0x3ac] sm:$0xf]
      %v832 = vld [vmem:[%s1 + $0x3b0] sm:$0xf]
      %v833 = vld [vmem:[%s1 + $0x3b4] sm:$0xf]
      %v834 = vld [vmem:[%s1 + $0x3b8] sm:$0xf]
      %v835 = vld [vmem:[%s1 + $0x3bc] sm:$0xf]
      %v836 = vld [vmem:[%s1 + $0x3c0] sm:$0xf]
      %v837 = vld [vmem:[%s1 + $0x3c4] sm:$0xf]
      %v838 = vld [vmem:[%s1 + $0x3c8] sm:$0xf]
      %v839 = vld [vmem:[%s1 + $0x3cc] sm:$0xf]
      %v840 = vld [vmem:[%s1 + $0x3d0] sm:$0xf]
      %v841 = vld [vmem:[%s1 + $0x3d4] sm:$0xf]
      %v842 = vld [vmem:[%s1 + $0x3d8] sm:$0xf]
      %v843 = vld [vmem:[%s1 + $0x3dc] sm:$0xf]
      %v844 = vld [vmem:[%s1 + $0x3e0] sm:$0xf]
      %v845 = vld [vmem:[%s1 + $0x3e4] sm:$0xf]
      %v846 = vld [vmem:[%s1 + $0x3e8] sm:$0xf]
      %v847 = vld [vmem:[%s1 + $0x3ec] sm:$0xf]
      %v848 = vld [vmem:[%s1 + $0x3f0] sm:$0xf]
      %v849 = vld [vmem:[%s1 + $0x3f4] sm:$0xf]
      %v850 = vld [vmem:[%s1 + $0x3f8] sm:$0xf]
      %v851 = vld [vmem:[%s1 + $0x3fc] sm:$0xf]
      %v1108 = vunpack.c.l.b16 %v596
      %v1109 = vunpack.c.l.b16 %v597
      %v1110 = vunpack.c.l.b16 %v598
      %v1111 = vunpack.c.l.b16 %v599
      %v1112 = vunpack.c.l.b16 %v600
      %v1113 = vunpack.c.l.b16 %v601
      %v1114 = vunpack.c.l.b16 %v602
      %v1115 = vunpack.c.l.b16 %v603
      %v1116 = vunpack.c.l.b16 %v604
      %v1117 = vunpack.c.l.b16 %v605
      %v1118 = vunpack.c.l.b16 %v606
      %v1119 = vunpack.c.l.b16 %v607
      %v1120 = vunpack.c.l.b16 %v608
      %v1121 = vunpack.c.l.b16 %v609
      %v1122 = vunpack.c.l.b16 %v610
      %v1123 = vunpack.c.l.b16 %v611
      %v1124 = vunpack.c.l.b16 %v612
      %v1125 = vunpack.c.l.b16 %v613
      %v1126 = vunpack.c.l.b16 %v614
      %v1127 = vunpack.c.l.b16 %v615
      %v1128 = vunpack.c.l.b16 %v616
      %v1129 = vunpack.c.l.b16 %v617
      %v1130 = vunpack.c.l.b16 %v618
      %v1131 = vunpack.c.l.b16 %v619
      %v1132 = vunpack.c.l.b16 %v620
      %v1133 = vunpack.c.l.b16 %v621
      %v1134 = vunpack.c.l.b16 %v622
      %v1135 = vunpack.c.l.b16 %v623
      %v1136 = vunpack.c.l.b16 %v624
      %v1137 = vunpack.c.l.b16 %v625
      %v1138 = vunpack.c.l.b16 %v626
      %v1139 = vunpack.c.l.b16 %v627
      %v1140 = vunpack.c.l.b16 %v628
      %v1141 = vunpack.c.l.b16 %v629
      %v1142 = vunpack.c.l.b16 %v630
      %v1143 = vunpack.c.l.b16 %v631
      %v1144 = vunpack.c.l.b16 %v632
      %v1145 = vunpack.c.l.b16 %v633
      %v1146 = vunpack.c.l.b16 %v634
      %v1147 = vunpack.c.l.b16 %v635
      %v1148 = vunpack.c.l.b16 %v636
      %v1149 = vunpack.c.l.b16 %v637
      %v1150 = vunpack.c.l.b16 %v638
      %v1151 = vunpack.c.l.b16 %v639
      %v1152 = vunpack.c.l.b16 %v640
      %v1153 = vunpack.c.l.b16 %v641
      %v1154 = vunpack.c.l.b16 %v642
      %v1155 = vunpack.c.l.b16 %v643
      %v1156 = vunpack.c.l.b16 %v644
      %v1157 = vunpack.c.l.b16 %v645
      %v1158 = vunpack.c.l.b16 %v646
      %v1159 = vunpack.c.l.b16 %v647
      %v1160 = vunpack.c.l.b16 %v648
      %v1161 = vunpack.c.l.b16 %v649
      %v1162 = vunpack.c.l.b16 %v650
      %v1163 = vunpack.c.l.b16 %v651
      %v1164 = vunpack.c.l.b16 %v652
      %v1165 = vunpack.c.l.b16 %v653
      %v1166 = vunpack.c.l.b16 %v654
      %v1167 = vunpack.c.l.b16 %v655
      %v1168 = vunpack.c.l.b16 %v656
      %v1169 = vunpack.c.l.b16 %v657
      %v1170 = vunpack.c.l.b16 %v658
      %v1171 = vunpack.c.l.b16 %v659
      %v1172 = vunpack.c.l.b16 %v660
      %v1173 = vunpack.c.l.b16 %v661
      %v1174 = vunpack.c.l.b16 %v662
      %v1175 = vunpack.c.l.b16 %v663
      %v1176 = vunpack.c.l.b16 %v664
      %v1177 = vunpack.c.l.b16 %v665
      %v1178 = vunpack.c.l.b16 %v666
      %v1179 = vunpack.c.l.b16 %v667
      %v1180 = vunpack.c.l.b16 %v668
      %v1181 = vunpack.c.l.b16 %v669
      %v1182 = vunpack.c.l.b16 %v670
      %v1183 = vunpack.c.l.b16 %v671
      %v1184 = vunpack.c.l.b16 %v672
      %v1185 = vunpack.c.l.b16 %v673
      %v1186 = vunpack.c.l.b16 %v674
      %v1187 = vunpack.c.l.b16 %v675
      %v1188 = vunpack.c.l.b16 %v676
      %v1189 = vunpack.c.l.b16 %v677
      %v1190 = vunpack.c.l.b16 %v678
      %v1191 = vunpack.c.l.b16 %v679
      %v1192 = vunpack.c.l.b16 %v680
      %v1193 = vunpack.c.l.b16 %v681
      %v1194 = vunpack.c.l.b16 %v682
      %v1195 = vunpack.c.l.b16 %v683
      %v1196 = vunpack.c.l.b16 %v684
      %v1197 = vunpack.c.l.b16 %v685
      %v1198 = vunpack.c.l.b16 %v686
      %v1199 = vunpack.c.l.b16 %v687
      %v1200 = vunpack.c.l.b16 %v688
      %v1201 = vunpack.c.l.b16 %v689
      %v1202 = vunpack.c.l.b16 %v690
      %v1203 = vunpack.c.l.b16 %v691
      %v1204 = vunpack.c.l.b16 %v692
      %v1205 = vunpack.c.l.b16 %v693
      %v1206 = vunpack.c.l.b16 %v694
      %v1207 = vunpack.c.l.b16 %v695
      %v1208 = vunpack.c.l.b16 %v696
      %v1209 = vunpack.c.l.b16 %v697
      %v1210 = vunpack.c.l.b16 %v698
      %v1211 = vunpack.c.l.b16 %v699
      %v1212 = vunpack.c.l.b16 %v700
      %v1213 = vunpack.c.l.b16 %v701
      %v1214 = vunpack.c.l.b16 %v702
      %v1215 = vunpack.c.l.b16 %v703
      %v1216 = vunpack.c.l.b16 %v704
      %v1217 = vunpack.c.l.b16 %v705
      %v1218 = vunpack.c.l.b16 %v706
      %v1219 = vunpack.c.l.b16 %v707
      %v1220 = vunpack.c.l.b16 %v708
      %v1221 = vunpack.c.l.b16 %v709
      %v1222 = vunpack.c.l.b16 %v710
      %v1223 = vunpack.c.l.b16 %v711
      %v1224 = vunpack.c.l.b16 %v712
      %v1225 = vunpack.c.l.b16 %v713
      %v1226 = vunpack.c.l.b16 %v714
      %v1227 = vunpack.c.l.b16 %v715
      %v1228 = vunpack.c.l.b16 %v716
      %v1229 = vunpack.c.l.b16 %v717
      %v1230 = vunpack.c.l.b16 %v718
      %v1231 = vunpack.c.l.b16 %v719
      %v1232 = vunpack.c.l.b16 %v720
      %v1233 = vunpack.c.l.b16 %v721
      %v1234 = vunpack.c.l.b16 %v722
      %v1235 = vunpack.c.l.b16 %v723
      %v1236 = vunpack.c.l.b16 %v724
      %v1237 = vunpack.c.l.b16 %v725
      %v1238 = vunpack.c.l.b16 %v726
      %v1239 = vunpack.c.l.b16 %v727
      %v1240 = vunpack.c.l.b16 %v728
      %v1241 = vunpack.c.l.b16 %v729
      %v1242 = vunpack.c.l.b16 %v730
      %v1243 = vunpack.c.l.b16 %v731
      %v1244 = vunpack.c.l.b16 %v732
      %v1245 = vunpack.c.l.b16 %v733
      %v1246 = vunpack.c.l.b16 %v734
      %v1247 = vunpack.c.l.b16 %v735
      %v1248 = vunpack.c.l.b16 %v736
      %v1249 = vunpack.c.l.b16 %v737
      %v1250 = vunpack.c.l.b16 %v738
      %v1251 = vunpack.c.l.b16 %v739
      %v1252 = vunpack.c.l.b16 %v740
      %v1253 = vunpack.c.l.b16 %v741
      %v1254 = vunpack.c.l.b16 %v742
      %v1255 = vunpack.c.l.b16 %v743
      %v1256 = vunpack.c.l.b16 %v744
      %v1257 = vunpack.c.l.b16 %v745
      %v1258 = vunpack.c.l.b16 %v746
      %v1259 = vunpack.c.l.b16 %v747
      %v1260 = vunpack.c.l.b16 %v748
      %v1261 = vunpack.c.l.b16 %v749
      %v1262 = vunpack.c.l.b16 %v750
      %v1263 = vunpack.c.l.b16 %v751
      %v1264 = vunpack.c.l.b16 %v752
      %v1265 = vunpack.c.l.b16 %v753
      %v1266 = vunpack.c.l.b16 %v754
      %v1267 = vunpack.c.l.b16 %v755
      %v1268 = vunpack.c.l.b16 %v756
      %v1269 = vunpack.c.l.b16 %v757
      %v1270 = vunpack.c.l.b16 %v758
      %v1271 = vunpack.c.l.b16 %v759
      %v1272 = vunpack.c.l.b16 %v760
      %v1273 = vunpack.c.l.b16 %v761
      %v1274 = vunpack.c.l.b16 %v762
      %v1275 = vunpack.c.l.b16 %v763
      %v1276 = vunpack.c.l.b16 %v764
      %v1277 = vunpack.c.l.b16 %v765
      %v1278 = vunpack.c.l.b16 %v766
      %v1279 = vunpack.c.l.b16 %v767
      %v1280 = vunpack.c.l.b16 %v768
      %v1281 = vunpack.c.l.b16 %v769
      %v1282 = vunpack.c.l.b16 %v770
      %v1283 = vunpack.c.l.b16 %v771
      %v1284 = vunpack.c.l.b16 %v772
      %v1285 = vunpack.c.l.b16 %v773
      %v1286 = vunpack.c.l.b16 %v774
      %v1287 = vunpack.c.l.b16 %v775
      %v1288 = vunpack.c.l.b16 %v776
      %v1289 = vunpack.c.l.b16 %v777
      %v1290 = vunpack.c.l.b16 %v778
      %v1291 = vunpack.c.l.b16 %v779
      %v1292 = vunpack.c.l.b16 %v780
      %v1293 = vunpack.c.l.b16 %v781
      %v1294 = vunpack.c.l.b16 %v782
      %v1295 = vunpack.c.l.b16 %v783
      %v1296 = vunpack.c.l.b16 %v784
      %v1297 = vunpack.c.l.b16 %v785
      %v1298 = vunpack.c.l.b16 %v786
      %v1299 = vunpack.c.l.b16 %v787
      %v1300 = vunpack.c.l.b16 %v788
      %v1301 = vunpack.c.l.b16 %v789
      %v1302 = vunpack.c.l.b16 %v790
      %v1303 = vunpack.c.l.b16 %v791
      %v1304 = vunpack.c.l.b16 %v792
      %v1305 = vunpack.c.l.b16 %v793
      %v1306 = vunpack.c.l.b16 %v794
      %v1307 = vunpack.c.l.b16 %v795
      %v1308 = vunpack.c.l.b16 %v796
      %v1309 = vunpack.c.l.b16 %v797
      %v1310 = vunpack.c.l.b16 %v798
      %v1311 = vunpack.c.l.b16 %v799
      %v1312 = vunpack.c.l.b16 %v800
      %v1313 = vunpack.c.l.b16 %v801
      %v1314 = vunpack.c.l.b16 %v802
      %v1315 = vunpack.c.l.b16 %v803
      %v1316 = vunpack.c.l.b16 %v804
      %v1317 = vunpack.c.l.b16 %v805
      %v1318 = vunpack.c.l.b16 %v806
      %v1319 = vunpack.c.l.b16 %v807
      %v1320 = vunpack.c.l.b16 %v808
      %v1321 = vunpack.c.l.b16 %v809
      %v1322 = vunpack.c.l.b16 %v810
      %v1323 = vunpack.c.l.b16 %v811
      %v1324 = vunpack.c.l.b16 %v812
      %v1325 = vunpack.c.l.b16 %v813
      %v1326 = vunpack.c.l.b16 %v814
      %v1327 = vunpack.c.l.b16 %v815
      %v1328 = vunpack.c.l.b16 %v816
      %v1329 = vunpack.c.l.b16 %v817
      %v1330 = vunpack.c.l.b16 %v818
      %v1331 = vunpack.c.l.b16 %v819
      %v1332 = vunpack.c.l.b16 %v820
      %v1333 = vunpack.c.l.b16 %v821
      %v1334 = vunpack.c.l.b16 %v822
      %v1335 = vunpack.c.l.b16 %v823
      %v1336 = vunpack.c.l.b16 %v824
      %v1337 = vunpack.c.l.b16 %v825
      %v1338 = vunpack.c.l.b16 %v826
      %v1339 = vunpack.c.l.b16 %v827
      %v1340 = vunpack.c.l.b16 %v828
      %v1341 = vunpack.c.l.b16 %v829
      %v1342 = vunpack.c.l.b16 %v830
      %v1343 = vunpack.c.l.b16 %v831
      %v1344 = vunpack.c.l.b16 %v832
      %v1345 = vunpack.c.l.b16 %v833
      %v1346 = vunpack.c.l.b16 %v834
      %v1347 = vunpack.c.l.b16 %v835
      %v1348 = vunpack.c.l.b16 %v836
      %v1349 = vunpack.c.l.b16 %v837
      %v1350 = vunpack.c.l.b16 %v838
      %v1351 = vunpack.c.l.b16 %v839
      %v1352 = vunpack.c.l.b16 %v840
      %v1353 = vunpack.c.l.b16 %v841
      %v1354 = vunpack.c.l.b16 %v842
      %v1355 = vunpack.c.l.b16 %v843
      %v1356 = vunpack.c.l.b16 %v844
      %v1357 = vunpack.c.l.b16 %v845
      %v1358 = vunpack.c.l.b16 %v846
      %v1359 = vunpack.c.l.b16 %v847
      %v1360 = vunpack.c.l.b16 %v848
      %v1361 = vunpack.c.l.b16 %v849
      %v1362 = vunpack.c.l.b16 %v850
      %v1363 = vunpack.c.l.b16 %v851
      %v1364 = vpack.c.b16 %v1109, %v1108
      %v1365 = vpack.c.b16 %v1111, %v1110
      %v1366 = vpack.c.b16 %v1113, %v1112
      %v1367 = vpack.c.b16 %v1115, %v1114
      %v1368 = vpack.c.b16 %v1117, %v1116
      %v1369 = vpack.c.b16 %v1119, %v1118
      %v1370 = vpack.c.b16 %v1121, %v1120
      %v1371 = vpack.c.b16 %v1123, %v1122
      %v1372 = vpack.c.b16 %v1125, %v1124
      %v1373 = vpack.c.b16 %v1127, %v1126
      %v1374 = vpack.c.b16 %v1129, %v1128
      %v1375 = vpack.c.b16 %v1131, %v1130
      %v1376 = vpack.c.b16 %v1133, %v1132
      %v1377 = vpack.c.b16 %v1135, %v1134
      %v1378 = vpack.c.b16 %v1137, %v1136
      %v1379 = vpack.c.b16 %v1139, %v1138
      %v1380 = vpack.c.b16 %v1141, %v1140
      %v1381 = vpack.c.b16 %v1143, %v1142
      %v1382 = vpack.c.b16 %v1145, %v1144
      %v1383 = vpack.c.b16 %v1147, %v1146
      %v1384 = vpack.c.b16 %v1149, %v1148
      %v1385 = vpack.c.b16 %v1151, %v1150
      %v1386 = vpack.c.b16 %v1153, %v1152
      %v1387 = vpack.c.b16 %v1155, %v1154
      %v1388 = vpack.c.b16 %v1157, %v1156
      %v1389 = vpack.c.b16 %v1159, %v1158
      %v1390 = vpack.c.b16 %v1161, %v1160
      %v1391 = vpack.c.b16 %v1163, %v1162
      %v1392 = vpack.c.b16 %v1165, %v1164
      %v1393 = vpack.c.b16 %v1167, %v1166
      %v1394 = vpack.c.b16 %v1169, %v1168
      %v1395 = vpack.c.b16 %v1171, %v1170
      %v1396 = vpack.c.b16 %v1173, %v1172
      %v1397 = vpack.c.b16 %v1175, %v1174
      %v1398 = vpack.c.b16 %v1177, %v1176
      %v1399 = vpack.c.b16 %v1179, %v1178
      %v1400 = vpack.c.b16 %v1181, %v1180
      %v1401 = vpack.c.b16 %v1183, %v1182
      %v1402 = vpack.c.b16 %v1185, %v1184
      %v1403 = vpack.c.b16 %v1187, %v1186
      %v1404 = vpack.c.b16 %v1189, %v1188
      %v1405 = vpack.c.b16 %v1191, %v1190
      %v1406 = vpack.c.b16 %v1193, %v1192
      %v1407 = vpack.c.b16 %v1195, %v1194
      %v1408 = vpack.c.b16 %v1197, %v1196
      %v1409 = vpack.c.b16 %v1199, %v1198
      %v1410 = vpack.c.b16 %v1201, %v1200
      %v1411 = vpack.c.b16 %v1203, %v1202
      %v1412 = vpack.c.b16 %v1205, %v1204
      %v1413 = vpack.c.b16 %v1207, %v1206
      %v1414 = vpack.c.b16 %v1209, %v1208
      %v1415 = vpack.c.b16 %v1211, %v1210
      %v1416 = vpack.c.b16 %v1213, %v1212
      %v1417 = vpack.c.b16 %v1215, %v1214
      %v1418 = vpack.c.b16 %v1217, %v1216
      %v1419 = vpack.c.b16 %v1219, %v1218
      %v1420 = vpack.c.b16 %v1221, %v1220
      %v1421 = vpack.c.b16 %v1223, %v1222
      %v1422 = vpack.c.b16 %v1225, %v1224
      %v1423 = vpack.c.b16 %v1227, %v1226
      %v1424 = vpack.c.b16 %v1229, %v1228
      %v1425 = vpack.c.b16 %v1231, %v1230
      %v1426 = vpack.c.b16 %v1233, %v1232
      %v1427 = vpack.c.b16 %v1235, %v1234
      %v1428 = vpack.c.b16 %v1237, %v1236
      %v1429 = vpack.c.b16 %v1239, %v1238
      %v1430 = vpack.c.b16 %v1241, %v1240
      %v1431 = vpack.c.b16 %v1243, %v1242
      %v1432 = vpack.c.b16 %v1245, %v1244
      %v1433 = vpack.c.b16 %v1247, %v1246
      %v1434 = vpack.c.b16 %v1249, %v1248
      %v1435 = vpack.c.b16 %v1251, %v1250
      %v1436 = vpack.c.b16 %v1253, %v1252
      %v1437 = vpack.c.b16 %v1255, %v1254
      %v1438 = vpack.c.b16 %v1257, %v1256
      %v1439 = vpack.c.b16 %v1259, %v1258
      %v1440 = vpack.c.b16 %v1261, %v1260
      %v1441 = vpack.c.b16 %v1263, %v1262
      %v1442 = vpack.c.b16 %v1265, %v1264
      %v1443 = vpack.c.b16 %v1267, %v1266
      %v1444 = vpack.c.b16 %v1269, %v1268
      %v1445 = vpack.c.b16 %v1271, %v1270
      %v1446 = vpack.c.b16 %v1273, %v1272
      %v1447 = vpack.c.b16 %v1275, %v1274
      %v1448 = vpack.c.b16 %v1277, %v1276
      %v1449 = vpack.c.b16 %v1279, %v1278
      %v1450 = vpack.c.b16 %v1281, %v1280
      %v1451 = vpack.c.b16 %v1283, %v1282
      %v1452 = vpack.c.b16 %v1285, %v1284
      %v1453 = vpack.c.b16 %v1287, %v1286
      %v1454 = vpack.c.b16 %v1289, %v1288
      %v1455 = vpack.c.b16 %v1291, %v1290
      %v1456 = vpack.c.b16 %v1293, %v1292
      %v1457 = vpack.c.b16 %v1295, %v1294
      %v1458 = vpack.c.b16 %v1297, %v1296
      %v1459 = vpack.c.b16 %v1299, %v1298
      %v1460 = vpack.c.b16 %v1301, %v1300
      %v1461 = vpack.c.b16 %v1303, %v1302
      %v1462 = vpack.c.b16 %v1305, %v1304
      %v1463 = vpack.c.b16 %v1307, %v1306
      %v1464 = vpack.c.b16 %v1309, %v1308
      %v1465 = vpack.c.b16 %v1311, %v1310
      %v1466 = vpack.c.b16 %v1313, %v1312
      %v1467 = vpack.c.b16 %v1315, %v1314
      %v1468 = vpack.c.b16 %v1317, %v1316
      %v1469 = vpack.c.b16 %v1319, %v1318
      %v1470 = vpack.c.b16 %v1321, %v1320
      %v1471 = vpack.c.b16 %v1323, %v1322
      %v1472 = vpack.c.b16 %v1325, %v1324
      %v1473 = vpack.c.b16 %v1327, %v1326
      %v1474 = vpack.c.b16 %v1329, %v1328
      %v1475 = vpack.c.b16 %v1331, %v1330
      %v1476 = vpack.c.b16 %v1333, %v1332
      %v1477 = vpack.c.b16 %v1335, %v1334
      %v1478 = vpack.c.b16 %v1337, %v1336
      %v1479 = vpack.c.b16 %v1339, %v1338
      %v1480 = vpack.c.b16 %v1341, %v1340
      %v1481 = vpack.c.b16 %v1343, %v1342
      %v1482 = vpack.c.b16 %v1345, %v1344
      %v1483 = vpack.c.b16 %v1347, %v1346
      %v1484 = vpack.c.b16 %v1349, %v1348
      %v1485 = vpack.c.b16 %v1351, %v1350
      %v1486 = vpack.c.b16 %v1353, %v1352
      %v1487 = vpack.c.b16 %v1355, %v1354
      %v1488 = vpack.c.b16 %v1357, %v1356
      %v1489 = vpack.c.b16 %v1359, %v1358
      %v1490 = vpack.c.b16 %v1361, %v1360
      %v1491 = vpack.c.b16 %v1363, %v1362
      %1620 = vmatprep.subr.bf16.mxu0 0
      %1621 = vmatpush1.bf16.msra.mxu0 %v1364
      %1622 = vmatprep.subr.bf16.mxu0 0
      %1623 = vmatpush1.bf16.msra.mxu0 %v1365
      %1624 = vmatprep.subr.bf16.mxu0 0
      %1625 = vmatpush1.bf16.msra.mxu0 %v1366
      %1626 = vmatprep.subr.bf16.mxu0 0
      %1627 = vmatpush1.bf16.msra.mxu0 %v1367
      %1628 = vmatprep.subr.bf16.mxu0 0
      %1629 = vmatpush1.bf16.msra.mxu0 %v1368
      %1630 = vmatprep.subr.bf16.mxu0 0
      %1631 = vmatpush1.bf16.msra.mxu0 %v1369
      %1632 = vmatprep.subr.bf16.mxu0 0
      %1633 = vmatpush1.bf16.msra.mxu0 %v1370
      %1634 = vmatprep.subr.bf16.mxu0 0
      %1635 = vmatpush1.bf16.msra.mxu0 %v1371
      %1636 = vmatprep.subr.bf16.mxu0 0
      %1637 = vmatpush1.bf16.msra.mxu0 %v1372
      %1638 = vmatprep.subr.bf16.mxu0 0
      %1639 = vmatpush1.bf16.msra.mxu0 %v1373
      %1640 = vmatprep.subr.bf16.mxu0 0
      %1641 = vmatpush1.bf16.msra.mxu0 %v1374
      %1642 = vmatprep.subr.bf16.mxu0 0
      %1643 = vmatpush1.bf16.msra.mxu0 %v1375
      %1644 = vmatprep.subr.bf16.mxu0 0
      %1645 = vmatpush1.bf16.msra.mxu0 %v1376
      %1646 = vmatprep.subr.bf16.mxu0 0
      %1647 = vmatpush1.bf16.msra.mxu0 %v1377
      %1648 = vmatprep.subr.bf16.mxu0 0
      %1649 = vmatpush1.bf16.msra.mxu0 %v1378
      %1650 = vmatprep.subr.bf16.mxu0 0
      %1651 = vmatpush1.bf16.msra.mxu0 %v1379
      %1652 = vmatprep.mubr.bf16.mxu0 %v552
      %1653 = vmatmul.mubr.bf16.gmra.mrb[0].mxu0 %v549
      %v1654 = vpop.f32.mrb[0].mxu0
      %v1655 = vadd.f32 0.0, %v1654
      %v1656 = vpop.f32.mrb[0].mxu0
      %v1657 = vpop.f32.mrb[0].mxu0
      %v1658 = vadd.f32 0.0, %v1657
      %v1659 = vpop.f32.mrb[0].mxu0
      %1660 = vdwg.mxu0
      %1661 = vmatprep.subr.bf16.mxu0 0
      %1662 = vmatpush1.bf16.msra.mxu0 %v1380
      %1663 = vmatprep.subr.bf16.mxu0 0
      %1664 = vmatpush1.bf16.msra.mxu0 %v1381
      %1665 = vmatprep.subr.bf16.mxu0 0
      %1666 = vmatpush1.bf16.msra.mxu0 %v1382
      %1667 = vmatprep.subr.bf16.mxu0 0
      %1668 = vmatpush1.bf16.msra.mxu0 %v1383
      %1669 = vmatprep.subr.bf16.mxu0 0
      %1670 = vmatpush1.bf16.msra.mxu0 %v1384
      %1671 = vmatprep.subr.bf16.mxu0 0
      %1672 = vmatpush1.bf16.msra.mxu0 %v1385
      %1673 = vmatprep.subr.bf16.mxu0 0
      %1674 = vmatpush1.bf16.msra.mxu0 %v1386
      %1675 = vmatprep.subr.bf16.mxu0 0
      %1676 = vmatpush1.bf16.msra.mxu0 %v1387
      %1677 = vmatprep.subr.bf16.mxu0 0
      %1678 = vmatpush1.bf16.msra.mxu0 %v1388
      %1679 = vmatprep.subr.bf16.mxu0 0
      %1680 = vmatpush1.bf16.msra.mxu0 %v1389
      %1681 = vmatprep.subr.bf16.mxu0 0
      %1682 = vmatpush1.bf16.msra.mxu0 %v1390
      %1683 = vmatprep.subr.bf16.mxu0 0
      %1684 = vmatpush1.bf16.msra.mxu0 %v1391
      %1685 = vmatprep.subr.bf16.mxu0 0
      %1686 = vmatpush1.bf16.msra.mxu0 %v1392
      %1687 = vmatprep.subr.bf16.mxu0 0
      %1688 = vmatpush1.bf16.msra.mxu0 %v1393
      %1689 = vmatprep.subr.bf16.mxu0 0
      %1690 = vmatpush1.bf16.msra.mxu0 %v1394
      %1691 = vmatprep.subr.bf16.mxu0 0
      %1692 = vmatpush1.bf16.msra.mxu0 %v1395
      %1693 = vmatprep.mubr.bf16.mxu0 %v558
      %1694 = vmatmul.mubr.bf16.gmra.mrb[0].mxu0 %v555
      %v1695 = vpop.f32.mrb[0].mxu0
      %v1696 = vadd.f32 %v1655, %v1695
      %v1697 = vpop.f32.mrb[0].mxu0
      %v1698 = vpop.f32.mrb[0].mxu0
      %v1699 = vadd.f32 %v1658, %v1698
      %v1700 = vpop.f32.mrb[0].mxu0
      %1701 = vdwg.mxu0
      %1702 = vmatprep.subr.bf16.mxu0 0
      %1703 = vmatpush1.bf16.msra.mxu0 %v1396
      %1704 = vmatprep.subr.bf16.mxu0 0
      %1705 = vmatpush1.bf16.msra.mxu0 %v1397
      %1706 = vmatprep.subr.bf16.mxu0 0
      %1707 = vmatpush1.bf16.msra.mxu0 %v1398
      %1708 = vmatprep.subr.bf16.mxu0 0
      %1709 = vmatpush1.bf16.msra.mxu0 %v1399
      %1710 = vmatprep.subr.bf16.mxu0 0
      %1711 = vmatpush1.bf16.msra.mxu0 %v1400
      %1712 = vmatprep.subr.bf16.mxu0 0
      %1713 = vmatpush1.bf16.msra.mxu0 %v1401
      %1714 = vmatprep.subr.bf16.mxu0 0
      %1715 = vmatpush1.bf16.msra.mxu0 %v1402
      %1716 = vmatprep.subr.bf16.mxu0 0
      %1717 = vmatpush1.bf16.msra.mxu0 %v1403
      %1718 = vmatprep.subr.bf16.mxu0 0
      %1719 = vmatpush1.bf16.msra.mxu0 %v1404
      %1720 = vmatprep.subr.bf16.mxu0 0
      %1721 = vmatpush1.bf16.msra.mxu0 %v1405
      %1722 = vmatprep.subr.bf16.mxu0 0
      %1723 = vmatpush1.bf16.msra.mxu0 %v1406
      %1724 = vmatprep.subr.bf16.mxu0 0
      %1725 = vmatpush1.bf16.msra.mxu0 %v1407
      %1726 = vmatprep.subr.bf16.mxu0 0
      %1727 = vmatpush1.bf16.msra.mxu0 %v1408
      %1728 = vmatprep.subr.bf16.mxu0 0
      %1729 = vmatpush1.bf16.msra.mxu0 %v1409
      %1730 = vmatprep.subr.bf16.mxu0 0
      %1731 = vmatpush1.bf16.msra.mxu0 %v1410
      %1732 = vmatprep.subr.bf16.mxu0 0
      %1733 = vmatpush1.bf16.msra.mxu0 %v1411
      %1734 = vmatprep.mubr.bf16.mxu0 %v564
      %1735 = vmatmul.mubr.bf16.gmra.mrb[0].mxu0 %v561
      %v1736 = vpop.f32.mrb[0].mxu0
      %v1737 = vadd.f32 %v1696, %v1736
      %v1738 = vpop.f32.mrb[0].mxu0
      %v1739 = vpop.f32.mrb[0].mxu0
      %v1740 = vadd.f32 %v1699, %v1739
      %v1741 = vpop.f32.mrb[0].mxu0
      %1742 = vdwg.mxu0
      %1743 = vmatprep.subr.bf16.mxu0 0
      %1744 = vmatpush1.bf16.msra.mxu0 %v1412
      %1745 = vmatprep.subr.bf16.mxu0 0
      %1746 = vmatpush1.bf16.msra.mxu0 %v1413
      %1747 = vmatprep.subr.bf16.mxu0 0
      %1748 = vmatpush1.bf16.msra.mxu0 %v1414
      %1749 = vmatprep.subr.bf16.mxu0 0
      %1750 = vmatpush1.bf16.msra.mxu0 %v1415
      %1751 = vmatprep.subr.bf16.mxu0 0
      %1752 = vmatpush1.bf16.msra.mxu0 %v1416
      %1753 = vmatprep.subr.bf16.mxu0 0
      %1754 = vmatpush1.bf16.msra.mxu0 %v1417
      %1755 = vmatprep.subr.bf16.mxu0 0
      %1756 = vmatpush1.bf16.msra.mxu0 %v1418
      %1757 = vmatprep.subr.bf16.mxu0 0
      %1758 = vmatpush1.bf16.msra.mxu0 %v1419
      %1759 = vmatprep.subr.bf16.mxu0 0
      %1760 = vmatpush1.bf16.msra.mxu0 %v1420
      %1761 = vmatprep.subr.bf16.mxu0 0
      %1762 = vmatpush1.bf16.msra.mxu0 %v1421
      %1763 = vmatprep.subr.bf16.mxu0 0
      %1764 = vmatpush1.bf16.msra.mxu0 %v1422
      %1765 = vmatprep.subr.bf16.mxu0 0
      %1766 = vmatpush1.bf16.msra.mxu0 %v1423
      %1767 = vmatprep.subr.bf16.mxu0 0
      %1768 = vmatpush1.bf16.msra.mxu0 %v1424
      %1769 = vmatprep.subr.bf16.mxu0 0
      %1770 = vmatpush1.bf16.msra.mxu0 %v1425
      %1771 = vmatprep.subr.bf16.mxu0 0
      %1772 = vmatpush1.bf16.msra.mxu0 %v1426
      %1773 = vmatprep.subr.bf16.mxu0 0
      %1774 = vmatpush1.bf16.msra.mxu0 %v1427
      %1775 = vmatprep.mubr.bf16.mxu0 %v570
      %1776 = vmatmul.mubr.bf16.gmra.mrb[0].mxu0 %v567
      %v1777 = vpop.f32.mrb[0].mxu0
      %v1778 = vadd.f32 %v1737, %v1777
      %v1779 = vpop.f32.mrb[0].mxu0
      %v1780 = vpop.f32.mrb[0].mxu0
      %v1781 = vadd.f32 %v1740, %v1780
      %v1782 = vpop.f32.mrb[0].mxu0
      %1783 = vdwg.mxu0
      %1784 = vmatprep.subr.bf16.mxu0 0
      %1785 = vmatpush1.bf16.msra.mxu0 %v1428
      %1786 = vmatprep.subr.bf16.mxu0 0
      %1787 = vmatpush1.bf16.msra.mxu0 %v1429
      %1788 = vmatprep.subr.bf16.mxu0 0
      %1789 = vmatpush1.bf16.msra.mxu0 %v1430
      %1790 = vmatprep.subr.bf16.mxu0 0
      %1791 = vmatpush1.bf16.msra.mxu0 %v1431
      %1792 = vmatprep.subr.bf16.mxu0 0
      %1793 = vmatpush1.bf16.msra.mxu0 %v1432
      %1794 = vmatprep.subr.bf16.mxu0 0
      %1795 = vmatpush1.bf16.msra.mxu0 %v1433
      %1796 = vmatprep.subr.bf16.mxu0 0
      %1797 = vmatpush1.bf16.msra.mxu0 %v1434
      %1798 = vmatprep.subr.bf16.mxu0 0
      %1799 = vmatpush1.bf16.msra.mxu0 %v1435
      %1800 = vmatprep.subr.bf16.mxu0 0
      %1801 = vmatpush1.bf16.msra.mxu0 %v1436
      %1802 = vmatprep.subr.bf16.mxu0 0
      %1803 = vmatpush1.bf16.msra.mxu0 %v1437
      %1804 = vmatprep.subr.bf16.mxu0 0
      %1805 = vmatpush1.bf16.msra.mxu0 %v1438
      %1806 = vmatprep.subr.bf16.mxu0 0
      %1807 = vmatpush1.bf16.msra.mxu0 %v1439
      %1808 = vmatprep.subr.bf16.mxu0 0
      %1809 = vmatpush1.bf16.msra.mxu0 %v1440
      %1810 = vmatprep.subr.bf16.mxu0 0
      %1811 = vmatpush1.bf16.msra.mxu0 %v1441
      %1812 = vmatprep.subr.bf16.mxu0 0
      %1813 = vmatpush1.bf16.msra.mxu0 %v1442
      %1814 = vmatprep.subr.bf16.mxu0 0
      %1815 = vmatpush1.bf16.msra.mxu0 %v1443
      %1816 = vmatprep.mubr.bf16.mxu0 %v576
      %1817 = vmatmul.mubr.bf16.gmra.mrb[0].mxu0 %v573
      %v1818 = vpop.f32.mrb[0].mxu0
      %v1819 = vadd.f32 %v1778, %v1818
      %v1820 = vpop.f32.mrb[0].mxu0
      %v1821 = vpop.f32.mrb[0].mxu0
      %v1822 = vadd.f32 %v1781, %v1821
      %v1823 = vpop.f32.mrb[0].mxu0
      %1824 = vdwg.mxu0
      %1825 = vmatprep.subr.bf16.mxu0 0
      %1826 = vmatpush1.bf16.msra.mxu0 %v1444
      %1827 = vmatprep.subr.bf16.mxu0 0
      %1828 = vmatpush1.bf16.msra.mxu0 %v1445
      %1829 = vmatprep.subr.bf16.mxu0 0
      %1830 = vmatpush1.bf16.msra.mxu0 %v1446
      %1831 = vmatprep.subr.bf16.mxu0 0
      %1832 = vmatpush1.bf16.msra.mxu0 %v1447
      %1833 = vmatprep.subr.bf16.mxu0 0
      %1834 = vmatpush1.bf16.msra.mxu0 %v1448
      %1835 = vmatprep.subr.bf16.mxu0 0
      %1836 = vmatpush1.bf16.msra.mxu0 %v1449
      %1837 = vmatprep.subr.bf16.mxu0 0
      %1838 = vmatpush1.bf16.msra.mxu0 %v1450
      %1839 = vmatprep.subr.bf16.mxu0 0
      %1840 = vmatpush1.bf16.msra.mxu0 %v1451
      %1841 = vmatprep.subr.bf16.mxu0 0
      %1842 = vmatpush1.bf16.msra.mxu0 %v1452
      %1843 = vmatprep.subr.bf16.mxu0 0
      %1844 = vmatpush1.bf16.msra.mxu0 %v1453
      %1845 = vmatprep.subr.bf16.mxu0 0
      %1846 = vmatpush1.bf16.msra.mxu0 %v1454
      %1847 = vmatprep.subr.bf16.mxu0 0
      %1848 = vmatpush1.bf16.msra.mxu0 %v1455
      %1849 = vmatprep.subr.bf16.mxu0 0
      %1850 = vmatpush1.bf16.msra.mxu0 %v1456
      %1851 = vmatprep.subr.bf16.mxu0 0
      %1852 = vmatpush1.bf16.msra.mxu0 %v1457
      %1853 = vmatprep.subr.bf16.mxu0 0
      %1854 = vmatpush1.bf16.msra.mxu0 %v1458
      %1855 = vmatprep.subr.bf16.mxu0 0
      %1856 = vmatpush1.bf16.msra.mxu0 %v1459
      %1857 = vmatprep.mubr.bf16.mxu0 %v582
      %1858 = vmatmul.mubr.bf16.gmra.mrb[0].mxu0 %v579
      %v1859 = vpop.f32.mrb[0].mxu0
      %v1860 = vadd.f32 %v1819, %v1859
      %v1861 = vpop.f32.mrb[0].mxu0
      %v1862 = vpop.f32.mrb[0].mxu0
      %v1863 = vadd.f32 %v1822, %v1862
      %v1864 = vpop.f32.mrb[0].mxu0
      %1865 = vdwg.mxu0
      %1866 = vmatprep.subr.bf16.mxu0 0
      %1867 = vmatpush1.bf16.msra.mxu0 %v1460
      %1868 = vmatprep.subr.bf16.mxu0 0
      %1869 = vmatpush1.bf16.msra.mxu0 %v1461
      %1870 = vmatprep.subr.bf16.mxu0 0
      %1871 = vmatpush1.bf16.msra.mxu0 %v1462
      %1872 = vmatprep.subr.bf16.mxu0 0
      %1873 = vmatpush1.bf16.msra.mxu0 %v1463
      %1874 = vmatprep.subr.bf16.mxu0 0
      %1875 = vmatpush1.bf16.msra.mxu0 %v1464
      %1876 = vmatprep.subr.bf16.mxu0 0
      %1877 = vmatpush1.bf16.msra.mxu0 %v1465
      %1878 = vmatprep.subr.bf16.mxu0 0
      %1879 = vmatpush1.bf16.msra.mxu0 %v1466
      %1880 = vmatprep.subr.bf16.mxu0 0
      %1881 = vmatpush1.bf16.msra.mxu0 %v1467
      %1882 = vmatprep.subr.bf16.mxu0 0
      %1883 = vmatpush1.bf16.msra.mxu0 %v1468
      %1884 = vmatprep.subr.bf16.mxu0 0
      %1885 = vmatpush1.bf16.msra.mxu0 %v1469
      %1886 = vmatprep.subr.bf16.mxu0 0
      %1887 = vmatpush1.bf16.msra.mxu0 %v1470
      %1888 = vmatprep.subr.bf16.mxu0 0
      %1889 = vmatpush1.bf16.msra.mxu0 %v1471
      %1890 = vmatprep.subr.bf16.mxu0 0
      %1891 = vmatpush1.bf16.msra.mxu0 %v1472
      %1892 = vmatprep.subr.bf16.mxu0 0
      %1893 = vmatpush1.bf16.msra.mxu0 %v1473
      %1894 = vmatprep.subr.bf16.mxu0 0
      %1895 = vmatpush1.bf16.msra.mxu0 %v1474
      %1896 = vmatprep.subr.bf16.mxu0 0
      %1897 = vmatpush1.bf16.msra.mxu0 %v1475
      %1898 = vmatprep.mubr.bf16.mxu0 %v588
      %1899 = vmatmul.mubr.bf16.gmra.mrb[0].mxu0 %v585
      %v1900 = vpop.f32.mrb[0].mxu0
      %v1901 = vadd.f32 %v1860, %v1900
      %v1902 = vpop.f32.mrb[0].mxu0
      %v1903 = vpop.f32.mrb[0].mxu0
      %v1904 = vadd.f32 %v1863, %v1903
      %v1905 = vpop.f32.mrb[0].mxu0
      %1906 = vdwg.mxu0
      %1907 = vmatprep.subr.bf16.mxu0 0
      %1908 = vmatpush1.bf16.msra.mxu0 %v1476
      %1909 = vmatprep.subr.bf16.mxu0 0
      %1910 = vmatpush1.bf16.msra.mxu0 %v1477
      %1911 = vmatprep.subr.bf16.mxu0 0
      %1912 = vmatpush1.bf16.msra.mxu0 %v1478
      %1913 = vmatprep.subr.bf16.mxu0 0
      %1914 = vmatpush1.bf16.msra.mxu0 %v1479
      %1915 = vmatprep.subr.bf16.mxu0 0
      %1916 = vmatpush1.bf16.msra.mxu0 %v1480
      %1917 = vmatprep.subr.bf16.mxu0 0
      %1918 = vmatpush1.bf16.msra.mxu0 %v1481
      %1919 = vmatprep.subr.bf16.mxu0 0
      %1920 = vmatpush1.bf16.msra.mxu0 %v1482
      %1921 = vmatprep.subr.bf16.mxu0 0
      %1922 = vmatpush1.bf16.msra.mxu0 %v1483
      %1923 = vmatprep.subr.bf16.mxu0 0
      %1924 = vmatpush1.bf16.msra.mxu0 %v1484
      %1925 = vmatprep.subr.bf16.mxu0 0
      %1926 = vmatpush1.bf16.msra.mxu0 %v1485
      %1927 = vmatprep.subr.bf16.mxu0 0
      %1928 = vmatpush1.bf16.msra.mxu0 %v1486
      %1929 = vmatprep.subr.bf16.mxu0 0
      %1930 = vmatpush1.bf16.msra.mxu0 %v1487
      %1931 = vmatprep.subr.bf16.mxu0 0
      %1932 = vmatpush1.bf16.msra.mxu0 %v1488
      %1933 = vmatprep.subr.bf16.mxu0 0
      %1934 = vmatpush1.bf16.msra.mxu0 %v1489
      %1935 = vmatprep.subr.bf16.mxu0 0
      %1936 = vmatpush1.bf16.msra.mxu0 %v1490
      %1937 = vmatprep.subr.bf16.mxu0 0
      %1938 = vmatpush1.bf16.msra.mxu0 %v1491
      %1939 = vmatprep.mubr.bf16.mxu0 %v594
      %1940 = vmatmul.mubr.bf16.gmra.mrb[0].mxu0 %v591
      %v1941 = vpop.f32.mrb[0].mxu0
      %v1942 = vadd.f32 %v1901, %v1941
      %v1943 = vpop.f32.mrb[0].mxu0
      %v1944 = vpop.f32.mrb[0].mxu0
      %v1945 = vadd.f32 %v1904, %v1944
      %v1946 = vpop.f32.mrb[0].mxu0
      %1947 = vdwg.mxu0
      %v1948 = vpack.c.bf16 %v1945, %v1942
      %v1950 = vunpack.c.l.b16 %v1948
      %v1951 = vunpack.c.h.b16 %v1948
      %v1952 = vpack.c.b16 %v1950, %v1950
      %v1953 = vpack.c.b16 %v1951, %v1951
      %1956 = vst [vmem:[%s208] sm:$0xf] %v1952
      %1957 = vst [vmem:[%s208 + $0x4] sm:$0xf] %v1953
      %v1958 = vadd.f32 %v1942, %v1945
      %v1959 = vrot.slane %v1958, 4
      %v1960 = vadd.f32 %v1958, %v1959
      %v1961 = vrot.slane %v1960, 2
      %v1962 = vadd.f32 %v1960, %v1961
      %v1963 = vrot.slane %v1962, 1
      %v1964 = vadd.f32 %v1962, %v1963
      %1965 = vst [vmem:[%s211] sm:$0x1] %v1964
      %v1966 = vmul.f32 %v1942, %v1942
      %v1967 = vmul.f32 %v1945, %v1945
      %v1968 = vadd.f32 %v1966, %v1967
      %v1969 = vrot.slane %v1968, 4
      %v1970 = vadd.f32 %v1968, %v1969
      %v1971 = vrot.slane %v1970, 2
      %v1972 = vadd.f32 %v1970, %v1971
      %v1973 = vrot.slane %v1972, 1
      %v1974 = vadd.f32 %v1972, %v1973
      %1975 = vst [vmem:[%s214] sm:$0x1] %v1974
      %p1976 = scmp.lt.s32.totalorder %s16, 1
      %s1977 = scalar_select %p1976, %s16, 1
      %s1978 = smul.addr %s1977, 2
      %s1979 = smul.addr %s1978, 4
      %s1980 = scalar_lea.vmem %s2, %s1979
      %p1981 = scmp.lt.s32.totalorder %s16, 1
      %s1982 = scalar_select %p1981, %s16, 1
      %s1983 = scalar_lea.vmem %s3, %s1982
      %p1984 = scmp.lt.s32.totalorder %s16, 1
      %s1985 = scalar_select %p1984, %s16, 1
      %s1986 = scalar_lea.vmem %s4, %s1985
      // Predicated region
      $region29: #{patch_discriminator_forward.7} parent=27 // pred_check
        %p1987 = pneg %p81
      $region30: #{patch_discriminator_forward.7} parent=27 // pred_check_branch
        %1989 = sbr.rel (%p1987) target = $region32
      $region31: #{patch_discriminator_forward.7} parent=27 // pred_region
        _
      $region32: #{patch_discriminator_forward.7} parent=27 // pred_fallthru
        _
      // Predicated region
      $region33: #{patch_discriminator_forward.7} parent=27 // pred_check
        %p1990 = pneg %p107
      $region34: #{patch_discriminator_forward.7} parent=27 // pred_check_branch
        %1992 = sbr.rel (%p1990) target = $region36
      $region35: #{patch_discriminator_forward.7} parent=27 // pred_region
        _
      $region36: #{patch_discriminator_forward.7} parent=27 // pred_fallthru
        _
      // Predicated region
      $region37: #{patch_discriminator_forward.7} parent=27 // pred_check
        %p1993 = pneg %p133
      $region38: #{patch_discriminator_forward.7} parent=27 // pred_check_branch
        %1995 = sbr.rel (%p1993) target = $region40
      $region39: #{patch_discriminator_forward.7} parent=27 // pred_region
        _
      $region40: #{patch_discriminator_forward.7} parent=27 // pred_fallthru
        _
    $region28: #{patch_discriminator_forward.7} parent=5 // pred_fallthru
      _
    %p1996 = scmp.le.s32.totalorder 2, %s11
    // Predicated region
    $region41: #{patch_discriminator_forward.7} parent=5 // pred_check
      %p1997 = pneg %p1996
    $region42: #{patch_discriminator_forward.7} parent=5 // pred_check_branch
      %1999 = sbr.rel (%p1997) target = $region44
    $region43: #{patch_discriminator_forward.7} parent=5 // pred_region
      %s2000 = ssub.s32 %s11, 2
      // Predicated region
      $region45: #{patch_discriminator_forward.7} parent=43 // pred_check
        %p2001 = pneg %p87
      $region46: #{patch_discriminator_forward.7} parent=43 // pred_check_branch
        %2003 = sbr.rel (%p2001) target = $region48
      $region47: #{patch_discriminator_forward.7} parent=43 // pred_region
        %p2004 = scmp.lt.s32.totalorder %s17, 1
        %s2005 = scalar_select %p2004, %s17, 1
        %s2006 = smul.addr %s2005, 2
        %s2007 = smul.addr %s2006, 4
        %s2008 = scalar_lea.vmem %s2, %s2007
      $region48: #{patch_discriminator_forward.7} parent=43 // pred_fallthru
        _
      // Predicated region
      $region49: #{patch_discriminator_forward.7} parent=43 // pred_check
        %p2009 = pneg %p113
      $region50: #{patch_discriminator_forward.7} parent=43 // pred_check_branch
        %2011 = sbr.rel (%p2009) target = $region52
      $region51: #{patch_discriminator_forward.7} parent=43 // pred_region
        %p2012 = scmp.lt.s32.totalorder %s17, 1
        %s2013 = scalar_select %p2012, %s17, 1
        %s2014 = scalar_lea.vmem %s3, %s2013
      $region52: #{patch_discriminator_forward.7} parent=43 // pred_fallthru
        _
      // Predicated region
      $region53: #{patch_discriminator_forward.7} parent=43 // pred_check
        %p2015 = pneg %p139
      $region54: #{patch_discriminator_forward.7} parent=43 // pred_check_branch
        %2017 = sbr.rel (%p2015) target = $region56
      $region55: #{patch_discriminator_forward.7} parent=43 // pred_region
        %p2018 = scmp.lt.s32.totalorder %s17, 1
        %s2019 = scalar_select %p2018, %s17, 1
        %s2020 = scalar_lea.vmem %s4, %s2019
      $region56: #{patch_discriminator_forward.7} parent=43 // pred_fallthru
        _
    $region44: #{patch_discriminator_forward.7} parent=5 // pred_fallthru
      _
  $region6: #{patch_discriminator_forward.7} parent=0 // loop_footer
    %s15 = sadd.s32 1, %s11
  $region7: #{patch_discriminator_forward.7} parent=0 // loop_footer_branch
    %10 = sbr.rel target = $region3
  $region8: #{patch_discriminator_forward.7} parent=0 // loop_exit
    _

// kernel: patch_discriminator_forward.8
$region0: #{patch_discriminator_forward.8}
  #allocation0 [shape = 'u32[]', space=smem, size = 0x4, offset = 0x4, fixed_abs, tag = 'smem constant byte address 0x4 - core index']
  #allocation1 [shape = 'u32[144,128]{1,0:T(1,128)}', space=vmem, size = 0x12000, scoped, tag = 'internal scratch']
  %s0 = inlined_call_operand.vmem [shape: bf16[2,6,6,128], index: 0, kind: input, shape index: {}]
  %s1 = inlined_call_operand.vmem [shape: bf16[2048,128], index: 1, kind: input, shape index: {}]
  %s2 = inlined_call_operand.vmem [shape: bf16[2,9,128], index: 2, kind: output, shape index: {0}]
  %s3 = inlined_call_operand.vmem [shape: f32[2,1,128], index: 3, kind: output, shape index: {1}]
  %s4 = inlined_call_operand.vmem [shape: f32[2,1,128], index: 4, kind: output, shape index: {2}]
  %5 = xla_tuple %s2, %s3, %s4
  %s6 = sld [smem:[#allocation0]]
  $region57: #{patch_discriminator_forward.8} parent=0
    _
  %s8 = ssub.s32 1, %s6
  %s9 = scalar_select 0, %s8, %s6
  loop: start=0, step=1, limit=4
  $region2: #{patch_discriminator_forward.8} parent=0 // loop_pre_header
    _
  $region3: #{patch_discriminator_forward.8} parent=0 // loop_header
    %s11 = sphi 0, %s15
    %p12 = scmp.ge.s32.totalorder %s11, 4
    %s21 = sphi 0, %s23
    %s24 = sphi 0, %s21
    %s25 = sphi 0, %s24
    %s41 = sphi 0, %s25
    %s45 = sphi 0, %s45
    %s47 = sphi 0, %s45
    %s48 = sphi 0, %s47
    %s62 = sphi 0, %s48
    %s68 = sphi 0, %s70
    %s71 = sphi 0, %s68
    %s72 = sphi 0, %s71
    %s88 = sphi 0, %s72
    %s94 = sphi 0, %s96
    %s97 = sphi 0, %s94
    %s98 = sphi 0, %s97
    %s114 = sphi 0, %s98
    %s120 = sphi 0, %s122
    %s123 = sphi 0, %s120
    %s124 = sphi 0, %s123
    %s140 = sphi 0, %s124
  $region4: #{patch_discriminator_forward.8} parent=0 // loop_header_branch
    %14 = sbr.rel (%p12) target = $region8
  $region5: #{patch_discriminator_forward.8} parent=0 // loop_body
    %s16 = ssub.s32 %s11, 1
    %s17 = ssub.s32 %s11, 2
    %s18 = sadd.s32 %s11, 1
    %s19 = ssub.s32 %s11, %s18
    %p20 = scmp.eq.s32.totalorder %s19, 0
    %s22 = sadd.s32 %s21, 1
    %s23 = scalar_select %p20, %s21, %s22
    %p26 = pneg %p20
    %p27 = scmp.eq.s32.totalorder %s11, 1
    %p28 = por %p26, %p27
    %p29 = scmp.ne.s32.totalorder %s21, %s24
    %p30 = scmp.eq.s32.totalorder %s11, 0
    %p31 = por %p29, %p30
    %p32 = scmp.ne.s32.totalorder %s21, %s24
    %p33 = scmp.eq.s32.totalorder %s16, 1
    %p34 = por %p32, %p33
    %p35 = scmp.ne.s32.totalorder %s24, %s25
    %p36 = scmp.eq.s32.totalorder %s16, 0
    %p37 = por %p35, %p36
    %p38 = scmp.ne.s32.totalorder %s24, %s25
    %p39 = scmp.eq.s32.totalorder %s17, 1
    %p40 = por %p38, %p39
    %p42 = scmp.ne.s32.totalorder %s25, %s41
    %p43 = scmp.eq.s32.totalorder %s17, 0
    %p44 = por %p42, %p43
    %s46 = sadd.s32 %s45, 1
    %p49 = scmp.eq.s32.totalorder %s11, 1
    %p50 = scmp.ne.s32.totalorder %s45, %s47
    %p51 = scmp.eq.s32.totalorder %s11, 0
    %p52 = por %p50, %p51
    %p53 = scmp.ne.s32.totalorder %s45, %s47
    %p54 = scmp.eq.s32.totalorder %s16, 1
    %p55 = por %p53, %p54
    %p56 = scmp.ne.s32.totalorder %s47, %s48
    %p57 = scmp.eq.s32.totalorder %s16, 0
    %p58 = por %p56, %p57
    %p59 = scmp.ne.s32.totalorder %s47, %s48
    %p60 = scmp.eq.s32.totalorder %s17, 1
    %p61 = por %p59, %p60
    %p63 = scmp.ne.s32.totalorder %s48, %s62
    %p64 = scmp.eq.s32.totalorder %s17, 0
    %p65 = por %p63, %p64
    %s66 = ssub.s32 %s11, %s18
    %p67 = scmp.eq.s32.totalorder %s66, 0
    %s69 = sadd.s32 %s68, 1
    %s70 = scalar_select %p67, %s68, %s69
    %p73 = pneg %p67
    %p74 = scmp.eq.s32.totalorder %s11, 1
    %p75 = por %p73, %p74
    %p76 = scmp.ne.s32.totalorder %s68, %s71
    %p77 = scmp.eq.s32.totalorder %s11, 0
    %p78 = por %p76, %p77
    %p79 = scmp.ne.s32.totalorder %s68, %s71
    %p80 = scmp.eq.s32.totalorder %s16, 1
    %p81 = por %p79, %p80
    %p82 = scmp.ne.s32.totalorder %s71, %s72
    %p83 = scmp.eq.s32.totalorder %s16, 0
    %p84 = por %p82, %p83
    %p85 = scmp.ne.s32.totalorder %s71, %s72
    %p86 = scmp.eq.s32.totalorder %s17, 1
    %p87 = por %p85, %p86
    %p89 = scmp.ne.s32.totalorder %s72, %s88
    %p90 = scmp.eq.s32.totalorder %s17, 0
    %p91 = por %p89, %p90
    %s92 = ssub.s32 %s11, %s18
    %p93 = scmp.eq.s32.totalorder %s92, 0
    %s95 = sadd.s32 %s94, 1
    %s96 = scalar_select %p93, %s94, %s95
    %p99 = pneg %p93
    %p100 = scmp.eq.s32.totalorder %s11, 1
    %p101 = por %p99, %p100
    %p102 = scmp.ne.s32.totalorder %s94, %s97
    %p103 = scmp.eq.s32.totalorder %s11, 0
    %p104 = por %p102, %p103
    %p105 = scmp.ne.s32.totalorder %s94, %s97
    %p106 = scmp.eq.s32.totalorder %s16, 1
    %p107 = por %p105, %p106
    %p108 = scmp.ne.s32.totalorder %s97, %s98
    %p109 = scmp.eq.s32.totalorder %s16, 0
    %p110 = por %p108, %p109
    %p111 = scmp.ne.s32.totalorder %s97, %s98
    %p112 = scmp.eq.s32.totalorder %s17, 1
    %p113 = por %p111, %p112
    %p115 = scmp.ne.s32.totalorder %s98, %s114
    %p116 = scmp.eq.s32.totalorder %s17, 0
    %p117 = por %p115, %p116
    %s118 = ssub.s32 %s11, %s18
    %p119 = scmp.eq.s32.totalorder %s118, 0
    %s121 = sadd.s32 %s120, 1
    %s122 = scalar_select %p119, %s120, %s121
    %p125 = pneg %p119
    %p126 = scmp.eq.s32.totalorder %s11, 1
    %p127 = por %p125, %p126
    %p128 = scmp.ne.s32.totalorder %s120, %s123
    %p129 = scmp.eq.s32.totalorder %s11, 0
    %p130 = por %p128, %p129
    %p131 = scmp.ne.s32.totalorder %s120, %s123
    %p132 = scmp.eq.s32.totalorder %s16, 1
    %p133 = por %p131, %p132
    %p134 = scmp.ne.s32.totalorder %s123, %s124
    %p135 = scmp.eq.s32.totalorder %s16, 0
    %p136 = por %p134, %p135
    %p137 = scmp.ne.s32.totalorder %s123, %s124
    %p138 = scmp.eq.s32.totalorder %s17, 1
    %p139 = por %p137, %p138
    %p141 = scmp.ne.s32.totalorder %s124, %s140
    %p142 = scmp.eq.s32.totalorder %s17, 0
    %p143 = por %p141, %p142
    %p144 = scmp.le.s32.totalorder 1, %s11
    %p145 = scmp.lt.s32.totalorder %s11, 3
    %p146 = pnand %p144, %p145
    %p147 = pneg %p146
    // Predicated region
    $region9: #{patch_discriminator_forward.8} parent=5 // pred_check
      _
    $region10: #{patch_discriminator_forward.8} parent=5 // pred_check_branch
      %149 = sbr.rel (%p146) target = $region12
    $region11: #{patch_discriminator_forward.8} parent=5 // pred_region
      %s150 = ssub.s32 %s11, 1
      // Predicated region
      $region13: #{patch_discriminator_forward.8} parent=11 // pred_check
        %p151 = pneg %p58
      $region14: #{patch_discriminator_forward.8} parent=11 // pred_check_branch
        %153 = sbr.rel (%p151) target = $region16
      $region15: #{patch_discriminator_forward.8} parent=11 // pred_region
        _
      $region16: #{patch_discriminator_forward.8} parent=11 // pred_fallthru
        _
    $region12: #{patch_discriminator_forward.8} parent=5 // pred_fallthru
      _
    %p154 = scmp.lt.s32.totalorder %s11, 2
    // Predicated region
    $region17: #{patch_discriminator_forward.8} parent=5 // pred_check
      %p155 = pneg %p154
    $region18: #{patch_discriminator_forward.8} parent=5 // pred_check_branch
      %157 = sbr.rel (%p155) target = $region20
    $region19: #{patch_discriminator_forward.8} parent=5 // pred_region
      // Predicated region
      $region21: #{patch_discriminator_forward.8} parent=19 // pred_check
        %p158 = pneg %p31
      $region22: #{patch_discriminator_forward.8} parent=19 // pred_check_branch
        %160 = sbr.rel (%p158) target = $region24
      $region23: #{patch_discriminator_forward.8} parent=19 // pred_region
        %p161 = scmp.lt.s32.totalorder %s11, 1
        %s162 = scalar_select %p161, %s11, 1
        %s163 = smul.addr %s162, 6
        %s164 = smul.addr %s163, 4
        %s165 = scalar_lea.vmem %s0, %s164
      $region24: #{patch_discriminator_forward.8} parent=19 // pred_fallthru
        _
    $region20: #{patch_discriminator_forward.8} parent=5 // pred_fallthru
      _
    %p166 = scmp.le.s32.totalorder 1, %s11
    %p167 = scmp.lt.s32.totalorder %s11, 3
    %p168 = pnand %p166, %p167
    %p169 = pneg %p168
    // Predicated region
    $region25: #{patch_discriminator_forward.8} parent=5 // pred_check
      _
    $region26: #{patch_discriminator_forward.8} parent=5 // pred_check_branch
      %171 = sbr.rel (%p168) target = $region28
    $region27: #{patch_discriminator_forward.8} parent=5 // pred_region
      %s172 = ssub.s32 %s11, 1
      %p173 = scmp.lt.s32.totalorder %s16, 1
      %s174 = scalar_select %p173, %s16, 1
      %s175 = smul.addr %s174, 6
      %s176 = smul.addr %s175, 4
      %s177 = scalar_lea.vmem %s0, %s176
      %p178 = pneg %p37
      %p179 = pneg %p34
      %p180 = pneg %p58
      %p181 = pneg %p55
      %p182 = pneg %p84
      %p183 = pneg %p81
      %p184 = scmp.lt.s32.totalorder %s16, 1
      %s185 = scalar_select %p184, %s16, 1
      %s186 = smul.addr %s185, 2
      %s187 = smul.addr %s186, 4
      %s188 = scalar_lea.vmem %s2, %s187
      %p189 = pneg %p110
      %p190 = pneg %p107
      %p191 = scmp.lt.s32.totalorder %s16, 1
      %s192 = scalar_select %p191, %s16, 1
      %s193 = scalar_lea.vmem %s3, %s192
      %p194 = pneg %p136
      %p195 = pneg %p133
      %p196 = scmp.lt.s32.totalorder %s16, 1
      %s197 = scalar_select %p196, %s16, 1
      %s198 = scalar_lea.vmem %s4, %s197
      %p199 = scmp.lt.s32.totalorder %s16, 1
      %s200 = scalar_select %p199, %s16, 1
      %s201 = smul.addr %s200, 6
      %s202 = smul.addr %s201, 4
      %s203 = scalar_lea.vmem %s0, %s202
      %p204 = scmp.lt.s32.totalorder %s16, 1
      %s205 = scalar_select %p204, %s16, 1
      %s206 = smul.addr %s205, 2
      %s207 = smul.addr %s206, 4
      %s208 = scalar_lea.vmem %s2, %s207
      %p209 = scmp.lt.s32.totalorder %s16, 1
      %s210 = scalar_select %p209, %s16, 1
      %s211 = scalar_lea.vmem %s3, %s210
      %p212 = scmp.lt.s32.totalorder %s16, 1
      %s213 = scalar_select %p212, %s16, 1
      %s214 = scalar_lea.vmem %s4, %s213
      %v216 = vld [vmem:[%s203] sm:$0x7]
      %s217 = scalar_lea.vmem %s203, 4
      %v218 = vld [vmem:[%s217] sm:$0x7]
      %s219 = scalar_lea.vmem %s203, 8
      %v220 = vld [vmem:[%s219] sm:$0x7]
      %s221 = scalar_lea.vmem %s203, 12
      %v222 = vld [vmem:[%s221] sm:$0x7]
      %v224 = vunpack.c.l.b16 %v216
      %v225 = vpack.c.b16 %v224, %v224
      %v227 = vshrl.u32 %v225, 16
      %v229 = vshll.u32 %v225, 16
      %v231 = vrot.slane %v229, 1
      %v232 = vor.u32 %v227, %v231
      %v234 = vrot.slane %v225, 1
      %v236 = vrot.slane %v227, 1
      %v237 = vrot.slane %v229, 2
      %v238 = vor.u32 %v236, %v237
      %v241 = vunpack.c.l.b16 %v218
      %v242 = vpack.c.b16 %v241, %v241
      %v244 = vshrl.u32 %v242, 16
      %v246 = vshll.u32 %v242, 16
      %v248 = vrot.slane %v246, 1
      %v249 = vor.u32 %v244, %v248
      %v251 = vrot.slane %v242, 1
      %v253 = vrot.slane %v244, 1
      %v254 = vrot.slane %v246, 2
      %v255 = vor.u32 %v253, %v254
      %v258 = vunpack.c.l.b16 %v220
      %v259 = vpack.c.b16 %v258, %v258
      %v261 = vshrl.u32 %v259, 16
      %v263 = vshll.u32 %v259, 16
      %v265 = vrot.slane %v263, 1
      %v266 = vor.u32 %v261, %v265
      %v268 = vrot.slane %v259, 1
      %v270 = vrot.slane %v261, 1
      %v271 = vrot.slane %v263, 2
      %v272 = vor.u32 %v270, %v271
      %v275 = vunpack.c.l.b16 %v222
      %v276 = vpack.c.b16 %v275, %v275
      %v278 = vshrl.u32 %v276, 16
      %v280 = vshll.u32 %v276, 16
      %v282 = vrot.slane %v280, 1
      %v283 = vor.u32 %v278, %v282
      %v285 = vrot.slane %v276, 1
      %v287 = vrot.slane %v278, 1
      %v288 = vrot.slane %v280, 2
      %v289 = vor.u32 %v287, %v288
      %s291 = scalar_lea.vmem %s203, 16
      %v292 = vld [vmem:[%s291] sm:$0x7]
      %v294 = vunpack.c.l.b16 %v292
      %v295 = vpack.c.b16 %v294, %v294
      %v297 = vshrl.u32 %v295, 16
      %v299 = vshll.u32 %v295, 16
      %v301 = vrot.slane %v299, 1
      %v302 = vor.u32 %v297, %v301
      %v303 = vrot.slane %v295, 1
      %v304 = vrot.slane %v297, 1
      %v305 = vrot.slane %v299, 2
      %v306 = vor.u32 %v304, %v305
      %s307 = scalar_lea.vmem %s203, 20
      %v308 = vld [vmem:[%s307] sm:$0x7]
      %v310 = vunpack.c.l.b16 %v308
      %v311 = vpack.c.b16 %v310, %v310
      %v313 = vshrl.u32 %v311, 16
      %v315 = vshll.u32 %v311, 16
      %v317 = vrot.slane %v315, 1
      %v318 = vor.u32 %v313, %v317
      %v319 = vrot.slane %v311, 1
      %v320 = vrot.slane %v313, 1
      %v321 = vrot.slane %v315, 2
      %v322 = vor.u32 %v320, %v321
      %v324 = vshrl.u32 %v218, 16
      %v326 = vrot.slane %v324, 6
      %v327 = vshll.u32 %v218, 16
      %v329 = vrot.slane %v327, 7
      %v330 = vor.u32 %v326, %v329
      %v332 = vshrl.u32 %v249, 16
      %v334 = vrot.slane %v332, 6
      %v335 = vshll.u32 %v249, 16
      %v337 = vrot.slane %v335, 7
      %v338 = vor.u32 %v334, %v337
      %v340 = vshrl.u32 %v251, 16
      %v342 = vrot.slane %v340, 6
      %v343 = vshll.u32 %v251, 16
      %v345 = vrot.slane %v343, 7
      %v346 = vor.u32 %v342, %v345
      %v348 = vshrl.u32 %v255, 16
      %v350 = vrot.slane %v348, 6
      %v351 = vshll.u32 %v255, 16
      %v353 = vrot.slane %v351, 7
      %v354 = vor.u32 %v350, %v353
      %v356 = vshrl.u32 %v220, 16
      %v358 = vrot.slane %v356, 6
      %v359 = vshll.u32 %v220, 16
      %v361 = vrot.slane %v359, 7
      %v362 = vor.u32 %v358, %v361
      %v364 = vshrl.u32 %v266, 16
      %v366 = vrot.slane %v364, 6
      %v367 = vshll.u32 %v266, 16
      %v369 = vrot.slane %v367, 7
      %v370 = vor.u32 %v366, %v369
      %v372 = vshrl.u32 %v268, 16
      %v374 = vrot.slane %v372, 6
      %v375 = vshll.u32 %v268, 16
      %v377 = vrot.slane %v375, 7
      %v378 = vor.u32 %v374, %v377
      %v380 = vshrl.u32 %v272, 16
      %v382 = vrot.slane %v380, 6
      %v383 = vshll.u32 %v272, 16
      %v385 = vrot.slane %v383, 7
      %v386 = vor.u32 %v382, %v385
      %v388 = vshrl.u32 %v222, 16
      %v390 = vrot.slane %v388, 6
      %v391 = vshll.u32 %v222, 16
      %v393 = vrot.slane %v391, 7
      %v394 = vor.u32 %v390, %v393
      %v396 = vshrl.u32 %v283, 16
      %v398 = vrot.slane %v396, 6
      %v399 = vshll.u32 %v283, 16
      %v401 = vrot.slane %v399, 7
      %v402 = vor.u32 %v398, %v401
      %v404 = vshrl.u32 %v285, 16
      %v406 = vrot.slane %v404, 6
      %v407 = vshll.u32 %v285, 16
      %v409 = vrot.slane %v407, 7
      %v410 = vor.u32 %v406, %v409
      %v412 = vshrl.u32 %v289, 16
      %v414 = vrot.slane %v412, 6
      %v415 = vshll.u32 %v289, 16
      %v417 = vrot.slane %v415, 7
      %v418 = vor.u32 %v414, %v417
      %v420 = vshrl.u32 %v292, 16
      %v422 = vrot.slane %v420, 6
      %v423 = vshll.u32 %v292, 16
      %v425 = vrot.slane %v423, 7
      %v426 = vor.u32 %v422, %v425
      %v428 = vshrl.u32 %v302, 16
      %v430 = vrot.slane %v428, 6
      %v431 = vshll.u32 %v302, 16
      %v433 = vrot.slane %v431, 7
      %v434 = vor.u32 %v430, %v433
      %v436 = vshrl.u32 %v303, 16
      %v438 = vrot.slane %v436, 6
      %v439 = vshll.u32 %v303, 16
      %v441 = vrot.slane %v439, 7
      %v442 = vor.u32 %v438, %v441
      %v444 = vshrl.u32 %v306, 16
      %v446 = vrot.slane %v444, 6
      %v447 = vshll.u32 %v306, 16
      %v449 = vrot.slane %v447, 7
      %v450 = vor.u32 %v446, %v449
      %v467 = vrot.slane %v220, 5
      %v468 = vrot.slane %v266, 5
      %v469 = vrot.slane %v268, 5
      %v470 = vrot.slane %v272, 5
      %v471 = vrot.slane %v222, 5
      %v472 = vrot.slane %v283, 5
      %v473 = vrot.slane %v285, 5
      %v474 = vrot.slane %v289, 5
      %v475 = vrot.slane %v292, 5
      %v476 = vrot.slane %v302, 5
      %v477 = vrot.slane %v303, 5
      %v478 = vrot.slane %v306, 5
      %v479 = vrot.slane %v308, 5
      %v480 = vrot.slane %v318, 5
      %v481 = vrot.slane %v319, 5
      %v482 = vrot.slane %v322, 5
      %vm483 = vcmask 1041408
      %vm484 = vsmask.f32 1280
      %vm485 = vmand %vm483, %vm484
      %v486 = vsel %vm485, %v216, %v330
      %v487 = vsel %vm485, %v232, %v338
      %v488 = vsel %vm485, %v234, %v346
      %v489 = vsel %vm485, %v238, %v354
      %v490 = vsel %vm485, %v218, %v362
      %v491 = vsel %vm485, %v249, %v370
      %v492 = vsel %vm485, %v251, %v378
      %v493 = vsel %vm485, %v255, %v386
      %v494 = vsel %vm485, %v220, %v394
      %v495 = vsel %vm485, %v266, %v402
      %v496 = vsel %vm485, %v268, %v410
      %v497 = vsel %vm485, %v272, %v418
      %v498 = vsel %vm485, %v222, %v426
      %v499 = vsel %vm485, %v283, %v434
      %v500 = vsel %vm485, %v285, %v442
      %v501 = vsel %vm485, %v289, %v450
      %vm502 = vcmask 1042432
      %v505 = vsel %vm502, %v486, %v467
      %v509 = vsel %vm502, %v487, %v468
      %v513 = vsel %vm502, %v488, %v469
      %v517 = vsel %vm502, %v489, %v470
      %v521 = vsel %vm502, %v490, %v471
      %v525 = vsel %vm502, %v491, %v472
      %v529 = vsel %vm502, %v492, %v473
      %v533 = vsel %vm502, %v493, %v474
      %v537 = vsel %vm502, %v494, %v475
      %v541 = vsel %vm502, %v495, %v476
      %v545 = vsel %vm502, %v496, %v477
      %v549 = vsel %vm502, %v497, %v478
      %v553 = vsel %vm502, %v498, %v479
      %v557 = vsel %vm502, %v499, %v480
      %v561 = vsel %vm502, %v500, %v481
      %v565 = vsel %vm502, %v501, %v482
      %v567 = vld [vmem:[%s1] sm:$0xf]
      %v568 = vld [vmem:[%s1 + $0x4] sm:$0xf]
      %v569 = vld [vmem:[%s1 + $0x8] sm:$0xf]
      %v570 = vld [vmem:[%s1 + $0xc] sm:$0xf]
      %v571 = vld [vmem:[%s1 + $0x10] sm:$0xf]
      %v572 = vld [vmem:[%s1 + $0x14] sm:$0xf]
      %v573 = vld [vmem:[%s1 + $0x18] sm:$0xf]
      %v574 = vld [vmem:[%s1 + $0x1c] sm:$0xf]
      %v575 = vld [vmem:[%s1 + $0x20] sm:$0xf]
      %v576 = vld [vmem:[%s1 + $0x24] sm:$0xf]
      %v577 = vld [vmem:[%s1 + $0x28] sm:$0xf]
      %v578 = vld [vmem:[%s1 + $0x2c] sm:$0xf]
      %v579 = vld [vmem:[%s1 + $0x30] sm:$0xf]
      %v580 = vld [vmem:[%s1 + $0x34] sm:$0xf]
      %v581 = vld [vmem:[%s1 + $0x38] sm:$0xf]
      %v582 = vld [vmem:[%s1 + $0x3c] sm:$0xf]
      %v583 = vld [vmem:[%s1 + $0x40] sm:$0xf]
      %v584 = vld [vmem:[%s1 + $0x44] sm:$0xf]
      %v585 = vld [vmem:[%s1 + $0x48] sm:$0xf]
      %v586 = vld [vmem:[%s1 + $0x4c] sm:$0xf]
      %v587 = vld [vmem:[%s1 + $0x50] sm:$0xf]
      %v588 = vld [vmem:[%s1 + $0x54] sm:$0xf]
      %v589 = vld [vmem:[%s1 + $0x58] sm:$0xf]
      %v590 = vld [vmem:[%s1 + $0x5c] sm:$0xf]
      %v591 = vld [vmem:[%s1 + $0x60] sm:$0xf]
      %v592 = vld [vmem:[%s1 + $0x64] sm:$0xf]
      %v593 = vld [vmem:[%s1 + $0x68] sm:$0xf]
      %v594 = vld [vmem:[%s1 + $0x6c] sm:$0xf]
      %v595 = vld [vmem:[%s1 + $0x70] sm:$0xf]
      %v596 = vld [vmem:[%s1 + $0x74] sm:$0xf]
      %v597 = vld [vmem:[%s1 + $0x78] sm:$0xf]
      %v598 = vld [vmem:[%s1 + $0x7c] sm:$0xf]
      %v599 = vld [vmem:[%s1 + $0x80] sm:$0xf]
      %v600 = vld [vmem:[%s1 + $0x84] sm:$0xf]
      %v601 = vld [vmem:[%s1 + $0x88] sm:$0xf]
      %v602 = vld [vmem:[%s1 + $0x8c] sm:$0xf]
      %v603 = vld [vmem:[%s1 + $0x90] sm:$0xf]
      %v604 = vld [vmem:[%s1 + $0x94] sm:$0xf]
      %v605 = vld [vmem:[%s1 + $0x98] sm:$0xf]
      %v606 = vld [vmem:[%s1 + $0x9c] sm:$0xf]
      %v607 = vld [vmem:[%s1 + $0xa0] sm:$0xf]
      %v608 = vld [vmem:[%s1 + $0xa4] sm:$0xf]
      %v609 = vld [vmem:[%s1 + $0xa8] sm:$0xf]
      %v610 = vld [vmem:[%s1 + $0xac] sm:$0xf]
      %v611 = vld [vmem:[%s1 + $0xb0] sm:$0xf]
      %v612 = vld [vmem:[%s1 + $0xb4] sm:$0xf]
      %v613 = vld [vmem:[%s1 + $0xb8] sm:$0xf]
      %v614 = vld [vmem:[%s1 + $0xbc] sm:$0xf]
      %v615 = vld [vmem:[%s1 + $0xc0] sm:$0xf]
      %v616 = vld [vmem:[%s1 + $0xc4] sm:$0xf]
      %v617 = vld [vmem:[%s1 + $0xc8] sm:$0xf]
      %v618 = vld [vmem:[%s1 + $0xcc] sm:$0xf]
      %v619 = vld [vmem:[%s1 + $0xd0] sm:$0xf]
      %v620 = vld [vmem:[%s1 + $0xd4] sm:$0xf]
      %v621 = vld [vmem:[%s1 + $0xd8] sm:$0xf]
      %v622 = vld [vmem:[%s1 + $0xdc] sm:$0xf]
      %v623 = vld [vmem:[%s1 + $0xe0] sm:$0xf]
      %v624 = vld [vmem:[%s1 + $0xe4] sm:$0xf]
      %v625 = vld [vmem:[%s1 + $0xe8] sm:$0xf]
      %v626 = vld [vmem:[%s1 + $0xec] sm:$0xf]
      %v627 = vld [vmem:[%s1 + $0xf0] sm:$0xf]
      %v628 = vld [vmem:[%s1 + $0xf4] sm:$0xf]
      %v629 = vld [vmem:[%s1 + $0xf8] sm:$0xf]
      %v630 = vld [vmem:[%s1 + $0xfc] sm:$0xf]
      %v631 = vld [vmem:[%s1 + $0x100] sm:$0xf]
      %v632 = vld [vmem:[%s1 + $0x104] sm:$0xf]
      %v633 = vld [vmem:[%s1 + $0x108] sm:$0xf]
      %v634 = vld [vmem:[%s1 + $0x10c] sm:$0xf]
      %v635 = vld [vmem:[%s1 + $0x110] sm:$0xf]
      %v636 = vld [vmem:[%s1 + $0x114] sm:$0xf]
      %v637 = vld [vmem:[%s1 + $0x118] sm:$0xf]
      %v638 = vld [vmem:[%s1 + $0x11c] sm:$0xf]
      %v639 = vld [vmem:[%s1 + $0x120] sm:$0xf]
      %v640 = vld [vmem:[%s1 + $0x124] sm:$0xf]
      %v641 = vld [vmem:[%s1 + $0x128] sm:$0xf]
      %v642 = vld [vmem:[%s1 + $0x12c] sm:$0xf]
      %v643 = vld [vmem:[%s1 + $0x130] sm:$0xf]
      %v644 = vld [vmem:[%s1 + $0x134] sm:$0xf]
      %v645 = vld [vmem:[%s1 + $0x138] sm:$0xf]
      %v646 = vld [vmem:[%s1 + $0x13c] sm:$0xf]
      %v647 = vld [vmem:[%s1 + $0x140] sm:$0xf]
      %v648 = vld [vmem:[%s1 + $0x144] sm:$0xf]
      %v649 = vld [vmem:[%s1 + $0x148] sm:$0xf]
      %v650 = vld [vmem:[%s1 + $0x14c] sm:$0xf]
      %v651 = vld [vmem:[%s1 + $0x150] sm:$0xf]
      %v652 = vld [vmem:[%s1 + $0x154] sm:$0xf]
      %v653 = vld [vmem:[%s1 + $0x158] sm:$0xf]
      %v654 = vld [vmem:[%s1 + $0x15c] sm:$0xf]
      %v655 = vld [vmem:[%s1 + $0x160] sm:$0xf]
      %v656 = vld [vmem:[%s1 + $0x164] sm:$0xf]
      %v657 = vld [vmem:[%s1 + $0x168] sm:$0xf]
      %v658 = vld [vmem:[%s1 + $0x16c] sm:$0xf]
      %v659 = vld [vmem:[%s1 + $0x170] sm:$0xf]
      %v660 = vld [vmem:[%s1 + $0x174] sm:$0xf]
      %v661 = vld [vmem:[%s1 + $0x178] sm:$0xf]
      %v662 = vld [vmem:[%s1 + $0x17c] sm:$0xf]
      %v663 = vld [vmem:[%s1 + $0x180] sm:$0xf]
      %v664 = vld [vmem:[%s1 + $0x184] sm:$0xf]
      %v665 = vld [vmem:[%s1 + $0x188] sm:$0xf]
      %v666 = vld [vmem:[%s1 + $0x18c] sm:$0xf]
      %v667 = vld [vmem:[%s1 + $0x190] sm:$0xf]
      %v668 = vld [vmem:[%s1 + $0x194] sm:$0xf]
      %v669 = vld [vmem:[%s1 + $0x198] sm:$0xf]
      %v670 = vld [vmem:[%s1 + $0x19c] sm:$0xf]
      %v671 = vld [vmem:[%s1 + $0x1a0] sm:$0xf]
      %v672 = vld [vmem:[%s1 + $0x1a4] sm:$0xf]
      %v673 = vld [vmem:[%s1 + $0x1a8] sm:$0xf]
      %v674 = vld [vmem:[%s1 + $0x1ac] sm:$0xf]
      %v675 = vld [vmem:[%s1 + $0x1b0] sm:$0xf]
      %v676 = vld [vmem:[%s1 + $0x1b4] sm:$0xf]
      %v677 = vld [vmem:[%s1 + $0x1b8] sm:$0xf]
      %v678 = vld [vmem:[%s1 + $0x1bc] sm:$0xf]
      %v679 = vld [vmem:[%s1 + $0x1c0] sm:$0xf]
      %v680 = vld [vmem:[%s1 + $0x1c4] sm:$0xf]
      %v681 = vld [vmem:[%s1 + $0x1c8] sm:$0xf]
      %v682 = vld [vmem:[%s1 + $0x1cc] sm:$0xf]
      %v683 = vld [vmem:[%s1 + $0x1d0] sm:$0xf]
      %v684 = vld [vmem:[%s1 + $0x1d4] sm:$0xf]
      %v685 = vld [vmem:[%s1 + $0x1d8] sm:$0xf]
      %v686 = vld [vmem:[%s1 + $0x1dc] sm:$0xf]
      %v687 = vld [vmem:[%s1 + $0x1e0] sm:$0xf]
      %v688 = vld [vmem:[%s1 + $0x1e4] sm:$0xf]
      %v689 = vld [vmem:[%s1 + $0x1e8] sm:$0xf]
      %v690 = vld [vmem:[%s1 + $0x1ec] sm:$0xf]
      %v691 = vld [vmem:[%s1 + $0x1f0] sm:$0xf]
      %v692 = vld [vmem:[%s1 + $0x1f4] sm:$0xf]
      %v693 = vld [vmem:[%s1 + $0x1f8] sm:$0xf]
      %v694 = vld [vmem:[%s1 + $0x1fc] sm:$0xf]
      %v695 = vld [vmem:[%s1 + $0x200] sm:$0xf]
      %v696 = vld [vmem:[%s1 + $0x204] sm:$0xf]
      %v697 = vld [vmem:[%s1 + $0x208] sm:$0xf]
      %v698 = vld [vmem:[%s1 + $0x20c] sm:$0xf]
      %v699 = vld [vmem:[%s1 + $0x210] sm:$0xf]
      %v700 = vld [vmem:[%s1 + $0x214] sm:$0xf]
      %v701 = vld [vmem:[%s1 + $0x218] sm:$0xf]
      %v702 = vld [vmem:[%s1 + $0x21c] sm:$0xf]
      %v703 = vld [vmem:[%s1 + $0x220] sm:$0xf]
      %v704 = vld [vmem:[%s1 + $0x224] sm:$0xf]
      %v705 = vld [vmem:[%s1 + $0x228] sm:$0xf]
      %v706 = vld [vmem:[%s1 + $0x22c] sm:$0xf]
      %v707 = vld [vmem:[%s1 + $0x230] sm:$0xf]
      %v708 = vld [vmem:[%s1 + $0x234] sm:$0xf]
      %v709 = vld [vmem:[%s1 + $0x238] sm:$0xf]
      %v710 = vld [vmem:[%s1 + $0x23c] sm:$0xf]
      %v711 = vld [vmem:[%s1 + $0x240] sm:$0xf]
      %v712 = vld [vmem:[%s1 + $0x244] sm:$0xf]
      %v713 = vld [vmem:[%s1 + $0x248] sm:$0xf]
      %v714 = vld [vmem:[%s1 + $0x24c] sm:$0xf]
      %v715 = vld [vmem:[%s1 + $0x250] sm:$0xf]
      %v716 = vld [vmem:[%s1 + $0x254] sm:$0xf]
      %v717 = vld [vmem:[%s1 + $0x258] sm:$0xf]
      %v718 = vld [vmem:[%s1 + $0x25c] sm:$0xf]
      %v719 = vld [vmem:[%s1 + $0x260] sm:$0xf]
      %v720 = vld [vmem:[%s1 + $0x264] sm:$0xf]
      %v721 = vld [vmem:[%s1 + $0x268] sm:$0xf]
      %v722 = vld [vmem:[%s1 + $0x26c] sm:$0xf]
      %v723 = vld [vmem:[%s1 + $0x270] sm:$0xf]
      %v724 = vld [vmem:[%s1 + $0x274] sm:$0xf]
      %v725 = vld [vmem:[%s1 + $0x278] sm:$0xf]
      %v726 = vld [vmem:[%s1 + $0x27c] sm:$0xf]
      %v727 = vld [vmem:[%s1 + $0x280] sm:$0xf]
      %v728 = vld [vmem:[%s1 + $0x284] sm:$0xf]
      %v729 = vld [vmem:[%s1 + $0x288] sm:$0xf]
      %v730 = vld [vmem:[%s1 + $0x28c] sm:$0xf]
      %v731 = vld [vmem:[%s1 + $0x290] sm:$0xf]
      %v732 = vld [vmem:[%s1 + $0x294] sm:$0xf]
      %v733 = vld [vmem:[%s1 + $0x298] sm:$0xf]
      %v734 = vld [vmem:[%s1 + $0x29c] sm:$0xf]
      %v735 = vld [vmem:[%s1 + $0x2a0] sm:$0xf]
      %v736 = vld [vmem:[%s1 + $0x2a4] sm:$0xf]
      %v737 = vld [vmem:[%s1 + $0x2a8] sm:$0xf]
      %v738 = vld [vmem:[%s1 + $0x2ac] sm:$0xf]
      %v739 = vld [vmem:[%s1 + $0x2b0] sm:$0xf]
      %v740 = vld [vmem:[%s1 + $0x2b4] sm:$0xf]
      %v741 = vld [vmem:[%s1 + $0x2b8] sm:$0xf]
      %v742 = vld [vmem:[%s1 + $0x2bc] sm:$0xf]
      %v743 = vld [vmem:[%s1 + $0x2c0] sm:$0xf]
      %v744 = vld [vmem:[%s1 + $0x2c4] sm:$0xf]
      %v745 = vld [vmem:[%s1 + $0x2c8] sm:$0xf]
      %v746 = vld [vmem:[%s1 + $0x2cc] sm:$0xf]
      %v747 = vld [vmem:[%s1 + $0x2d0] sm:$0xf]
      %v748 = vld [vmem:[%s1 + $0x2d4] sm:$0xf]
      %v749 = vld [vmem:[%s1 + $0x2d8] sm:$0xf]
      %v750 = vld [vmem:[%s1 + $0x2dc] sm:$0xf]
      %v751 = vld [vmem:[%s1 + $0x2e0] sm:$0xf]
      %v752 = vld [vmem:[%s1 + $0x2e4] sm:$0xf]
      %v753 = vld [vmem:[%s1 + $0x2e8] sm:$0xf]
      %v754 = vld [vmem:[%s1 + $0x2ec] sm:$0xf]
      %v755 = vld [vmem:[%s1 + $0x2f0] sm:$0xf]
      %v756 = vld [vmem:[%s1 + $0x2f4] sm:$0xf]
      %v757 = vld [vmem:[%s1 + $0x2f8] sm:$0xf]
      %v758 = vld [vmem:[%s1 + $0x2fc] sm:$0xf]
      %v759 = vld [vmem:[%s1 + $0x300] sm:$0xf]
      %v760 = vld [vmem:[%s1 + $0x304] sm:$0xf]
      %v761 = vld [vmem:[%s1 + $0x308] sm:$0xf]
      %v762 = vld [vmem:[%s1 + $0x30c] sm:$0xf]
      %v763 = vld [vmem:[%s1 + $0x310] sm:$0xf]
      %v764 = vld [vmem:[%s1 + $0x314] sm:$0xf]
      %v765 = vld [vmem:[%s1 + $0x318] sm:$0xf]
      %v766 = vld [vmem:[%s1 + $0x31c] sm:$0xf]
      %v767 = vld [vmem:[%s1 + $0x320] sm:$0xf]
      %v768 = vld [vmem:[%s1 + $0x324] sm:$0xf]
      %v769 = vld [vmem:[%s1 + $0x328] sm:$0xf]
      %v770 = vld [vmem:[%s1 + $0x32c] sm:$0xf]
      %v771 = vld [vmem:[%s1 + $0x330] sm:$0xf]
      %v772 = vld [vmem:[%s1 + $0x334] sm:$0xf]
      %v773 = vld [vmem:[%s1 + $0x338] sm:$0xf]
      %v774 = vld [vmem:[%s1 + $0x33c] sm:$0xf]
      %v775 = vld [vmem:[%s1 + $0x340] sm:$0xf]
      %v776 = vld [vmem:[%s1 + $0x344] sm:$0xf]
      %v777 = vld [vmem:[%s1 + $0x348] sm:$0xf]
      %v778 = vld [vmem:[%s1 + $0x34c] sm:$0xf]
      %v779 = vld [vmem:[%s1 + $0x350] sm:$0xf]
      %v780 = vld [vmem:[%s1 + $0x354] sm:$0xf]
      %v781 = vld [vmem:[%s1 + $0x358] sm:$0xf]
      %v782 = vld [vmem:[%s1 + $0x35c] sm:$0xf]
      %v783 = vld [vmem:[%s1 + $0x360] sm:$0xf]
      %v784 = vld [vmem:[%s1 + $0x364] sm:$0xf]
      %v785 = vld [vmem:[%s1 + $0x368] sm:$0xf]
      %v786 = vld [vmem:[%s1 + $0x36c] sm:$0xf]
      %v787 = vld [vmem:[%s1 + $0x370] sm:$0xf]
      %v788 = vld [vmem:[%s1 + $0x374] sm:$0xf]
      %v789 = vld [vmem:[%s1 + $0x378] sm:$0xf]
      %v790 = vld [vmem:[%s1 + $0x37c] sm:$0xf]
      %v791 = vld [vmem:[%s1 + $0x380] sm:$0xf]
      %v792 = vld [vmem:[%s1 + $0x384] sm:$0xf]
      %v793 = vld [vmem:[%s1 + $0x388] sm:$0xf]
      %v794 = vld [vmem:[%s1 + $0x38c] sm:$0xf]
      %v795 = vld [vmem:[%s1 + $0x390] sm:$0xf]
      %v796 = vld [vmem:[%s1 + $0x394] sm:$0xf]
      %v797 = vld [vmem:[%s1 + $0x398] sm:$0xf]
      %v798 = vld [vmem:[%s1 + $0x39c] sm:$0xf]
      %v799 = vld [vmem:[%s1 + $0x3a0] sm:$0xf]
      %v800 = vld [vmem:[%s1 + $0x3a4] sm:$0xf]
      %v801 = vld [vmem:[%s1 + $0x3a8] sm:$0xf]
      %v802 = vld [vmem:[%s1 + $0x3ac] sm:$0xf]
      %v803 = vld [vmem:[%s1 + $0x3b0] sm:$0xf]
      %v804 = vld [vmem:[%s1 + $0x3b4] sm:$0xf]
      %v805 = vld [vmem:[%s1 + $0x3b8] sm:$0xf]
      %v806 = vld [vmem:[%s1 + $0x3bc] sm:$0xf]
      %v807 = vld [vmem:[%s1 + $0x3c0] sm:$0xf]
      %v808 = vld [vmem:[%s1 + $0x3c4] sm:$0xf]
      %v809 = vld [vmem:[%s1 + $0x3c8] sm:$0xf]
      %v810 = vld [vmem:[%s1 + $0x3cc] sm:$0xf]
      %v811 = vld [vmem:[%s1 + $0x3d0] sm:$0xf]
      %v812 = vld [vmem:[%s1 + $0x3d4] sm:$0xf]
      %v813 = vld [vmem:[%s1 + $0x3d8] sm:$0xf]
      %v814 = vld [vmem:[%s1 + $0x3dc] sm:$0xf]
      %v815 = vld [vmem:[%s1 + $0x3e0] sm:$0xf]
      %v816 = vld [vmem:[%s1 + $0x3e4] sm:$0xf]
      %v817 = vld [vmem:[%s1 + $0x3e8] sm:$0xf]
      %v818 = vld [vmem:[%s1 + $0x3ec] sm:$0xf]
      %v819 = vld [vmem:[%s1 + $0x3f0] sm:$0xf]
      %v820 = vld [vmem:[%s1 + $0x3f4] sm:$0xf]
      %v821 = vld [vmem:[%s1 + $0x3f8] sm:$0xf]
      %v822 = vld [vmem:[%s1 + $0x3fc] sm:$0xf]
      %v1079 = vunpack.c.l.b16 %v567
      %v1080 = vunpack.c.l.b16 %v568
      %v1081 = vunpack.c.l.b16 %v569
      %v1082 = vunpack.c.l.b16 %v570
      %v1083 = vunpack.c.l.b16 %v571
      %v1084 = vunpack.c.l.b16 %v572
      %v1085 = vunpack.c.l.b16 %v573
      %v1086 = vunpack.c.l.b16 %v574
      %v1087 = vunpack.c.l.b16 %v575
      %v1088 = vunpack.c.l.b16 %v576
      %v1089 = vunpack.c.l.b16 %v577
      %v1090 = vunpack.c.l.b16 %v578
      %v1091 = vunpack.c.l.b16 %v579
      %v1092 = vunpack.c.l.b16 %v580
      %v1093 = vunpack.c.l.b16 %v581
      %v1094 = vunpack.c.l.b16 %v582
      %v1095 = vunpack.c.l.b16 %v583
      %v1096 = vunpack.c.l.b16 %v584
      %v1097 = vunpack.c.l.b16 %v585
      %v1098 = vunpack.c.l.b16 %v586
      %v1099 = vunpack.c.l.b16 %v587
      %v1100 = vunpack.c.l.b16 %v588
      %v1101 = vunpack.c.l.b16 %v589
      %v1102 = vunpack.c.l.b16 %v590
      %v1103 = vunpack.c.l.b16 %v591
      %v1104 = vunpack.c.l.b16 %v592
      %v1105 = vunpack.c.l.b16 %v593
      %v1106 = vunpack.c.l.b16 %v594
      %v1107 = vunpack.c.l.b16 %v595
      %v1108 = vunpack.c.l.b16 %v596
      %v1109 = vunpack.c.l.b16 %v597
      %v1110 = vunpack.c.l.b16 %v598
      %v1111 = vunpack.c.l.b16 %v599
      %v1112 = vunpack.c.l.b16 %v600
      %v1113 = vunpack.c.l.b16 %v601
      %v1114 = vunpack.c.l.b16 %v602
      %v1115 = vunpack.c.l.b16 %v603
      %v1116 = vunpack.c.l.b16 %v604
      %v1117 = vunpack.c.l.b16 %v605
      %v1118 = vunpack.c.l.b16 %v606
      %v1119 = vunpack.c.l.b16 %v607
      %v1120 = vunpack.c.l.b16 %v608
      %v1121 = vunpack.c.l.b16 %v609
      %v1122 = vunpack.c.l.b16 %v610
      %v1123 = vunpack.c.l.b16 %v611
      %v1124 = vunpack.c.l.b16 %v612
      %v1125 = vunpack.c.l.b16 %v613
      %v1126 = vunpack.c.l.b16 %v614
      %v1127 = vunpack.c.l.b16 %v615
      %v1128 = vunpack.c.l.b16 %v616
      %v1129 = vunpack.c.l.b16 %v617
      %v1130 = vunpack.c.l.b16 %v618
      %v1131 = vunpack.c.l.b16 %v619
      %v1132 = vunpack.c.l.b16 %v620
      %v1133 = vunpack.c.l.b16 %v621
      %v1134 = vunpack.c.l.b16 %v622
      %v1135 = vunpack.c.l.b16 %v623
      %v1136 = vunpack.c.l.b16 %v624
      %v1137 = vunpack.c.l.b16 %v625
      %v1138 = vunpack.c.l.b16 %v626
      %v1139 = vunpack.c.l.b16 %v627
      %v1140 = vunpack.c.l.b16 %v628
      %v1141 = vunpack.c.l.b16 %v629
      %v1142 = vunpack.c.l.b16 %v630
      %v1143 = vunpack.c.l.b16 %v631
      %v1144 = vunpack.c.l.b16 %v632
      %v1145 = vunpack.c.l.b16 %v633
      %v1146 = vunpack.c.l.b16 %v634
      %v1147 = vunpack.c.l.b16 %v635
      %v1148 = vunpack.c.l.b16 %v636
      %v1149 = vunpack.c.l.b16 %v637
      %v1150 = vunpack.c.l.b16 %v638
      %v1151 = vunpack.c.l.b16 %v639
      %v1152 = vunpack.c.l.b16 %v640
      %v1153 = vunpack.c.l.b16 %v641
      %v1154 = vunpack.c.l.b16 %v642
      %v1155 = vunpack.c.l.b16 %v643
      %v1156 = vunpack.c.l.b16 %v644
      %v1157 = vunpack.c.l.b16 %v645
      %v1158 = vunpack.c.l.b16 %v646
      %v1159 = vunpack.c.l.b16 %v647
      %v1160 = vunpack.c.l.b16 %v648
      %v1161 = vunpack.c.l.b16 %v649
      %v1162 = vunpack.c.l.b16 %v650
      %v1163 = vunpack.c.l.b16 %v651
      %v1164 = vunpack.c.l.b16 %v652
      %v1165 = vunpack.c.l.b16 %v653
      %v1166 = vunpack.c.l.b16 %v654
      %v1167 = vunpack.c.l.b16 %v655
      %v1168 = vunpack.c.l.b16 %v656
      %v1169 = vunpack.c.l.b16 %v657
      %v1170 = vunpack.c.l.b16 %v658
      %v1171 = vunpack.c.l.b16 %v659
      %v1172 = vunpack.c.l.b16 %v660
      %v1173 = vunpack.c.l.b16 %v661
      %v1174 = vunpack.c.l.b16 %v662
      %v1175 = vunpack.c.l.b16 %v663
      %v1176 = vunpack.c.l.b16 %v664
      %v1177 = vunpack.c.l.b16 %v665
      %v1178 = vunpack.c.l.b16 %v666
      %v1179 = vunpack.c.l.b16 %v667
      %v1180 = vunpack.c.l.b16 %v668
      %v1181 = vunpack.c.l.b16 %v669
      %v1182 = vunpack.c.l.b16 %v670
      %v1183 = vunpack.c.l.b16 %v671
      %v1184 = vunpack.c.l.b16 %v672
      %v1185 = vunpack.c.l.b16 %v673
      %v1186 = vunpack.c.l.b16 %v674
      %v1187 = vunpack.c.l.b16 %v675
      %v1188 = vunpack.c.l.b16 %v676
      %v1189 = vunpack.c.l.b16 %v677
      %v1190 = vunpack.c.l.b16 %v678
      %v1191 = vunpack.c.l.b16 %v679
      %v1192 = vunpack.c.l.b16 %v680
      %v1193 = vunpack.c.l.b16 %v681
      %v1194 = vunpack.c.l.b16 %v682
      %v1195 = vunpack.c.l.b16 %v683
      %v1196 = vunpack.c.l.b16 %v684
      %v1197 = vunpack.c.l.b16 %v685
      %v1198 = vunpack.c.l.b16 %v686
      %v1199 = vunpack.c.l.b16 %v687
      %v1200 = vunpack.c.l.b16 %v688
      %v1201 = vunpack.c.l.b16 %v689
      %v1202 = vunpack.c.l.b16 %v690
      %v1203 = vunpack.c.l.b16 %v691
      %v1204 = vunpack.c.l.b16 %v692
      %v1205 = vunpack.c.l.b16 %v693
      %v1206 = vunpack.c.l.b16 %v694
      %v1207 = vunpack.c.l.b16 %v695
      %v1208 = vunpack.c.l.b16 %v696
      %v1209 = vunpack.c.l.b16 %v697
      %v1210 = vunpack.c.l.b16 %v698
      %v1211 = vunpack.c.l.b16 %v699
      %v1212 = vunpack.c.l.b16 %v700
      %v1213 = vunpack.c.l.b16 %v701
      %v1214 = vunpack.c.l.b16 %v702
      %v1215 = vunpack.c.l.b16 %v703
      %v1216 = vunpack.c.l.b16 %v704
      %v1217 = vunpack.c.l.b16 %v705
      %v1218 = vunpack.c.l.b16 %v706
      %v1219 = vunpack.c.l.b16 %v707
      %v1220 = vunpack.c.l.b16 %v708
      %v1221 = vunpack.c.l.b16 %v709
      %v1222 = vunpack.c.l.b16 %v710
      %v1223 = vunpack.c.l.b16 %v711
      %v1224 = vunpack.c.l.b16 %v712
      %v1225 = vunpack.c.l.b16 %v713
      %v1226 = vunpack.c.l.b16 %v714
      %v1227 = vunpack.c.l.b16 %v715
      %v1228 = vunpack.c.l.b16 %v716
      %v1229 = vunpack.c.l.b16 %v717
      %v1230 = vunpack.c.l.b16 %v718
      %v1231 = vunpack.c.l.b16 %v719
      %v1232 = vunpack.c.l.b16 %v720
      %v1233 = vunpack.c.l.b16 %v721
      %v1234 = vunpack.c.l.b16 %v722
      %v1235 = vunpack.c.l.b16 %v723
      %v1236 = vunpack.c.l.b16 %v724
      %v1237 = vunpack.c.l.b16 %v725
      %v1238 = vunpack.c.l.b16 %v726
      %v1239 = vunpack.c.l.b16 %v727
      %v1240 = vunpack.c.l.b16 %v728
      %v1241 = vunpack.c.l.b16 %v729
      %v1242 = vunpack.c.l.b16 %v730
      %v1243 = vunpack.c.l.b16 %v731
      %v1244 = vunpack.c.l.b16 %v732
      %v1245 = vunpack.c.l.b16 %v733
      %v1246 = vunpack.c.l.b16 %v734
      %v1247 = vunpack.c.l.b16 %v735
      %v1248 = vunpack.c.l.b16 %v736
      %v1249 = vunpack.c.l.b16 %v737
      %v1250 = vunpack.c.l.b16 %v738
      %v1251 = vunpack.c.l.b16 %v739
      %v1252 = vunpack.c.l.b16 %v740
      %v1253 = vunpack.c.l.b16 %v741
      %v1254 = vunpack.c.l.b16 %v742
      %v1255 = vunpack.c.l.b16 %v743
      %v1256 = vunpack.c.l.b16 %v744
      %v1257 = vunpack.c.l.b16 %v745
      %v1258 = vunpack.c.l.b16 %v746
      %v1259 = vunpack.c.l.b16 %v747
      %v1260 = vunpack.c.l.b16 %v748
      %v1261 = vunpack.c.l.b16 %v749
      %v1262 = vunpack.c.l.b16 %v750
      %v1263 = vunpack.c.l.b16 %v751
      %v1264 = vunpack.c.l.b16 %v752
      %v1265 = vunpack.c.l.b16 %v753
      %v1266 = vunpack.c.l.b16 %v754
      %v1267 = vunpack.c.l.b16 %v755
      %v1268 = vunpack.c.l.b16 %v756
      %v1269 = vunpack.c.l.b16 %v757
      %v1270 = vunpack.c.l.b16 %v758
      %v1271 = vunpack.c.l.b16 %v759
      %v1272 = vunpack.c.l.b16 %v760
      %v1273 = vunpack.c.l.b16 %v761
      %v1274 = vunpack.c.l.b16 %v762
      %v1275 = vunpack.c.l.b16 %v763
      %v1276 = vunpack.c.l.b16 %v764
      %v1277 = vunpack.c.l.b16 %v765
      %v1278 = vunpack.c.l.b16 %v766
      %v1279 = vunpack.c.l.b16 %v767
      %v1280 = vunpack.c.l.b16 %v768
      %v1281 = vunpack.c.l.b16 %v769
      %v1282 = vunpack.c.l.b16 %v770
      %v1283 = vunpack.c.l.b16 %v771
      %v1284 = vunpack.c.l.b16 %v772
      %v1285 = vunpack.c.l.b16 %v773
      %v1286 = vunpack.c.l.b16 %v774
      %v1287 = vunpack.c.l.b16 %v775
      %v1288 = vunpack.c.l.b16 %v776
      %v1289 = vunpack.c.l.b16 %v777
      %v1290 = vunpack.c.l.b16 %v778
      %v1291 = vunpack.c.l.b16 %v779
      %v1292 = vunpack.c.l.b16 %v780
      %v1293 = vunpack.c.l.b16 %v781
      %v1294 = vunpack.c.l.b16 %v782
      %v1295 = vunpack.c.l.b16 %v783
      %v1296 = vunpack.c.l.b16 %v784
      %v1297 = vunpack.c.l.b16 %v785
      %v1298 = vunpack.c.l.b16 %v786
      %v1299 = vunpack.c.l.b16 %v787
      %v1300 = vunpack.c.l.b16 %v788
      %v1301 = vunpack.c.l.b16 %v789
      %v1302 = vunpack.c.l.b16 %v790
      %v1303 = vunpack.c.l.b16 %v791
      %v1304 = vunpack.c.l.b16 %v792
      %v1305 = vunpack.c.l.b16 %v793
      %v1306 = vunpack.c.l.b16 %v794
      %v1307 = vunpack.c.l.b16 %v795
      %v1308 = vunpack.c.l.b16 %v796
      %v1309 = vunpack.c.l.b16 %v797
      %v1310 = vunpack.c.l.b16 %v798
      %v1311 = vunpack.c.l.b16 %v799
      %v1312 = vunpack.c.l.b16 %v800
      %v1313 = vunpack.c.l.b16 %v801
      %v1314 = vunpack.c.l.b16 %v802
      %v1315 = vunpack.c.l.b16 %v803
      %v1316 = vunpack.c.l.b16 %v804
      %v1317 = vunpack.c.l.b16 %v805
      %v1318 = vunpack.c.l.b16 %v806
      %v1319 = vunpack.c.l.b16 %v807
      %v1320 = vunpack.c.l.b16 %v808
      %v1321 = vunpack.c.l.b16 %v809
      %v1322 = vunpack.c.l.b16 %v810
      %v1323 = vunpack.c.l.b16 %v811
      %v1324 = vunpack.c.l.b16 %v812
      %v1325 = vunpack.c.l.b16 %v813
      %v1326 = vunpack.c.l.b16 %v814
      %v1327 = vunpack.c.l.b16 %v815
      %v1328 = vunpack.c.l.b16 %v816
      %v1329 = vunpack.c.l.b16 %v817
      %v1330 = vunpack.c.l.b16 %v818
      %v1331 = vunpack.c.l.b16 %v819
      %v1332 = vunpack.c.l.b16 %v820
      %v1333 = vunpack.c.l.b16 %v821
      %v1334 = vunpack.c.l.b16 %v822
      %v1335 = vpack.c.b16 %v1080, %v1079
      %v1336 = vpack.c.b16 %v1082, %v1081
      %v1337 = vpack.c.b16 %v1084, %v1083
      %v1338 = vpack.c.b16 %v1086, %v1085
      %v1339 = vpack.c.b16 %v1088, %v1087
      %v1340 = vpack.c.b16 %v1090, %v1089
      %v1341 = vpack.c.b16 %v1092, %v1091
      %v1342 = vpack.c.b16 %v1094, %v1093
      %v1343 = vpack.c.b16 %v1096, %v1095
      %v1344 = vpack.c.b16 %v1098, %v1097
      %v1345 = vpack.c.b16 %v1100, %v1099
      %v1346 = vpack.c.b16 %v1102, %v1101
      %v1347 = vpack.c.b16 %v1104, %v1103
      %v1348 = vpack.c.b16 %v1106, %v1105
      %v1349 = vpack.c.b16 %v1108, %v1107
      %v1350 = vpack.c.b16 %v1110, %v1109
      %v1351 = vpack.c.b16 %v1112, %v1111
      %v1352 = vpack.c.b16 %v1114, %v1113
      %v1353 = vpack.c.b16 %v1116, %v1115
      %v1354 = vpack.c.b16 %v1118, %v1117
      %v1355 = vpack.c.b16 %v1120, %v1119
      %v1356 = vpack.c.b16 %v1122, %v1121
      %v1357 = vpack.c.b16 %v1124, %v1123
      %v1358 = vpack.c.b16 %v1126, %v1125
      %v1359 = vpack.c.b16 %v1128, %v1127
      %v1360 = vpack.c.b16 %v1130, %v1129
      %v1361 = vpack.c.b16 %v1132, %v1131
      %v1362 = vpack.c.b16 %v1134, %v1133
      %v1363 = vpack.c.b16 %v1136, %v1135
      %v1364 = vpack.c.b16 %v1138, %v1137
      %v1365 = vpack.c.b16 %v1140, %v1139
      %v1366 = vpack.c.b16 %v1142, %v1141
      %v1367 = vpack.c.b16 %v1144, %v1143
      %v1368 = vpack.c.b16 %v1146, %v1145
      %v1369 = vpack.c.b16 %v1148, %v1147
      %v1370 = vpack.c.b16 %v1150, %v1149
      %v1371 = vpack.c.b16 %v1152, %v1151
      %v1372 = vpack.c.b16 %v1154, %v1153
      %v1373 = vpack.c.b16 %v1156, %v1155
      %v1374 = vpack.c.b16 %v1158, %v1157
      %v1375 = vpack.c.b16 %v1160, %v1159
      %v1376 = vpack.c.b16 %v1162, %v1161
      %v1377 = vpack.c.b16 %v1164, %v1163
      %v1378 = vpack.c.b16 %v1166, %v1165
      %v1379 = vpack.c.b16 %v1168, %v1167
      %v1380 = vpack.c.b16 %v1170, %v1169
      %v1381 = vpack.c.b16 %v1172, %v1171
      %v1382 = vpack.c.b16 %v1174, %v1173
      %v1383 = vpack.c.b16 %v1176, %v1175
      %v1384 = vpack.c.b16 %v1178, %v1177
      %v1385 = vpack.c.b16 %v1180, %v1179
      %v1386 = vpack.c.b16 %v1182, %v1181
      %v1387 = vpack.c.b16 %v1184, %v1183
      %v1388 = vpack.c.b16 %v1186, %v1185
      %v1389 = vpack.c.b16 %v1188, %v1187
      %v1390 = vpack.c.b16 %v1190, %v1189
      %v1391 = vpack.c.b16 %v1192, %v1191
      %v1392 = vpack.c.b16 %v1194, %v1193
      %v1393 = vpack.c.b16 %v1196, %v1195
      %v1394 = vpack.c.b16 %v1198, %v1197
      %v1395 = vpack.c.b16 %v1200, %v1199
      %v1396 = vpack.c.b16 %v1202, %v1201
      %v1397 = vpack.c.b16 %v1204, %v1203
      %v1398 = vpack.c.b16 %v1206, %v1205
      %v1399 = vpack.c.b16 %v1208, %v1207
      %v1400 = vpack.c.b16 %v1210, %v1209
      %v1401 = vpack.c.b16 %v1212, %v1211
      %v1402 = vpack.c.b16 %v1214, %v1213
      %v1403 = vpack.c.b16 %v1216, %v1215
      %v1404 = vpack.c.b16 %v1218, %v1217
      %v1405 = vpack.c.b16 %v1220, %v1219
      %v1406 = vpack.c.b16 %v1222, %v1221
      %v1407 = vpack.c.b16 %v1224, %v1223
      %v1408 = vpack.c.b16 %v1226, %v1225
      %v1409 = vpack.c.b16 %v1228, %v1227
      %v1410 = vpack.c.b16 %v1230, %v1229
      %v1411 = vpack.c.b16 %v1232, %v1231
      %v1412 = vpack.c.b16 %v1234, %v1233
      %v1413 = vpack.c.b16 %v1236, %v1235
      %v1414 = vpack.c.b16 %v1238, %v1237
      %v1415 = vpack.c.b16 %v1240, %v1239
      %v1416 = vpack.c.b16 %v1242, %v1241
      %v1417 = vpack.c.b16 %v1244, %v1243
      %v1418 = vpack.c.b16 %v1246, %v1245
      %v1419 = vpack.c.b16 %v1248, %v1247
      %v1420 = vpack.c.b16 %v1250, %v1249
      %v1421 = vpack.c.b16 %v1252, %v1251
      %v1422 = vpack.c.b16 %v1254, %v1253
      %v1423 = vpack.c.b16 %v1256, %v1255
      %v1424 = vpack.c.b16 %v1258, %v1257
      %v1425 = vpack.c.b16 %v1260, %v1259
      %v1426 = vpack.c.b16 %v1262, %v1261
      %v1427 = vpack.c.b16 %v1264, %v1263
      %v1428 = vpack.c.b16 %v1266, %v1265
      %v1429 = vpack.c.b16 %v1268, %v1267
      %v1430 = vpack.c.b16 %v1270, %v1269
      %v1431 = vpack.c.b16 %v1272, %v1271
      %v1432 = vpack.c.b16 %v1274, %v1273
      %v1433 = vpack.c.b16 %v1276, %v1275
      %v1434 = vpack.c.b16 %v1278, %v1277
      %v1435 = vpack.c.b16 %v1280, %v1279
      %v1436 = vpack.c.b16 %v1282, %v1281
      %v1437 = vpack.c.b16 %v1284, %v1283
      %v1438 = vpack.c.b16 %v1286, %v1285
      %v1439 = vpack.c.b16 %v1288, %v1287
      %v1440 = vpack.c.b16 %v1290, %v1289
      %v1441 = vpack.c.b16 %v1292, %v1291
      %v1442 = vpack.c.b16 %v1294, %v1293
      %v1443 = vpack.c.b16 %v1296, %v1295
      %v1444 = vpack.c.b16 %v1298, %v1297
      %v1445 = vpack.c.b16 %v1300, %v1299
      %v1446 = vpack.c.b16 %v1302, %v1301
      %v1447 = vpack.c.b16 %v1304, %v1303
      %v1448 = vpack.c.b16 %v1306, %v1305
      %v1449 = vpack.c.b16 %v1308, %v1307
      %v1450 = vpack.c.b16 %v1310, %v1309
      %v1451 = vpack.c.b16 %v1312, %v1311
      %v1452 = vpack.c.b16 %v1314, %v1313
      %v1453 = vpack.c.b16 %v1316, %v1315
      %v1454 = vpack.c.b16 %v1318, %v1317
      %v1455 = vpack.c.b16 %v1320, %v1319
      %v1456 = vpack.c.b16 %v1322, %v1321
      %v1457 = vpack.c.b16 %v1324, %v1323
      %v1458 = vpack.c.b16 %v1326, %v1325
      %v1459 = vpack.c.b16 %v1328, %v1327
      %v1460 = vpack.c.b16 %v1330, %v1329
      %v1461 = vpack.c.b16 %v1332, %v1331
      %v1462 = vpack.c.b16 %v1334, %v1333
      %1591 = vmatprep.subr.bf16.mxu0 0
      %1592 = vmatpush1.bf16.msra.mxu0 %v1335
      %1593 = vmatprep.subr.bf16.mxu0 0
      %1594 = vmatpush1.bf16.msra.mxu0 %v1336
      %1595 = vmatprep.subr.bf16.mxu0 0
      %1596 = vmatpush1.bf16.msra.mxu0 %v1337
      %1597 = vmatprep.subr.bf16.mxu0 0
      %1598 = vmatpush1.bf16.msra.mxu0 %v1338
      %1599 = vmatprep.subr.bf16.mxu0 0
      %1600 = vmatpush1.bf16.msra.mxu0 %v1339
      %1601 = vmatprep.subr.bf16.mxu0 0
      %1602 = vmatpush1.bf16.msra.mxu0 %v1340
      %1603 = vmatprep.subr.bf16.mxu0 0
      %1604 = vmatpush1.bf16.msra.mxu0 %v1341
      %1605 = vmatprep.subr.bf16.mxu0 0
      %1606 = vmatpush1.bf16.msra.mxu0 %v1342
      %1607 = vmatprep.subr.bf16.mxu0 0
      %1608 = vmatpush1.bf16.msra.mxu0 %v1343
      %1609 = vmatprep.subr.bf16.mxu0 0
      %1610 = vmatpush1.bf16.msra.mxu0 %v1344
      %1611 = vmatprep.subr.bf16.mxu0 0
      %1612 = vmatpush1.bf16.msra.mxu0 %v1345
      %1613 = vmatprep.subr.bf16.mxu0 0
      %1614 = vmatpush1.bf16.msra.mxu0 %v1346
      %1615 = vmatprep.subr.bf16.mxu0 0
      %1616 = vmatpush1.bf16.msra.mxu0 %v1347
      %1617 = vmatprep.subr.bf16.mxu0 0
      %1618 = vmatpush1.bf16.msra.mxu0 %v1348
      %1619 = vmatprep.subr.bf16.mxu0 0
      %1620 = vmatpush1.bf16.msra.mxu0 %v1349
      %1621 = vmatprep.subr.bf16.mxu0 0
      %1622 = vmatpush1.bf16.msra.mxu0 %v1350
      %1623 = vmatprep.mubr.bf16.mxu0 %v509
      %1624 = vmatmul.mubr.bf16.gmra.mrb[0].mxu0 %v505
      %v1625 = vpop.f32.mrb[0].mxu0
      %v1626 = vadd.f32 0.0, %v1625
      %v1627 = vpop.f32.mrb[0].mxu0
      %v1628 = vpop.f32.mrb[0].mxu0
      %v1629 = vadd.f32 0.0, %v1628
      %v1630 = vpop.f32.mrb[0].mxu0
      %1631 = vdwg.mxu0
      %1632 = vmatprep.subr.bf16.mxu0 0
      %1633 = vmatpush1.bf16.msra.mxu0 %v1351
      %1634 = vmatprep.subr.bf16.mxu0 0
      %1635 = vmatpush1.bf16.msra.mxu0 %v1352
      %1636 = vmatprep.subr.bf16.mxu0 0
      %1637 = vmatpush1.bf16.msra.mxu0 %v1353
      %1638 = vmatprep.subr.bf16.mxu0 0
      %1639 = vmatpush1.bf16.msra.mxu0 %v1354
      %1640 = vmatprep.subr.bf16.mxu0 0
      %1641 = vmatpush1.bf16.msra.mxu0 %v1355
      %1642 = vmatprep.subr.bf16.mxu0 0
      %1643 = vmatpush1.bf16.msra.mxu0 %v1356
      %1644 = vmatprep.subr.bf16.mxu0 0
      %1645 = vmatpush1.bf16.msra.mxu0 %v1357
      %1646 = vmatprep.subr.bf16.mxu0 0
      %1647 = vmatpush1.bf16.msra.mxu0 %v1358
      %1648 = vmatprep.subr.bf16.mxu0 0
      %1649 = vmatpush1.bf16.msra.mxu0 %v1359
      %1650 = vmatprep.subr.bf16.mxu0 0
      %1651 = vmatpush1.bf16.msra.mxu0 %v1360
      %1652 = vmatprep.subr.bf16.mxu0 0
      %1653 = vmatpush1.bf16.msra.mxu0 %v1361
      %1654 = vmatprep.subr.bf16.mxu0 0
      %1655 = vmatpush1.bf16.msra.mxu0 %v1362
      %1656 = vmatprep.subr.bf16.mxu0 0
      %1657 = vmatpush1.bf16.msra.mxu0 %v1363
      %1658 = vmatprep.subr.bf16.mxu0 0
      %1659 = vmatpush1.bf16.msra.mxu0 %v1364
      %1660 = vmatprep.subr.bf16.mxu0 0
      %1661 = vmatpush1.bf16.msra.mxu0 %v1365
      %1662 = vmatprep.subr.bf16.mxu0 0
      %1663 = vmatpush1.bf16.msra.mxu0 %v1366
      %1664 = vmatprep.mubr.bf16.mxu0 %v517
      %1665 = vmatmul.mubr.bf16.gmra.mrb[0].mxu0 %v513
      %v1666 = vpop.f32.mrb[0].mxu0
      %v1667 = vadd.f32 %v1626, %v1666
      %v1668 = vpop.f32.mrb[0].mxu0
      %v1669 = vpop.f32.mrb[0].mxu0
      %v1670 = vadd.f32 %v1629, %v1669
      %v1671 = vpop.f32.mrb[0].mxu0
      %1672 = vdwg.mxu0
      %1673 = vmatprep.subr.bf16.mxu0 0
      %1674 = vmatpush1.bf16.msra.mxu0 %v1367
      %1675 = vmatprep.subr.bf16.mxu0 0
      %1676 = vmatpush1.bf16.msra.mxu0 %v1368
      %1677 = vmatprep.subr.bf16.mxu0 0
      %1678 = vmatpush1.bf16.msra.mxu0 %v1369
      %1679 = vmatprep.subr.bf16.mxu0 0
      %1680 = vmatpush1.bf16.msra.mxu0 %v1370
      %1681 = vmatprep.subr.bf16.mxu0 0
      %1682 = vmatpush1.bf16.msra.mxu0 %v1371
      %1683 = vmatprep.subr.bf16.mxu0 0
      %1684 = vmatpush1.bf16.msra.mxu0 %v1372
      %1685 = vmatprep.subr.bf16.mxu0 0
      %1686 = vmatpush1.bf16.msra.mxu0 %v1373
      %1687 = vmatprep.subr.bf16.mxu0 0
      %1688 = vmatpush1.bf16.msra.mxu0 %v1374
      %1689 = vmatprep.subr.bf16.mxu0 0
      %1690 = vmatpush1.bf16.msra.mxu0 %v1375
      %1691 = vmatprep.subr.bf16.mxu0 0
      %1692 = vmatpush1.bf16.msra.mxu0 %v1376
      %1693 = vmatprep.subr.bf16.mxu0 0
      %1694 = vmatpush1.bf16.msra.mxu0 %v1377
      %1695 = vmatprep.subr.bf16.mxu0 0
      %1696 = vmatpush1.bf16.msra.mxu0 %v1378
      %1697 = vmatprep.subr.bf16.mxu0 0
      %1698 = vmatpush1.bf16.msra.mxu0 %v1379
      %1699 = vmatprep.subr.bf16.mxu0 0
      %1700 = vmatpush1.bf16.msra.mxu0 %v1380
      %1701 = vmatprep.subr.bf16.mxu0 0
      %1702 = vmatpush1.bf16.msra.mxu0 %v1381
      %1703 = vmatprep.subr.bf16.mxu0 0
      %1704 = vmatpush1.bf16.msra.mxu0 %v1382
      %1705 = vmatprep.mubr.bf16.mxu0 %v525
      %1706 = vmatmul.mubr.bf16.gmra.mrb[0].mxu0 %v521
      %v1707 = vpop.f32.mrb[0].mxu0
      %v1708 = vadd.f32 %v1667, %v1707
      %v1709 = vpop.f32.mrb[0].mxu0
      %v1710 = vpop.f32.mrb[0].mxu0
      %v1711 = vadd.f32 %v1670, %v1710
      %v1712 = vpop.f32.mrb[0].mxu0
      %1713 = vdwg.mxu0
      %1714 = vmatprep.subr.bf16.mxu0 0
      %1715 = vmatpush1.bf16.msra.mxu0 %v1383
      %1716 = vmatprep.subr.bf16.mxu0 0
      %1717 = vmatpush1.bf16.msra.mxu0 %v1384
      %1718 = vmatprep.subr.bf16.mxu0 0
      %1719 = vmatpush1.bf16.msra.mxu0 %v1385
      %1720 = vmatprep.subr.bf16.mxu0 0
      %1721 = vmatpush1.bf16.msra.mxu0 %v1386
      %1722 = vmatprep.subr.bf16.mxu0 0
      %1723 = vmatpush1.bf16.msra.mxu0 %v1387
      %1724 = vmatprep.subr.bf16.mxu0 0
      %1725 = vmatpush1.bf16.msra.mxu0 %v1388
      %1726 = vmatprep.subr.bf16.mxu0 0
      %1727 = vmatpush1.bf16.msra.mxu0 %v1389
      %1728 = vmatprep.subr.bf16.mxu0 0
      %1729 = vmatpush1.bf16.msra.mxu0 %v1390
      %1730 = vmatprep.subr.bf16.mxu0 0
      %1731 = vmatpush1.bf16.msra.mxu0 %v1391
      %1732 = vmatprep.subr.bf16.mxu0 0
      %1733 = vmatpush1.bf16.msra.mxu0 %v1392
      %1734 = vmatprep.subr.bf16.mxu0 0
      %1735 = vmatpush1.bf16.msra.mxu0 %v1393
      %1736 = vmatprep.subr.bf16.mxu0 0
      %1737 = vmatpush1.bf16.msra.mxu0 %v1394
      %1738 = vmatprep.subr.bf16.mxu0 0
      %1739 = vmatpush1.bf16.msra.mxu0 %v1395
      %1740 = vmatprep.subr.bf16.mxu0 0
      %1741 = vmatpush1.bf16.msra.mxu0 %v1396
      %1742 = vmatprep.subr.bf16.mxu0 0
      %1743 = vmatpush1.bf16.msra.mxu0 %v1397
      %1744 = vmatprep.subr.bf16.mxu0 0
      %1745 = vmatpush1.bf16.msra.mxu0 %v1398
      %1746 = vmatprep.mubr.bf16.mxu0 %v533
      %1747 = vmatmul.mubr.bf16.gmra.mrb[0].mxu0 %v529
      %v1748 = vpop.f32.mrb[0].mxu0
      %v1749 = vadd.f32 %v1708, %v1748
      %v1750 = vpop.f32.mrb[0].mxu0
      %v1751 = vpop.f32.mrb[0].mxu0
      %v1752 = vadd.f32 %v1711, %v1751
      %v1753 = vpop.f32.mrb[0].mxu0
      %1754 = vdwg.mxu0
      %1755 = vmatprep.subr.bf16.mxu0 0
      %1756 = vmatpush1.bf16.msra.mxu0 %v1399
      %1757 = vmatprep.subr.bf16.mxu0 0
      %1758 = vmatpush1.bf16.msra.mxu0 %v1400
      %1759 = vmatprep.subr.bf16.mxu0 0
      %1760 = vmatpush1.bf16.msra.mxu0 %v1401
      %1761 = vmatprep.subr.bf16.mxu0 0
      %1762 = vmatpush1.bf16.msra.mxu0 %v1402
      %1763 = vmatprep.subr.bf16.mxu0 0
      %1764 = vmatpush1.bf16.msra.mxu0 %v1403
      %1765 = vmatprep.subr.bf16.mxu0 0
      %1766 = vmatpush1.bf16.msra.mxu0 %v1404
      %1767 = vmatprep.subr.bf16.mxu0 0
      %1768 = vmatpush1.bf16.msra.mxu0 %v1405
      %1769 = vmatprep.subr.bf16.mxu0 0
      %1770 = vmatpush1.bf16.msra.mxu0 %v1406
      %1771 = vmatprep.subr.bf16.mxu0 0
      %1772 = vmatpush1.bf16.msra.mxu0 %v1407
      %1773 = vmatprep.subr.bf16.mxu0 0
      %1774 = vmatpush1.bf16.msra.mxu0 %v1408
      %1775 = vmatprep.subr.bf16.mxu0 0
      %1776 = vmatpush1.bf16.msra.mxu0 %v1409
      %1777 = vmatprep.subr.bf16.mxu0 0
      %1778 = vmatpush1.bf16.msra.mxu0 %v1410
      %1779 = vmatprep.subr.bf16.mxu0 0
      %1780 = vmatpush1.bf16.msra.mxu0 %v1411
      %1781 = vmatprep.subr.bf16.mxu0 0
      %1782 = vmatpush1.bf16.msra.mxu0 %v1412
      %1783 = vmatprep.subr.bf16.mxu0 0
      %1784 = vmatpush1.bf16.msra.mxu0 %v1413
      %1785 = vmatprep.subr.bf16.mxu0 0
      %1786 = vmatpush1.bf16.msra.mxu0 %v1414
      %1787 = vmatprep.mubr.bf16.mxu0 %v541
      %1788 = vmatmul.mubr.bf16.gmra.mrb[0].mxu0 %v537
      %v1789 = vpop.f32.mrb[0].mxu0
      %v1790 = vadd.f32 %v1749, %v1789
      %v1791 = vpop.f32.mrb[0].mxu0
      %v1792 = vpop.f32.mrb[0].mxu0
      %v1793 = vadd.f32 %v1752, %v1792
      %v1794 = vpop.f32.mrb[0].mxu0
      %1795 = vdwg.mxu0
      %1796 = vmatprep.subr.bf16.mxu0 0
      %1797 = vmatpush1.bf16.msra.mxu0 %v1415
      %1798 = vmatprep.subr.bf16.mxu0 0
      %1799 = vmatpush1.bf16.msra.mxu0 %v1416
      %1800 = vmatprep.subr.bf16.mxu0 0
      %1801 = vmatpush1.bf16.msra.mxu0 %v1417
      %1802 = vmatprep.subr.bf16.mxu0 0
      %1803 = vmatpush1.bf16.msra.mxu0 %v1418
      %1804 = vmatprep.subr.bf16.mxu0 0
      %1805 = vmatpush1.bf16.msra.mxu0 %v1419
      %1806 = vmatprep.subr.bf16.mxu0 0
      %1807 = vmatpush1.bf16.msra.mxu0 %v1420
      %1808 = vmatprep.subr.bf16.mxu0 0
      %1809 = vmatpush1.bf16.msra.mxu0 %v1421
      %1810 = vmatprep.subr.bf16.mxu0 0
      %1811 = vmatpush1.bf16.msra.mxu0 %v1422
      %1812 = vmatprep.subr.bf16.mxu0 0
      %1813 = vmatpush1.bf16.msra.mxu0 %v1423
      %1814 = vmatprep.subr.bf16.mxu0 0
      %1815 = vmatpush1.bf16.msra.mxu0 %v1424
      %1816 = vmatprep.subr.bf16.mxu0 0
      %1817 = vmatpush1.bf16.msra.mxu0 %v1425
      %1818 = vmatprep.subr.bf16.mxu0 0
      %1819 = vmatpush1.bf16.msra.mxu0 %v1426
      %1820 = vmatprep.subr.bf16.mxu0 0
      %1821 = vmatpush1.bf16.msra.mxu0 %v1427
      %1822 = vmatprep.subr.bf16.mxu0 0
      %1823 = vmatpush1.bf16.msra.mxu0 %v1428
      %1824 = vmatprep.subr.bf16.mxu0 0
      %1825 = vmatpush1.bf16.msra.mxu0 %v1429
      %1826 = vmatprep.subr.bf16.mxu0 0
      %1827 = vmatpush1.bf16.msra.mxu0 %v1430
      %1828 = vmatprep.mubr.bf16.mxu0 %v549
      %1829 = vmatmul.mubr.bf16.gmra.mrb[0].mxu0 %v545
      %v1830 = vpop.f32.mrb[0].mxu0
      %v1831 = vadd.f32 %v1790, %v1830
      %v1832 = vpop.f32.mrb[0].mxu0
      %v1833 = vpop.f32.mrb[0].mxu0
      %v1834 = vadd.f32 %v1793, %v1833
      %v1835 = vpop.f32.mrb[0].mxu0
      %1836 = vdwg.mxu0
      %1837 = vmatprep.subr.bf16.mxu0 0
      %1838 = vmatpush1.bf16.msra.mxu0 %v1431
      %1839 = vmatprep.subr.bf16.mxu0 0
      %1840 = vmatpush1.bf16.msra.mxu0 %v1432
      %1841 = vmatprep.subr.bf16.mxu0 0
      %1842 = vmatpush1.bf16.msra.mxu0 %v1433
      %1843 = vmatprep.subr.bf16.mxu0 0
      %1844 = vmatpush1.bf16.msra.mxu0 %v1434
      %1845 = vmatprep.subr.bf16.mxu0 0
      %1846 = vmatpush1.bf16.msra.mxu0 %v1435
      %1847 = vmatprep.subr.bf16.mxu0 0
      %1848 = vmatpush1.bf16.msra.mxu0 %v1436
      %1849 = vmatprep.subr.bf16.mxu0 0
      %1850 = vmatpush1.bf16.msra.mxu0 %v1437
      %1851 = vmatprep.subr.bf16.mxu0 0
      %1852 = vmatpush1.bf16.msra.mxu0 %v1438
      %1853 = vmatprep.subr.bf16.mxu0 0
      %1854 = vmatpush1.bf16.msra.mxu0 %v1439
      %1855 = vmatprep.subr.bf16.mxu0 0
      %1856 = vmatpush1.bf16.msra.mxu0 %v1440
      %1857 = vmatprep.subr.bf16.mxu0 0
      %1858 = vmatpush1.bf16.msra.mxu0 %v1441
      %1859 = vmatprep.subr.bf16.mxu0 0
      %1860 = vmatpush1.bf16.msra.mxu0 %v1442
      %1861 = vmatprep.subr.bf16.mxu0 0
      %1862 = vmatpush1.bf16.msra.mxu0 %v1443
      %1863 = vmatprep.subr.bf16.mxu0 0
      %1864 = vmatpush1.bf16.msra.mxu0 %v1444
      %1865 = vmatprep.subr.bf16.mxu0 0
      %1866 = vmatpush1.bf16.msra.mxu0 %v1445
      %1867 = vmatprep.subr.bf16.mxu0 0
      %1868 = vmatpush1.bf16.msra.mxu0 %v1446
      %1869 = vmatprep.mubr.bf16.mxu0 %v557
      %1870 = vmatmul.mubr.bf16.gmra.mrb[0].mxu0 %v553
      %v1871 = vpop.f32.mrb[0].mxu0
      %v1872 = vadd.f32 %v1831, %v1871
      %v1873 = vpop.f32.mrb[0].mxu0
      %v1874 = vpop.f32.mrb[0].mxu0
      %v1875 = vadd.f32 %v1834, %v1874
      %v1876 = vpop.f32.mrb[0].mxu0
      %1877 = vdwg.mxu0
      %1878 = vmatprep.subr.bf16.mxu0 0
      %1879 = vmatpush1.bf16.msra.mxu0 %v1447
      %1880 = vmatprep.subr.bf16.mxu0 0
      %1881 = vmatpush1.bf16.msra.mxu0 %v1448
      %1882 = vmatprep.subr.bf16.mxu0 0
      %1883 = vmatpush1.bf16.msra.mxu0 %v1449
      %1884 = vmatprep.subr.bf16.mxu0 0
      %1885 = vmatpush1.bf16.msra.mxu0 %v1450
      %1886 = vmatprep.subr.bf16.mxu0 0
      %1887 = vmatpush1.bf16.msra.mxu0 %v1451
      %1888 = vmatprep.subr.bf16.mxu0 0
      %1889 = vmatpush1.bf16.msra.mxu0 %v1452
      %1890 = vmatprep.subr.bf16.mxu0 0
      %1891 = vmatpush1.bf16.msra.mxu0 %v1453
      %1892 = vmatprep.subr.bf16.mxu0 0
      %1893 = vmatpush1.bf16.msra.mxu0 %v1454
      %1894 = vmatprep.subr.bf16.mxu0 0
      %1895 = vmatpush1.bf16.msra.mxu0 %v1455
      %1896 = vmatprep.subr.bf16.mxu0 0
      %1897 = vmatpush1.bf16.msra.mxu0 %v1456
      %1898 = vmatprep.subr.bf16.mxu0 0
      %1899 = vmatpush1.bf16.msra.mxu0 %v1457
      %1900 = vmatprep.subr.bf16.mxu0 0
      %1901 = vmatpush1.bf16.msra.mxu0 %v1458
      %1902 = vmatprep.subr.bf16.mxu0 0
      %1903 = vmatpush1.bf16.msra.mxu0 %v1459
      %1904 = vmatprep.subr.bf16.mxu0 0
      %1905 = vmatpush1.bf16.msra.mxu0 %v1460
      %1906 = vmatprep.subr.bf16.mxu0 0
      %1907 = vmatpush1.bf16.msra.mxu0 %v1461
      %1908 = vmatprep.subr.bf16.mxu0 0
      %1909 = vmatpush1.bf16.msra.mxu0 %v1462
      %1910 = vmatprep.mubr.bf16.mxu0 %v565
      %1911 = vmatmul.mubr.bf16.gmra.mrb[0].mxu0 %v561
      %v1912 = vpop.f32.mrb[0].mxu0
      %v1913 = vadd.f32 %v1872, %v1912
      %v1914 = vpop.f32.mrb[0].mxu0
      %v1915 = vpop.f32.mrb[0].mxu0
      %v1916 = vadd.f32 %v1875, %v1915
      %v1917 = vpop.f32.mrb[0].mxu0
      %1918 = vdwg.mxu0
      %v1919 = vpack.c.bf16 %v1916, %v1913
      %v1921 = vunpack.c.l.b16 %v1919
      %v1922 = vunpack.c.h.b16 %v1919
      %v1923 = vpack.c.b16 %v1921, %v1921
      %v1924 = vpack.c.b16 %v1922, %v1922
      %1927 = vst [vmem:[%s208] sm:$0xf] %v1923
      %vm1928 = vcmask 1040384
      %vm1929 = vsmask.f32 256
      %vm1930 = vmand %vm1928, %vm1929
      %v1931 = vld [vmem:[%s208 + $0x4] sm:$0x1]
      %v1932 = vsel %vm1930, %v1924, %v1931
      %1933 = vst [vmem:[%s208 + $0x4] sm:$0x1] %v1932
      %vm1934 = vcmask 1040384
      %v1935 = vsel %vm1934, %v1916, 0.0
      %v1936 = vadd.f32 %v1913, %v1935
      %v1937 = vrot.slane %v1936, 4
      %v1938 = vadd.f32 %v1936, %v1937
      %v1939 = vrot.slane %v1938, 2
      %v1940 = vadd.f32 %v1938, %v1939
      %v1941 = vrot.slane %v1940, 1
      %v1942 = vadd.f32 %v1940, %v1941
      %1943 = vst [vmem:[%s211] sm:$0x1] %v1942
      %v1944 = vmul.f32 %v1913, %v1913
      %v1945 = vmul.f32 %v1916, %v1916
      %v1946 = vsel %vm1934, %v1945, 0.0
      %v1947 = vadd.f32 %v1944, %v1946
      %v1948 = vrot.slane %v1947, 4
      %v1949 = vadd.f32 %v1947, %v1948
      %v1950 = vrot.slane %v1949, 2
      %v1951 = vadd.f32 %v1949, %v1950
      %v1952 = vrot.slane %v1951, 1
      %v1953 = vadd.f32 %v1951, %v1952
      %1954 = vst [vmem:[%s214] sm:$0x1] %v1953
      %p1955 = scmp.lt.s32.totalorder %s16, 1
      %s1956 = scalar_select %p1955, %s16, 1
      %s1957 = smul.addr %s1956, 2
      %s1958 = smul.addr %s1957, 4
      %s1959 = scalar_lea.vmem %s2, %s1958
      %p1960 = scmp.lt.s32.totalorder %s16, 1
      %s1961 = scalar_select %p1960, %s16, 1
      %s1962 = scalar_lea.vmem %s3, %s1961
      %p1963 = scmp.lt.s32.totalorder %s16, 1
      %s1964 = scalar_select %p1963, %s16, 1
      %s1965 = scalar_lea.vmem %s4, %s1964
      // Predicated region
      $region29: #{patch_discriminator_forward.8} parent=27 // pred_check
        %p1966 = pneg %p81
      $region30: #{patch_discriminator_forward.8} parent=27 // pred_check_branch
        %1968 = sbr.rel (%p1966) target = $region32
      $region31: #{patch_discriminator_forward.8} parent=27 // pred_region
        _
      $region32: #{patch_discriminator_forward.8} parent=27 // pred_fallthru
        _
      // Predicated region
      $region33: #{patch_discriminator_forward.8} parent=27 // pred_check
        %p1969 = pneg %p107
      $region34: #{patch_discriminator_forward.8} parent=27 // pred_check_branch
        %1971 = sbr.rel (%p1969) target = $region36
      $region35: #{patch_discriminator_forward.8} parent=27 // pred_region
        _
      $region36: #{patch_discriminator_forward.8} parent=27 // pred_fallthru
        _
      // Predicated region
      $region37: #{patch_discriminator_forward.8} parent=27 // pred_check
        %p1972 = pneg %p133
      $region38: #{patch_discriminator_forward.8} parent=27 // pred_check_branch
        %1974 = sbr.rel (%p1972) target = $region40
      $region39: #{patch_discriminator_forward.8} parent=27 // pred_region
        _
      $region40: #{patch_discriminator_forward.8} parent=27 // pred_fallthru
        _
    $region28: #{patch_discriminator_forward.8} parent=5 // pred_fallthru
      _
    %p1975 = scmp.le.s32.totalorder 2, %s11
    // Predicated region
    $region41: #{patch_discriminator_forward.8} parent=5 // pred_check
      %p1976 = pneg %p1975
    $region42: #{patch_discriminator_forward.8} parent=5 // pred_check_branch
      %1978 = sbr.rel (%p1976) target = $region44
    $region43: #{patch_discriminator_forward.8} parent=5 // pred_region
      %s1979 = ssub.s32 %s11, 2
      // Predicated region
      $region45: #{patch_discriminator_forward.8} parent=43 // pred_check
        %p1980 = pneg %p87
      $region46: #{patch_discriminator_forward.8} parent=43 // pred_check_branch
        %1982 = sbr.rel (%p1980) target = $region48
      $region47: #{patch_discriminator_forward.8} parent=43 // pred_region
        %p1983 = scmp.lt.s32.totalorder %s17, 1
        %s1984 = scalar_select %p1983, %s17, 1
        %s1985 = smul.addr %s1984, 2
        %s1986 = smul.addr %s1985, 4
        %s1987 = scalar_lea.vmem %s2, %s1986
      $region48: #{patch_discriminator_forward.8} parent=43 // pred_fallthru
        _
      // Predicated region
      $region49: #{patch_discriminator_forward.8} parent=43 // pred_check
        %p1988 = pneg %p113
      $region50: #{patch_discriminator_forward.8} parent=43 // pred_check_branch
        %1990 = sbr.rel (%p1988) target = $region52
      $region51: #{patch_discriminator_forward.8} parent=43 // pred_region
        %p1991 = scmp.lt.s32.totalorder %s17, 1
        %s1992 = scalar_select %p1991, %s17, 1
        %s1993 = scalar_lea.vmem %s3, %s1992
      $region52: #{patch_discriminator_forward.8} parent=43 // pred_fallthru
        _
      // Predicated region
      $region53: #{patch_discriminator_forward.8} parent=43 // pred_check
        %p1994 = pneg %p139
      $region54: #{patch_discriminator_forward.8} parent=43 // pred_check_branch
        %1996 = sbr.rel (%p1994) target = $region56
      $region55: #{patch_discriminator_forward.8} parent=43 // pred_region
        %p1997 = scmp.lt.s32.totalorder %s17, 1
        %s1998 = scalar_select %p1997, %s17, 1
        %s1999 = scalar_lea.vmem %s4, %s1998
      $region56: #{patch_discriminator_forward.8} parent=43 // pred_fallthru
        _
    $region44: #{patch_discriminator_forward.8} parent=5 // pred_fallthru
      _
  $region6: #{patch_discriminator_forward.8} parent=0 // loop_footer
    %s15 = sadd.s32 1, %s11
  $region7: #{patch_discriminator_forward.8} parent=0 // loop_footer_branch
    %10 = sbr.rel target = $region3
  $region8: #{patch_discriminator_forward.8} parent=0 // loop_exit
    _

// kernel: patch_discriminator_forward.9
$region0: #{patch_discriminator_forward.9}
  #allocation0 [shape = 'u32[]', space=smem, size = 0x4, offset = 0x4, fixed_abs, tag = 'smem constant byte address 0x4 - core index']
  #allocation1 [shape = 'u32[144,128]{1,0:T(1,128)}', space=vmem, size = 0x12000, scoped, tag = 'internal scratch']
  %s0 = inlined_call_operand.vmem [shape: bf16[2,5,5,128], index: 0, kind: input, shape index: {}]
  %s1 = inlined_call_operand.vmem [shape: bf16[2048,128], index: 1, kind: input, shape index: {}]
  %s2 = inlined_call_operand.vmem [shape: f32[1,128], index: 2, kind: input, shape index: {}]
  %s3 = inlined_call_operand.vmem [shape: bf16[2,4,128], index: 3, kind: output, shape index: {}]
  %s4 = sld [smem:[#allocation0]]
  $region45: #{patch_discriminator_forward.9} parent=0
    _
  %s6 = ssub.s32 1, %s4
  %s7 = scalar_select 0, %s6, %s4
  loop: start=0, step=1, limit=4
  $region2: #{patch_discriminator_forward.9} parent=0 // loop_pre_header
    _
  $region3: #{patch_discriminator_forward.9} parent=0 // loop_header
    %s9 = sphi 0, %s13
    %p10 = scmp.ge.s32.totalorder %s9, 4
    %s19 = sphi 0, %s21
    %s22 = sphi 0, %s19
    %s23 = sphi 0, %s22
    %s39 = sphi 0, %s23
    %s43 = sphi 0, %s43
    %s45 = sphi 0, %s43
    %s46 = sphi 0, %s45
    %s60 = sphi 0, %s46
    %s64 = sphi 0, %s64
    %s66 = sphi 0, %s64
    %s67 = sphi 0, %s66
    %s81 = sphi 0, %s67
    %s87 = sphi 0, %s89
    %s90 = sphi 0, %s87
    %s91 = sphi 0, %s90
    %s107 = sphi 0, %s91
  $region4: #{patch_discriminator_forward.9} parent=0 // loop_header_branch
    %12 = sbr.rel (%p10) target = $region8
  $region5: #{patch_discriminator_forward.9} parent=0 // loop_body
    %s14 = ssub.s32 %s9, 1
    %s15 = ssub.s32 %s9, 2
    %s16 = sadd.s32 %s9, 1
    %s17 = ssub.s32 %s9, %s16
    %p18 = scmp.eq.s32.totalorder %s17, 0
    %s20 = sadd.s32 %s19, 1
    %s21 = scalar_select %p18, %s19, %s20
    %p24 = pneg %p18
    %p25 = scmp.eq.s32.totalorder %s9, 1
    %p26 = por %p24, %p25
    %p27 = scmp.ne.s32.totalorder %s19, %s22
    %p28 = scmp.eq.s32.totalorder %s9, 0
    %p29 = por %p27, %p28
    %p30 = scmp.ne.s32.totalorder %s19, %s22
    %p31 = scmp.eq.s32.totalorder %s14, 1
    %p32 = por %p30, %p31
    %p33 = scmp.ne.s32.totalorder %s22, %s23
    %p34 = scmp.eq.s32.totalorder %s14, 0
    %p35 = por %p33, %p34
    %p36 = scmp.ne.s32.totalorder %s22, %s23
    %p37 = scmp.eq.s32.totalorder %s15, 1
    %p38 = por %p36, %p37
    %p40 = scmp.ne.s32.totalorder %s23, %s39
    %p41 = scmp.eq.s32.totalorder %s15, 0
    %p42 = por %p40, %p41
    %s44 = sadd.s32 %s43, 1
    %p47 = scmp.eq.s32.totalorder %s9, 1
    %p48 = scmp.ne.s32.totalorder %s43, %s45
    %p49 = scmp.eq.s32.totalorder %s9, 0
    %p50 = por %p48, %p49
    %p51 = scmp.ne.s32.totalorder %s43, %s45
    %p52 = scmp.eq.s32.totalorder %s14, 1
    %p53 = por %p51, %p52
    %p54 = scmp.ne.s32.totalorder %s45, %s46
    %p55 = scmp.eq.s32.totalorder %s14, 0
    %p56 = por %p54, %p55
    %p57 = scmp.ne.s32.totalorder %s45, %s46
    %p58 = scmp.eq.s32.totalorder %s15, 1
    %p59 = por %p57, %p58
    %p61 = scmp.ne.s32.totalorder %s46, %s60
    %p62 = scmp.eq.s32.totalorder %s15, 0
    %p63 = por %p61, %p62
    %s65 = sadd.s32 %s64, 1
    %p68 = scmp.eq.s32.totalorder %s9, 1
    %p69 = scmp.ne.s32.totalorder %s64, %s66
    %p70 = scmp.eq.s32.totalorder %s9, 0
    %p71 = por %p69, %p70
    %p72 = scmp.ne.s32.totalorder %s64, %s66
    %p73 = scmp.eq.s32.totalorder %s14, 1
    %p74 = por %p72, %p73
    %p75 = scmp.ne.s32.totalorder %s66, %s67
    %p76 = scmp.eq.s32.totalorder %s14, 0
    %p77 = por %p75, %p76
    %p78 = scmp.ne.s32.totalorder %s66, %s67
    %p79 = scmp.eq.s32.totalorder %s15, 1
    %p80 = por %p78, %p79
    %p82 = scmp.ne.s32.totalorder %s67, %s81
    %p83 = scmp.eq.s32.totalorder %s15, 0
    %p84 = por %p82, %p83
    %s85 = ssub.s32 %s9, %s16
    %p86 = scmp.eq.s32.totalorder %s85, 0
    %s88 = sadd.s32 %s87, 1
    %s89 = scalar_select %p86, %s87, %s88
    %p92 = pneg %p86
    %p93 = scmp.eq.s32.totalorder %s9, 1
    %p94 = por %p92, %p93
    %p95 = scmp.ne.s32.totalorder %s87, %s90
    %p96 = scmp.eq.s32.totalorder %s9, 0
    %p97 = por %p95, %p96
    %p98 = scmp.ne.s32.totalorder %s87, %s90
    %p99 = scmp.eq.s32.totalorder %s14, 1
    %p100 = por %p98, %p99
    %p101 = scmp.ne.s32.totalorder %s90, %s91
    %p102 = scmp.eq.s32.totalorder %s14, 0
    %p103 = por %p101, %p102
    %p104 = scmp.ne.s32.totalorder %s90, %s91
    %p105 = scmp.eq.s32.totalorder %s15, 1
    %p106 = por %p104, %p105
    %p108 = scmp.ne.s32.totalorder %s91, %s107
    %p109 = scmp.eq.s32.totalorder %s15, 0
    %p110 = por %p108, %p109
    %p111 = scmp.le.s32.totalorder 1, %s9
    %p112 = scmp.lt.s32.totalorder %s9, 3
    %p113 = pnand %p111, %p112
    %p114 = pneg %p113
    // Predicated region
    $region9: #{patch_discriminator_forward.9} parent=5 // pred_check
      _
    $region10: #{patch_discriminator_forward.9} parent=5 // pred_check_branch
      %116 = sbr.rel (%p113) target = $region12
    $region11: #{patch_discriminator_forward.9} parent=5 // pred_region
      %s117 = ssub.s32 %s9, 1
      // Predicated region
      $region13: #{patch_discriminator_forward.9} parent=11 // pred_check
        %p118 = pneg %p56
      $region14: #{patch_discriminator_forward.9} parent=11 // pred_check_branch
        %120 = sbr.rel (%p118) target = $region16
      $region15: #{patch_discriminator_forward.9} parent=11 // pred_region
        _
      $region16: #{patch_discriminator_forward.9} parent=11 // pred_fallthru
        _
      // Predicated region
      $region17: #{patch_discriminator_forward.9} parent=11 // pred_check
        %p121 = pneg %p77
      $region18: #{patch_discriminator_forward.9} parent=11 // pred_check_branch
        %123 = sbr.rel (%p121) target = $region20
      $region19: #{patch_discriminator_forward.9} parent=11 // pred_region
        _
      $region20: #{patch_discriminator_forward.9} parent=11 // pred_fallthru
        _
    $region12: #{patch_discriminator_forward.9} parent=5 // pred_fallthru
      _
    %p124 = scmp.lt.s32.totalorder %s9, 2
    // Predicated region
    $region21: #{patch_discriminator_forward.9} parent=5 // pred_check
      %p125 = pneg %p124
    $region22: #{patch_discriminator_forward.9} parent=5 // pred_check_branch
      %127 = sbr.rel (%p125) target = $region24
    $region23: #{patch_discriminator_forward.9} parent=5 // pred_region
      // Predicated region
      $region25: #{patch_discriminator_forward.9} parent=23 // pred_check
        %p128 = pneg %p29
      $region26: #{patch_discriminator_forward.9} parent=23 // pred_check_branch
        %130 = sbr.rel (%p128) target = $region28
      $region27: #{patch_discriminator_forward.9} parent=23 // pred_region
        %p131 = scmp.lt.s32.totalorder %s9, 1
        %s132 = scalar_select %p131, %s9, 1
        %s133 = smul.addr %s132, 5
        %s134 = smul.addr %s133, 4
        %s135 = scalar_lea.vmem %s0, %s134
      $region28: #{patch_discriminator_forward.9} parent=23 // pred_fallthru
        _
    $region24: #{patch_discriminator_forward.9} parent=5 // pred_fallthru
      _
    %p136 = scmp.le.s32.totalorder 1, %s9
    %p137 = scmp.lt.s32.totalorder %s9, 3
    %p138 = pnand %p136, %p137
    %p139 = pneg %p138
    // Predicated region
    $region29: #{patch_discriminator_forward.9} parent=5 // pred_check
      _
    $region30: #{patch_discriminator_forward.9} parent=5 // pred_check_branch
      %141 = sbr.rel (%p138) target = $region32
    $region31: #{patch_discriminator_forward.9} parent=5 // pred_region
      %s142 = ssub.s32 %s9, 1
      %p143 = scmp.lt.s32.totalorder %s14, 1
      %s144 = scalar_select %p143, %s14, 1
      %s145 = smul.addr %s144, 5
      %s146 = smul.addr %s145, 4
      %s147 = scalar_lea.vmem %s0, %s146
      %p148 = pneg %p35
      %p149 = pneg %p32
      %p150 = pneg %p56
      %p151 = pneg %p53
      %p152 = pneg %p77
      %p153 = pneg %p74
      %p154 = pneg %p103
      %p155 = pneg %p100
      %p156 = scmp.lt.s32.totalorder %s14, 1
      %s157 = scalar_select %p156, %s14, 1
      %s158 = smul.addr %s157, 2
      %s159 = scalar_lea.vmem %s3, %s158
      %p160 = scmp.lt.s32.totalorder %s14, 1
      %s161 = scalar_select %p160, %s14, 1
      %s162 = smul.addr %s161, 5
      %s163 = smul.addr %s162, 4
      %s164 = scalar_lea.vmem %s0, %s163
      %p165 = scmp.lt.s32.totalorder %s14, 1
      %s166 = scalar_select %p165, %s14, 1
      %s167 = smul.addr %s166, 2
      %s168 = scalar_lea.vmem %s3, %s167
      %v170 = vld [vmem:[%s164] sm:$0x7]
      %s171 = scalar_lea.vmem %s164, 4
      %v172 = vld [vmem:[%s171] sm:$0x7]
      %s173 = scalar_lea.vmem %s164, 8
      %v174 = vld [vmem:[%s173] sm:$0x7]
      %s175 = scalar_lea.vmem %s164, 12
      %v176 = vld [vmem:[%s175] sm:$0x7]
      %v178 = vunpack.c.l.b16 %v170
      %v179 = vpack.c.b16 %v178, %v178
      %v181 = vshrl.u32 %v179, 16
      %v183 = vshll.u32 %v179, 16
      %v185 = vrot.slane %v183, 1
      %v186 = vor.u32 %v181, %v185
      %v187 = vrot.slane %v179, 1
      %v188 = vrot.slane %v181, 1
      %v189 = vrot.slane %v183, 2
      %v190 = vor.u32 %v188, %v189
      %v192 = vunpack.c.l.b16 %v172
      %v193 = vpack.c.b16 %v192, %v192
      %v195 = vshrl.u32 %v193, 16
      %v197 = vshll.u32 %v193, 16
      %v199 = vrot.slane %v197, 1
      %v200 = vor.u32 %v195, %v199
      %v201 = vrot.slane %v193, 1
      %v202 = vrot.slane %v195, 1
      %v203 = vrot.slane %v197, 2
      %v204 = vor.u32 %v202, %v203
      %v206 = vunpack.c.l.b16 %v174
      %v207 = vpack.c.b16 %v206, %v206
      %v209 = vshrl.u32 %v207, 16
      %v211 = vshll.u32 %v207, 16
      %v213 = vrot.slane %v211, 1
      %v214 = vor.u32 %v209, %v213
      %v215 = vrot.slane %v207, 1
      %v216 = vrot.slane %v209, 1
      %v217 = vrot.slane %v211, 2
      %v218 = vor.u32 %v216, %v217
      %v220 = vunpack.c.l.b16 %v176
      %v221 = vpack.c.b16 %v220, %v220
      %v223 = vshrl.u32 %v221, 16
      %v225 = vshll.u32 %v221, 16
      %v227 = vrot.slane %v225, 1
      %v228 = vor.u32 %v223, %v227
      %v229 = vrot.slane %v221, 1
      %v230 = vrot.slane %v223, 1
      %v231 = vrot.slane %v225, 2
      %v232 = vor.u32 %v230, %v231
      %s233 = scalar_lea.vmem %s164, 16
      %v234 = vld [vmem:[%s233] sm:$0x7]
      %v236 = vunpack.c.l.b16 %v234
      %v237 = vpack.c.b16 %v236, %v236
      %v239 = vshrl.u32 %v237, 16
      %v241 = vshll.u32 %v237, 16
      %v243 = vrot.slane %v241, 1
      %v244 = vor.u32 %v239, %v243
      %v245 = vrot.slane %v237, 1
      %v246 = vrot.slane %v239, 1
      %v247 = vrot.slane %v241, 2
      %v248 = vor.u32 %v246, %v247
      %v249 = vrot.slane %v172, 7
      %v250 = vrot.slane %v200, 7
      %v251 = vrot.slane %v201, 7
      %v252 = vrot.slane %v204, 7
      %v253 = vrot.slane %v174, 7
      %v254 = vrot.slane %v214, 7
      %v255 = vrot.slane %v215, 7
      %v256 = vrot.slane %v218, 7
      %v257 = vrot.slane %v176, 7
      %v258 = vrot.slane %v228, 7
      %v259 = vrot.slane %v229, 7
      %v260 = vrot.slane %v232, 7
      %v261 = vrot.slane %v234, 7
      %v262 = vrot.slane %v244, 7
      %v263 = vrot.slane %v245, 7
      %v264 = vrot.slane %v248, 7
      %vm265 = vcmask 1040384
      %v268 = vsel %vm265, %v170, %v249
      %v272 = vsel %vm265, %v186, %v250
      %v276 = vsel %vm265, %v187, %v251
      %v280 = vsel %vm265, %v190, %v252
      %v284 = vsel %vm265, %v172, %v253
      %v288 = vsel %vm265, %v200, %v254
      %v292 = vsel %vm265, %v201, %v255
      %v296 = vsel %vm265, %v204, %v256
      %v300 = vsel %vm265, %v174, %v257
      %v304 = vsel %vm265, %v214, %v258
      %v308 = vsel %vm265, %v215, %v259
      %v312 = vsel %vm265, %v218, %v260
      %v316 = vsel %vm265, %v176, %v261
      %v320 = vsel %vm265, %v228, %v262
      %v324 = vsel %vm265, %v229, %v263
      %v328 = vsel %vm265, %v232, %v264
      %v330 = vld [vmem:[%s1] sm:$0xf]
      %v331 = vld [vmem:[%s1 + $0x4] sm:$0xf]
      %v332 = vld [vmem:[%s1 + $0x8] sm:$0xf]
      %v333 = vld [vmem:[%s1 + $0xc] sm:$0xf]
      %v334 = vld [vmem:[%s1 + $0x10] sm:$0xf]
      %v335 = vld [vmem:[%s1 + $0x14] sm:$0xf]
      %v336 = vld [vmem:[%s1 + $0x18] sm:$0xf]
      %v337 = vld [vmem:[%s1 + $0x1c] sm:$0xf]
      %v338 = vld [vmem:[%s1 + $0x20] sm:$0xf]
      %v339 = vld [vmem:[%s1 + $0x24] sm:$0xf]
      %v340 = vld [vmem:[%s1 + $0x28] sm:$0xf]
      %v341 = vld [vmem:[%s1 + $0x2c] sm:$0xf]
      %v342 = vld [vmem:[%s1 + $0x30] sm:$0xf]
      %v343 = vld [vmem:[%s1 + $0x34] sm:$0xf]
      %v344 = vld [vmem:[%s1 + $0x38] sm:$0xf]
      %v345 = vld [vmem:[%s1 + $0x3c] sm:$0xf]
      %v346 = vld [vmem:[%s1 + $0x40] sm:$0xf]
      %v347 = vld [vmem:[%s1 + $0x44] sm:$0xf]
      %v348 = vld [vmem:[%s1 + $0x48] sm:$0xf]
      %v349 = vld [vmem:[%s1 + $0x4c] sm:$0xf]
      %v350 = vld [vmem:[%s1 + $0x50] sm:$0xf]
      %v351 = vld [vmem:[%s1 + $0x54] sm:$0xf]
      %v352 = vld [vmem:[%s1 + $0x58] sm:$0xf]
      %v353 = vld [vmem:[%s1 + $0x5c] sm:$0xf]
      %v354 = vld [vmem:[%s1 + $0x60] sm:$0xf]
      %v355 = vld [vmem:[%s1 + $0x64] sm:$0xf]
      %v356 = vld [vmem:[%s1 + $0x68] sm:$0xf]
      %v357 = vld [vmem:[%s1 + $0x6c] sm:$0xf]
      %v358 = vld [vmem:[%s1 + $0x70] sm:$0xf]
      %v359 = vld [vmem:[%s1 + $0x74] sm:$0xf]
      %v360 = vld [vmem:[%s1 + $0x78] sm:$0xf]
      %v361 = vld [vmem:[%s1 + $0x7c] sm:$0xf]
      %v362 = vld [vmem:[%s1 + $0x80] sm:$0xf]
      %v363 = vld [vmem:[%s1 + $0x84] sm:$0xf]
      %v364 = vld [vmem:[%s1 + $0x88] sm:$0xf]
      %v365 = vld [vmem:[%s1 + $0x8c] sm:$0xf]
      %v366 = vld [vmem:[%s1 + $0x90] sm:$0xf]
      %v367 = vld [vmem:[%s1 + $0x94] sm:$0xf]
      %v368 = vld [vmem:[%s1 + $0x98] sm:$0xf]
      %v369 = vld [vmem:[%s1 + $0x9c] sm:$0xf]
      %v370 = vld [vmem:[%s1 + $0xa0] sm:$0xf]
      %v371 = vld [vmem:[%s1 + $0xa4] sm:$0xf]
      %v372 = vld [vmem:[%s1 + $0xa8] sm:$0xf]
      %v373 = vld [vmem:[%s1 + $0xac] sm:$0xf]
      %v374 = vld [vmem:[%s1 + $0xb0] sm:$0xf]
      %v375 = vld [vmem:[%s1 + $0xb4] sm:$0xf]
      %v376 = vld [vmem:[%s1 + $0xb8] sm:$0xf]
      %v377 = vld [vmem:[%s1 + $0xbc] sm:$0xf]
      %v378 = vld [vmem:[%s1 + $0xc0] sm:$0xf]
      %v379 = vld [vmem:[%s1 + $0xc4] sm:$0xf]
      %v380 = vld [vmem:[%s1 + $0xc8] sm:$0xf]
      %v381 = vld [vmem:[%s1 + $0xcc] sm:$0xf]
      %v382 = vld [vmem:[%s1 + $0xd0] sm:$0xf]
      %v383 = vld [vmem:[%s1 + $0xd4] sm:$0xf]
      %v384 = vld [vmem:[%s1 + $0xd8] sm:$0xf]
      %v385 = vld [vmem:[%s1 + $0xdc] sm:$0xf]
      %v386 = vld [vmem:[%s1 + $0xe0] sm:$0xf]
      %v387 = vld [vmem:[%s1 + $0xe4] sm:$0xf]
      %v388 = vld [vmem:[%s1 + $0xe8] sm:$0xf]
      %v389 = vld [vmem:[%s1 + $0xec] sm:$0xf]
      %v390 = vld [vmem:[%s1 + $0xf0] sm:$0xf]
      %v391 = vld [vmem:[%s1 + $0xf4] sm:$0xf]
      %v392 = vld [vmem:[%s1 + $0xf8] sm:$0xf]
      %v393 = vld [vmem:[%s1 + $0xfc] sm:$0xf]
      %v394 = vld [vmem:[%s1 + $0x100] sm:$0xf]
      %v395 = vld [vmem:[%s1 + $0x104] sm:$0xf]
      %v396 = vld [vmem:[%s1 + $0x108] sm:$0xf]
      %v397 = vld [vmem:[%s1 + $0x10c] sm:$0xf]
      %v398 = vld [vmem:[%s1 + $0x110] sm:$0xf]
      %v399 = vld [vmem:[%s1 + $0x114] sm:$0xf]
      %v400 = vld [vmem:[%s1 + $0x118] sm:$0xf]
      %v401 = vld [vmem:[%s1 + $0x11c] sm:$0xf]
      %v402 = vld [vmem:[%s1 + $0x120] sm:$0xf]
      %v403 = vld [vmem:[%s1 + $0x124] sm:$0xf]
      %v404 = vld [vmem:[%s1 + $0x128] sm:$0xf]
      %v405 = vld [vmem:[%s1 + $0x12c] sm:$0xf]
      %v406 = vld [vmem:[%s1 + $0x130] sm:$0xf]
      %v407 = vld [vmem:[%s1 + $0x134] sm:$0xf]
      %v408 = vld [vmem:[%s1 + $0x138] sm:$0xf]
      %v409 = vld [vmem:[%s1 + $0x13c] sm:$0xf]
      %v410 = vld [vmem:[%s1 + $0x140] sm:$0xf]
      %v411 = vld [vmem:[%s1 + $0x144] sm:$0xf]
      %v412 = vld [vmem:[%s1 + $0x148] sm:$0xf]
      %v413 = vld [vmem:[%s1 + $0x14c] sm:$0xf]
      %v414 = vld [vmem:[%s1 + $0x150] sm:$0xf]
      %v415 = vld [vmem:[%s1 + $0x154] sm:$0xf]
      %v416 = vld [vmem:[%s1 + $0x158] sm:$0xf]
      %v417 = vld [vmem:[%s1 + $0x15c] sm:$0xf]
      %v418 = vld [vmem:[%s1 + $0x160] sm:$0xf]
      %v419 = vld [vmem:[%s1 + $0x164] sm:$0xf]
      %v420 = vld [vmem:[%s1 + $0x168] sm:$0xf]
      %v421 = vld [vmem:[%s1 + $0x16c] sm:$0xf]
      %v422 = vld [vmem:[%s1 + $0x170] sm:$0xf]
      %v423 = vld [vmem:[%s1 + $0x174] sm:$0xf]
      %v424 = vld [vmem:[%s1 + $0x178] sm:$0xf]
      %v425 = vld [vmem:[%s1 + $0x17c] sm:$0xf]
      %v426 = vld [vmem:[%s1 + $0x180] sm:$0xf]
      %v427 = vld [vmem:[%s1 + $0x184] sm:$0xf]
      %v428 = vld [vmem:[%s1 + $0x188] sm:$0xf]
      %v429 = vld [vmem:[%s1 + $0x18c] sm:$0xf]
      %v430 = vld [vmem:[%s1 + $0x190] sm:$0xf]
      %v431 = vld [vmem:[%s1 + $0x194] sm:$0xf]
      %v432 = vld [vmem:[%s1 + $0x198] sm:$0xf]
      %v433 = vld [vmem:[%s1 + $0x19c] sm:$0xf]
      %v434 = vld [vmem:[%s1 + $0x1a0] sm:$0xf]
      %v435 = vld [vmem:[%s1 + $0x1a4] sm:$0xf]
      %v436 = vld [vmem:[%s1 + $0x1a8] sm:$0xf]
      %v437 = vld [vmem:[%s1 + $0x1ac] sm:$0xf]
      %v438 = vld [vmem:[%s1 + $0x1b0] sm:$0xf]
      %v439 = vld [vmem:[%s1 + $0x1b4] sm:$0xf]
      %v440 = vld [vmem:[%s1 + $0x1b8] sm:$0xf]
      %v441 = vld [vmem:[%s1 + $0x1bc] sm:$0xf]
      %v442 = vld [vmem:[%s1 + $0x1c0] sm:$0xf]
      %v443 = vld [vmem:[%s1 + $0x1c4] sm:$0xf]
      %v444 = vld [vmem:[%s1 + $0x1c8] sm:$0xf]
      %v445 = vld [vmem:[%s1 + $0x1cc] sm:$0xf]
      %v446 = vld [vmem:[%s1 + $0x1d0] sm:$0xf]
      %v447 = vld [vmem:[%s1 + $0x1d4] sm:$0xf]
      %v448 = vld [vmem:[%s1 + $0x1d8] sm:$0xf]
      %v449 = vld [vmem:[%s1 + $0x1dc] sm:$0xf]
      %v450 = vld [vmem:[%s1 + $0x1e0] sm:$0xf]
      %v451 = vld [vmem:[%s1 + $0x1e4] sm:$0xf]
      %v452 = vld [vmem:[%s1 + $0x1e8] sm:$0xf]
      %v453 = vld [vmem:[%s1 + $0x1ec] sm:$0xf]
      %v454 = vld [vmem:[%s1 + $0x1f0] sm:$0xf]
      %v455 = vld [vmem:[%s1 + $0x1f4] sm:$0xf]
      %v456 = vld [vmem:[%s1 + $0x1f8] sm:$0xf]
      %v457 = vld [vmem:[%s1 + $0x1fc] sm:$0xf]
      %v458 = vld [vmem:[%s1 + $0x200] sm:$0xf]
      %v459 = vld [vmem:[%s1 + $0x204] sm:$0xf]
      %v460 = vld [vmem:[%s1 + $0x208] sm:$0xf]
      %v461 = vld [vmem:[%s1 + $0x20c] sm:$0xf]
      %v462 = vld [vmem:[%s1 + $0x210] sm:$0xf]
      %v463 = vld [vmem:[%s1 + $0x214] sm:$0xf]
      %v464 = vld [vmem:[%s1 + $0x218] sm:$0xf]
      %v465 = vld [vmem:[%s1 + $0x21c] sm:$0xf]
      %v466 = vld [vmem:[%s1 + $0x220] sm:$0xf]
      %v467 = vld [vmem:[%s1 + $0x224] sm:$0xf]
      %v468 = vld [vmem:[%s1 + $0x228] sm:$0xf]
      %v469 = vld [vmem:[%s1 + $0x22c] sm:$0xf]
      %v470 = vld [vmem:[%s1 + $0x230] sm:$0xf]
      %v471 = vld [vmem:[%s1 + $0x234] sm:$0xf]
      %v472 = vld [vmem:[%s1 + $0x238] sm:$0xf]
      %v473 = vld [vmem:[%s1 + $0x23c] sm:$0xf]
      %v474 = vld [vmem:[%s1 + $0x240] sm:$0xf]
      %v475 = vld [vmem:[%s1 + $0x244] sm:$0xf]
      %v476 = vld [vmem:[%s1 + $0x248] sm:$0xf]
      %v477 = vld [vmem:[%s1 + $0x24c] sm:$0xf]
      %v478 = vld [vmem:[%s1 + $0x250] sm:$0xf]
      %v479 = vld [vmem:[%s1 + $0x254] sm:$0xf]
      %v480 = vld [vmem:[%s1 + $0x258] sm:$0xf]
      %v481 = vld [vmem:[%s1 + $0x25c] sm:$0xf]
      %v482 = vld [vmem:[%s1 + $0x260] sm:$0xf]
      %v483 = vld [vmem:[%s1 + $0x264] sm:$0xf]
      %v484 = vld [vmem:[%s1 + $0x268] sm:$0xf]
      %v485 = vld [vmem:[%s1 + $0x26c] sm:$0xf]
      %v486 = vld [vmem:[%s1 + $0x270] sm:$0xf]
      %v487 = vld [vmem:[%s1 + $0x274] sm:$0xf]
      %v488 = vld [vmem:[%s1 + $0x278] sm:$0xf]
      %v489 = vld [vmem:[%s1 + $0x27c] sm:$0xf]
      %v490 = vld [vmem:[%s1 + $0x280] sm:$0xf]
      %v491 = vld [vmem:[%s1 + $0x284] sm:$0xf]
      %v492 = vld [vmem:[%s1 + $0x288] sm:$0xf]
      %v493 = vld [vmem:[%s1 + $0x28c] sm:$0xf]
      %v494 = vld [vmem:[%s1 + $0x290] sm:$0xf]
      %v495 = vld [vmem:[%s1 + $0x294] sm:$0xf]
      %v496 = vld [vmem:[%s1 + $0x298] sm:$0xf]
      %v497 = vld [vmem:[%s1 + $0x29c] sm:$0xf]
      %v498 = vld [vmem:[%s1 + $0x2a0] sm:$0xf]
      %v499 = vld [vmem:[%s1 + $0x2a4] sm:$0xf]
      %v500 = vld [vmem:[%s1 + $0x2a8] sm:$0xf]
      %v501 = vld [vmem:[%s1 + $0x2ac] sm:$0xf]
      %v502 = vld [vmem:[%s1 + $0x2b0] sm:$0xf]
      %v503 = vld [vmem:[%s1 + $0x2b4] sm:$0xf]
      %v504 = vld [vmem:[%s1 + $0x2b8] sm:$0xf]
      %v505 = vld [vmem:[%s1 + $0x2bc] sm:$0xf]
      %v506 = vld [vmem:[%s1 + $0x2c0] sm:$0xf]
      %v507 = vld [vmem:[%s1 + $0x2c4] sm:$0xf]
      %v508 = vld [vmem:[%s1 + $0x2c8] sm:$0xf]
      %v509 = vld [vmem:[%s1 + $0x2cc] sm:$0xf]
      %v510 = vld [vmem:[%s1 + $0x2d0] sm:$0xf]
      %v511 = vld [vmem:[%s1 + $0x2d4] sm:$0xf]
      %v512 = vld [vmem:[%s1 + $0x2d8] sm:$0xf]
      %v513 = vld [vmem:[%s1 + $0x2dc] sm:$0xf]
      %v514 = vld [vmem:[%s1 + $0x2e0] sm:$0xf]
      %v515 = vld [vmem:[%s1 + $0x2e4] sm:$0xf]
      %v516 = vld [vmem:[%s1 + $0x2e8] sm:$0xf]
      %v517 = vld [vmem:[%s1 + $0x2ec] sm:$0xf]
      %v518 = vld [vmem:[%s1 + $0x2f0] sm:$0xf]
      %v519 = vld [vmem:[%s1 + $0x2f4] sm:$0xf]
      %v520 = vld [vmem:[%s1 + $0x2f8] sm:$0xf]
      %v521 = vld [vmem:[%s1 + $0x2fc] sm:$0xf]
      %v522 = vld [vmem:[%s1 + $0x300] sm:$0xf]
      %v523 = vld [vmem:[%s1 + $0x304] sm:$0xf]
      %v524 = vld [vmem:[%s1 + $0x308] sm:$0xf]
      %v525 = vld [vmem:[%s1 + $0x30c] sm:$0xf]
      %v526 = vld [vmem:[%s1 + $0x310] sm:$0xf]
      %v527 = vld [vmem:[%s1 + $0x314] sm:$0xf]
      %v528 = vld [vmem:[%s1 + $0x318] sm:$0xf]
      %v529 = vld [vmem:[%s1 + $0x31c] sm:$0xf]
      %v530 = vld [vmem:[%s1 + $0x320] sm:$0xf]
      %v531 = vld [vmem:[%s1 + $0x324] sm:$0xf]
      %v532 = vld [vmem:[%s1 + $0x328] sm:$0xf]
      %v533 = vld [vmem:[%s1 + $0x32c] sm:$0xf]
      %v534 = vld [vmem:[%s1 + $0x330] sm:$0xf]
      %v535 = vld [vmem:[%s1 + $0x334] sm:$0xf]
      %v536 = vld [vmem:[%s1 + $0x338] sm:$0xf]
      %v537 = vld [vmem:[%s1 + $0x33c] sm:$0xf]
      %v538 = vld [vmem:[%s1 + $0x340] sm:$0xf]
      %v539 = vld [vmem:[%s1 + $0x344] sm:$0xf]
      %v540 = vld [vmem:[%s1 + $0x348] sm:$0xf]
      %v541 = vld [vmem:[%s1 + $0x34c] sm:$0xf]
      %v542 = vld [vmem:[%s1 + $0x350] sm:$0xf]
      %v543 = vld [vmem:[%s1 + $0x354] sm:$0xf]
      %v544 = vld [vmem:[%s1 + $0x358] sm:$0xf]
      %v545 = vld [vmem:[%s1 + $0x35c] sm:$0xf]
      %v546 = vld [vmem:[%s1 + $0x360] sm:$0xf]
      %v547 = vld [vmem:[%s1 + $0x364] sm:$0xf]
      %v548 = vld [vmem:[%s1 + $0x368] sm:$0xf]
      %v549 = vld [vmem:[%s1 + $0x36c] sm:$0xf]
      %v550 = vld [vmem:[%s1 + $0x370] sm:$0xf]
      %v551 = vld [vmem:[%s1 + $0x374] sm:$0xf]
      %v552 = vld [vmem:[%s1 + $0x378] sm:$0xf]
      %v553 = vld [vmem:[%s1 + $0x37c] sm:$0xf]
      %v554 = vld [vmem:[%s1 + $0x380] sm:$0xf]
      %v555 = vld [vmem:[%s1 + $0x384] sm:$0xf]
      %v556 = vld [vmem:[%s1 + $0x388] sm:$0xf]
      %v557 = vld [vmem:[%s1 + $0x38c] sm:$0xf]
      %v558 = vld [vmem:[%s1 + $0x390] sm:$0xf]
      %v559 = vld [vmem:[%s1 + $0x394] sm:$0xf]
      %v560 = vld [vmem:[%s1 + $0x398] sm:$0xf]
      %v561 = vld [vmem:[%s1 + $0x39c] sm:$0xf]
      %v562 = vld [vmem:[%s1 + $0x3a0] sm:$0xf]
      %v563 = vld [vmem:[%s1 + $0x3a4] sm:$0xf]
      %v564 = vld [vmem:[%s1 + $0x3a8] sm:$0xf]
      %v565 = vld [vmem:[%s1 + $0x3ac] sm:$0xf]
      %v566 = vld [vmem:[%s1 + $0x3b0] sm:$0xf]
      %v567 = vld [vmem:[%s1 + $0x3b4] sm:$0xf]
      %v568 = vld [vmem:[%s1 + $0x3b8] sm:$0xf]
      %v569 = vld [vmem:[%s1 + $0x3bc] sm:$0xf]
      %v570 = vld [vmem:[%s1 + $0x3c0] sm:$0xf]
      %v571 = vld [vmem:[%s1 + $0x3c4] sm:$0xf]
      %v572 = vld [vmem:[%s1 + $0x3c8] sm:$0xf]
      %v573 = vld [vmem:[%s1 + $0x3cc] sm:$0xf]
      %v574 = vld [vmem:[%s1 + $0x3d0] sm:$0xf]
      %v575 = vld [vmem:[%s1 + $0x3d4] sm:$0xf]
      %v576 = vld [vmem:[%s1 + $0x3d8] sm:$0xf]
      %v577 = vld [vmem:[%s1 + $0x3dc] sm:$0xf]
      %v578 = vld [vmem:[%s1 + $0x3e0] sm:$0xf]
      %v579 = vld [vmem:[%s1 + $0x3e4] sm:$0xf]
      %v580 = vld [vmem:[%s1 + $0x3e8] sm:$0xf]
      %v581 = vld [vmem:[%s1 + $0x3ec] sm:$0xf]
      %v582 = vld [vmem:[%s1 + $0x3f0] sm:$0xf]
      %v583 = vld [vmem:[%s1 + $0x3f4] sm:$0xf]
      %v584 = vld [vmem:[%s1 + $0x3f8] sm:$0xf]
      %v585 = vld [vmem:[%s1 + $0x3fc] sm:$0xf]
      %v586 = vld [vmem:[%s2] sm:$0x1]
      %v588 = vlaneseq
      %v589 = vshrl.u32 %v588, 7
      %v590 = vsub.s32 0, %v589
      %v591 = vrot.slane %v586, %v590
      %v849 = vunpack.c.l.b16 %v330
      %v850 = vunpack.c.l.b16 %v331
      %v851 = vunpack.c.l.b16 %v332
      %v852 = vunpack.c.l.b16 %v333
      %v853 = vunpack.c.l.b16 %v334
      %v854 = vunpack.c.l.b16 %v335
      %v855 = vunpack.c.l.b16 %v336
      %v856 = vunpack.c.l.b16 %v337
      %v857 = vunpack.c.l.b16 %v338
      %v858 = vunpack.c.l.b16 %v339
      %v859 = vunpack.c.l.b16 %v340
      %v860 = vunpack.c.l.b16 %v341
      %v861 = vunpack.c.l.b16 %v342
      %v862 = vunpack.c.l.b16 %v343
      %v863 = vunpack.c.l.b16 %v344
      %v864 = vunpack.c.l.b16 %v345
      %v865 = vunpack.c.l.b16 %v346
      %v866 = vunpack.c.l.b16 %v347
      %v867 = vunpack.c.l.b16 %v348
      %v868 = vunpack.c.l.b16 %v349
      %v869 = vunpack.c.l.b16 %v350
      %v870 = vunpack.c.l.b16 %v351
      %v871 = vunpack.c.l.b16 %v352
      %v872 = vunpack.c.l.b16 %v353
      %v873 = vunpack.c.l.b16 %v354
      %v874 = vunpack.c.l.b16 %v355
      %v875 = vunpack.c.l.b16 %v356
      %v876 = vunpack.c.l.b16 %v357
      %v877 = vunpack.c.l.b16 %v358
      %v878 = vunpack.c.l.b16 %v359
      %v879 = vunpack.c.l.b16 %v360
      %v880 = vunpack.c.l.b16 %v361
      %v881 = vunpack.c.l.b16 %v362
      %v882 = vunpack.c.l.b16 %v363
      %v883 = vunpack.c.l.b16 %v364
      %v884 = vunpack.c.l.b16 %v365
      %v885 = vunpack.c.l.b16 %v366
      %v886 = vunpack.c.l.b16 %v367
      %v887 = vunpack.c.l.b16 %v368
      %v888 = vunpack.c.l.b16 %v369
      %v889 = vunpack.c.l.b16 %v370
      %v890 = vunpack.c.l.b16 %v371
      %v891 = vunpack.c.l.b16 %v372
      %v892 = vunpack.c.l.b16 %v373
      %v893 = vunpack.c.l.b16 %v374
      %v894 = vunpack.c.l.b16 %v375
      %v895 = vunpack.c.l.b16 %v376
      %v896 = vunpack.c.l.b16 %v377
      %v897 = vunpack.c.l.b16 %v378
      %v898 = vunpack.c.l.b16 %v379
      %v899 = vunpack.c.l.b16 %v380
      %v900 = vunpack.c.l.b16 %v381
      %v901 = vunpack.c.l.b16 %v382
      %v902 = vunpack.c.l.b16 %v383
      %v903 = vunpack.c.l.b16 %v384
      %v904 = vunpack.c.l.b16 %v385
      %v905 = vunpack.c.l.b16 %v386
      %v906 = vunpack.c.l.b16 %v387
      %v907 = vunpack.c.l.b16 %v388
      %v908 = vunpack.c.l.b16 %v389
      %v909 = vunpack.c.l.b16 %v390
      %v910 = vunpack.c.l.b16 %v391
      %v911 = vunpack.c.l.b16 %v392
      %v912 = vunpack.c.l.b16 %v393
      %v913 = vunpack.c.l.b16 %v394
      %v914 = vunpack.c.l.b16 %v395
      %v915 = vunpack.c.l.b16 %v396
      %v916 = vunpack.c.l.b16 %v397
      %v917 = vunpack.c.l.b16 %v398
      %v918 = vunpack.c.l.b16 %v399
      %v919 = vunpack.c.l.b16 %v400
      %v920 = vunpack.c.l.b16 %v401
      %v921 = vunpack.c.l.b16 %v402
      %v922 = vunpack.c.l.b16 %v403
      %v923 = vunpack.c.l.b16 %v404
      %v924 = vunpack.c.l.b16 %v405
      %v925 = vunpack.c.l.b16 %v406
      %v926 = vunpack.c.l.b16 %v407
      %v927 = vunpack.c.l.b16 %v408
      %v928 = vunpack.c.l.b16 %v409
      %v929 = vunpack.c.l.b16 %v410
      %v930 = vunpack.c.l.b16 %v411
      %v931 = vunpack.c.l.b16 %v412
      %v932 = vunpack.c.l.b16 %v413
      %v933 = vunpack.c.l.b16 %v414
      %v934 = vunpack.c.l.b16 %v415
      %v935 = vunpack.c.l.b16 %v416
      %v936 = vunpack.c.l.b16 %v417
      %v937 = vunpack.c.l.b16 %v418
      %v938 = vunpack.c.l.b16 %v419
      %v939 = vunpack.c.l.b16 %v420
      %v940 = vunpack.c.l.b16 %v421
      %v941 = vunpack.c.l.b16 %v422
      %v942 = vunpack.c.l.b16 %v423
      %v943 = vunpack.c.l.b16 %v424
      %v944 = vunpack.c.l.b16 %v425
      %v945 = vunpack.c.l.b16 %v426
      %v946 = vunpack.c.l.b16 %v427
      %v947 = vunpack.c.l.b16 %v428
      %v948 = vunpack.c.l.b16 %v429
      %v949 = vunpack.c.l.b16 %v430
      %v950 = vunpack.c.l.b16 %v431
      %v951 = vunpack.c.l.b16 %v432
      %v952 = vunpack.c.l.b16 %v433
      %v953 = vunpack.c.l.b16 %v434
      %v954 = vunpack.c.l.b16 %v435
      %v955 = vunpack.c.l.b16 %v436
      %v956 = vunpack.c.l.b16 %v437
      %v957 = vunpack.c.l.b16 %v438
      %v958 = vunpack.c.l.b16 %v439
      %v959 = vunpack.c.l.b16 %v440
      %v960 = vunpack.c.l.b16 %v441
      %v961 = vunpack.c.l.b16 %v442
      %v962 = vunpack.c.l.b16 %v443
      %v963 = vunpack.c.l.b16 %v444
      %v964 = vunpack.c.l.b16 %v445
      %v965 = vunpack.c.l.b16 %v446
      %v966 = vunpack.c.l.b16 %v447
      %v967 = vunpack.c.l.b16 %v448
      %v968 = vunpack.c.l.b16 %v449
      %v969 = vunpack.c.l.b16 %v450
      %v970 = vunpack.c.l.b16 %v451
      %v971 = vunpack.c.l.b16 %v452
      %v972 = vunpack.c.l.b16 %v453
      %v973 = vunpack.c.l.b16 %v454
      %v974 = vunpack.c.l.b16 %v455
      %v975 = vunpack.c.l.b16 %v456
      %v976 = vunpack.c.l.b16 %v457
      %v977 = vunpack.c.l.b16 %v458
      %v978 = vunpack.c.l.b16 %v459
      %v979 = vunpack.c.l.b16 %v460
      %v980 = vunpack.c.l.b16 %v461
      %v981 = vunpack.c.l.b16 %v462
      %v982 = vunpack.c.l.b16 %v463
      %v983 = vunpack.c.l.b16 %v464
      %v984 = vunpack.c.l.b16 %v465
      %v985 = vunpack.c.l.b16 %v466
      %v986 = vunpack.c.l.b16 %v467
      %v987 = vunpack.c.l.b16 %v468
      %v988 = vunpack.c.l.b16 %v469
      %v989 = vunpack.c.l.b16 %v470
      %v990 = vunpack.c.l.b16 %v471
      %v991 = vunpack.c.l.b16 %v472
      %v992 = vunpack.c.l.b16 %v473
      %v993 = vunpack.c.l.b16 %v474
      %v994 = vunpack.c.l.b16 %v475
      %v995 = vunpack.c.l.b16 %v476
      %v996 = vunpack.c.l.b16 %v477
      %v997 = vunpack.c.l.b16 %v478
      %v998 = vunpack.c.l.b16 %v479
      %v999 = vunpack.c.l.b16 %v480
      %v1000 = vunpack.c.l.b16 %v481
      %v1001 = vunpack.c.l.b16 %v482
      %v1002 = vunpack.c.l.b16 %v483
      %v1003 = vunpack.c.l.b16 %v484
      %v1004 = vunpack.c.l.b16 %v485
      %v1005 = vunpack.c.l.b16 %v486
      %v1006 = vunpack.c.l.b16 %v487
      %v1007 = vunpack.c.l.b16 %v488
      %v1008 = vunpack.c.l.b16 %v489
      %v1009 = vunpack.c.l.b16 %v490
      %v1010 = vunpack.c.l.b16 %v491
      %v1011 = vunpack.c.l.b16 %v492
      %v1012 = vunpack.c.l.b16 %v493
      %v1013 = vunpack.c.l.b16 %v494
      %v1014 = vunpack.c.l.b16 %v495
      %v1015 = vunpack.c.l.b16 %v496
      %v1016 = vunpack.c.l.b16 %v497
      %v1017 = vunpack.c.l.b16 %v498
      %v1018 = vunpack.c.l.b16 %v499
      %v1019 = vunpack.c.l.b16 %v500
      %v1020 = vunpack.c.l.b16 %v501
      %v1021 = vunpack.c.l.b16 %v502
      %v1022 = vunpack.c.l.b16 %v503
      %v1023 = vunpack.c.l.b16 %v504
      %v1024 = vunpack.c.l.b16 %v505
      %v1025 = vunpack.c.l.b16 %v506
      %v1026 = vunpack.c.l.b16 %v507
      %v1027 = vunpack.c.l.b16 %v508
      %v1028 = vunpack.c.l.b16 %v509
      %v1029 = vunpack.c.l.b16 %v510
      %v1030 = vunpack.c.l.b16 %v511
      %v1031 = vunpack.c.l.b16 %v512
      %v1032 = vunpack.c.l.b16 %v513
      %v1033 = vunpack.c.l.b16 %v514
      %v1034 = vunpack.c.l.b16 %v515
      %v1035 = vunpack.c.l.b16 %v516
      %v1036 = vunpack.c.l.b16 %v517
      %v1037 = vunpack.c.l.b16 %v518
      %v1038 = vunpack.c.l.b16 %v519
      %v1039 = vunpack.c.l.b16 %v520
      %v1040 = vunpack.c.l.b16 %v521
      %v1041 = vunpack.c.l.b16 %v522
      %v1042 = vunpack.c.l.b16 %v523
      %v1043 = vunpack.c.l.b16 %v524
      %v1044 = vunpack.c.l.b16 %v525
      %v1045 = vunpack.c.l.b16 %v526
      %v1046 = vunpack.c.l.b16 %v527
      %v1047 = vunpack.c.l.b16 %v528
      %v1048 = vunpack.c.l.b16 %v529
      %v1049 = vunpack.c.l.b16 %v530
      %v1050 = vunpack.c.l.b16 %v531
      %v1051 = vunpack.c.l.b16 %v532
      %v1052 = vunpack.c.l.b16 %v533
      %v1053 = vunpack.c.l.b16 %v534
      %v1054 = vunpack.c.l.b16 %v535
      %v1055 = vunpack.c.l.b16 %v536
      %v1056 = vunpack.c.l.b16 %v537
      %v1057 = vunpack.c.l.b16 %v538
      %v1058 = vunpack.c.l.b16 %v539
      %v1059 = vunpack.c.l.b16 %v540
      %v1060 = vunpack.c.l.b16 %v541
      %v1061 = vunpack.c.l.b16 %v542
      %v1062 = vunpack.c.l.b16 %v543
      %v1063 = vunpack.c.l.b16 %v544
      %v1064 = vunpack.c.l.b16 %v545
      %v1065 = vunpack.c.l.b16 %v546
      %v1066 = vunpack.c.l.b16 %v547
      %v1067 = vunpack.c.l.b16 %v548
      %v1068 = vunpack.c.l.b16 %v549
      %v1069 = vunpack.c.l.b16 %v550
      %v1070 = vunpack.c.l.b16 %v551
      %v1071 = vunpack.c.l.b16 %v552
      %v1072 = vunpack.c.l.b16 %v553
      %v1073 = vunpack.c.l.b16 %v554
      %v1074 = vunpack.c.l.b16 %v555
      %v1075 = vunpack.c.l.b16 %v556
      %v1076 = vunpack.c.l.b16 %v557
      %v1077 = vunpack.c.l.b16 %v558
      %v1078 = vunpack.c.l.b16 %v559
      %v1079 = vunpack.c.l.b16 %v560
      %v1080 = vunpack.c.l.b16 %v561
      %v1081 = vunpack.c.l.b16 %v562
      %v1082 = vunpack.c.l.b16 %v563
      %v1083 = vunpack.c.l.b16 %v564
      %v1084 = vunpack.c.l.b16 %v565
      %v1085 = vunpack.c.l.b16 %v566
      %v1086 = vunpack.c.l.b16 %v567
      %v1087 = vunpack.c.l.b16 %v568
      %v1088 = vunpack.c.l.b16 %v569
      %v1089 = vunpack.c.l.b16 %v570
      %v1090 = vunpack.c.l.b16 %v571
      %v1091 = vunpack.c.l.b16 %v572
      %v1092 = vunpack.c.l.b16 %v573
      %v1093 = vunpack.c.l.b16 %v574
      %v1094 = vunpack.c.l.b16 %v575
      %v1095 = vunpack.c.l.b16 %v576
      %v1096 = vunpack.c.l.b16 %v577
      %v1097 = vunpack.c.l.b16 %v578
      %v1098 = vunpack.c.l.b16 %v579
      %v1099 = vunpack.c.l.b16 %v580
      %v1100 = vunpack.c.l.b16 %v581
      %v1101 = vunpack.c.l.b16 %v582
      %v1102 = vunpack.c.l.b16 %v583
      %v1103 = vunpack.c.l.b16 %v584
      %v1104 = vunpack.c.l.b16 %v585
      %v1105 = vpack.c.b16 %v850, %v849
      %v1106 = vpack.c.b16 %v852, %v851
      %v1107 = vpack.c.b16 %v854, %v853
      %v1108 = vpack.c.b16 %v856, %v855
      %v1109 = vpack.c.b16 %v858, %v857
      %v1110 = vpack.c.b16 %v860, %v859
      %v1111 = vpack.c.b16 %v862, %v861
      %v1112 = vpack.c.b16 %v864, %v863
      %v1113 = vpack.c.b16 %v866, %v865
      %v1114 = vpack.c.b16 %v868, %v867
      %v1115 = vpack.c.b16 %v870, %v869
      %v1116 = vpack.c.b16 %v872, %v871
      %v1117 = vpack.c.b16 %v874, %v873
      %v1118 = vpack.c.b16 %v876, %v875
      %v1119 = vpack.c.b16 %v878, %v877
      %v1120 = vpack.c.b16 %v880, %v879
      %v1121 = vpack.c.b16 %v882, %v881
      %v1122 = vpack.c.b16 %v884, %v883
      %v1123 = vpack.c.b16 %v886, %v885
      %v1124 = vpack.c.b16 %v888, %v887
      %v1125 = vpack.c.b16 %v890, %v889
      %v1126 = vpack.c.b16 %v892, %v891
      %v1127 = vpack.c.b16 %v894, %v893
      %v1128 = vpack.c.b16 %v896, %v895
      %v1129 = vpack.c.b16 %v898, %v897
      %v1130 = vpack.c.b16 %v900, %v899
      %v1131 = vpack.c.b16 %v902, %v901
      %v1132 = vpack.c.b16 %v904, %v903
      %v1133 = vpack.c.b16 %v906, %v905
      %v1134 = vpack.c.b16 %v908, %v907
      %v1135 = vpack.c.b16 %v910, %v909
      %v1136 = vpack.c.b16 %v912, %v911
      %v1137 = vpack.c.b16 %v914, %v913
      %v1138 = vpack.c.b16 %v916, %v915
      %v1139 = vpack.c.b16 %v918, %v917
      %v1140 = vpack.c.b16 %v920, %v919
      %v1141 = vpack.c.b16 %v922, %v921
      %v1142 = vpack.c.b16 %v924, %v923
      %v1143 = vpack.c.b16 %v926, %v925
      %v1144 = vpack.c.b16 %v928, %v927
      %v1145 = vpack.c.b16 %v930, %v929
      %v1146 = vpack.c.b16 %v932, %v931
      %v1147 = vpack.c.b16 %v934, %v933
      %v1148 = vpack.c.b16 %v936, %v935
      %v1149 = vpack.c.b16 %v938, %v937
      %v1150 = vpack.c.b16 %v940, %v939
      %v1151 = vpack.c.b16 %v942, %v941
      %v1152 = vpack.c.b16 %v944, %v943
      %v1153 = vpack.c.b16 %v946, %v945
      %v1154 = vpack.c.b16 %v948, %v947
      %v1155 = vpack.c.b16 %v950, %v949
      %v1156 = vpack.c.b16 %v952, %v951
      %v1157 = vpack.c.b16 %v954, %v953
      %v1158 = vpack.c.b16 %v956, %v955
      %v1159 = vpack.c.b16 %v958, %v957
      %v1160 = vpack.c.b16 %v960, %v959
      %v1161 = vpack.c.b16 %v962, %v961
      %v1162 = vpack.c.b16 %v964, %v963
      %v1163 = vpack.c.b16 %v966, %v965
      %v1164 = vpack.c.b16 %v968, %v967
      %v1165 = vpack.c.b16 %v970, %v969
      %v1166 = vpack.c.b16 %v972, %v971
      %v1167 = vpack.c.b16 %v974, %v973
      %v1168 = vpack.c.b16 %v976, %v975
      %v1169 = vpack.c.b16 %v978, %v977
      %v1170 = vpack.c.b16 %v980, %v979
      %v1171 = vpack.c.b16 %v982, %v981
      %v1172 = vpack.c.b16 %v984, %v983
      %v1173 = vpack.c.b16 %v986, %v985
      %v1174 = vpack.c.b16 %v988, %v987
      %v1175 = vpack.c.b16 %v990, %v989
      %v1176 = vpack.c.b16 %v992, %v991
      %v1177 = vpack.c.b16 %v994, %v993
      %v1178 = vpack.c.b16 %v996, %v995
      %v1179 = vpack.c.b16 %v998, %v997
      %v1180 = vpack.c.b16 %v1000, %v999
      %v1181 = vpack.c.b16 %v1002, %v1001
      %v1182 = vpack.c.b16 %v1004, %v1003
      %v1183 = vpack.c.b16 %v1006, %v1005
      %v1184 = vpack.c.b16 %v1008, %v1007
      %v1185 = vpack.c.b16 %v1010, %v1009
      %v1186 = vpack.c.b16 %v1012, %v1011
      %v1187 = vpack.c.b16 %v1014, %v1013
      %v1188 = vpack.c.b16 %v1016, %v1015
      %v1189 = vpack.c.b16 %v1018, %v1017
      %v1190 = vpack.c.b16 %v1020, %v1019
      %v1191 = vpack.c.b16 %v1022, %v1021
      %v1192 = vpack.c.b16 %v1024, %v1023
      %v1193 = vpack.c.b16 %v1026, %v1025
      %v1194 = vpack.c.b16 %v1028, %v1027
      %v1195 = vpack.c.b16 %v1030, %v1029
      %v1196 = vpack.c.b16 %v1032, %v1031
      %v1197 = vpack.c.b16 %v1034, %v1033
      %v1198 = vpack.c.b16 %v1036, %v1035
      %v1199 = vpack.c.b16 %v1038, %v1037
      %v1200 = vpack.c.b16 %v1040, %v1039
      %v1201 = vpack.c.b16 %v1042, %v1041
      %v1202 = vpack.c.b16 %v1044, %v1043
      %v1203 = vpack.c.b16 %v1046, %v1045
      %v1204 = vpack.c.b16 %v1048, %v1047
      %v1205 = vpack.c.b16 %v1050, %v1049
      %v1206 = vpack.c.b16 %v1052, %v1051
      %v1207 = vpack.c.b16 %v1054, %v1053
      %v1208 = vpack.c.b16 %v1056, %v1055
      %v1209 = vpack.c.b16 %v1058, %v1057
      %v1210 = vpack.c.b16 %v1060, %v1059
      %v1211 = vpack.c.b16 %v1062, %v1061
      %v1212 = vpack.c.b16 %v1064, %v1063
      %v1213 = vpack.c.b16 %v1066, %v1065
      %v1214 = vpack.c.b16 %v1068, %v1067
      %v1215 = vpack.c.b16 %v1070, %v1069
      %v1216 = vpack.c.b16 %v1072, %v1071
      %v1217 = vpack.c.b16 %v1074, %v1073
      %v1218 = vpack.c.b16 %v1076, %v1075
      %v1219 = vpack.c.b16 %v1078, %v1077
      %v1220 = vpack.c.b16 %v1080, %v1079
      %v1221 = vpack.c.b16 %v1082, %v1081
      %v1222 = vpack.c.b16 %v1084, %v1083
      %v1223 = vpack.c.b16 %v1086, %v1085
      %v1224 = vpack.c.b16 %v1088, %v1087
      %v1225 = vpack.c.b16 %v1090, %v1089
      %v1226 = vpack.c.b16 %v1092, %v1091
      %v1227 = vpack.c.b16 %v1094, %v1093
      %v1228 = vpack.c.b16 %v1096, %v1095
      %v1229 = vpack.c.b16 %v1098, %v1097
      %v1230 = vpack.c.b16 %v1100, %v1099
      %v1231 = vpack.c.b16 %v1102, %v1101
      %v1232 = vpack.c.b16 %v1104, %v1103
      %1361 = vmatprep.subr.bf16.mxu0 0
      %1362 = vmatpush1.bf16.msra.mxu0 %v1105
      %1363 = vmatprep.subr.bf16.mxu0 0
      %1364 = vmatpush1.bf16.msra.mxu0 %v1106
      %1365 = vmatprep.subr.bf16.mxu0 0
      %1366 = vmatpush1.bf16.msra.mxu0 %v1107
      %1367 = vmatprep.subr.bf16.mxu0 0
      %1368 = vmatpush1.bf16.msra.mxu0 %v1108
      %1369 = vmatprep.subr.bf16.mxu0 0
      %1370 = vmatpush1.bf16.msra.mxu0 %v1109
      %1371 = vmatprep.subr.bf16.mxu0 0
      %1372 = vmatpush1.bf16.msra.mxu0 %v1110
      %1373 = vmatprep.subr.bf16.mxu0 0
      %1374 = vmatpush1.bf16.msra.mxu0 %v1111
      %1375 = vmatprep.subr.bf16.mxu0 0
      %1376 = vmatpush1.bf16.msra.mxu0 %v1112
      %1377 = vmatprep.subr.bf16.mxu0 0
      %1378 = vmatpush1.bf16.msra.mxu0 %v1113
      %1379 = vmatprep.subr.bf16.mxu0 0
      %1380 = vmatpush1.bf16.msra.mxu0 %v1114
      %1381 = vmatprep.subr.bf16.mxu0 0
      %1382 = vmatpush1.bf16.msra.mxu0 %v1115
      %1383 = vmatprep.subr.bf16.mxu0 0
      %1384 = vmatpush1.bf16.msra.mxu0 %v1116
      %1385 = vmatprep.subr.bf16.mxu0 0
      %1386 = vmatpush1.bf16.msra.mxu0 %v1117
      %1387 = vmatprep.subr.bf16.mxu0 0
      %1388 = vmatpush1.bf16.msra.mxu0 %v1118
      %1389 = vmatprep.subr.bf16.mxu0 0
      %1390 = vmatpush1.bf16.msra.mxu0 %v1119
      %1391 = vmatprep.subr.bf16.mxu0 0
      %1392 = vmatpush1.bf16.msra.mxu0 %v1120
      %1393 = vmatprep.mubr.bf16.mxu0 %v272
      %1394 = vmatmul.mubr.bf16.gmra.mrb[0].mxu0 %v268
      %v1395 = vpop.f32.mrb[0].mxu0
      %v1396 = vadd.f32 %v591, %v1395
      %v1397 = vpop.f32.mrb[0].mxu0
      %v1398 = vpop.f32.mrb[0].mxu0
      %v1399 = vpop.f32.mrb[0].mxu0
      %1400 = vdwg.mxu0
      %1401 = vmatprep.subr.bf16.mxu0 0
      %1402 = vmatpush1.bf16.msra.mxu0 %v1121
      %1403 = vmatprep.subr.bf16.mxu0 0
      %1404 = vmatpush1.bf16.msra.mxu0 %v1122
      %1405 = vmatprep.subr.bf16.mxu0 0
      %1406 = vmatpush1.bf16.msra.mxu0 %v1123
      %1407 = vmatprep.subr.bf16.mxu0 0
      %1408 = vmatpush1.bf16.msra.mxu0 %v1124
      %1409 = vmatprep.subr.bf16.mxu0 0
      %1410 = vmatpush1.bf16.msra.mxu0 %v1125
      %1411 = vmatprep.subr.bf16.mxu0 0
      %1412 = vmatpush1.bf16.msra.mxu0 %v1126
      %1413 = vmatprep.subr.bf16.mxu0 0
      %1414 = vmatpush1.bf16.msra.mxu0 %v1127
      %1415 = vmatprep.subr.bf16.mxu0 0
      %1416 = vmatpush1.bf16.msra.mxu0 %v1128
      %1417 = vmatprep.subr.bf16.mxu0 0
      %1418 = vmatpush1.bf16.msra.mxu0 %v1129
      %1419 = vmatprep.subr.bf16.mxu0 0
      %1420 = vmatpush1.bf16.msra.mxu0 %v1130
      %1421 = vmatprep.subr.bf16.mxu0 0
      %1422 = vmatpush1.bf16.msra.mxu0 %v1131
      %1423 = vmatprep.subr.bf16.mxu0 0
      %1424 = vmatpush1.bf16.msra.mxu0 %v1132
      %1425 = vmatprep.subr.bf16.mxu0 0
      %1426 = vmatpush1.bf16.msra.mxu0 %v1133
      %1427 = vmatprep.subr.bf16.mxu0 0
      %1428 = vmatpush1.bf16.msra.mxu0 %v1134
      %1429 = vmatprep.subr.bf16.mxu0 0
      %1430 = vmatpush1.bf16.msra.mxu0 %v1135
      %1431 = vmatprep.subr.bf16.mxu0 0
      %1432 = vmatpush1.bf16.msra.mxu0 %v1136
      %1433 = vmatprep.mubr.bf16.mxu0 %v280
      %1434 = vmatmul.mubr.bf16.gmra.mrb[0].mxu0 %v276
      %v1435 = vpop.f32.mrb[0].mxu0
      %v1436 = vadd.f32 %v1396, %v1435
      %v1437 = vpop.f32.mrb[0].mxu0
      %v1438 = vpop.f32.mrb[0].mxu0
      %v1439 = vpop.f32.mrb[0].mxu0
      %1440 = vdwg.mxu0
      %1441 = vmatprep.subr.bf16.mxu0 0
      %1442 = vmatpush1.bf16.msra.mxu0 %v1137
      %1443 = vmatprep.subr.bf16.mxu0 0
      %1444 = vmatpush1.bf16.msra.mxu0 %v1138
      %1445 = vmatprep.subr.bf16.mxu0 0
      %1446 = vmatpush1.bf16.msra.mxu0 %v1139
      %1447 = vmatprep.subr.bf16.mxu0 0
      %1448 = vmatpush1.bf16.msra.mxu0 %v1140
      %1449 = vmatprep.subr.bf16.mxu0 0
      %1450 = vmatpush1.bf16.msra.mxu0 %v1141
      %1451 = vmatprep.subr.bf16.mxu0 0
      %1452 = vmatpush1.bf16.msra.mxu0 %v1142
      %1453 = vmatprep.subr.bf16.mxu0 0
      %1454 = vmatpush1.bf16.msra.mxu0 %v1143
      %1455 = vmatprep.subr.bf16.mxu0 0
      %1456 = vmatpush1.bf16.msra.mxu0 %v1144
      %1457 = vmatprep.subr.bf16.mxu0 0
      %1458 = vmatpush1.bf16.msra.mxu0 %v1145
      %1459 = vmatprep.subr.bf16.mxu0 0
      %1460 = vmatpush1.bf16.msra.mxu0 %v1146
      %1461 = vmatprep.subr.bf16.mxu0 0
      %1462 = vmatpush1.bf16.msra.mxu0 %v1147
      %1463 = vmatprep.subr.bf16.mxu0 0
      %1464 = vmatpush1.bf16.msra.mxu0 %v1148
      %1465 = vmatprep.subr.bf16.mxu0 0
      %1466 = vmatpush1.bf16.msra.mxu0 %v1149
      %1467 = vmatprep.subr.bf16.mxu0 0
      %1468 = vmatpush1.bf16.msra.mxu0 %v1150
      %1469 = vmatprep.subr.bf16.mxu0 0
      %1470 = vmatpush1.bf16.msra.mxu0 %v1151
      %1471 = vmatprep.subr.bf16.mxu0 0
      %1472 = vmatpush1.bf16.msra.mxu0 %v1152
      %1473 = vmatprep.mubr.bf16.mxu0 %v288
      %1474 = vmatmul.mubr.bf16.gmra.mrb[0].mxu0 %v284
      %v1475 = vpop.f32.mrb[0].mxu0
      %v1476 = vadd.f32 %v1436, %v1475
      %v1477 = vpop.f32.mrb[0].mxu0
      %v1478 = vpop.f32.mrb[0].mxu0
      %v1479 = vpop.f32.mrb[0].mxu0
      %1480 = vdwg.mxu0
      %1481 = vmatprep.subr.bf16.mxu0 0
      %1482 = vmatpush1.bf16.msra.mxu0 %v1153
      %1483 = vmatprep.subr.bf16.mxu0 0
      %1484 = vmatpush1.bf16.msra.mxu0 %v1154
      %1485 = vmatprep.subr.bf16.mxu0 0
      %1486 = vmatpush1.bf16.msra.mxu0 %v1155
      %1487 = vmatprep.subr.bf16.mxu0 0
      %1488 = vmatpush1.bf16.msra.mxu0 %v1156
      %1489 = vmatprep.subr.bf16.mxu0 0
      %1490 = vmatpush1.bf16.msra.mxu0 %v1157
      %1491 = vmatprep.subr.bf16.mxu0 0
      %1492 = vmatpush1.bf16.msra.mxu0 %v1158
      %1493 = vmatprep.subr.bf16.mxu0 0
      %1494 = vmatpush1.bf16.msra.mxu0 %v1159
      %1495 = vmatprep.subr.bf16.mxu0 0
      %1496 = vmatpush1.bf16.msra.mxu0 %v1160
      %1497 = vmatprep.subr.bf16.mxu0 0
      %1498 = vmatpush1.bf16.msra.mxu0 %v1161
      %1499 = vmatprep.subr.bf16.mxu0 0
      %1500 = vmatpush1.bf16.msra.mxu0 %v1162
      %1501 = vmatprep.subr.bf16.mxu0 0
      %1502 = vmatpush1.bf16.msra.mxu0 %v1163
      %1503 = vmatprep.subr.bf16.mxu0 0
      %1504 = vmatpush1.bf16.msra.mxu0 %v1164
      %1505 = vmatprep.subr.bf16.mxu0 0
      %1506 = vmatpush1.bf16.msra.mxu0 %v1165
      %1507 = vmatprep.subr.bf16.mxu0 0
      %1508 = vmatpush1.bf16.msra.mxu0 %v1166
      %1509 = vmatprep.subr.bf16.mxu0 0
      %1510 = vmatpush1.bf16.msra.mxu0 %v1167
      %1511 = vmatprep.subr.bf16.mxu0 0
      %1512 = vmatpush1.bf16.msra.mxu0 %v1168
      %1513 = vmatprep.mubr.bf16.mxu0 %v296
      %1514 = vmatmul.mubr.bf16.gmra.mrb[0].mxu0 %v292
      %v1515 = vpop.f32.mrb[0].mxu0
      %v1516 = vadd.f32 %v1476, %v1515
      %v1517 = vpop.f32.mrb[0].mxu0
      %v1518 = vpop.f32.mrb[0].mxu0
      %v1519 = vpop.f32.mrb[0].mxu0
      %1520 = vdwg.mxu0
      %1521 = vmatprep.subr.bf16.mxu0 0
      %1522 = vmatpush1.bf16.msra.mxu0 %v1169
      %1523 = vmatprep.subr.bf16.mxu0 0
      %1524 = vmatpush1.bf16.msra.mxu0 %v1170
      %1525 = vmatprep.subr.bf16.mxu0 0
      %1526 = vmatpush1.bf16.msra.mxu0 %v1171
      %1527 = vmatprep.subr.bf16.mxu0 0
      %1528 = vmatpush1.bf16.msra.mxu0 %v1172
      %1529 = vmatprep.subr.bf16.mxu0 0
      %1530 = vmatpush1.bf16.msra.mxu0 %v1173
      %1531 = vmatprep.subr.bf16.mxu0 0
      %1532 = vmatpush1.bf16.msra.mxu0 %v1174
      %1533 = vmatprep.subr.bf16.mxu0 0
      %1534 = vmatpush1.bf16.msra.mxu0 %v1175
      %1535 = vmatprep.subr.bf16.mxu0 0
      %1536 = vmatpush1.bf16.msra.mxu0 %v1176
      %1537 = vmatprep.subr.bf16.mxu0 0
      %1538 = vmatpush1.bf16.msra.mxu0 %v1177
      %1539 = vmatprep.subr.bf16.mxu0 0
      %1540 = vmatpush1.bf16.msra.mxu0 %v1178
      %1541 = vmatprep.subr.bf16.mxu0 0
      %1542 = vmatpush1.bf16.msra.mxu0 %v1179
      %1543 = vmatprep.subr.bf16.mxu0 0
      %1544 = vmatpush1.bf16.msra.mxu0 %v1180
      %1545 = vmatprep.subr.bf16.mxu0 0
      %1546 = vmatpush1.bf16.msra.mxu0 %v1181
      %1547 = vmatprep.subr.bf16.mxu0 0
      %1548 = vmatpush1.bf16.msra.mxu0 %v1182
      %1549 = vmatprep.subr.bf16.mxu0 0
      %1550 = vmatpush1.bf16.msra.mxu0 %v1183
      %1551 = vmatprep.subr.bf16.mxu0 0
      %1552 = vmatpush1.bf16.msra.mxu0 %v1184
      %1553 = vmatprep.mubr.bf16.mxu0 %v304
      %1554 = vmatmul.mubr.bf16.gmra.mrb[0].mxu0 %v300
      %v1555 = vpop.f32.mrb[0].mxu0
      %v1556 = vadd.f32 %v1516, %v1555
      %v1557 = vpop.f32.mrb[0].mxu0
      %v1558 = vpop.f32.mrb[0].mxu0
      %v1559 = vpop.f32.mrb[0].mxu0
      %1560 = vdwg.mxu0
      %1561 = vmatprep.subr.bf16.mxu0 0
      %1562 = vmatpush1.bf16.msra.mxu0 %v1185
      %1563 = vmatprep.subr.bf16.mxu0 0
      %1564 = vmatpush1.bf16.msra.mxu0 %v1186
      %1565 = vmatprep.subr.bf16.mxu0 0
      %1566 = vmatpush1.bf16.msra.mxu0 %v1187
      %1567 = vmatprep.subr.bf16.mxu0 0
      %1568 = vmatpush1.bf16.msra.mxu0 %v1188
      %1569 = vmatprep.subr.bf16.mxu0 0
      %1570 = vmatpush1.bf16.msra.mxu0 %v1189
      %1571 = vmatprep.subr.bf16.mxu0 0
      %1572 = vmatpush1.bf16.msra.mxu0 %v1190
      %1573 = vmatprep.subr.bf16.mxu0 0
      %1574 = vmatpush1.bf16.msra.mxu0 %v1191
      %1575 = vmatprep.subr.bf16.mxu0 0
      %1576 = vmatpush1.bf16.msra.mxu0 %v1192
      %1577 = vmatprep.subr.bf16.mxu0 0
      %1578 = vmatpush1.bf16.msra.mxu0 %v1193
      %1579 = vmatprep.subr.bf16.mxu0 0
      %1580 = vmatpush1.bf16.msra.mxu0 %v1194
      %1581 = vmatprep.subr.bf16.mxu0 0
      %1582 = vmatpush1.bf16.msra.mxu0 %v1195
      %1583 = vmatprep.subr.bf16.mxu0 0
      %1584 = vmatpush1.bf16.msra.mxu0 %v1196
      %1585 = vmatprep.subr.bf16.mxu0 0
      %1586 = vmatpush1.bf16.msra.mxu0 %v1197
      %1587 = vmatprep.subr.bf16.mxu0 0
      %1588 = vmatpush1.bf16.msra.mxu0 %v1198
      %1589 = vmatprep.subr.bf16.mxu0 0
      %1590 = vmatpush1.bf16.msra.mxu0 %v1199
      %1591 = vmatprep.subr.bf16.mxu0 0
      %1592 = vmatpush1.bf16.msra.mxu0 %v1200
      %1593 = vmatprep.mubr.bf16.mxu0 %v312
      %1594 = vmatmul.mubr.bf16.gmra.mrb[0].mxu0 %v308
      %v1595 = vpop.f32.mrb[0].mxu0
      %v1596 = vadd.f32 %v1556, %v1595
      %v1597 = vpop.f32.mrb[0].mxu0
      %v1598 = vpop.f32.mrb[0].mxu0
      %v1599 = vpop.f32.mrb[0].mxu0
      %1600 = vdwg.mxu0
      %1601 = vmatprep.subr.bf16.mxu0 0
      %1602 = vmatpush1.bf16.msra.mxu0 %v1201
      %1603 = vmatprep.subr.bf16.mxu0 0
      %1604 = vmatpush1.bf16.msra.mxu0 %v1202
      %1605 = vmatprep.subr.bf16.mxu0 0
      %1606 = vmatpush1.bf16.msra.mxu0 %v1203
      %1607 = vmatprep.subr.bf16.mxu0 0
      %1608 = vmatpush1.bf16.msra.mxu0 %v1204
      %1609 = vmatprep.subr.bf16.mxu0 0
      %1610 = vmatpush1.bf16.msra.mxu0 %v1205
      %1611 = vmatprep.subr.bf16.mxu0 0
      %1612 = vmatpush1.bf16.msra.mxu0 %v1206
      %1613 = vmatprep.subr.bf16.mxu0 0
      %1614 = vmatpush1.bf16.msra.mxu0 %v1207
      %1615 = vmatprep.subr.bf16.mxu0 0
      %1616 = vmatpush1.bf16.msra.mxu0 %v1208
      %1617 = vmatprep.subr.bf16.mxu0 0
      %1618 = vmatpush1.bf16.msra.mxu0 %v1209
      %1619 = vmatprep.subr.bf16.mxu0 0
      %1620 = vmatpush1.bf16.msra.mxu0 %v1210
      %1621 = vmatprep.subr.bf16.mxu0 0
      %1622 = vmatpush1.bf16.msra.mxu0 %v1211
      %1623 = vmatprep.subr.bf16.mxu0 0
      %1624 = vmatpush1.bf16.msra.mxu0 %v1212
      %1625 = vmatprep.subr.bf16.mxu0 0
      %1626 = vmatpush1.bf16.msra.mxu0 %v1213
      %1627 = vmatprep.subr.bf16.mxu0 0
      %1628 = vmatpush1.bf16.msra.mxu0 %v1214
      %1629 = vmatprep.subr.bf16.mxu0 0
      %1630 = vmatpush1.bf16.msra.mxu0 %v1215
      %1631 = vmatprep.subr.bf16.mxu0 0
      %1632 = vmatpush1.bf16.msra.mxu0 %v1216
      %1633 = vmatprep.mubr.bf16.mxu0 %v320
      %1634 = vmatmul.mubr.bf16.gmra.mrb[0].mxu0 %v316
      %v1635 = vpop.f32.mrb[0].mxu0
      %v1636 = vadd.f32 %v1596, %v1635
      %v1637 = vpop.f32.mrb[0].mxu0
      %v1638 = vpop.f32.mrb[0].mxu0
      %v1639 = vpop.f32.mrb[0].mxu0
      %1640 = vdwg.mxu0
      %1641 = vmatprep.subr.bf16.mxu0 0
      %1642 = vmatpush1.bf16.msra.mxu0 %v1217
      %1643 = vmatprep.subr.bf16.mxu0 0
      %1644 = vmatpush1.bf16.msra.mxu0 %v1218
      %1645 = vmatprep.subr.bf16.mxu0 0
      %1646 = vmatpush1.bf16.msra.mxu0 %v1219
      %1647 = vmatprep.subr.bf16.mxu0 0
      %1648 = vmatpush1.bf16.msra.mxu0 %v1220
      %1649 = vmatprep.subr.bf16.mxu0 0
      %1650 = vmatpush1.bf16.msra.mxu0 %v1221
      %1651 = vmatprep.subr.bf16.mxu0 0
      %1652 = vmatpush1.bf16.msra.mxu0 %v1222
      %1653 = vmatprep.subr.bf16.mxu0 0
      %1654 = vmatpush1.bf16.msra.mxu0 %v1223
      %1655 = vmatprep.subr.bf16.mxu0 0
      %1656 = vmatpush1.bf16.msra.mxu0 %v1224
      %1657 = vmatprep.subr.bf16.mxu0 0
      %1658 = vmatpush1.bf16.msra.mxu0 %v1225
      %1659 = vmatprep.subr.bf16.mxu0 0
      %1660 = vmatpush1.bf16.msra.mxu0 %v1226
      %1661 = vmatprep.subr.bf16.mxu0 0
      %1662 = vmatpush1.bf16.msra.mxu0 %v1227
      %1663 = vmatprep.subr.bf16.mxu0 0
      %1664 = vmatpush1.bf16.msra.mxu0 %v1228
      %1665 = vmatprep.subr.bf16.mxu0 0
      %1666 = vmatpush1.bf16.msra.mxu0 %v1229
      %1667 = vmatprep.subr.bf16.mxu0 0
      %1668 = vmatpush1.bf16.msra.mxu0 %v1230
      %1669 = vmatprep.subr.bf16.mxu0 0
      %1670 = vmatpush1.bf16.msra.mxu0 %v1231
      %1671 = vmatprep.subr.bf16.mxu0 0
      %1672 = vmatpush1.bf16.msra.mxu0 %v1232
      %1673 = vmatprep.mubr.bf16.mxu0 %v328
      %1674 = vmatmul.mubr.bf16.gmra.mrb[0].mxu0 %v324
      %v1675 = vpop.f32.mrb[0].mxu0
      %v1676 = vadd.f32 %v1636, %v1675
      %v1677 = vpop.f32.mrb[0].mxu0
      %v1678 = vpop.f32.mrb[0].mxu0
      %v1679 = vpop.f32.mrb[0].mxu0
      %1680 = vdwg.mxu0
      %v1681 = vpack.c.bf16 %v1676, %v1676
      %1682 = vst [vmem:[%s168] sm:$0x3] %v1681
      %p1683 = scmp.lt.s32.totalorder %s14, 1
      %s1684 = scalar_select %p1683, %s14, 1
      %s1685 = smul.addr %s1684, 2
      %s1686 = scalar_lea.vmem %s3, %s1685
      // Predicated region
      $region33: #{patch_discriminator_forward.9} parent=31 // pred_check
        %p1687 = pneg %p100
      $region34: #{patch_discriminator_forward.9} parent=31 // pred_check_branch
        %1689 = sbr.rel (%p1687) target = $region36
      $region35: #{patch_discriminator_forward.9} parent=31 // pred_region
        _
      $region36: #{patch_discriminator_forward.9} parent=31 // pred_fallthru
        _
    $region32: #{patch_discriminator_forward.9} parent=5 // pred_fallthru
      _
    %p1690 = scmp.le.s32.totalorder 2, %s9
    // Predicated region
    $region37: #{patch_discriminator_forward.9} parent=5 // pred_check
      %p1691 = pneg %p1690
    $region38: #{patch_discriminator_forward.9} parent=5 // pred_check_branch
      %1693 = sbr.rel (%p1691) target = $region40
    $region39: #{patch_discriminator_forward.9} parent=5 // pred_region
      %s1694 = ssub.s32 %s9, 2
      // Predicated region
      $region41: #{patch_discriminator_forward.9} parent=39 // pred_check
        %p1695 = pneg %p106
      $region42: #{patch_discriminator_forward.9} parent=39 // pred_check_branch
        %1697 = sbr.rel (%p1695) target = $region44
      $region43: #{patch_discriminator_forward.9} parent=39 // pred_region
        %p1698 = scmp.lt.s32.totalorder %s15, 1
        %s1699 = scalar_select %p1698, %s15, 1
        %s1700 = smul.addr %s1699, 2
        %s1701 = scalar_lea.vmem %s3, %s1700
      $region44: #{patch_discriminator_forward.9} parent=39 // pred_fallthru
        _
    $region40: #{patch_discriminator_forward.9} parent=5 // pred_fallthru
      _
  $region6: #{patch_discriminator_forward.9} parent=0 // loop_footer
    %s13 = sadd.s32 1, %s9
  $region7: #{patch_discriminator_forward.9} parent=0 // loop_footer_branch
    %8 = sbr.rel target = $region3
  $region8: #{patch_discriminator_forward.9} parent=0 // loop_exit
    _

</llo_original>
